<compile_context>
chip_gen: v7x
topology: tpu7x:2x2x1
jax: 0.10.0
libtpu: 0.0.40
codegen_flags: <defaults>
</compile_context>

<pallas_src>
import jax
import jax.numpy as jnp
from jax.experimental import pallas as pl
from jax.experimental.pallas import tpu as pltpu


def _round_up(x, m):
    return (x + m - 1) // m * m


# ----------------------------------------------------------------------------
# Kernel 1: paired-modality Conv(k=2,s=2)+BN+ReLU as a full-block GEMM
#   grid = (2,)  ->  one grid step per modality (parallel axis)
# ----------------------------------------------------------------------------
def conv_pair_kernel(x_ref, w_ref, s_ref, b_ref, o_ref):
    # x_ref: (1, Mp, K), w_ref: (1, K, OC), s_ref/b_ref: (1, 1, OC) f32
    y = jnp.dot(x_ref[0], w_ref[0], preferred_element_type=jnp.float32)
    y = jnp.maximum(y * s_ref[0] + b_ref[0], 0.0)          # f32 epilogue
    o_ref[0] = y.astype(o_ref.dtype)


def conv_pair(x2, w2, s2, b2):
    """x2: (2, M, K); w2: (2, K, OC); s2/b2: (2, 1, OC) f32 -> (2, M, OC) bf16."""
    _, M, K = x2.shape
    OC = w2.shape[-1]
    Mp = _round_up(M, 8)                       # sublane minimum, NOT 128
    if Mp != M:
        x2 = jnp.pad(x2, ((0, 0), (0, Mp - M), (0, 0)))

    itm = lambda a: int(a.size) * a.dtype.itemsize
    cost = pl.CostEstimate(
        flops=2 * 2 * Mp * K * OC,
        transcendentals=0,
        bytes_accessed=itm(x2) + itm(w2) + itm(s2) + itm(b2) + 2 * Mp * OC * 2)

    out = pl.pallas_call(
        conv_pair_kernel,
        out_shape=jax.ShapeDtypeStruct((2, Mp, OC), jnp.bfloat16),
        grid_spec=pltpu.PrefetchScalarGridSpec(
            num_scalar_prefetch=0,
            grid=(2,),
            in_specs=[
                pl.BlockSpec((1, Mp, K), lambda m: (m, 0, 0)),
                pl.BlockSpec((1, K, OC), lambda m: (m, 0, 0)),
                pl.BlockSpec((1, 1, OC), lambda m: (m, 0, 0)),
                pl.BlockSpec((1, 1, OC), lambda m: (m, 0, 0)),
            ],
            out_specs=pl.BlockSpec((1, Mp, OC), lambda m: (m, 0, 0)),
        ),
        compiler_params=pltpu.CompilerParams(
            dimension_semantics=("parallel",)),
        cost_estimate=cost,
    )(x2, w2, s2, b2)
    return out[:, :M, :]


# ----------------------------------------------------------------------------
# Encoder glue: im2col (non-overlapping 2x2 patches) + BN fold, per depth
# ----------------------------------------------------------------------------
def _im2col_2x2(x_nhwc):
    B, H, W, C = x_nhwc.shape
    OH, OW = H // 2, W // 2
    p = (x_nhwc.reshape(B, OH, 2, OW, 2, C)
         .transpose(0, 1, 3, 2, 4, 5)
         .reshape(B * OH * OW, 4 * C))
    return p, OH, OW


def _fold_bn(lp, eps=1e-5):
    s = lp["gamma"] * jax.lax.rsqrt(lp["var"] + eps)
    b = (lp["conv_b"] - lp["mean"]) * s + lp["beta"]
    return s, b


def encoders_forward(x1_nchw, x2_nchw, acc_layers, sk_layers):
    ha = jnp.transpose(x1_nchw, (0, 2, 3, 1))   # NCHW -> NHWC
    hs = jnp.transpose(x2_nchw, (0, 2, 3, 1))
    B = ha.shape[0]
    for la, ls in zip(acc_layers, sk_layers):
        pa, oha, owa = _im2col_2x2(ha)
        ps, ohs, ows = _im2col_2x2(hs)
        assert pa.shape == ps.shape   # identical GEMM shapes for both modalities
        K = pa.shape[-1]
        OC = la["w"].shape[-1]
        # Tiny-K first layer stays f32; bigger GEMMs stream bf16 (f32 accum).
        cdt = jnp.float32 if K < 128 else jnp.bfloat16
        x = jnp.stack([pa, ps]).astype(cdt)
        w = jnp.stack([la["w"].reshape(K, OC),
                       ls["w"].reshape(K, OC)]).astype(cdt)
        sa, ba = _fold_bn(la)
        ss, bs = _fold_bn(ls)
        s = jnp.stack([sa, ss]).reshape(2, 1, OC).astype(jnp.float32)
        b = jnp.stack([ba, bs]).reshape(2, 1, OC).astype(jnp.float32)
        out = conv_pair(x, w, s, b)
        ha = out[0].reshape(B, oha, owa, OC)
        hs = out[1].reshape(B, ohs, ows, OC)
    # Match PyTorch's x.view(B, -1) on an NCHW tensor.
    fa = jnp.transpose(ha, (0, 3, 1, 2)).reshape(B, -1)
    fs = jnp.transpose(hs, (0, 3, 1, 2)).reshape(B, -1)
    return fa, fs


# ----------------------------------------------------------------------------
# Kernel 2: fully fused classifier  fc1+BN+ReLU -> fc2+BN+ReLU -> fc3
#   grid = (K_tiles,) over fc1's reduction dim; fc2/fc3 run on the last step.
# ----------------------------------------------------------------------------
def classifier_kernel(x_ref, w1_ref, s1_ref, b1_ref, w2_ref, s2_ref, b2_ref,
                      w3_ref, b3_ref, o_ref, acc_ref):
    k = pl.program_id(0)

    @pl.when(k == 0)
    def _():
        acc_ref[...] = jnp.zeros_like(acc_ref)

    acc_ref[...] += jnp.dot(x_ref[...], w1_ref[...],
                            preferred_element_type=jnp.float32)

    @pl.when(k == pl.num_programs(0) - 1)
    def _():
        h1 = jnp.maximum(acc_ref[...] * s1_ref[...] + b1_ref[...], 0.0)
        h2 = jnp.dot(h1.astype(w2_ref.dtype), w2_ref[...],
                     preferred_element_type=jnp.float32)
        h2 = jnp.maximum(h2 * s2_ref[...] + b2_ref[...], 0.0)
        h3 = jnp.dot(h2.astype(w3_ref.dtype), w3_ref[...],
                     preferred_element_type=jnp.float32) + b3_ref[...]
        o_ref[...] = h3            # fc3 has unit scale: bias-only epilogue


def classifier_forward(feat, w1, s1, b1, w2, s2, b2, w3, b3):
    B, F = feat.shape
    H1, H2, NCp = w1.shape[1], w2.shape[1], w3.shape[1]
    Mp = _round_up(B, 8)                        # pad batch rows to 8, not 128
    x = feat.astype(jnp.bfloat16)
    if Mp != B:
        x = jnp.pad(x, ((0, Mp - B), (0, 0)))

    # Largest reduction tile that divides F (3840 -> 1280 -> 3 grid steps).
    TK = F
    if F > 1536:
        for cand in (1280, 1024, 768, 640, 512, 384, 256, 128):
            if F % cand == 0:
                TK = cand
                break
    kt = F // TK

    w1 = w1.astype(jnp.bfloat16)
    w2 = w2.astype(jnp.bfloat16)
    w3 = w3.astype(jnp.bfloat16)

    itm = lambda a: int(a.size) * a.dtype.itemsize
    cost = pl.CostEstimate(
        flops=2 * Mp * (F * H1 + H1 * H2 + H2 * NCp),
        transcendentals=0,
        bytes_accessed=(itm(x) + itm(w1) + itm(w2) + itm(w3) + itm(s1)
                        + itm(b1) + itm(s2) + itm(b2) + itm(b3) + Mp * NCp * 4))

    out = pl.pallas_call(
        classifier_kernel,
        out_shape=jax.ShapeDtypeStruct((Mp, NCp), jnp.float32),
        grid_spec=pltpu.PrefetchScalarGridSpec(
            num_scalar_prefetch=0,
            grid=(kt,),
            in_specs=[
                pl.BlockSpec((Mp, TK), lambda k: (0, k)),    # feature chunk
                pl.BlockSpec((TK, H1), lambda k: (k, 0)),    # fc1 weight chunk
                pl.BlockSpec((1, H1), lambda k: (0, 0)),     # bn1 scale
                pl.BlockSpec((1, H1), lambda k: (0, 0)),     # bn1 bias
                pl.BlockSpec((H1, H2), lambda k: (0, 0)),    # fc2 weight
                pl.BlockSpec((1, H2), lambda k: (0, 0)),     # bn2 scale
                pl.BlockSpec((1, H2), lambda k: (0, 0)),     # bn2 bias
                pl.BlockSpec((H2, NCp), lambda k: (0, 0)),   # fc3 weight (padded)
                pl.BlockSpec((1, NCp), lambda k: (0, 0)),    # fc3 bias (padded)
            ],
            out_specs=pl.BlockSpec((Mp, NCp), lambda k: (0, 0)),
            scratch_shapes=[pltpu.VMEM((Mp, H1), jnp.float32)],
        ),
        compiler_params=pltpu.CompilerParams(
            dimension_semantics=("arbitrary",),
            vmem_limit_bytes=32 * 1024 * 1024,   # bf16 weights fit v7x's VMEM
        ),
        cost_estimate=cost,
    )(x, w1, s1, b1, w2, s2, b2, w3, b3)
    return out[:B]


# ----------------------------------------------------------------------------
# Full model forward (jit-ed so pad/transpose/reshape glue fuses)
# ----------------------------------------------------------------------------
@jax.jit
def model_forward(params, x1, x2):
    fa, fs = encoders_forward(x1, x2, params["acc"], params["skeleton"])
    fused = jnp.concatenate([fa, fs], axis=1)              # (B, 3840)

    c = params["cls"]
    eps = 1e-5
    s1 = c["bn1_gamma"] * jax.lax.rsqrt(c["bn1_var"] + eps)
    b1 = (c["fc1_b"] - c["bn1_mean"]) * s1 + c["bn1_beta"]
    s2 = c["bn2_gamma"] * jax.lax.rsqrt(c["bn2_var"] + eps)
    b2 = (c["fc2_b"] - c["bn2_mean"]) * s2 + c["bn2_beta"]

    num_classes = c["fc3_b"].shape[0]
    NCp = _round_up(num_classes, 128)            # lane-dense output block
    w3 = jnp.pad(c["fc3_w"], ((0, 0), (0, NCp - num_classes)))
    b3 = jnp.pad(c["fc3_b"], ((0, NCp - num_classes),))

    out = classifier_forward(
        fused, c["fc1_w"], s1.reshape(1, -1), b1.reshape(1, -1),
        c["fc2_w"], s2.reshape(1, -1), b2.reshape(1, -1),
        w3, b3.reshape(1, -1))
    return out[:, :num_classes]


# ----------------------------------------------------------------------------
# Deterministic synthetic parameters (shapes follow the module __init__)
# ----------------------------------------------------------------------------
def init_params(key, input_size, num_classes):
    keys = iter(jax.random.split(key, 128))

    def conv_layer(cin, cout):
        return dict(
            w=jax.random.normal(next(keys), (2, 2, cin, cout), jnp.float32)
            * (1.0 / jnp.sqrt(4.0 * cin)),
            conv_b=0.01 * jax.random.normal(next(keys), (cout,), jnp.float32),
            gamma=1.0 + 0.1 * jax.random.normal(next(keys), (cout,), jnp.float32),
            beta=0.1 * jax.random.normal(next(keys), (cout,), jnp.float32),
            mean=0.1 * jax.random.normal(next(keys), (cout,), jnp.float32),
            var=1.0 + 0.1 * jnp.abs(jax.random.normal(next(keys), (cout,), jnp.float32)),
        )

    def linear(fin, fout):
        w = jax.random.normal(next(keys), (fin, fout), jnp.float32) / jnp.sqrt(fin)
        b = 0.01 * jax.random.normal(next(keys), (fout,), jnp.float32)
        return w, b

    acc = [conv_layer(input_size, 64), conv_layer(64, 64), conv_layer(64, 64)]
    skeleton = [conv_layer(input_size, 64), conv_layer(64, 64), conv_layer(64, 64)]

    fc1_w, fc1_b = linear(3840, 1280)
    fc2_w, fc2_b = linear(1280, 128)
    fc3_w, fc3_b = linear(128, num_classes)
    cls = dict(
        fc1_w=fc1_w, fc1_b=fc1_b,
        bn1_gamma=1.0 + 0.1 * jax.random.normal(next(keys), (1280,), jnp.float32),
        bn1_beta=0.1 * jax.random.normal(next(keys), (1280,), jnp.float32),
        bn1_mean=0.1 * jax.random.normal(next(keys), (1280,), jnp.float32),
        bn1_var=1.0 + 0.1 * jnp.abs(jax.random.normal(next(keys), (1280,), jnp.float32)),
        fc2_w=fc2_w, fc2_b=fc2_b,
        bn2_gamma=1.0 + 0.1 * jax.random.normal(next(keys), (128,), jnp.float32),
        bn2_beta=0.1 * jax.random.normal(next(keys), (128,), jnp.float32),
        bn2_mean=0.1 * jax.random.normal(next(keys), (128,), jnp.float32),
        bn2_var=1.0 + 0.1 * jnp.abs(jax.random.normal(next(keys), (128,), jnp.float32)),
        fc3_w=fc3_w, fc3_b=fc3_b,
    )
    return dict(acc=acc, skeleton=skeleton, cls=cls)


if __name__ == "__main__":
    key = jax.random.PRNGKey(0)
    k_p, k_x1, k_x2 = jax.random.split(key, 3)

    input_size = 1       # channels of the sensor "image"
    num_classes = 27     # UTD-MHAD action classes
    batch = 2

    # PyTorch-style NCHW inputs; spatial sizes chosen so each encoder
    # (3x Conv2d k=2,s=2 -> 64 ch) flattens to exactly 1920 features.
    x1 = jax.random.normal(k_x1, (batch, input_size, 48, 40), jnp.float32)  # acc
    x2 = jax.random.normal(k_x2, (batch, input_size, 40, 48), jnp.float32)  # skeleton

    params = init_params(k_p, input_size, num_classes)

    out = model_forward(params, x1, x2)
    out = jax.block_until_ready(out)

    assert out.shape == (batch, num_classes), out.shape
    assert bool(jnp.all(jnp.isfinite(out)))
    print("KERNEL_OK")
</pallas_src>

<mosaic_0001>
module attributes {stable_mosaic.version = 11 : i64} {
  func.func @conv_pair_kernel(%arg0: i32, %arg1: memref<1x960x4xf32, #tpu.memory_space<vmem>>, %arg2: memref<1x4x64xf32, #tpu.memory_space<vmem>>, %arg3: memref<1x1x64xf32, #tpu.memory_space<vmem>>, %arg4: memref<1x1x64xf32, #tpu.memory_space<vmem>>, %arg5: memref<1x960x64xbf16, #tpu.memory_space<vmem>>) attributes {dimension_semantics = [#tpu.dimension_semantics<parallel>], iteration_bounds = array<i64: 2>, scalar_prefetch = 0 : i64, scratch_operands = 0 : i64, tpu.core_type = #tpu.core_type<tc>, window_params = [{transform_indices = @transform_0, window_bounds = array<i64: 1, 960, 4>}, {transform_indices = @transform_1, window_bounds = array<i64: 1, 4, 64>}, {transform_indices = @transform_2, window_bounds = array<i64: 1, 1, 64>}, {transform_indices = @transform_3, window_bounds = array<i64: 1, 1, 64>}, {transform_indices = @transform_4, window_bounds = array<i64: 1, 960, 64>}]} {
    %c0 = arith.constant 0 : index
    %c0_0 = arith.constant 0 : index
    %c0_1 = arith.constant 0 : index
    %0 = vector.load %arg1[%c0, %c0_0, %c0_1] : memref<1x960x4xf32, #tpu.memory_space<vmem>>, vector<1x960x4xf32>
    %1 = vector.shape_cast %0 : vector<1x960x4xf32> to vector<960x4xf32>
    %c0_2 = arith.constant 0 : index
    %c0_3 = arith.constant 0 : index
    %c0_4 = arith.constant 0 : index
    %2 = vector.load %arg2[%c0_2, %c0_3, %c0_4] : memref<1x4x64xf32, #tpu.memory_space<vmem>>, vector<1x4x64xf32>
    %3 = vector.shape_cast %2 : vector<1x4x64xf32> to vector<4x64xf32>
    %cst = arith.constant dense<0.000000e+00> : vector<960x64xf32>
    %4 = tpu.matmul %1, %3, %cst {dimension_numbers = #tpu.dot_dimension_numbers<[1], [0], [0], [1], [0, 0, 1, 1], [], []>} : vector<960x4xf32>, vector<4x64xf32>, vector<960x64xf32> -> vector<960x64xf32>
    %c0_5 = arith.constant 0 : index
    %c0_6 = arith.constant 0 : index
    %c0_7 = arith.constant 0 : index
    %5 = vector.load %arg3[%c0_5, %c0_6, %c0_7] : memref<1x1x64xf32, #tpu.memory_space<vmem>>, vector<1x1x64xf32>
    %6 = vector.shape_cast %5 : vector<1x1x64xf32> to vector<1x64xf32>
    %7 = vector.broadcast %6 : vector<1x64xf32> to vector<960x64xf32>
    %8 = arith.mulf %4, %7 : vector<960x64xf32>
    %c0_8 = arith.constant 0 : index
    %c0_9 = arith.constant 0 : index
    %c0_10 = arith.constant 0 : index
    %9 = vector.load %arg4[%c0_8, %c0_9, %c0_10] : memref<1x1x64xf32, #tpu.memory_space<vmem>>, vector<1x1x64xf32>
    %10 = vector.shape_cast %9 : vector<1x1x64xf32> to vector<1x64xf32>
    %11 = vector.broadcast %10 : vector<1x64xf32> to vector<960x64xf32>
    %12 = arith.addf %8, %11 : vector<960x64xf32>
    %cst_11 = arith.constant 0.000000e+00 : f32
    %13 = vector.broadcast %cst_11 : f32 to vector<960x64xf32>
    %14 = arith.maximumf %12, %13 : vector<960x64xf32>
    %15 = arith.truncf %14 : vector<960x64xf32> to vector<960x64xbf16>
    %c0_12 = arith.constant 0 : index
    %c0_13 = arith.constant 0 : index
    %c0_14 = arith.constant 0 : index
    %16 = vector.load %arg5[%c0_12, %c0_13, %c0_14] : memref<1x960x64xbf16, #tpu.memory_space<vmem>>, vector<1x960x64xbf16>
    %17 = vector.shape_cast %16 : vector<1x960x64xbf16> to vector<960x64xbf16>
    %18 = vector.shape_cast %15 : vector<960x64xbf16> to vector<1x960x64xbf16>
    tpu.vector_store %arg5[%c0_12, %c0_13, %c0_14], %18 {strides = array<i32>} : memref<1x960x64xbf16, #tpu.memory_space<vmem>>, vector<1x960x64xbf16>,
    return
  }
  func.func @transform_0(%arg0: i32) -> (i32, i32, i32) {
    %c0_i32 = arith.constant 0 : i32
    %c0_i32_0 = arith.constant 0 : i32
    %c0_i32_1 = arith.constant 0 : i32
    return %arg0, %c0_i32, %c0_i32_0 : i32, i32, i32
  }
  func.func @transform_1(%arg0: i32) -> (i32, i32, i32) {
    %c0_i32 = arith.constant 0 : i32
    %c0_i32_0 = arith.constant 0 : i32
    %c0_i32_1 = arith.constant 0 : i32
    return %arg0, %c0_i32, %c0_i32_0 : i32, i32, i32
  }
  func.func @transform_2(%arg0: i32) -> (i32, i32, i32) {
    %c0_i32 = arith.constant 0 : i32
    %c0_i32_0 = arith.constant 0 : i32
    %c0_i32_1 = arith.constant 0 : i32
    return %arg0, %c0_i32, %c0_i32_0 : i32, i32, i32
  }
  func.func @transform_3(%arg0: i32) -> (i32, i32, i32) {
    %c0_i32 = arith.constant 0 : i32
    %c0_i32_0 = arith.constant 0 : i32
    %c0_i32_1 = arith.constant 0 : i32
    return %arg0, %c0_i32, %c0_i32_0 : i32, i32, i32
  }
  func.func @transform_4(%arg0: i32) -> (i32, i32, i32) {
    %c0_i32 = arith.constant 0 : i32
    %c0_i32_0 = arith.constant 0 : i32
    %c0_i32_1 = arith.constant 0 : i32
    return %arg0, %c0_i32, %c0_i32_0 : i32, i32, i32
  }
}

module attributes {stable_mosaic.version = 11 : i64} {
  func.func @conv_pair_kernel(%arg0: i32, %arg1: memref<1x240x256xbf16, #tpu.memory_space<vmem>>, %arg2: memref<1x256x64xbf16, #tpu.memory_space<vmem>>, %arg3: memref<1x1x64xf32, #tpu.memory_space<vmem>>, %arg4: memref<1x1x64xf32, #tpu.memory_space<vmem>>, %arg5: memref<1x240x64xbf16, #tpu.memory_space<vmem>>) attributes {dimension_semantics = [#tpu.dimension_semantics<parallel>], iteration_bounds = array<i64: 2>, scalar_prefetch = 0 : i64, scratch_operands = 0 : i64, tpu.core_type = #tpu.core_type<tc>, window_params = [{transform_indices = @transform_0, window_bounds = array<i64: 1, 240, 256>}, {transform_indices = @transform_1, window_bounds = array<i64: 1, 256, 64>}, {transform_indices = @transform_2, window_bounds = array<i64: 1, 1, 64>}, {transform_indices = @transform_3, window_bounds = array<i64: 1, 1, 64>}, {transform_indices = @transform_4, window_bounds = array<i64: 1, 240, 64>}]} {
    %c0 = arith.constant 0 : index
    %c0_0 = arith.constant 0 : index
    %c0_1 = arith.constant 0 : index
    %0 = vector.load %arg1[%c0, %c0_0, %c0_1] : memref<1x240x256xbf16, #tpu.memory_space<vmem>>, vector<1x240x256xbf16>
    %1 = vector.shape_cast %0 : vector<1x240x256xbf16> to vector<240x256xbf16>
    %c0_2 = arith.constant 0 : index
    %c0_3 = arith.constant 0 : index
    %c0_4 = arith.constant 0 : index
    %2 = vector.load %arg2[%c0_2, %c0_3, %c0_4] : memref<1x256x64xbf16, #tpu.memory_space<vmem>>, vector<1x256x64xbf16>
    %3 = vector.shape_cast %2 : vector<1x256x64xbf16> to vector<256x64xbf16>
    %cst = arith.constant dense<0.000000e+00> : vector<240x64xf32>
    %4 = tpu.matmul %1, %3, %cst {dimension_numbers = #tpu.dot_dimension_numbers<[1], [0], [0], [1], [0, 0, 1, 1], [], []>} : vector<240x256xbf16>, vector<256x64xbf16>, vector<240x64xf32> -> vector<240x64xf32>
    %c0_5 = arith.constant 0 : index
    %c0_6 = arith.constant 0 : index
    %c0_7 = arith.constant 0 : index
    %5 = vector.load %arg3[%c0_5, %c0_6, %c0_7] : memref<1x1x64xf32, #tpu.memory_space<vmem>>, vector<1x1x64xf32>
    %6 = vector.shape_cast %5 : vector<1x1x64xf32> to vector<1x64xf32>
    %7 = vector.broadcast %6 : vector<1x64xf32> to vector<240x64xf32>
    %8 = arith.mulf %4, %7 : vector<240x64xf32>
    %c0_8 = arith.constant 0 : index
    %c0_9 = arith.constant 0 : index
    %c0_10 = arith.constant 0 : index
    %9 = vector.load %arg4[%c0_8, %c0_9, %c0_10] : memref<1x1x64xf32, #tpu.memory_space<vmem>>, vector<1x1x64xf32>
    %10 = vector.shape_cast %9 : vector<1x1x64xf32> to vector<1x64xf32>
    %11 = vector.broadcast %10 : vector<1x64xf32> to vector<240x64xf32>
    %12 = arith.addf %8, %11 : vector<240x64xf32>
    %cst_11 = arith.constant 0.000000e+00 : f32
    %13 = vector.broadcast %cst_11 : f32 to vector<240x64xf32>
    %14 = arith.maximumf %12, %13 : vector<240x64xf32>
    %15 = arith.truncf %14 : vector<240x64xf32> to vector<240x64xbf16>
    %c0_12 = arith.constant 0 : index
    %c0_13 = arith.constant 0 : index
    %c0_14 = arith.constant 0 : index
    %16 = vector.load %arg5[%c0_12, %c0_13, %c0_14] : memref<1x240x64xbf16, #tpu.memory_space<vmem>>, vector<1x240x64xbf16>
    %17 = vector.shape_cast %16 : vector<1x240x64xbf16> to vector<240x64xbf16>
    %18 = vector.shape_cast %15 : vector<240x64xbf16> to vector<1x240x64xbf16>
    tpu.vector_store %arg5[%c0_12, %c0_13, %c0_14], %18 {strides = array<i32>} : memref<1x240x64xbf16, #tpu.memory_space<vmem>>, vector<1x240x64xbf16>,
    return
  }
  func.func @transform_0(%arg0: i32) -> (i32, i32, i32) {
    %c0_i32 = arith.constant 0 : i32
    %c0_i32_0 = arith.constant 0 : i32
    %c0_i32_1 = arith.constant 0 : i32
    return %arg0, %c0_i32, %c0_i32_0 : i32, i32, i32
  }
  func.func @transform_1(%arg0: i32) -> (i32, i32, i32) {
    %c0_i32 = arith.constant 0 : i32
    %c0_i32_0 = arith.constant 0 : i32
    %c0_i32_1 = arith.constant 0 : i32
    return %arg0, %c0_i32, %c0_i32_0 : i32, i32, i32
  }
  func.func @transform_2(%arg0: i32) -> (i32, i32, i32) {
    %c0_i32 = arith.constant 0 : i32
    %c0_i32_0 = arith.constant 0 : i32
    %c0_i32_1 = arith.constant 0 : i32
    return %arg0, %c0_i32, %c0_i32_0 : i32, i32, i32
  }
  func.func @transform_3(%arg0: i32) -> (i32, i32, i32) {
    %c0_i32 = arith.constant 0 : i32
    %c0_i32_0 = arith.constant 0 : i32
    %c0_i32_1 = arith.constant 0 : i32
    return %arg0, %c0_i32, %c0_i32_0 : i32, i32, i32
  }
  func.func @transform_4(%arg0: i32) -> (i32, i32, i32) {
    %c0_i32 = arith.constant 0 : i32
    %c0_i32_0 = arith.constant 0 : i32
    %c0_i32_1 = arith.constant 0 : i32
    return %arg0, %c0_i32, %c0_i32_0 : i32, i32, i32
  }
}

module attributes {stable_mosaic.version = 11 : i64} {
  func.func @conv_pair_kernel(%arg0: i32, %arg1: memref<1x64x256xbf16, #tpu.memory_space<vmem>>, %arg2: memref<1x256x64xbf16, #tpu.memory_space<vmem>>, %arg3: memref<1x1x64xf32, #tpu.memory_space<vmem>>, %arg4: memref<1x1x64xf32, #tpu.memory_space<vmem>>, %arg5: memref<1x64x64xbf16, #tpu.memory_space<vmem>>) attributes {dimension_semantics = [#tpu.dimension_semantics<parallel>], iteration_bounds = array<i64: 2>, scalar_prefetch = 0 : i64, scratch_operands = 0 : i64, tpu.core_type = #tpu.core_type<tc>, window_params = [{transform_indices = @transform_0, window_bounds = array<i64: 1, 64, 256>}, {transform_indices = @transform_1, window_bounds = array<i64: 1, 256, 64>}, {transform_indices = @transform_2, window_bounds = array<i64: 1, 1, 64>}, {transform_indices = @transform_3, window_bounds = array<i64: 1, 1, 64>}, {transform_indices = @transform_4, window_bounds = array<i64: 1, 64, 64>}]} {
    %c0 = arith.constant 0 : index
    %c0_0 = arith.constant 0 : index
    %c0_1 = arith.constant 0 : index
    %0 = vector.load %arg1[%c0, %c0_0, %c0_1] : memref<1x64x256xbf16, #tpu.memory_space<vmem>>, vector<1x64x256xbf16>
    %1 = vector.shape_cast %0 : vector<1x64x256xbf16> to vector<64x256xbf16>
    %c0_2 = arith.constant 0 : index
    %c0_3 = arith.constant 0 : index
    %c0_4 = arith.constant 0 : index
    %2 = vector.load %arg2[%c0_2, %c0_3, %c0_4] : memref<1x256x64xbf16, #tpu.memory_space<vmem>>, vector<1x256x64xbf16>
    %3 = vector.shape_cast %2 : vector<1x256x64xbf16> to vector<256x64xbf16>
    %cst = arith.constant dense<0.000000e+00> : vector<64x64xf32>
    %4 = tpu.matmul %1, %3, %cst {dimension_numbers = #tpu.dot_dimension_numbers<[1], [0], [0], [1], [0, 0, 1, 1], [], []>} : vector<64x256xbf16>, vector<256x64xbf16>, vector<64x64xf32> -> vector<64x64xf32>
    %c0_5 = arith.constant 0 : index
    %c0_6 = arith.constant 0 : index
    %c0_7 = arith.constant 0 : index
    %5 = vector.load %arg3[%c0_5, %c0_6, %c0_7] : memref<1x1x64xf32, #tpu.memory_space<vmem>>, vector<1x1x64xf32>
    %6 = vector.shape_cast %5 : vector<1x1x64xf32> to vector<1x64xf32>
    %7 = vector.broadcast %6 : vector<1x64xf32> to vector<64x64xf32>
    %8 = arith.mulf %4, %7 : vector<64x64xf32>
    %c0_8 = arith.constant 0 : index
    %c0_9 = arith.constant 0 : index
    %c0_10 = arith.constant 0 : index
    %9 = vector.load %arg4[%c0_8, %c0_9, %c0_10] : memref<1x1x64xf32, #tpu.memory_space<vmem>>, vector<1x1x64xf32>
    %10 = vector.shape_cast %9 : vector<1x1x64xf32> to vector<1x64xf32>
    %11 = vector.broadcast %10 : vector<1x64xf32> to vector<64x64xf32>
    %12 = arith.addf %8, %11 : vector<64x64xf32>
    %cst_11 = arith.constant 0.000000e+00 : f32
    %13 = vector.broadcast %cst_11 : f32 to vector<64x64xf32>
    %14 = arith.maximumf %12, %13 : vector<64x64xf32>
    %15 = arith.truncf %14 : vector<64x64xf32> to vector<64x64xbf16>
    %c0_12 = arith.constant 0 : index
    %c0_13 = arith.constant 0 : index
    %c0_14 = arith.constant 0 : index
    %16 = vector.load %arg5[%c0_12, %c0_13, %c0_14] : memref<1x64x64xbf16, #tpu.memory_space<vmem>>, vector<1x64x64xbf16>
    %17 = vector.shape_cast %16 : vector<1x64x64xbf16> to vector<64x64xbf16>
    %18 = vector.shape_cast %15 : vector<64x64xbf16> to vector<1x64x64xbf16>
    tpu.vector_store %arg5[%c0_12, %c0_13, %c0_14], %18 {strides = array<i32>} : memref<1x64x64xbf16, #tpu.memory_space<vmem>>, vector<1x64x64xbf16>,
    return
  }
  func.func @transform_0(%arg0: i32) -> (i32, i32, i32) {
    %c0_i32 = arith.constant 0 : i32
    %c0_i32_0 = arith.constant 0 : i32
    %c0_i32_1 = arith.constant 0 : i32
    return %arg0, %c0_i32, %c0_i32_0 : i32, i32, i32
  }
  func.func @transform_1(%arg0: i32) -> (i32, i32, i32) {
    %c0_i32 = arith.constant 0 : i32
    %c0_i32_0 = arith.constant 0 : i32
    %c0_i32_1 = arith.constant 0 : i32
    return %arg0, %c0_i32, %c0_i32_0 : i32, i32, i32
  }
  func.func @transform_2(%arg0: i32) -> (i32, i32, i32) {
    %c0_i32 = arith.constant 0 : i32
    %c0_i32_0 = arith.constant 0 : i32
    %c0_i32_1 = arith.constant 0 : i32
    return %arg0, %c0_i32, %c0_i32_0 : i32, i32, i32
  }
  func.func @transform_3(%arg0: i32) -> (i32, i32, i32) {
    %c0_i32 = arith.constant 0 : i32
    %c0_i32_0 = arith.constant 0 : i32
    %c0_i32_1 = arith.constant 0 : i32
    return %arg0, %c0_i32, %c0_i32_0 : i32, i32, i32
  }
  func.func @transform_4(%arg0: i32) -> (i32, i32, i32) {
    %c0_i32 = arith.constant 0 : i32
    %c0_i32_0 = arith.constant 0 : i32
    %c0_i32_1 = arith.constant 0 : i32
    return %arg0, %c0_i32, %c0_i32_0 : i32, i32, i32
  }
}

module attributes {stable_mosaic.version = 11 : i64} {
  func.func @classifier_kernel(%arg0: i32, %arg1: memref<8x1280xbf16, #tpu.memory_space<vmem>>, %arg2: memref<1280x1280xbf16, #tpu.memory_space<vmem>>, %arg3: memref<1x1280xf32, #tpu.memory_space<vmem>>, %arg4: memref<1x1280xf32, #tpu.memory_space<vmem>>, %arg5: memref<1280x128xbf16, #tpu.memory_space<vmem>>, %arg6: memref<1x128xf32, #tpu.memory_space<vmem>>, %arg7: memref<1x128xf32, #tpu.memory_space<vmem>>, %arg8: memref<128x128xbf16, #tpu.memory_space<vmem>>, %arg9: memref<1x128xf32, #tpu.memory_space<vmem>>, %arg10: memref<8x128xf32, #tpu.memory_space<vmem>>, %arg11: memref<8x1280xf32, #tpu.memory_space<vmem>>) attributes {dimension_semantics = [#tpu.dimension_semantics<arbitrary>], iteration_bounds = array<i64: 3>, scalar_prefetch = 0 : i64, scratch_operands = 1 : i64, tpu.core_type = #tpu.core_type<tc>, window_params = [{transform_indices = @transform_0, window_bounds = array<i64: 8, 1280>}, {transform_indices = @transform_1, window_bounds = array<i64: 1280, 1280>}, {pipeline_mode = #tpu.pipeline_mode<synchronous>, transform_indices = @transform_2, window_bounds = array<i64: 1, 1280>}, {pipeline_mode = #tpu.pipeline_mode<synchronous>, transform_indices = @transform_3, window_bounds = array<i64: 1, 1280>}, {pipeline_mode = #tpu.pipeline_mode<synchronous>, transform_indices = @transform_4, window_bounds = array<i64: 1280, 128>}, {pipeline_mode = #tpu.pipeline_mode<synchronous>, transform_indices = @transform_5, window_bounds = array<i64: 1, 128>}, {pipeline_mode = #tpu.pipeline_mode<synchronous>, transform_indices = @transform_6, window_bounds = array<i64: 1, 128>}, {pipeline_mode = #tpu.pipeline_mode<synchronous>, transform_indices = @transform_7, window_bounds = array<i64: 128, 128>}, {pipeline_mode = #tpu.pipeline_mode<synchronous>, transform_indices = @transform_8, window_bounds = array<i64: 1, 128>}, {pipeline_mode = #tpu.pipeline_mode<synchronous>, transform_indices = @transform_9, window_bounds = array<i64: 8, 128>}]} {
    %c0_i32 = arith.constant 0 : i32
    %0 = arith.cmpi eq, %arg0, %c0_i32 : i32
    %1 = arith.extui %0 : i1 to i32
    %c0_i32_0 = arith.constant 0 : i32
    %2 = arith.cmpi ne, %1, %c0_i32_0 : i32
    scf.if %2 {
      %cst_9 = arith.constant 0.000000e+00 : f32
      %12 = vector.broadcast %cst_9 : f32 to vector<8x1280xf32>
      %c0_10 = arith.constant 0 : index
      %c0_11 = arith.constant 0 : index
      %13 = vector.load %arg11[%c0_10, %c0_11] : memref<8x1280xf32, #tpu.memory_space<vmem>>, vector<8x1280xf32>
      tpu.vector_store %arg11[%c0_10, %c0_11], %12 {strides = array<i32>} : memref<8x1280xf32, #tpu.memory_space<vmem>>, vector<8x1280xf32>,
    } else {
    }
    %c0 = arith.constant 0 : index
    %c0_1 = arith.constant 0 : index
    %3 = vector.load %arg11[%c0, %c0_1] : memref<8x1280xf32, #tpu.memory_space<vmem>>, vector<8x1280xf32>
    %c0_2 = arith.constant 0 : index
    %c0_3 = arith.constant 0 : index
    %4 = vector.load %arg1[%c0_2, %c0_3] : memref<8x1280xbf16, #tpu.memory_space<vmem>>, vector<8x1280xbf16>
    %c0_4 = arith.constant 0 : index
    %c0_5 = arith.constant 0 : index
    %5 = vector.load %arg2[%c0_4, %c0_5] : memref<1280x1280xbf16, #tpu.memory_space<vmem>>, vector<1280x1280xbf16>
    %cst = arith.constant dense<0.000000e+00> : vector<8x1280xf32>
    %6 = tpu.matmul %4, %5, %cst {dimension_numbers = #tpu.dot_dimension_numbers<[1], [0], [0], [1], [0, 0, 1, 1], [], []>} : vector<8x1280xbf16>, vector<1280x1280xbf16>, vector<8x1280xf32> -> vector<8x1280xf32>
    %7 = arith.addf %3, %6 : vector<8x1280xf32>
    %c0_6 = arith.constant 0 : index
    %c0_7 = arith.constant 0 : index
    %8 = vector.load %arg11[%c0_6, %c0_7] : memref<8x1280xf32, #tpu.memory_space<vmem>>, vector<8x1280xf32>
    tpu.vector_store %arg11[%c0_6, %c0_7], %7 {strides = array<i32>} : memref<8x1280xf32, #tpu.memory_space<vmem>>, vector<8x1280xf32>,
    %c2_i32 = arith.constant 2 : i32
    %9 = arith.cmpi eq, %arg0, %c2_i32 : i32
    %10 = arith.extui %9 : i1 to i32
    %c0_i32_8 = arith.constant 0 : i32
    %11 = arith.cmpi ne, %10, %c0_i32_8 : i32
    scf.if %11 {
      %c0_9 = arith.constant 0 : index
      %c0_10 = arith.constant 0 : index
      %12 = vector.load %arg11[%c0_9, %c0_10] : memref<8x1280xf32, #tpu.memory_space<vmem>>, vector<8x1280xf32>
      %c0_11 = arith.constant 0 : index
      %c0_12 = arith.constant 0 : index
      %13 = vector.load %arg3[%c0_11, %c0_12] : memref<1x1280xf32, #tpu.memory_space<vmem>>, vector<1x1280xf32>
      %14 = vector.broadcast %13 : vector<1x1280xf32> to vector<8x1280xf32>
      %15 = arith.mulf %12, %14 : vector<8x1280xf32>
      %c0_13 = arith.constant 0 : index
      %c0_14 = arith.constant 0 : index
      %16 = vector.load %arg4[%c0_13, %c0_14] : memref<1x1280xf32, #tpu.memory_space<vmem>>, vector<1x1280xf32>
      %17 = vector.broadcast %16 : vector<1x1280xf32> to vector<8x1280xf32>
      %18 = arith.addf %15, %17 : vector<8x1280xf32>
      %cst_15 = arith.constant 0.000000e+00 : f32
      %19 = vector.broadcast %cst_15 : f32 to vector<8x1280xf32>
      %20 = arith.maximumf %18, %19 : vector<8x1280xf32>
      %21 = arith.truncf %20 : vector<8x1280xf32> to vector<8x1280xbf16>
      %c0_16 = arith.constant 0 : index
      %c0_17 = arith.constant 0 : index
      %22 = vector.load %arg5[%c0_16, %c0_17] : memref<1280x128xbf16, #tpu.memory_space<vmem>>, vector<1280x128xbf16>
      %cst_18 = arith.constant dense<0.000000e+00> : vector<8x128xf32>
      %23 = tpu.matmul %21, %22, %cst_18 {dimension_numbers = #tpu.dot_dimension_numbers<[1], [0], [0], [1], [0, 0, 1, 1], [], []>} : vector<8x1280xbf16>, vector<1280x128xbf16>, vector<8x128xf32> -> vector<8x128xf32>
      %c0_19 = arith.constant 0 : index
      %c0_20 = arith.constant 0 : index
      %24 = vector.load %arg6[%c0_19, %c0_20] : memref<1x128xf32, #tpu.memory_space<vmem>>, vector<1x128xf32>
      %25 = vector.broadcast %24 : vector<1x128xf32> to vector<8x128xf32>
      %26 = arith.mulf %23, %25 : vector<8x128xf32>
      %c0_21 = arith.constant 0 : index
      %c0_22 = arith.constant 0 : index
      %27 = vector.load %arg7[%c0_21, %c0_22] : memref<1x128xf32, #tpu.memory_space<vmem>>, vector<1x128xf32>
      %28 = vector.broadcast %27 : vector<1x128xf32> to vector<8x128xf32>
      %29 = arith.addf %26, %28 : vector<8x128xf32>
      %cst_23 = arith.constant 0.000000e+00 : f32
      %30 = vector.broadcast %cst_23 : f32 to vector<8x128xf32>
      %31 = arith.maximumf %29, %30 : vector<8x128xf32>
      %32 = arith.truncf %31 : vector<8x128xf32> to vector<8x128xbf16>
      %c0_24 = arith.constant 0 : index
      %c0_25 = arith.constant 0 : index
      %33 = vector.load %arg8[%c0_24, %c0_25] : memref<128x128xbf16, #tpu.memory_space<vmem>>, vector<128x128xbf16>
      %cst_26 = arith.constant dense<0.000000e+00> : vector<8x128xf32>
      %34 = tpu.matmul %32, %33, %cst_26 {dimension_numbers = #tpu.dot_dimension_numbers<[1], [0], [0], [1], [0, 0, 1, 1], [], []>} : vector<8x128xbf16>, vector<128x128xbf16>, vector<8x128xf32> -> vector<8x128xf32>
      %c0_27 = arith.constant 0 : index
      %c0_28 = arith.constant 0 : index
      %35 = vector.load %arg9[%c0_27, %c0_28] : memref<1x128xf32, #tpu.memory_space<vmem>>, vector<1x128xf32>
      %36 = vector.broadcast %35 : vector<1x128xf32> to vector<8x128xf32>
      %37 = arith.addf %34, %36 : vector<8x128xf32>
      %c0_29 = arith.constant 0 : index
      %c0_30 = arith.constant 0 : index
      %38 = vector.load %arg10[%c0_29, %c0_30] : memref<8x128xf32, #tpu.memory_space<vmem>>, vector<8x128xf32>
      tpu.vector_store %arg10[%c0_29, %c0_30], %37 {strides = array<i32>} : memref<8x128xf32, #tpu.memory_space<vmem>>, vector<8x128xf32>,
    } else {
    }
    return
  }
  func.func @transform_0(%arg0: i32) -> (i32, i32) {
    %c0_i32 = arith.constant 0 : i32
    %c0_i32_0 = arith.constant 0 : i32
    return %c0_i32, %arg0 : i32, i32
  }
  func.func @transform_1(%arg0: i32) -> (i32, i32) {
    %c0_i32 = arith.constant 0 : i32
    %c0_i32_0 = arith.constant 0 : i32
    return %arg0, %c0_i32 : i32, i32
  }
  func.func @transform_2(%arg0: i32) -> (i32, i32) {
    %c0_i32 = arith.constant 0 : i32
    %c0_i32_0 = arith.constant 0 : i32
    %c0_i32_1 = arith.constant 0 : i32
    return %c0_i32, %c0_i32_0 : i32, i32
  }
  func.func @transform_3(%arg0: i32) -> (i32, i32) {
    %c0_i32 = arith.constant 0 : i32
    %c0_i32_0 = arith.constant 0 : i32
    %c0_i32_1 = arith.constant 0 : i32
    return %c0_i32, %c0_i32_0 : i32, i32
  }
  func.func @transform_4(%arg0: i32) -> (i32, i32) {
    %c0_i32 = arith.constant 0 : i32
    %c0_i32_0 = arith.constant 0 : i32
    %c0_i32_1 = arith.constant 0 : i32
    return %c0_i32, %c0_i32_0 : i32, i32
  }
  func.func @transform_5(%arg0: i32) -> (i32, i32) {
    %c0_i32 = arith.constant 0 : i32
    %c0_i32_0 = arith.constant 0 : i32
    %c0_i32_1 = arith.constant 0 : i32
    return %c0_i32, %c0_i32_0 : i32, i32
  }
  func.func @transform_6(%arg0: i32) -> (i32, i32) {
    %c0_i32 = arith.constant 0 : i32
    %c0_i32_0 = arith.constant 0 : i32
    %c0_i32_1 = arith.constant 0 : i32
    return %c0_i32, %c0_i32_0 : i32, i32
  }
  func.func @transform_7(%arg0: i32) -> (i32, i32) {
    %c0_i32 = arith.constant 0 : i32
    %c0_i32_0 = arith.constant 0 : i32
    %c0_i32_1 = arith.constant 0 : i32
    return %c0_i32, %c0_i32_0 : i32, i32
  }
  func.func @transform_8(%arg0: i32) -> (i32, i32) {
    %c0_i32 = arith.constant 0 : i32
    %c0_i32_0 = arith.constant 0 : i32
    %c0_i32_1 = arith.constant 0 : i32
    return %c0_i32, %c0_i32_0 : i32, i32
  }
  func.func @transform_9(%arg0: i32) -> (i32, i32) {
    %c0_i32 = arith.constant 0 : i32
    %c0_i32_0 = arith.constant 0 : i32
    %c0_i32_1 = arith.constant 0 : i32
    return %c0_i32, %c0_i32_0 : i32, i32
  }
}

</mosaic_0001>

<llo_original>
// kernel: model_forward.4
$region0: #{model_forward.4}
  #allocation0 [shape = 'u32[]', space=smem, size = 0x4, offset = 0x4, fixed_abs, tag = 'smem constant byte address 0x4 - core index']
  #allocation1 [shape = 'u32[144,128]{1,0:T(1,128)}', space=vmem, size = 0x12000, scoped, tag = 'internal scratch']
  %s0 = inlined_call_operand.vmem [shape: f32[2,960,4], index: 0, kind: input, shape index: {}]
  %s1 = inlined_call_operand.vmem [shape: f32[2,4,64], index: 1, kind: input, shape index: {}]
  %s2 = inlined_call_operand.vmem [shape: f32[2,1,64], index: 2, kind: input, shape index: {}]
  %s3 = inlined_call_operand.vmem [shape: f32[2,1,64], index: 3, kind: input, shape index: {}]
  %s4 = inlined_call_operand.vmem [shape: bf16[2,960,64], index: 4, kind: output, shape index: {}]
  %s5 = sld [smem:[#allocation0]]
  $region49: #{model_forward.4} parent=0
    _
  %s7 = ssub.s32 1, %s5
  %s8 = scalar_select 0, %s7, %s5
  loop: start=0, step=1, limit=4
  $region2: #{model_forward.4} parent=0 // loop_pre_header
    _
  $region3: #{model_forward.4} parent=0 // loop_header
    %s10 = sphi 0, %s14
    %p11 = scmp.ge.s32.totalorder %s10, 4
    %s20 = sphi 0, %s22
    %s23 = sphi 0, %s20
    %s24 = sphi 0, %s23
    %s40 = sphi 0, %s24
    %s46 = sphi 0, %s48
    %s49 = sphi 0, %s46
    %s50 = sphi 0, %s49
    %s66 = sphi 0, %s50
    %s72 = sphi 0, %s74
    %s75 = sphi 0, %s72
    %s76 = sphi 0, %s75
    %s92 = sphi 0, %s76
    %s98 = sphi 0, %s100
    %s101 = sphi 0, %s98
    %s102 = sphi 0, %s101
    %s118 = sphi 0, %s102
    %s124 = sphi 0, %s126
    %s127 = sphi 0, %s124
    %s128 = sphi 0, %s127
    %s144 = sphi 0, %s128
  $region4: #{model_forward.4} parent=0 // loop_header_branch
    %13 = sbr.rel (%p11) target = $region8
  $region5: #{model_forward.4} parent=0 // loop_body
    %s15 = ssub.s32 %s10, 1
    %s16 = ssub.s32 %s10, 2
    %s17 = sadd.s32 %s10, 1
    %s18 = ssub.s32 %s10, %s17
    %p19 = scmp.eq.s32.totalorder %s18, 0
    %s21 = sadd.s32 %s20, 1
    %s22 = scalar_select %p19, %s20, %s21
    %p25 = pneg %p19
    %p26 = scmp.eq.s32.totalorder %s10, 1
    %p27 = por %p25, %p26
    %p28 = scmp.ne.s32.totalorder %s20, %s23
    %p29 = scmp.eq.s32.totalorder %s10, 0
    %p30 = por %p28, %p29
    %p31 = scmp.ne.s32.totalorder %s20, %s23
    %p32 = scmp.eq.s32.totalorder %s15, 1
    %p33 = por %p31, %p32
    %p34 = scmp.ne.s32.totalorder %s23, %s24
    %p35 = scmp.eq.s32.totalorder %s15, 0
    %p36 = por %p34, %p35
    %p37 = scmp.ne.s32.totalorder %s23, %s24
    %p38 = scmp.eq.s32.totalorder %s16, 1
    %p39 = por %p37, %p38
    %p41 = scmp.ne.s32.totalorder %s24, %s40
    %p42 = scmp.eq.s32.totalorder %s16, 0
    %p43 = por %p41, %p42
    %s44 = ssub.s32 %s10, %s17
    %p45 = scmp.eq.s32.totalorder %s44, 0
    %s47 = sadd.s32 %s46, 1
    %s48 = scalar_select %p45, %s46, %s47
    %p51 = pneg %p45
    %p52 = scmp.eq.s32.totalorder %s10, 1
    %p53 = por %p51, %p52
    %p54 = scmp.ne.s32.totalorder %s46, %s49
    %p55 = scmp.eq.s32.totalorder %s10, 0
    %p56 = por %p54, %p55
    %p57 = scmp.ne.s32.totalorder %s46, %s49
    %p58 = scmp.eq.s32.totalorder %s15, 1
    %p59 = por %p57, %p58
    %p60 = scmp.ne.s32.totalorder %s49, %s50
    %p61 = scmp.eq.s32.totalorder %s15, 0
    %p62 = por %p60, %p61
    %p63 = scmp.ne.s32.totalorder %s49, %s50
    %p64 = scmp.eq.s32.totalorder %s16, 1
    %p65 = por %p63, %p64
    %p67 = scmp.ne.s32.totalorder %s50, %s66
    %p68 = scmp.eq.s32.totalorder %s16, 0
    %p69 = por %p67, %p68
    %s70 = ssub.s32 %s10, %s17
    %p71 = scmp.eq.s32.totalorder %s70, 0
    %s73 = sadd.s32 %s72, 1
    %s74 = scalar_select %p71, %s72, %s73
    %p77 = pneg %p71
    %p78 = scmp.eq.s32.totalorder %s10, 1
    %p79 = por %p77, %p78
    %p80 = scmp.ne.s32.totalorder %s72, %s75
    %p81 = scmp.eq.s32.totalorder %s10, 0
    %p82 = por %p80, %p81
    %p83 = scmp.ne.s32.totalorder %s72, %s75
    %p84 = scmp.eq.s32.totalorder %s15, 1
    %p85 = por %p83, %p84
    %p86 = scmp.ne.s32.totalorder %s75, %s76
    %p87 = scmp.eq.s32.totalorder %s15, 0
    %p88 = por %p86, %p87
    %p89 = scmp.ne.s32.totalorder %s75, %s76
    %p90 = scmp.eq.s32.totalorder %s16, 1
    %p91 = por %p89, %p90
    %p93 = scmp.ne.s32.totalorder %s76, %s92
    %p94 = scmp.eq.s32.totalorder %s16, 0
    %p95 = por %p93, %p94
    %s96 = ssub.s32 %s10, %s17
    %p97 = scmp.eq.s32.totalorder %s96, 0
    %s99 = sadd.s32 %s98, 1
    %s100 = scalar_select %p97, %s98, %s99
    %p103 = pneg %p97
    %p104 = scmp.eq.s32.totalorder %s10, 1
    %p105 = por %p103, %p104
    %p106 = scmp.ne.s32.totalorder %s98, %s101
    %p107 = scmp.eq.s32.totalorder %s10, 0
    %p108 = por %p106, %p107
    %p109 = scmp.ne.s32.totalorder %s98, %s101
    %p110 = scmp.eq.s32.totalorder %s15, 1
    %p111 = por %p109, %p110
    %p112 = scmp.ne.s32.totalorder %s101, %s102
    %p113 = scmp.eq.s32.totalorder %s15, 0
    %p114 = por %p112, %p113
    %p115 = scmp.ne.s32.totalorder %s101, %s102
    %p116 = scmp.eq.s32.totalorder %s16, 1
    %p117 = por %p115, %p116
    %p119 = scmp.ne.s32.totalorder %s102, %s118
    %p120 = scmp.eq.s32.totalorder %s16, 0
    %p121 = por %p119, %p120
    %s122 = ssub.s32 %s10, %s17
    %p123 = scmp.eq.s32.totalorder %s122, 0
    %s125 = sadd.s32 %s124, 1
    %s126 = scalar_select %p123, %s124, %s125
    %p129 = pneg %p123
    %p130 = scmp.eq.s32.totalorder %s10, 1
    %p131 = por %p129, %p130
    %p132 = scmp.ne.s32.totalorder %s124, %s127
    %p133 = scmp.eq.s32.totalorder %s10, 0
    %p134 = por %p132, %p133
    %p135 = scmp.ne.s32.totalorder %s124, %s127
    %p136 = scmp.eq.s32.totalorder %s15, 1
    %p137 = por %p135, %p136
    %p138 = scmp.ne.s32.totalorder %s127, %s128
    %p139 = scmp.eq.s32.totalorder %s15, 0
    %p140 = por %p138, %p139
    %p141 = scmp.ne.s32.totalorder %s127, %s128
    %p142 = scmp.eq.s32.totalorder %s16, 1
    %p143 = por %p141, %p142
    %p145 = scmp.ne.s32.totalorder %s128, %s144
    %p146 = scmp.eq.s32.totalorder %s16, 0
    %p147 = por %p145, %p146
    %p148 = scmp.le.s32.totalorder 1, %s10
    %p149 = scmp.lt.s32.totalorder %s10, 3
    %p150 = pnand %p148, %p149
    %p151 = pneg %p150
    // Predicated region
    $region9: #{model_forward.4} parent=5 // pred_check
      _
    $region10: #{model_forward.4} parent=5 // pred_check_branch
      %153 = sbr.rel (%p150) target = $region12
    $region11: #{model_forward.4} parent=5 // pred_region
      %s154 = ssub.s32 %s10, 1
    $region12: #{model_forward.4} parent=5 // pred_fallthru
      _
    %p155 = scmp.lt.s32.totalorder %s10, 2
    // Predicated region
    $region13: #{model_forward.4} parent=5 // pred_check
      %p156 = pneg %p155
    $region14: #{model_forward.4} parent=5 // pred_check_branch
      %158 = sbr.rel (%p156) target = $region16
    $region15: #{model_forward.4} parent=5 // pred_region
      // Predicated region
      $region17: #{model_forward.4} parent=15 // pred_check
        %p159 = pneg %p30
      $region18: #{model_forward.4} parent=15 // pred_check_branch
        %161 = sbr.rel (%p159) target = $region20
      $region19: #{model_forward.4} parent=15 // pred_region
        %p162 = scmp.lt.s32.totalorder %s10, 1
        %s163 = scalar_select %p162, %s10, 1
        %s164 = smul.addr %s163, 120
        %s165 = smul.addr %s164, 8
        %s166 = scalar_lea.vmem %s0, %s165
      $region20: #{model_forward.4} parent=15 // pred_fallthru
        _
      // Predicated region
      $region21: #{model_forward.4} parent=15 // pred_check
        %p167 = pneg %p56
      $region22: #{model_forward.4} parent=15 // pred_check_branch
        %169 = sbr.rel (%p167) target = $region24
      $region23: #{model_forward.4} parent=15 // pred_region
        %p170 = scmp.lt.s32.totalorder %s10, 1
        %s171 = scalar_select %p170, %s10, 1
        %s172 = smul.addr %s171, 4
        %s173 = scalar_lea.vmem %s1, %s172
      $region24: #{model_forward.4} parent=15 // pred_fallthru
        _
      // Predicated region
      $region25: #{model_forward.4} parent=15 // pred_check
        %p174 = pneg %p82
      $region26: #{model_forward.4} parent=15 // pred_check_branch
        %176 = sbr.rel (%p174) target = $region28
      $region27: #{model_forward.4} parent=15 // pred_region
        %p177 = scmp.lt.s32.totalorder %s10, 1
        %s178 = scalar_select %p177, %s10, 1
        %s179 = scalar_lea.vmem %s2, %s178
      $region28: #{model_forward.4} parent=15 // pred_fallthru
        _
      // Predicated region
      $region29: #{model_forward.4} parent=15 // pred_check
        %p180 = pneg %p108
      $region30: #{model_forward.4} parent=15 // pred_check_branch
        %182 = sbr.rel (%p180) target = $region32
      $region31: #{model_forward.4} parent=15 // pred_region
        %p183 = scmp.lt.s32.totalorder %s10, 1
        %s184 = scalar_select %p183, %s10, 1
        %s185 = scalar_lea.vmem %s3, %s184
      $region32: #{model_forward.4} parent=15 // pred_fallthru
        _
    $region16: #{model_forward.4} parent=5 // pred_fallthru
      _
    %p186 = scmp.le.s32.totalorder 1, %s10
    %p187 = scmp.lt.s32.totalorder %s10, 3
    %p188 = pnand %p186, %p187
    %p189 = pneg %p188
    // Predicated region
    $region33: #{model_forward.4} parent=5 // pred_check
      _
    $region34: #{model_forward.4} parent=5 // pred_check_branch
      %191 = sbr.rel (%p188) target = $region36
    $region35: #{model_forward.4} parent=5 // pred_region
      %s192 = ssub.s32 %s10, 1
      %p193 = scmp.lt.s32.totalorder %s15, 1
      %s194 = scalar_select %p193, %s15, 1
      %s195 = smul.addr %s194, 120
      %s196 = smul.addr %s195, 8
      %s197 = scalar_lea.vmem %s0, %s196
      %p198 = pneg %p36
      %p199 = pneg %p33
      %p200 = scmp.lt.s32.totalorder %s15, 1
      %s201 = scalar_select %p200, %s15, 1
      %s202 = smul.addr %s201, 4
      %s203 = scalar_lea.vmem %s1, %s202
      %p204 = pneg %p62
      %p205 = pneg %p59
      %p206 = scmp.lt.s32.totalorder %s15, 1
      %s207 = scalar_select %p206, %s15, 1
      %s208 = scalar_lea.vmem %s2, %s207
      %p209 = pneg %p88
      %p210 = pneg %p85
      %p211 = scmp.lt.s32.totalorder %s15, 1
      %s212 = scalar_select %p211, %s15, 1
      %s213 = scalar_lea.vmem %s3, %s212
      %p214 = pneg %p114
      %p215 = pneg %p111
      %p216 = pneg %p140
      %p217 = pneg %p137
      %p218 = scmp.lt.s32.totalorder %s15, 1
      %s219 = scalar_select %p218, %s15, 1
      %s220 = smul.addr %s219, 120
      %s221 = smul.addr %s220, 4
      %s222 = scalar_lea.vmem %s4, %s221
      %p223 = scmp.lt.s32.totalorder %s15, 1
      %s224 = scalar_select %p223, %s15, 1
      %s225 = smul.addr %s224, 120
      %s226 = smul.addr %s225, 8
      %s227 = scalar_lea.vmem %s0, %s226
      %p228 = scmp.lt.s32.totalorder %s15, 1
      %s229 = scalar_select %p228, %s15, 1
      %s230 = smul.addr %s229, 4
      %s231 = scalar_lea.vmem %s1, %s230
      %p232 = scmp.lt.s32.totalorder %s15, 1
      %s233 = scalar_select %p232, %s15, 1
      %s234 = scalar_lea.vmem %s2, %s233
      %p235 = scmp.lt.s32.totalorder %s15, 1
      %s236 = scalar_select %p235, %s15, 1
      %s237 = scalar_lea.vmem %s3, %s236
      %p238 = scmp.lt.s32.totalorder %s15, 1
      %s239 = scalar_select %p238, %s15, 1
      %s240 = smul.addr %s239, 120
      %s241 = smul.addr %s240, 4
      %s242 = scalar_lea.vmem %s4, %s241
      %v243 = vld [vmem:[%s227] sm:$0xff]
      %v244 = vld [vmem:[%s227 + $0x8] sm:$0xff]
      %v245 = vld [vmem:[%s227 + $0x10] sm:$0xff]
      %v246 = vld [vmem:[%s227 + $0x18] sm:$0xff]
      %v247 = vld [vmem:[%s227 + $0x20] sm:$0xff]
      %v248 = vld [vmem:[%s227 + $0x28] sm:$0xff]
      %v249 = vld [vmem:[%s227 + $0x30] sm:$0xff]
      %v250 = vld [vmem:[%s227 + $0x38] sm:$0xff]
      %v251 = vld [vmem:[%s227 + $0x40] sm:$0xff]
      %v252 = vld [vmem:[%s227 + $0x48] sm:$0xff]
      %v253 = vld [vmem:[%s227 + $0x50] sm:$0xff]
      %v254 = vld [vmem:[%s227 + $0x58] sm:$0xff]
      %v255 = vld [vmem:[%s227 + $0x60] sm:$0xff]
      %v256 = vld [vmem:[%s227 + $0x68] sm:$0xff]
      %v257 = vld [vmem:[%s227 + $0x70] sm:$0xff]
      %v258 = vld [vmem:[%s227 + $0x78] sm:$0xff]
      %v259 = vld [vmem:[%s227 + $0x80] sm:$0xff]
      %v260 = vld [vmem:[%s227 + $0x88] sm:$0xff]
      %v261 = vld [vmem:[%s227 + $0x90] sm:$0xff]
      %v262 = vld [vmem:[%s227 + $0x98] sm:$0xff]
      %v263 = vld [vmem:[%s227 + $0xa0] sm:$0xff]
      %v264 = vld [vmem:[%s227 + $0xa8] sm:$0xff]
      %v265 = vld [vmem:[%s227 + $0xb0] sm:$0xff]
      %v266 = vld [vmem:[%s227 + $0xb8] sm:$0xff]
      %v267 = vld [vmem:[%s227 + $0xc0] sm:$0xff]
      %v268 = vld [vmem:[%s227 + $0xc8] sm:$0xff]
      %v269 = vld [vmem:[%s227 + $0xd0] sm:$0xff]
      %v270 = vld [vmem:[%s227 + $0xd8] sm:$0xff]
      %v271 = vld [vmem:[%s227 + $0xe0] sm:$0xff]
      %v272 = vld [vmem:[%s227 + $0xe8] sm:$0xff]
      %v273 = vld [vmem:[%s227 + $0xf0] sm:$0xff]
      %v274 = vld [vmem:[%s227 + $0xf8] sm:$0xff]
      %v275 = vld [vmem:[%s227 + $0x100] sm:$0xff]
      %v276 = vld [vmem:[%s227 + $0x108] sm:$0xff]
      %v277 = vld [vmem:[%s227 + $0x110] sm:$0xff]
      %v278 = vld [vmem:[%s227 + $0x118] sm:$0xff]
      %v279 = vld [vmem:[%s227 + $0x120] sm:$0xff]
      %v280 = vld [vmem:[%s227 + $0x128] sm:$0xff]
      %v281 = vld [vmem:[%s227 + $0x130] sm:$0xff]
      %v282 = vld [vmem:[%s227 + $0x138] sm:$0xff]
      %v283 = vld [vmem:[%s227 + $0x140] sm:$0xff]
      %v284 = vld [vmem:[%s227 + $0x148] sm:$0xff]
      %v285 = vld [vmem:[%s227 + $0x150] sm:$0xff]
      %v286 = vld [vmem:[%s227 + $0x158] sm:$0xff]
      %v287 = vld [vmem:[%s227 + $0x160] sm:$0xff]
      %v288 = vld [vmem:[%s227 + $0x168] sm:$0xff]
      %v289 = vld [vmem:[%s227 + $0x170] sm:$0xff]
      %v290 = vld [vmem:[%s227 + $0x178] sm:$0xff]
      %v291 = vld [vmem:[%s227 + $0x180] sm:$0xff]
      %v292 = vld [vmem:[%s227 + $0x188] sm:$0xff]
      %v293 = vld [vmem:[%s227 + $0x190] sm:$0xff]
      %v294 = vld [vmem:[%s227 + $0x198] sm:$0xff]
      %v295 = vld [vmem:[%s227 + $0x1a0] sm:$0xff]
      %v296 = vld [vmem:[%s227 + $0x1a8] sm:$0xff]
      %v297 = vld [vmem:[%s227 + $0x1b0] sm:$0xff]
      %v298 = vld [vmem:[%s227 + $0x1b8] sm:$0xff]
      %v299 = vld [vmem:[%s227 + $0x1c0] sm:$0xff]
      %v300 = vld [vmem:[%s227 + $0x1c8] sm:$0xff]
      %v301 = vld [vmem:[%s227 + $0x1d0] sm:$0xff]
      %v302 = vld [vmem:[%s227 + $0x1d8] sm:$0xff]
      %v303 = vld [vmem:[%s227 + $0x1e0] sm:$0xff]
      %v304 = vld [vmem:[%s227 + $0x1e8] sm:$0xff]
      %v305 = vld [vmem:[%s227 + $0x1f0] sm:$0xff]
      %v306 = vld [vmem:[%s227 + $0x1f8] sm:$0xff]
      %v307 = vld [vmem:[%s227 + $0x200] sm:$0xff]
      %v308 = vld [vmem:[%s227 + $0x208] sm:$0xff]
      %v309 = vld [vmem:[%s227 + $0x210] sm:$0xff]
      %v310 = vld [vmem:[%s227 + $0x218] sm:$0xff]
      %v311 = vld [vmem:[%s227 + $0x220] sm:$0xff]
      %v312 = vld [vmem:[%s227 + $0x228] sm:$0xff]
      %v313 = vld [vmem:[%s227 + $0x230] sm:$0xff]
      %v314 = vld [vmem:[%s227 + $0x238] sm:$0xff]
      %v315 = vld [vmem:[%s227 + $0x240] sm:$0xff]
      %v316 = vld [vmem:[%s227 + $0x248] sm:$0xff]
      %v317 = vld [vmem:[%s227 + $0x250] sm:$0xff]
      %v318 = vld [vmem:[%s227 + $0x258] sm:$0xff]
      %v319 = vld [vmem:[%s227 + $0x260] sm:$0xff]
      %v320 = vld [vmem:[%s227 + $0x268] sm:$0xff]
      %v321 = vld [vmem:[%s227 + $0x270] sm:$0xff]
      %v322 = vld [vmem:[%s227 + $0x278] sm:$0xff]
      %v323 = vld [vmem:[%s227 + $0x280] sm:$0xff]
      %v324 = vld [vmem:[%s227 + $0x288] sm:$0xff]
      %v325 = vld [vmem:[%s227 + $0x290] sm:$0xff]
      %v326 = vld [vmem:[%s227 + $0x298] sm:$0xff]
      %v327 = vld [vmem:[%s227 + $0x2a0] sm:$0xff]
      %v328 = vld [vmem:[%s227 + $0x2a8] sm:$0xff]
      %v329 = vld [vmem:[%s227 + $0x2b0] sm:$0xff]
      %v330 = vld [vmem:[%s227 + $0x2b8] sm:$0xff]
      %v331 = vld [vmem:[%s227 + $0x2c0] sm:$0xff]
      %v332 = vld [vmem:[%s227 + $0x2c8] sm:$0xff]
      %v333 = vld [vmem:[%s227 + $0x2d0] sm:$0xff]
      %v334 = vld [vmem:[%s227 + $0x2d8] sm:$0xff]
      %v335 = vld [vmem:[%s227 + $0x2e0] sm:$0xff]
      %v336 = vld [vmem:[%s227 + $0x2e8] sm:$0xff]
      %v337 = vld [vmem:[%s227 + $0x2f0] sm:$0xff]
      %v338 = vld [vmem:[%s227 + $0x2f8] sm:$0xff]
      %v339 = vld [vmem:[%s227 + $0x300] sm:$0xff]
      %v340 = vld [vmem:[%s227 + $0x308] sm:$0xff]
      %v341 = vld [vmem:[%s227 + $0x310] sm:$0xff]
      %v342 = vld [vmem:[%s227 + $0x318] sm:$0xff]
      %v343 = vld [vmem:[%s227 + $0x320] sm:$0xff]
      %v344 = vld [vmem:[%s227 + $0x328] sm:$0xff]
      %v345 = vld [vmem:[%s227 + $0x330] sm:$0xff]
      %v346 = vld [vmem:[%s227 + $0x338] sm:$0xff]
      %v347 = vld [vmem:[%s227 + $0x340] sm:$0xff]
      %v348 = vld [vmem:[%s227 + $0x348] sm:$0xff]
      %v349 = vld [vmem:[%s227 + $0x350] sm:$0xff]
      %v350 = vld [vmem:[%s227 + $0x358] sm:$0xff]
      %v351 = vld [vmem:[%s227 + $0x360] sm:$0xff]
      %v352 = vld [vmem:[%s227 + $0x368] sm:$0xff]
      %v353 = vld [vmem:[%s227 + $0x370] sm:$0xff]
      %v354 = vld [vmem:[%s227 + $0x378] sm:$0xff]
      %v355 = vld [vmem:[%s227 + $0x380] sm:$0xff]
      %v356 = vld [vmem:[%s227 + $0x388] sm:$0xff]
      %v357 = vld [vmem:[%s227 + $0x390] sm:$0xff]
      %v358 = vld [vmem:[%s227 + $0x398] sm:$0xff]
      %v359 = vld [vmem:[%s227 + $0x3a0] sm:$0xff]
      %v360 = vld [vmem:[%s227 + $0x3a8] sm:$0xff]
      %v361 = vld [vmem:[%s227 + $0x3b0] sm:$0xff]
      %v362 = vld [vmem:[%s227 + $0x3b8] sm:$0xff]
      %v363 = vld [vmem:[%s231] sm:$0xf]
      %vm364 = vcmask 31744
      %v366 = vsel %vm364, %v243, 0
      %v369 = vsel %vm364, %v244, 0
      %v372 = vsel %vm364, %v245, 0
      %v375 = vsel %vm364, %v246, 0
      %v378 = vsel %vm364, %v247, 0
      %v381 = vsel %vm364, %v248, 0
      %v384 = vsel %vm364, %v249, 0
      %v387 = vsel %vm364, %v250, 0
      %v390 = vsel %vm364, %v251, 0
      %v393 = vsel %vm364, %v252, 0
      %v396 = vsel %vm364, %v253, 0
      %v399 = vsel %vm364, %v254, 0
      %v402 = vsel %vm364, %v255, 0
      %v405 = vsel %vm364, %v256, 0
      %v408 = vsel %vm364, %v257, 0
      %v411 = vsel %vm364, %v258, 0
      %v414 = vsel %vm364, %v259, 0
      %v417 = vsel %vm364, %v260, 0
      %v420 = vsel %vm364, %v261, 0
      %v423 = vsel %vm364, %v262, 0
      %v426 = vsel %vm364, %v263, 0
      %v429 = vsel %vm364, %v264, 0
      %v432 = vsel %vm364, %v265, 0
      %v435 = vsel %vm364, %v266, 0
      %v438 = vsel %vm364, %v267, 0
      %v441 = vsel %vm364, %v268, 0
      %v444 = vsel %vm364, %v269, 0
      %v447 = vsel %vm364, %v270, 0
      %v450 = vsel %vm364, %v271, 0
      %v453 = vsel %vm364, %v272, 0
      %v456 = vsel %vm364, %v273, 0
      %v459 = vsel %vm364, %v274, 0
      %v462 = vsel %vm364, %v275, 0
      %v465 = vsel %vm364, %v276, 0
      %v468 = vsel %vm364, %v277, 0
      %v471 = vsel %vm364, %v278, 0
      %v474 = vsel %vm364, %v279, 0
      %v477 = vsel %vm364, %v280, 0
      %v480 = vsel %vm364, %v281, 0
      %v483 = vsel %vm364, %v282, 0
      %v486 = vsel %vm364, %v283, 0
      %v489 = vsel %vm364, %v284, 0
      %v492 = vsel %vm364, %v285, 0
      %v495 = vsel %vm364, %v286, 0
      %v498 = vsel %vm364, %v287, 0
      %v501 = vsel %vm364, %v288, 0
      %v504 = vsel %vm364, %v289, 0
      %v507 = vsel %vm364, %v290, 0
      %v510 = vsel %vm364, %v291, 0
      %v513 = vsel %vm364, %v292, 0
      %v516 = vsel %vm364, %v293, 0
      %v519 = vsel %vm364, %v294, 0
      %v522 = vsel %vm364, %v295, 0
      %v525 = vsel %vm364, %v296, 0
      %v528 = vsel %vm364, %v297, 0
      %v531 = vsel %vm364, %v298, 0
      %v534 = vsel %vm364, %v299, 0
      %v537 = vsel %vm364, %v300, 0
      %v540 = vsel %vm364, %v301, 0
      %v543 = vsel %vm364, %v302, 0
      %v546 = vsel %vm364, %v303, 0
      %v549 = vsel %vm364, %v304, 0
      %v552 = vsel %vm364, %v305, 0
      %v555 = vsel %vm364, %v306, 0
      %v558 = vsel %vm364, %v307, 0
      %v561 = vsel %vm364, %v308, 0
      %v564 = vsel %vm364, %v309, 0
      %v567 = vsel %vm364, %v310, 0
      %v570 = vsel %vm364, %v311, 0
      %v573 = vsel %vm364, %v312, 0
      %v576 = vsel %vm364, %v313, 0
      %v579 = vsel %vm364, %v314, 0
      %v582 = vsel %vm364, %v315, 0
      %v585 = vsel %vm364, %v316, 0
      %v588 = vsel %vm364, %v317, 0
      %v591 = vsel %vm364, %v318, 0
      %v594 = vsel %vm364, %v319, 0
      %v597 = vsel %vm364, %v320, 0
      %v600 = vsel %vm364, %v321, 0
      %v603 = vsel %vm364, %v322, 0
      %v606 = vsel %vm364, %v323, 0
      %v609 = vsel %vm364, %v324, 0
      %v612 = vsel %vm364, %v325, 0
      %v615 = vsel %vm364, %v326, 0
      %v618 = vsel %vm364, %v327, 0
      %v621 = vsel %vm364, %v328, 0
      %v624 = vsel %vm364, %v329, 0
      %v627 = vsel %vm364, %v330, 0
      %v630 = vsel %vm364, %v331, 0
      %v633 = vsel %vm364, %v332, 0
      %v636 = vsel %vm364, %v333, 0
      %v639 = vsel %vm364, %v334, 0
      %v642 = vsel %vm364, %v335, 0
      %v645 = vsel %vm364, %v336, 0
      %v648 = vsel %vm364, %v337, 0
      %v651 = vsel %vm364, %v338, 0
      %v654 = vsel %vm364, %v339, 0
      %v657 = vsel %vm364, %v340, 0
      %v660 = vsel %vm364, %v341, 0
      %v663 = vsel %vm364, %v342, 0
      %v666 = vsel %vm364, %v343, 0
      %v669 = vsel %vm364, %v344, 0
      %v672 = vsel %vm364, %v345, 0
      %v675 = vsel %vm364, %v346, 0
      %v678 = vsel %vm364, %v347, 0
      %v681 = vsel %vm364, %v348, 0
      %v684 = vsel %vm364, %v349, 0
      %v687 = vsel %vm364, %v350, 0
      %v690 = vsel %vm364, %v351, 0
      %v693 = vsel %vm364, %v352, 0
      %v696 = vsel %vm364, %v353, 0
      %v699 = vsel %vm364, %v354, 0
      %v702 = vsel %vm364, %v355, 0
      %v705 = vsel %vm364, %v356, 0
      %v708 = vsel %vm364, %v357, 0
      %v711 = vsel %vm364, %v358, 0
      %v714 = vsel %vm364, %v359, 0
      %v717 = vsel %vm364, %v360, 0
      %v720 = vsel %vm364, %v361, 0
      %v723 = vsel %vm364, %v362, 0
      %vm725 = vcmask 1043456
      %v727 = vsel %vm725, %v363, 0
      %729 = vmatprep.subr.mxu0 0.0
      %730 = vmatpush1.msra.mxu0 %v727
      %731 = vmatprep.subr.mxu0 0.0
      %732 = vmatpush1.msra.mxu0 0.0
      %733 = vmatprep.subr.mxu0 0.0
      %734 = vmatpush1.msra.mxu0 0.0
      %735 = vmatprep.subr.mxu0 0.0
      %736 = vmatpush1.msra.mxu0 0.0
      %737 = vmatprep.subr.mxu0 0.0
      %738 = vmatpush1.msra.mxu0 0.0
      %739 = vmatprep.subr.mxu0 0.0
      %740 = vmatpush1.msra.mxu0 0.0
      %741 = vmatprep.subr.mxu0 0.0
      %742 = vmatpush1.msra.mxu0 0.0
      %743 = vmatprep.subr.mxu0 0.0
      %744 = vmatpush1.msra.mxu0 0.0
      %745 = vmatprep.subr.mxu0 0.0
      %746 = vmatpush1.msra.mxu0 0.0
      %747 = vmatprep.subr.mxu0 0.0
      %748 = vmatpush1.msra.mxu0 0.0
      %749 = vmatprep.subr.mxu0 0.0
      %750 = vmatpush1.msra.mxu0 0.0
      %751 = vmatprep.subr.mxu0 0.0
      %752 = vmatpush1.msra.mxu0 0.0
      %753 = vmatprep.subr.mxu0 0.0
      %754 = vmatpush1.msra.mxu0 0.0
      %755 = vmatprep.subr.mxu0 0.0
      %756 = vmatpush1.msra.mxu0 0.0
      %757 = vmatprep.subr.mxu0 0.0
      %758 = vmatpush1.msra.mxu0 0.0
      %759 = vmatprep.subr.mxu0 0.0
      %760 = vmatpush1.msra.mxu0 0.0
      %761 = vmatprep.subr.mxu0 0.0
      %762 = vmatpush1.msra.mxu0 0.0
      %763 = vmatprep.subr.mxu0 0.0
      %764 = vmatpush1.msra.mxu0 0.0
      %765 = vmatprep.subr.mxu0 0.0
      %766 = vmatpush1.msra.mxu0 0.0
      %767 = vmatprep.subr.mxu0 0.0
      %768 = vmatpush1.msra.mxu0 0.0
      %769 = vmatprep.subr.mxu0 0.0
      %770 = vmatpush1.msra.mxu0 0.0
      %771 = vmatprep.subr.mxu0 0.0
      %772 = vmatpush1.msra.mxu0 0.0
      %773 = vmatprep.subr.mxu0 0.0
      %774 = vmatpush1.msra.mxu0 0.0
      %775 = vmatprep.subr.mxu0 0.0
      %776 = vmatpush1.msra.mxu0 0.0
      %777 = vmatprep.subr.mxu0 0.0
      %778 = vmatpush1.msra.mxu0 0.0
      %779 = vmatprep.subr.mxu0 0.0
      %780 = vmatpush1.msra.mxu0 0.0
      %781 = vmatprep.subr.mxu0 0.0
      %782 = vmatpush1.msra.mxu0 0.0
      %783 = vmatprep.subr.mxu0 0.0
      %784 = vmatpush1.msra.mxu0 0.0
      %785 = vmatprep.subr.mxu0 0.0
      %786 = vmatpush1.msra.mxu0 0.0
      %787 = vmatprep.subr.mxu0 0.0
      %788 = vmatpush1.msra.mxu0 0.0
      %789 = vmatprep.subr.mxu0 0.0
      %790 = vmatpush1.msra.mxu0 0.0
      %791 = vmatprep.subr.mxu0 0.0
      %792 = vmatpush1.msra.mxu0 0.0
      %793 = vmatprep.mubr.f32.mxu0 0.0
      %794 = vmatmul.mubr.f32.gmra.mrb[0].mxu0 %v366
      %v795 = vpop.f32.mrb[0].mxu0
      %v796 = vadd.f32 0.0, %v795
      %v797 = vpop.f32.mrb[0].mxu0
      %798 = vmatprep.mubr.f32.mxu0 0.0
      %799 = vmatmul.mubr.f32.gmra.mrb[0].mxu0 %v369
      %v800 = vpop.f32.mrb[0].mxu0
      %v801 = vadd.f32 0.0, %v800
      %v802 = vpop.f32.mrb[0].mxu0
      %803 = vmatprep.mubr.f32.mxu0 0.0
      %804 = vmatmul.mubr.f32.gmra.mrb[0].mxu0 %v372
      %v805 = vpop.f32.mrb[0].mxu0
      %v806 = vadd.f32 0.0, %v805
      %v807 = vpop.f32.mrb[0].mxu0
      %808 = vmatprep.mubr.f32.mxu0 0.0
      %809 = vmatmul.mubr.f32.gmra.mrb[0].mxu0 %v375
      %v810 = vpop.f32.mrb[0].mxu0
      %v811 = vadd.f32 0.0, %v810
      %v812 = vpop.f32.mrb[0].mxu0
      %813 = vmatprep.mubr.f32.mxu0 0.0
      %814 = vmatmul.mubr.f32.gmra.mrb[0].mxu0 %v378
      %v815 = vpop.f32.mrb[0].mxu0
      %v816 = vadd.f32 0.0, %v815
      %v817 = vpop.f32.mrb[0].mxu0
      %818 = vmatprep.mubr.f32.mxu0 0.0
      %819 = vmatmul.mubr.f32.gmra.mrb[0].mxu0 %v381
      %v820 = vpop.f32.mrb[0].mxu0
      %v821 = vadd.f32 0.0, %v820
      %v822 = vpop.f32.mrb[0].mxu0
      %823 = vmatprep.mubr.f32.mxu0 0.0
      %824 = vmatmul.mubr.f32.gmra.mrb[0].mxu0 %v384
      %v825 = vpop.f32.mrb[0].mxu0
      %v826 = vadd.f32 0.0, %v825
      %v827 = vpop.f32.mrb[0].mxu0
      %828 = vmatprep.mubr.f32.mxu0 0.0
      %829 = vmatmul.mubr.f32.gmra.mrb[0].mxu0 %v387
      %v830 = vpop.f32.mrb[0].mxu0
      %v831 = vadd.f32 0.0, %v830
      %v832 = vpop.f32.mrb[0].mxu0
      %833 = vmatprep.mubr.f32.mxu0 0.0
      %834 = vmatmul.mubr.f32.gmra.mrb[0].mxu0 %v390
      %v835 = vpop.f32.mrb[0].mxu0
      %v836 = vadd.f32 0.0, %v835
      %v837 = vpop.f32.mrb[0].mxu0
      %838 = vmatprep.mubr.f32.mxu0 0.0
      %839 = vmatmul.mubr.f32.gmra.mrb[0].mxu0 %v393
      %v840 = vpop.f32.mrb[0].mxu0
      %v841 = vadd.f32 0.0, %v840
      %v842 = vpop.f32.mrb[0].mxu0
      %843 = vmatprep.mubr.f32.mxu0 0.0
      %844 = vmatmul.mubr.f32.gmra.mrb[0].mxu0 %v396
      %v845 = vpop.f32.mrb[0].mxu0
      %v846 = vadd.f32 0.0, %v845
      %v847 = vpop.f32.mrb[0].mxu0
      %848 = vmatprep.mubr.f32.mxu0 0.0
      %849 = vmatmul.mubr.f32.gmra.mrb[0].mxu0 %v399
      %v850 = vpop.f32.mrb[0].mxu0
      %v851 = vadd.f32 0.0, %v850
      %v852 = vpop.f32.mrb[0].mxu0
      %853 = vmatprep.mubr.f32.mxu0 0.0
      %854 = vmatmul.mubr.f32.gmra.mrb[0].mxu0 %v402
      %v855 = vpop.f32.mrb[0].mxu0
      %v856 = vadd.f32 0.0, %v855
      %v857 = vpop.f32.mrb[0].mxu0
      %858 = vmatprep.mubr.f32.mxu0 0.0
      %859 = vmatmul.mubr.f32.gmra.mrb[0].mxu0 %v405
      %v860 = vpop.f32.mrb[0].mxu0
      %v861 = vadd.f32 0.0, %v860
      %v862 = vpop.f32.mrb[0].mxu0
      %863 = vmatprep.mubr.f32.mxu0 0.0
      %864 = vmatmul.mubr.f32.gmra.mrb[0].mxu0 %v408
      %v865 = vpop.f32.mrb[0].mxu0
      %v866 = vadd.f32 0.0, %v865
      %v867 = vpop.f32.mrb[0].mxu0
      %868 = vmatprep.mubr.f32.mxu0 0.0
      %869 = vmatmul.mubr.f32.gmra.mrb[0].mxu0 %v411
      %v870 = vpop.f32.mrb[0].mxu0
      %v871 = vadd.f32 0.0, %v870
      %v872 = vpop.f32.mrb[0].mxu0
      %873 = vmatprep.mubr.f32.mxu0 0.0
      %874 = vmatmul.mubr.f32.gmra.mrb[0].mxu0 %v414
      %v875 = vpop.f32.mrb[0].mxu0
      %v876 = vadd.f32 0.0, %v875
      %v877 = vpop.f32.mrb[0].mxu0
      %878 = vmatprep.mubr.f32.mxu0 0.0
      %879 = vmatmul.mubr.f32.gmra.mrb[0].mxu0 %v417
      %v880 = vpop.f32.mrb[0].mxu0
      %v881 = vadd.f32 0.0, %v880
      %v882 = vpop.f32.mrb[0].mxu0
      %883 = vmatprep.mubr.f32.mxu0 0.0
      %884 = vmatmul.mubr.f32.gmra.mrb[0].mxu0 %v420
      %v885 = vpop.f32.mrb[0].mxu0
      %v886 = vadd.f32 0.0, %v885
      %v887 = vpop.f32.mrb[0].mxu0
      %888 = vmatprep.mubr.f32.mxu0 0.0
      %889 = vmatmul.mubr.f32.gmra.mrb[0].mxu0 %v423
      %v890 = vpop.f32.mrb[0].mxu0
      %v891 = vadd.f32 0.0, %v890
      %v892 = vpop.f32.mrb[0].mxu0
      %893 = vmatprep.mubr.f32.mxu0 0.0
      %894 = vmatmul.mubr.f32.gmra.mrb[0].mxu0 %v426
      %v895 = vpop.f32.mrb[0].mxu0
      %v896 = vadd.f32 0.0, %v895
      %v897 = vpop.f32.mrb[0].mxu0
      %898 = vmatprep.mubr.f32.mxu0 0.0
      %899 = vmatmul.mubr.f32.gmra.mrb[0].mxu0 %v429
      %v900 = vpop.f32.mrb[0].mxu0
      %v901 = vadd.f32 0.0, %v900
      %v902 = vpop.f32.mrb[0].mxu0
      %903 = vmatprep.mubr.f32.mxu0 0.0
      %904 = vmatmul.mubr.f32.gmra.mrb[0].mxu0 %v432
      %v905 = vpop.f32.mrb[0].mxu0
      %v906 = vadd.f32 0.0, %v905
      %v907 = vpop.f32.mrb[0].mxu0
      %908 = vmatprep.mubr.f32.mxu0 0.0
      %909 = vmatmul.mubr.f32.gmra.mrb[0].mxu0 %v435
      %v910 = vpop.f32.mrb[0].mxu0
      %v911 = vadd.f32 0.0, %v910
      %v912 = vpop.f32.mrb[0].mxu0
      %913 = vmatprep.mubr.f32.mxu0 0.0
      %914 = vmatmul.mubr.f32.gmra.mrb[0].mxu0 %v438
      %v915 = vpop.f32.mrb[0].mxu0
      %v916 = vadd.f32 0.0, %v915
      %v917 = vpop.f32.mrb[0].mxu0
      %918 = vmatprep.mubr.f32.mxu0 0.0
      %919 = vmatmul.mubr.f32.gmra.mrb[0].mxu0 %v441
      %v920 = vpop.f32.mrb[0].mxu0
      %v921 = vadd.f32 0.0, %v920
      %v922 = vpop.f32.mrb[0].mxu0
      %923 = vmatprep.mubr.f32.mxu0 0.0
      %924 = vmatmul.mubr.f32.gmra.mrb[0].mxu0 %v444
      %v925 = vpop.f32.mrb[0].mxu0
      %v926 = vadd.f32 0.0, %v925
      %v927 = vpop.f32.mrb[0].mxu0
      %928 = vmatprep.mubr.f32.mxu0 0.0
      %929 = vmatmul.mubr.f32.gmra.mrb[0].mxu0 %v447
      %v930 = vpop.f32.mrb[0].mxu0
      %v931 = vadd.f32 0.0, %v930
      %v932 = vpop.f32.mrb[0].mxu0
      %933 = vmatprep.mubr.f32.mxu0 0.0
      %934 = vmatmul.mubr.f32.gmra.mrb[0].mxu0 %v450
      %v935 = vpop.f32.mrb[0].mxu0
      %v936 = vadd.f32 0.0, %v935
      %v937 = vpop.f32.mrb[0].mxu0
      %938 = vmatprep.mubr.f32.mxu0 0.0
      %939 = vmatmul.mubr.f32.gmra.mrb[0].mxu0 %v453
      %v940 = vpop.f32.mrb[0].mxu0
      %v941 = vadd.f32 0.0, %v940
      %v942 = vpop.f32.mrb[0].mxu0
      %943 = vmatprep.mubr.f32.mxu0 0.0
      %944 = vmatmul.mubr.f32.gmra.mrb[0].mxu0 %v456
      %v945 = vpop.f32.mrb[0].mxu0
      %v946 = vadd.f32 0.0, %v945
      %v947 = vpop.f32.mrb[0].mxu0
      %948 = vmatprep.mubr.f32.mxu0 0.0
      %949 = vmatmul.mubr.f32.gmra.mrb[0].mxu0 %v459
      %v950 = vpop.f32.mrb[0].mxu0
      %v951 = vadd.f32 0.0, %v950
      %v952 = vpop.f32.mrb[0].mxu0
      %953 = vmatprep.mubr.f32.mxu0 0.0
      %954 = vmatmul.mubr.f32.gmra.mrb[0].mxu0 %v462
      %v955 = vpop.f32.mrb[0].mxu0
      %v956 = vadd.f32 0.0, %v955
      %v957 = vpop.f32.mrb[0].mxu0
      %958 = vmatprep.mubr.f32.mxu0 0.0
      %959 = vmatmul.mubr.f32.gmra.mrb[0].mxu0 %v465
      %v960 = vpop.f32.mrb[0].mxu0
      %v961 = vadd.f32 0.0, %v960
      %v962 = vpop.f32.mrb[0].mxu0
      %963 = vmatprep.mubr.f32.mxu0 0.0
      %964 = vmatmul.mubr.f32.gmra.mrb[0].mxu0 %v468
      %v965 = vpop.f32.mrb[0].mxu0
      %v966 = vadd.f32 0.0, %v965
      %v967 = vpop.f32.mrb[0].mxu0
      %968 = vmatprep.mubr.f32.mxu0 0.0
      %969 = vmatmul.mubr.f32.gmra.mrb[0].mxu0 %v471
      %v970 = vpop.f32.mrb[0].mxu0
      %v971 = vadd.f32 0.0, %v970
      %v972 = vpop.f32.mrb[0].mxu0
      %973 = vmatprep.mubr.f32.mxu0 0.0
      %974 = vmatmul.mubr.f32.gmra.mrb[0].mxu0 %v474
      %v975 = vpop.f32.mrb[0].mxu0
      %v976 = vadd.f32 0.0, %v975
      %v977 = vpop.f32.mrb[0].mxu0
      %978 = vmatprep.mubr.f32.mxu0 0.0
      %979 = vmatmul.mubr.f32.gmra.mrb[0].mxu0 %v477
      %v980 = vpop.f32.mrb[0].mxu0
      %v981 = vadd.f32 0.0, %v980
      %v982 = vpop.f32.mrb[0].mxu0
      %983 = vmatprep.mubr.f32.mxu0 0.0
      %984 = vmatmul.mubr.f32.gmra.mrb[0].mxu0 %v480
      %v985 = vpop.f32.mrb[0].mxu0
      %v986 = vadd.f32 0.0, %v985
      %v987 = vpop.f32.mrb[0].mxu0
      %988 = vmatprep.mubr.f32.mxu0 0.0
      %989 = vmatmul.mubr.f32.gmra.mrb[0].mxu0 %v483
      %v990 = vpop.f32.mrb[0].mxu0
      %v991 = vadd.f32 0.0, %v990
      %v992 = vpop.f32.mrb[0].mxu0
      %993 = vmatprep.mubr.f32.mxu0 0.0
      %994 = vmatmul.mubr.f32.gmra.mrb[0].mxu0 %v486
      %v995 = vpop.f32.mrb[0].mxu0
      %v996 = vadd.f32 0.0, %v995
      %v997 = vpop.f32.mrb[0].mxu0
      %998 = vmatprep.mubr.f32.mxu0 0.0
      %999 = vmatmul.mubr.f32.gmra.mrb[0].mxu0 %v489
      %v1000 = vpop.f32.mrb[0].mxu0
      %v1001 = vadd.f32 0.0, %v1000
      %v1002 = vpop.f32.mrb[0].mxu0
      %1003 = vmatprep.mubr.f32.mxu0 0.0
      %1004 = vmatmul.mubr.f32.gmra.mrb[0].mxu0 %v492
      %v1005 = vpop.f32.mrb[0].mxu0
      %v1006 = vadd.f32 0.0, %v1005
      %v1007 = vpop.f32.mrb[0].mxu0
      %1008 = vmatprep.mubr.f32.mxu0 0.0
      %1009 = vmatmul.mubr.f32.gmra.mrb[0].mxu0 %v495
      %v1010 = vpop.f32.mrb[0].mxu0
      %v1011 = vadd.f32 0.0, %v1010
      %v1012 = vpop.f32.mrb[0].mxu0
      %1013 = vmatprep.mubr.f32.mxu0 0.0
      %1014 = vmatmul.mubr.f32.gmra.mrb[0].mxu0 %v498
      %v1015 = vpop.f32.mrb[0].mxu0
      %v1016 = vadd.f32 0.0, %v1015
      %v1017 = vpop.f32.mrb[0].mxu0
      %1018 = vmatprep.mubr.f32.mxu0 0.0
      %1019 = vmatmul.mubr.f32.gmra.mrb[0].mxu0 %v501
      %v1020 = vpop.f32.mrb[0].mxu0
      %v1021 = vadd.f32 0.0, %v1020
      %v1022 = vpop.f32.mrb[0].mxu0
      %1023 = vmatprep.mubr.f32.mxu0 0.0
      %1024 = vmatmul.mubr.f32.gmra.mrb[0].mxu0 %v504
      %v1025 = vpop.f32.mrb[0].mxu0
      %v1026 = vadd.f32 0.0, %v1025
      %v1027 = vpop.f32.mrb[0].mxu0
      %1028 = vmatprep.mubr.f32.mxu0 0.0
      %1029 = vmatmul.mubr.f32.gmra.mrb[0].mxu0 %v507
      %v1030 = vpop.f32.mrb[0].mxu0
      %v1031 = vadd.f32 0.0, %v1030
      %v1032 = vpop.f32.mrb[0].mxu0
      %1033 = vmatprep.mubr.f32.mxu0 0.0
      %1034 = vmatmul.mubr.f32.gmra.mrb[0].mxu0 %v510
      %v1035 = vpop.f32.mrb[0].mxu0
      %v1036 = vadd.f32 0.0, %v1035
      %v1037 = vpop.f32.mrb[0].mxu0
      %1038 = vmatprep.mubr.f32.mxu0 0.0
      %1039 = vmatmul.mubr.f32.gmra.mrb[0].mxu0 %v513
      %v1040 = vpop.f32.mrb[0].mxu0
      %v1041 = vadd.f32 0.0, %v1040
      %v1042 = vpop.f32.mrb[0].mxu0
      %1043 = vmatprep.mubr.f32.mxu0 0.0
      %1044 = vmatmul.mubr.f32.gmra.mrb[0].mxu0 %v516
      %v1045 = vpop.f32.mrb[0].mxu0
      %v1046 = vadd.f32 0.0, %v1045
      %v1047 = vpop.f32.mrb[0].mxu0
      %1048 = vmatprep.mubr.f32.mxu0 0.0
      %1049 = vmatmul.mubr.f32.gmra.mrb[0].mxu0 %v519
      %v1050 = vpop.f32.mrb[0].mxu0
      %v1051 = vadd.f32 0.0, %v1050
      %v1052 = vpop.f32.mrb[0].mxu0
      %1053 = vmatprep.mubr.f32.mxu0 0.0
      %1054 = vmatmul.mubr.f32.gmra.mrb[0].mxu0 %v522
      %v1055 = vpop.f32.mrb[0].mxu0
      %v1056 = vadd.f32 0.0, %v1055
      %v1057 = vpop.f32.mrb[0].mxu0
      %1058 = vmatprep.mubr.f32.mxu0 0.0
      %1059 = vmatmul.mubr.f32.gmra.mrb[0].mxu0 %v525
      %v1060 = vpop.f32.mrb[0].mxu0
      %v1061 = vadd.f32 0.0, %v1060
      %v1062 = vpop.f32.mrb[0].mxu0
      %1063 = vmatprep.mubr.f32.mxu0 0.0
      %1064 = vmatmul.mubr.f32.gmra.mrb[0].mxu0 %v528
      %v1065 = vpop.f32.mrb[0].mxu0
      %v1066 = vadd.f32 0.0, %v1065
      %v1067 = vpop.f32.mrb[0].mxu0
      %1068 = vmatprep.mubr.f32.mxu0 0.0
      %1069 = vmatmul.mubr.f32.gmra.mrb[0].mxu0 %v531
      %v1070 = vpop.f32.mrb[0].mxu0
      %v1071 = vadd.f32 0.0, %v1070
      %v1072 = vpop.f32.mrb[0].mxu0
      %1073 = vmatprep.mubr.f32.mxu0 0.0
      %1074 = vmatmul.mubr.f32.gmra.mrb[0].mxu0 %v534
      %v1075 = vpop.f32.mrb[0].mxu0
      %v1076 = vadd.f32 0.0, %v1075
      %v1077 = vpop.f32.mrb[0].mxu0
      %1078 = vmatprep.mubr.f32.mxu0 0.0
      %1079 = vmatmul.mubr.f32.gmra.mrb[0].mxu0 %v537
      %v1080 = vpop.f32.mrb[0].mxu0
      %v1081 = vadd.f32 0.0, %v1080
      %v1082 = vpop.f32.mrb[0].mxu0
      %1083 = vmatprep.mubr.f32.mxu0 0.0
      %1084 = vmatmul.mubr.f32.gmra.mrb[0].mxu0 %v540
      %v1085 = vpop.f32.mrb[0].mxu0
      %v1086 = vadd.f32 0.0, %v1085
      %v1087 = vpop.f32.mrb[0].mxu0
      %1088 = vmatprep.mubr.f32.mxu0 0.0
      %1089 = vmatmul.mubr.f32.gmra.mrb[0].mxu0 %v543
      %v1090 = vpop.f32.mrb[0].mxu0
      %v1091 = vadd.f32 0.0, %v1090
      %v1092 = vpop.f32.mrb[0].mxu0
      %1093 = vmatprep.mubr.f32.mxu0 0.0
      %1094 = vmatmul.mubr.f32.gmra.mrb[0].mxu0 %v546
      %v1095 = vpop.f32.mrb[0].mxu0
      %v1096 = vadd.f32 0.0, %v1095
      %v1097 = vpop.f32.mrb[0].mxu0
      %1098 = vmatprep.mubr.f32.mxu0 0.0
      %1099 = vmatmul.mubr.f32.gmra.mrb[0].mxu0 %v549
      %v1100 = vpop.f32.mrb[0].mxu0
      %v1101 = vadd.f32 0.0, %v1100
      %v1102 = vpop.f32.mrb[0].mxu0
      %1103 = vmatprep.mubr.f32.mxu0 0.0
      %1104 = vmatmul.mubr.f32.gmra.mrb[0].mxu0 %v552
      %v1105 = vpop.f32.mrb[0].mxu0
      %v1106 = vadd.f32 0.0, %v1105
      %v1107 = vpop.f32.mrb[0].mxu0
      %1108 = vmatprep.mubr.f32.mxu0 0.0
      %1109 = vmatmul.mubr.f32.gmra.mrb[0].mxu0 %v555
      %v1110 = vpop.f32.mrb[0].mxu0
      %v1111 = vadd.f32 0.0, %v1110
      %v1112 = vpop.f32.mrb[0].mxu0
      %1113 = vmatprep.mubr.f32.mxu0 0.0
      %1114 = vmatmul.mubr.f32.gmra.mrb[0].mxu0 %v558
      %v1115 = vpop.f32.mrb[0].mxu0
      %v1116 = vadd.f32 0.0, %v1115
      %v1117 = vpop.f32.mrb[0].mxu0
      %1118 = vmatprep.mubr.f32.mxu0 0.0
      %1119 = vmatmul.mubr.f32.gmra.mrb[0].mxu0 %v561
      %v1120 = vpop.f32.mrb[0].mxu0
      %v1121 = vadd.f32 0.0, %v1120
      %v1122 = vpop.f32.mrb[0].mxu0
      %1123 = vmatprep.mubr.f32.mxu0 0.0
      %1124 = vmatmul.mubr.f32.gmra.mrb[0].mxu0 %v564
      %v1125 = vpop.f32.mrb[0].mxu0
      %v1126 = vadd.f32 0.0, %v1125
      %v1127 = vpop.f32.mrb[0].mxu0
      %1128 = vmatprep.mubr.f32.mxu0 0.0
      %1129 = vmatmul.mubr.f32.gmra.mrb[0].mxu0 %v567
      %v1130 = vpop.f32.mrb[0].mxu0
      %v1131 = vadd.f32 0.0, %v1130
      %v1132 = vpop.f32.mrb[0].mxu0
      %1133 = vmatprep.mubr.f32.mxu0 0.0
      %1134 = vmatmul.mubr.f32.gmra.mrb[0].mxu0 %v570
      %v1135 = vpop.f32.mrb[0].mxu0
      %v1136 = vadd.f32 0.0, %v1135
      %v1137 = vpop.f32.mrb[0].mxu0
      %1138 = vmatprep.mubr.f32.mxu0 0.0
      %1139 = vmatmul.mubr.f32.gmra.mrb[0].mxu0 %v573
      %v1140 = vpop.f32.mrb[0].mxu0
      %v1141 = vadd.f32 0.0, %v1140
      %v1142 = vpop.f32.mrb[0].mxu0
      %1143 = vmatprep.mubr.f32.mxu0 0.0
      %1144 = vmatmul.mubr.f32.gmra.mrb[0].mxu0 %v576
      %v1145 = vpop.f32.mrb[0].mxu0
      %v1146 = vadd.f32 0.0, %v1145
      %v1147 = vpop.f32.mrb[0].mxu0
      %1148 = vmatprep.mubr.f32.mxu0 0.0
      %1149 = vmatmul.mubr.f32.gmra.mrb[0].mxu0 %v579
      %v1150 = vpop.f32.mrb[0].mxu0
      %v1151 = vadd.f32 0.0, %v1150
      %v1152 = vpop.f32.mrb[0].mxu0
      %1153 = vmatprep.mubr.f32.mxu0 0.0
      %1154 = vmatmul.mubr.f32.gmra.mrb[0].mxu0 %v582
      %v1155 = vpop.f32.mrb[0].mxu0
      %v1156 = vadd.f32 0.0, %v1155
      %v1157 = vpop.f32.mrb[0].mxu0
      %1158 = vmatprep.mubr.f32.mxu0 0.0
      %1159 = vmatmul.mubr.f32.gmra.mrb[0].mxu0 %v585
      %v1160 = vpop.f32.mrb[0].mxu0
      %v1161 = vadd.f32 0.0, %v1160
      %v1162 = vpop.f32.mrb[0].mxu0
      %1163 = vmatprep.mubr.f32.mxu0 0.0
      %1164 = vmatmul.mubr.f32.gmra.mrb[0].mxu0 %v588
      %v1165 = vpop.f32.mrb[0].mxu0
      %v1166 = vadd.f32 0.0, %v1165
      %v1167 = vpop.f32.mrb[0].mxu0
      %1168 = vmatprep.mubr.f32.mxu0 0.0
      %1169 = vmatmul.mubr.f32.gmra.mrb[0].mxu0 %v591
      %v1170 = vpop.f32.mrb[0].mxu0
      %v1171 = vadd.f32 0.0, %v1170
      %v1172 = vpop.f32.mrb[0].mxu0
      %1173 = vmatprep.mubr.f32.mxu0 0.0
      %1174 = vmatmul.mubr.f32.gmra.mrb[0].mxu0 %v594
      %v1175 = vpop.f32.mrb[0].mxu0
      %v1176 = vadd.f32 0.0, %v1175
      %v1177 = vpop.f32.mrb[0].mxu0
      %1178 = vmatprep.mubr.f32.mxu0 0.0
      %1179 = vmatmul.mubr.f32.gmra.mrb[0].mxu0 %v597
      %v1180 = vpop.f32.mrb[0].mxu0
      %v1181 = vadd.f32 0.0, %v1180
      %v1182 = vpop.f32.mrb[0].mxu0
      %1183 = vmatprep.mubr.f32.mxu0 0.0
      %1184 = vmatmul.mubr.f32.gmra.mrb[0].mxu0 %v600
      %v1185 = vpop.f32.mrb[0].mxu0
      %v1186 = vadd.f32 0.0, %v1185
      %v1187 = vpop.f32.mrb[0].mxu0
      %1188 = vmatprep.mubr.f32.mxu0 0.0
      %1189 = vmatmul.mubr.f32.gmra.mrb[0].mxu0 %v603
      %v1190 = vpop.f32.mrb[0].mxu0
      %v1191 = vadd.f32 0.0, %v1190
      %v1192 = vpop.f32.mrb[0].mxu0
      %1193 = vmatprep.mubr.f32.mxu0 0.0
      %1194 = vmatmul.mubr.f32.gmra.mrb[0].mxu0 %v606
      %v1195 = vpop.f32.mrb[0].mxu0
      %v1196 = vadd.f32 0.0, %v1195
      %v1197 = vpop.f32.mrb[0].mxu0
      %1198 = vmatprep.mubr.f32.mxu0 0.0
      %1199 = vmatmul.mubr.f32.gmra.mrb[0].mxu0 %v609
      %v1200 = vpop.f32.mrb[0].mxu0
      %v1201 = vadd.f32 0.0, %v1200
      %v1202 = vpop.f32.mrb[0].mxu0
      %1203 = vmatprep.mubr.f32.mxu0 0.0
      %1204 = vmatmul.mubr.f32.gmra.mrb[0].mxu0 %v612
      %v1205 = vpop.f32.mrb[0].mxu0
      %v1206 = vadd.f32 0.0, %v1205
      %v1207 = vpop.f32.mrb[0].mxu0
      %1208 = vmatprep.mubr.f32.mxu0 0.0
      %1209 = vmatmul.mubr.f32.gmra.mrb[0].mxu0 %v615
      %v1210 = vpop.f32.mrb[0].mxu0
      %v1211 = vadd.f32 0.0, %v1210
      %v1212 = vpop.f32.mrb[0].mxu0
      %1213 = vmatprep.mubr.f32.mxu0 0.0
      %1214 = vmatmul.mubr.f32.gmra.mrb[0].mxu0 %v618
      %v1215 = vpop.f32.mrb[0].mxu0
      %v1216 = vadd.f32 0.0, %v1215
      %v1217 = vpop.f32.mrb[0].mxu0
      %1218 = vmatprep.mubr.f32.mxu0 0.0
      %1219 = vmatmul.mubr.f32.gmra.mrb[0].mxu0 %v621
      %v1220 = vpop.f32.mrb[0].mxu0
      %v1221 = vadd.f32 0.0, %v1220
      %v1222 = vpop.f32.mrb[0].mxu0
      %1223 = vmatprep.mubr.f32.mxu0 0.0
      %1224 = vmatmul.mubr.f32.gmra.mrb[0].mxu0 %v624
      %v1225 = vpop.f32.mrb[0].mxu0
      %v1226 = vadd.f32 0.0, %v1225
      %v1227 = vpop.f32.mrb[0].mxu0
      %1228 = vmatprep.mubr.f32.mxu0 0.0
      %1229 = vmatmul.mubr.f32.gmra.mrb[0].mxu0 %v627
      %v1230 = vpop.f32.mrb[0].mxu0
      %v1231 = vadd.f32 0.0, %v1230
      %v1232 = vpop.f32.mrb[0].mxu0
      %1233 = vmatprep.mubr.f32.mxu0 0.0
      %1234 = vmatmul.mubr.f32.gmra.mrb[0].mxu0 %v630
      %v1235 = vpop.f32.mrb[0].mxu0
      %v1236 = vadd.f32 0.0, %v1235
      %v1237 = vpop.f32.mrb[0].mxu0
      %1238 = vmatprep.mubr.f32.mxu0 0.0
      %1239 = vmatmul.mubr.f32.gmra.mrb[0].mxu0 %v633
      %v1240 = vpop.f32.mrb[0].mxu0
      %v1241 = vadd.f32 0.0, %v1240
      %v1242 = vpop.f32.mrb[0].mxu0
      %1243 = vmatprep.mubr.f32.mxu0 0.0
      %1244 = vmatmul.mubr.f32.gmra.mrb[0].mxu0 %v636
      %v1245 = vpop.f32.mrb[0].mxu0
      %v1246 = vadd.f32 0.0, %v1245
      %v1247 = vpop.f32.mrb[0].mxu0
      %1248 = vmatprep.mubr.f32.mxu0 0.0
      %1249 = vmatmul.mubr.f32.gmra.mrb[0].mxu0 %v639
      %v1250 = vpop.f32.mrb[0].mxu0
      %v1251 = vadd.f32 0.0, %v1250
      %v1252 = vpop.f32.mrb[0].mxu0
      %1253 = vmatprep.mubr.f32.mxu0 0.0
      %1254 = vmatmul.mubr.f32.gmra.mrb[0].mxu0 %v642
      %v1255 = vpop.f32.mrb[0].mxu0
      %v1256 = vadd.f32 0.0, %v1255
      %v1257 = vpop.f32.mrb[0].mxu0
      %1258 = vmatprep.mubr.f32.mxu0 0.0
      %1259 = vmatmul.mubr.f32.gmra.mrb[0].mxu0 %v645
      %v1260 = vpop.f32.mrb[0].mxu0
      %v1261 = vadd.f32 0.0, %v1260
      %v1262 = vpop.f32.mrb[0].mxu0
      %1263 = vmatprep.mubr.f32.mxu0 0.0
      %1264 = vmatmul.mubr.f32.gmra.mrb[0].mxu0 %v648
      %v1265 = vpop.f32.mrb[0].mxu0
      %v1266 = vadd.f32 0.0, %v1265
      %v1267 = vpop.f32.mrb[0].mxu0
      %1268 = vmatprep.mubr.f32.mxu0 0.0
      %1269 = vmatmul.mubr.f32.gmra.mrb[0].mxu0 %v651
      %v1270 = vpop.f32.mrb[0].mxu0
      %v1271 = vadd.f32 0.0, %v1270
      %v1272 = vpop.f32.mrb[0].mxu0
      %1273 = vmatprep.mubr.f32.mxu0 0.0
      %1274 = vmatmul.mubr.f32.gmra.mrb[0].mxu0 %v654
      %v1275 = vpop.f32.mrb[0].mxu0
      %v1276 = vadd.f32 0.0, %v1275
      %v1277 = vpop.f32.mrb[0].mxu0
      %1278 = vmatprep.mubr.f32.mxu0 0.0
      %1279 = vmatmul.mubr.f32.gmra.mrb[0].mxu0 %v657
      %v1280 = vpop.f32.mrb[0].mxu0
      %v1281 = vadd.f32 0.0, %v1280
      %v1282 = vpop.f32.mrb[0].mxu0
      %1283 = vmatprep.mubr.f32.mxu0 0.0
      %1284 = vmatmul.mubr.f32.gmra.mrb[0].mxu0 %v660
      %v1285 = vpop.f32.mrb[0].mxu0
      %v1286 = vadd.f32 0.0, %v1285
      %v1287 = vpop.f32.mrb[0].mxu0
      %1288 = vmatprep.mubr.f32.mxu0 0.0
      %1289 = vmatmul.mubr.f32.gmra.mrb[0].mxu0 %v663
      %v1290 = vpop.f32.mrb[0].mxu0
      %v1291 = vadd.f32 0.0, %v1290
      %v1292 = vpop.f32.mrb[0].mxu0
      %1293 = vmatprep.mubr.f32.mxu0 0.0
      %1294 = vmatmul.mubr.f32.gmra.mrb[0].mxu0 %v666
      %v1295 = vpop.f32.mrb[0].mxu0
      %v1296 = vadd.f32 0.0, %v1295
      %v1297 = vpop.f32.mrb[0].mxu0
      %1298 = vmatprep.mubr.f32.mxu0 0.0
      %1299 = vmatmul.mubr.f32.gmra.mrb[0].mxu0 %v669
      %v1300 = vpop.f32.mrb[0].mxu0
      %v1301 = vadd.f32 0.0, %v1300
      %v1302 = vpop.f32.mrb[0].mxu0
      %1303 = vmatprep.mubr.f32.mxu0 0.0
      %1304 = vmatmul.mubr.f32.gmra.mrb[0].mxu0 %v672
      %v1305 = vpop.f32.mrb[0].mxu0
      %v1306 = vadd.f32 0.0, %v1305
      %v1307 = vpop.f32.mrb[0].mxu0
      %1308 = vmatprep.mubr.f32.mxu0 0.0
      %1309 = vmatmul.mubr.f32.gmra.mrb[0].mxu0 %v675
      %v1310 = vpop.f32.mrb[0].mxu0
      %v1311 = vadd.f32 0.0, %v1310
      %v1312 = vpop.f32.mrb[0].mxu0
      %1313 = vmatprep.mubr.f32.mxu0 0.0
      %1314 = vmatmul.mubr.f32.gmra.mrb[0].mxu0 %v678
      %v1315 = vpop.f32.mrb[0].mxu0
      %v1316 = vadd.f32 0.0, %v1315
      %v1317 = vpop.f32.mrb[0].mxu0
      %1318 = vmatprep.mubr.f32.mxu0 0.0
      %1319 = vmatmul.mubr.f32.gmra.mrb[0].mxu0 %v681
      %v1320 = vpop.f32.mrb[0].mxu0
      %v1321 = vadd.f32 0.0, %v1320
      %v1322 = vpop.f32.mrb[0].mxu0
      %1323 = vmatprep.mubr.f32.mxu0 0.0
      %1324 = vmatmul.mubr.f32.gmra.mrb[0].mxu0 %v684
      %v1325 = vpop.f32.mrb[0].mxu0
      %v1326 = vadd.f32 0.0, %v1325
      %v1327 = vpop.f32.mrb[0].mxu0
      %1328 = vmatprep.mubr.f32.mxu0 0.0
      %1329 = vmatmul.mubr.f32.gmra.mrb[0].mxu0 %v687
      %v1330 = vpop.f32.mrb[0].mxu0
      %v1331 = vadd.f32 0.0, %v1330
      %v1332 = vpop.f32.mrb[0].mxu0
      %1333 = vmatprep.mubr.f32.mxu0 0.0
      %1334 = vmatmul.mubr.f32.gmra.mrb[0].mxu0 %v690
      %v1335 = vpop.f32.mrb[0].mxu0
      %v1336 = vadd.f32 0.0, %v1335
      %v1337 = vpop.f32.mrb[0].mxu0
      %1338 = vmatprep.mubr.f32.mxu0 0.0
      %1339 = vmatmul.mubr.f32.gmra.mrb[0].mxu0 %v693
      %v1340 = vpop.f32.mrb[0].mxu0
      %v1341 = vadd.f32 0.0, %v1340
      %v1342 = vpop.f32.mrb[0].mxu0
      %1343 = vmatprep.mubr.f32.mxu0 0.0
      %1344 = vmatmul.mubr.f32.gmra.mrb[0].mxu0 %v696
      %v1345 = vpop.f32.mrb[0].mxu0
      %v1346 = vadd.f32 0.0, %v1345
      %v1347 = vpop.f32.mrb[0].mxu0
      %1348 = vmatprep.mubr.f32.mxu0 0.0
      %1349 = vmatmul.mubr.f32.gmra.mrb[0].mxu0 %v699
      %v1350 = vpop.f32.mrb[0].mxu0
      %v1351 = vadd.f32 0.0, %v1350
      %v1352 = vpop.f32.mrb[0].mxu0
      %1353 = vmatprep.mubr.f32.mxu0 0.0
      %1354 = vmatmul.mubr.f32.gmra.mrb[0].mxu0 %v702
      %v1355 = vpop.f32.mrb[0].mxu0
      %v1356 = vadd.f32 0.0, %v1355
      %v1357 = vpop.f32.mrb[0].mxu0
      %1358 = vmatprep.mubr.f32.mxu0 0.0
      %1359 = vmatmul.mubr.f32.gmra.mrb[0].mxu0 %v705
      %v1360 = vpop.f32.mrb[0].mxu0
      %v1361 = vadd.f32 0.0, %v1360
      %v1362 = vpop.f32.mrb[0].mxu0
      %1363 = vmatprep.mubr.f32.mxu0 0.0
      %1364 = vmatmul.mubr.f32.gmra.mrb[0].mxu0 %v708
      %v1365 = vpop.f32.mrb[0].mxu0
      %v1366 = vadd.f32 0.0, %v1365
      %v1367 = vpop.f32.mrb[0].mxu0
      %1368 = vmatprep.mubr.f32.mxu0 0.0
      %1369 = vmatmul.mubr.f32.gmra.mrb[0].mxu0 %v711
      %v1370 = vpop.f32.mrb[0].mxu0
      %v1371 = vadd.f32 0.0, %v1370
      %v1372 = vpop.f32.mrb[0].mxu0
      %1373 = vmatprep.mubr.f32.mxu0 0.0
      %1374 = vmatmul.mubr.f32.gmra.mrb[0].mxu0 %v714
      %v1375 = vpop.f32.mrb[0].mxu0
      %v1376 = vadd.f32 0.0, %v1375
      %v1377 = vpop.f32.mrb[0].mxu0
      %1378 = vmatprep.mubr.f32.mxu0 0.0
      %1379 = vmatmul.mubr.f32.gmra.mrb[0].mxu0 %v717
      %v1380 = vpop.f32.mrb[0].mxu0
      %v1381 = vadd.f32 0.0, %v1380
      %v1382 = vpop.f32.mrb[0].mxu0
      %1383 = vmatprep.mubr.f32.mxu0 0.0
      %1384 = vmatmul.mubr.f32.gmra.mrb[0].mxu0 %v720
      %v1385 = vpop.f32.mrb[0].mxu0
      %v1386 = vadd.f32 0.0, %v1385
      %v1387 = vpop.f32.mrb[0].mxu0
      %1388 = vmatprep.mubr.f32.mxu0 0.0
      %1389 = vmatmul.mubr.f32.gmra.mrb[0].mxu0 %v723
      %v1390 = vpop.f32.mrb[0].mxu0
      %v1391 = vadd.f32 0.0, %v1390
      %v1392 = vpop.f32.mrb[0].mxu0
      %1393 = vdwg.mxu0
      %v1394 = vld [vmem:[%s234] sm:$0x1]
      %v1396 = vlaneseq
      %v1397 = vshrl.u32 %v1396, 7
      %v1398 = vsub.s32 0, %v1397
      %v1399 = vrot.slane %v1394, %v1398
      %v1401 = vmul.f32 %v796, %v1399
      %v1402 = vmul.f32 %v801, %v1399
      %v1403 = vmul.f32 %v806, %v1399
      %v1404 = vmul.f32 %v811, %v1399
      %v1405 = vmul.f32 %v816, %v1399
      %v1406 = vmul.f32 %v821, %v1399
      %v1407 = vmul.f32 %v826, %v1399
      %v1408 = vmul.f32 %v831, %v1399
      %v1409 = vmul.f32 %v836, %v1399
      %v1410 = vmul.f32 %v841, %v1399
      %v1411 = vmul.f32 %v846, %v1399
      %v1412 = vmul.f32 %v851, %v1399
      %v1413 = vmul.f32 %v856, %v1399
      %v1414 = vmul.f32 %v861, %v1399
      %v1415 = vmul.f32 %v866, %v1399
      %v1416 = vmul.f32 %v871, %v1399
      %v1417 = vmul.f32 %v876, %v1399
      %v1418 = vmul.f32 %v881, %v1399
      %v1419 = vmul.f32 %v886, %v1399
      %v1420 = vmul.f32 %v891, %v1399
      %v1421 = vmul.f32 %v896, %v1399
      %v1422 = vmul.f32 %v901, %v1399
      %v1423 = vmul.f32 %v906, %v1399
      %v1424 = vmul.f32 %v911, %v1399
      %v1425 = vmul.f32 %v916, %v1399
      %v1426 = vmul.f32 %v921, %v1399
      %v1427 = vmul.f32 %v926, %v1399
      %v1428 = vmul.f32 %v931, %v1399
      %v1429 = vmul.f32 %v936, %v1399
      %v1430 = vmul.f32 %v941, %v1399
      %v1431 = vmul.f32 %v946, %v1399
      %v1432 = vmul.f32 %v951, %v1399
      %v1433 = vmul.f32 %v956, %v1399
      %v1434 = vmul.f32 %v961, %v1399
      %v1435 = vmul.f32 %v966, %v1399
      %v1436 = vmul.f32 %v971, %v1399
      %v1437 = vmul.f32 %v976, %v1399
      %v1438 = vmul.f32 %v981, %v1399
      %v1439 = vmul.f32 %v986, %v1399
      %v1440 = vmul.f32 %v991, %v1399
      %v1441 = vmul.f32 %v996, %v1399
      %v1442 = vmul.f32 %v1001, %v1399
      %v1443 = vmul.f32 %v1006, %v1399
      %v1444 = vmul.f32 %v1011, %v1399
      %v1445 = vmul.f32 %v1016, %v1399
      %v1446 = vmul.f32 %v1021, %v1399
      %v1447 = vmul.f32 %v1026, %v1399
      %v1448 = vmul.f32 %v1031, %v1399
      %v1449 = vmul.f32 %v1036, %v1399
      %v1450 = vmul.f32 %v1041, %v1399
      %v1451 = vmul.f32 %v1046, %v1399
      %v1452 = vmul.f32 %v1051, %v1399
      %v1453 = vmul.f32 %v1056, %v1399
      %v1454 = vmul.f32 %v1061, %v1399
      %v1455 = vmul.f32 %v1066, %v1399
      %v1456 = vmul.f32 %v1071, %v1399
      %v1457 = vmul.f32 %v1076, %v1399
      %v1458 = vmul.f32 %v1081, %v1399
      %v1459 = vmul.f32 %v1086, %v1399
      %v1460 = vmul.f32 %v1091, %v1399
      %v1461 = vmul.f32 %v1096, %v1399
      %v1462 = vmul.f32 %v1101, %v1399
      %v1463 = vmul.f32 %v1106, %v1399
      %v1464 = vmul.f32 %v1111, %v1399
      %v1465 = vmul.f32 %v1116, %v1399
      %v1466 = vmul.f32 %v1121, %v1399
      %v1467 = vmul.f32 %v1126, %v1399
      %v1468 = vmul.f32 %v1131, %v1399
      %v1469 = vmul.f32 %v1136, %v1399
      %v1470 = vmul.f32 %v1141, %v1399
      %v1471 = vmul.f32 %v1146, %v1399
      %v1472 = vmul.f32 %v1151, %v1399
      %v1473 = vmul.f32 %v1156, %v1399
      %v1474 = vmul.f32 %v1161, %v1399
      %v1475 = vmul.f32 %v1166, %v1399
      %v1476 = vmul.f32 %v1171, %v1399
      %v1477 = vmul.f32 %v1176, %v1399
      %v1478 = vmul.f32 %v1181, %v1399
      %v1479 = vmul.f32 %v1186, %v1399
      %v1480 = vmul.f32 %v1191, %v1399
      %v1481 = vmul.f32 %v1196, %v1399
      %v1482 = vmul.f32 %v1201, %v1399
      %v1483 = vmul.f32 %v1206, %v1399
      %v1484 = vmul.f32 %v1211, %v1399
      %v1485 = vmul.f32 %v1216, %v1399
      %v1486 = vmul.f32 %v1221, %v1399
      %v1487 = vmul.f32 %v1226, %v1399
      %v1488 = vmul.f32 %v1231, %v1399
      %v1489 = vmul.f32 %v1236, %v1399
      %v1490 = vmul.f32 %v1241, %v1399
      %v1491 = vmul.f32 %v1246, %v1399
      %v1492 = vmul.f32 %v1251, %v1399
      %v1493 = vmul.f32 %v1256, %v1399
      %v1494 = vmul.f32 %v1261, %v1399
      %v1495 = vmul.f32 %v1266, %v1399
      %v1496 = vmul.f32 %v1271, %v1399
      %v1497 = vmul.f32 %v1276, %v1399
      %v1498 = vmul.f32 %v1281, %v1399
      %v1499 = vmul.f32 %v1286, %v1399
      %v1500 = vmul.f32 %v1291, %v1399
      %v1501 = vmul.f32 %v1296, %v1399
      %v1502 = vmul.f32 %v1301, %v1399
      %v1503 = vmul.f32 %v1306, %v1399
      %v1504 = vmul.f32 %v1311, %v1399
      %v1505 = vmul.f32 %v1316, %v1399
      %v1506 = vmul.f32 %v1321, %v1399
      %v1507 = vmul.f32 %v1326, %v1399
      %v1508 = vmul.f32 %v1331, %v1399
      %v1509 = vmul.f32 %v1336, %v1399
      %v1510 = vmul.f32 %v1341, %v1399
      %v1511 = vmul.f32 %v1346, %v1399
      %v1512 = vmul.f32 %v1351, %v1399
      %v1513 = vmul.f32 %v1356, %v1399
      %v1514 = vmul.f32 %v1361, %v1399
      %v1515 = vmul.f32 %v1366, %v1399
      %v1516 = vmul.f32 %v1371, %v1399
      %v1517 = vmul.f32 %v1376, %v1399
      %v1518 = vmul.f32 %v1381, %v1399
      %v1519 = vmul.f32 %v1386, %v1399
      %v1520 = vmul.f32 %v1391, %v1399
      %v1521 = vld [vmem:[%s237] sm:$0x1]
      %v1523 = vlaneseq
      %v1524 = vshrl.u32 %v1523, 7
      %v1525 = vsub.s32 0, %v1524
      %v1526 = vrot.slane %v1521, %v1525
      %v1528 = vadd.f32 %v1401, %v1526
      %v1529 = vadd.f32 %v1402, %v1526
      %v1530 = vadd.f32 %v1403, %v1526
      %v1531 = vadd.f32 %v1404, %v1526
      %v1532 = vadd.f32 %v1405, %v1526
      %v1533 = vadd.f32 %v1406, %v1526
      %v1534 = vadd.f32 %v1407, %v1526
      %v1535 = vadd.f32 %v1408, %v1526
      %v1536 = vadd.f32 %v1409, %v1526
      %v1537 = vadd.f32 %v1410, %v1526
      %v1538 = vadd.f32 %v1411, %v1526
      %v1539 = vadd.f32 %v1412, %v1526
      %v1540 = vadd.f32 %v1413, %v1526
      %v1541 = vadd.f32 %v1414, %v1526
      %v1542 = vadd.f32 %v1415, %v1526
      %v1543 = vadd.f32 %v1416, %v1526
      %v1544 = vadd.f32 %v1417, %v1526
      %v1545 = vadd.f32 %v1418, %v1526
      %v1546 = vadd.f32 %v1419, %v1526
      %v1547 = vadd.f32 %v1420, %v1526
      %v1548 = vadd.f32 %v1421, %v1526
      %v1549 = vadd.f32 %v1422, %v1526
      %v1550 = vadd.f32 %v1423, %v1526
      %v1551 = vadd.f32 %v1424, %v1526
      %v1552 = vadd.f32 %v1425, %v1526
      %v1553 = vadd.f32 %v1426, %v1526
      %v1554 = vadd.f32 %v1427, %v1526
      %v1555 = vadd.f32 %v1428, %v1526
      %v1556 = vadd.f32 %v1429, %v1526
      %v1557 = vadd.f32 %v1430, %v1526
      %v1558 = vadd.f32 %v1431, %v1526
      %v1559 = vadd.f32 %v1432, %v1526
      %v1560 = vadd.f32 %v1433, %v1526
      %v1561 = vadd.f32 %v1434, %v1526
      %v1562 = vadd.f32 %v1435, %v1526
      %v1563 = vadd.f32 %v1436, %v1526
      %v1564 = vadd.f32 %v1437, %v1526
      %v1565 = vadd.f32 %v1438, %v1526
      %v1566 = vadd.f32 %v1439, %v1526
      %v1567 = vadd.f32 %v1440, %v1526
      %v1568 = vadd.f32 %v1441, %v1526
      %v1569 = vadd.f32 %v1442, %v1526
      %v1570 = vadd.f32 %v1443, %v1526
      %v1571 = vadd.f32 %v1444, %v1526
      %v1572 = vadd.f32 %v1445, %v1526
      %v1573 = vadd.f32 %v1446, %v1526
      %v1574 = vadd.f32 %v1447, %v1526
      %v1575 = vadd.f32 %v1448, %v1526
      %v1576 = vadd.f32 %v1449, %v1526
      %v1577 = vadd.f32 %v1450, %v1526
      %v1578 = vadd.f32 %v1451, %v1526
      %v1579 = vadd.f32 %v1452, %v1526
      %v1580 = vadd.f32 %v1453, %v1526
      %v1581 = vadd.f32 %v1454, %v1526
      %v1582 = vadd.f32 %v1455, %v1526
      %v1583 = vadd.f32 %v1456, %v1526
      %v1584 = vadd.f32 %v1457, %v1526
      %v1585 = vadd.f32 %v1458, %v1526
      %v1586 = vadd.f32 %v1459, %v1526
      %v1587 = vadd.f32 %v1460, %v1526
      %v1588 = vadd.f32 %v1461, %v1526
      %v1589 = vadd.f32 %v1462, %v1526
      %v1590 = vadd.f32 %v1463, %v1526
      %v1591 = vadd.f32 %v1464, %v1526
      %v1592 = vadd.f32 %v1465, %v1526
      %v1593 = vadd.f32 %v1466, %v1526
      %v1594 = vadd.f32 %v1467, %v1526
      %v1595 = vadd.f32 %v1468, %v1526
      %v1596 = vadd.f32 %v1469, %v1526
      %v1597 = vadd.f32 %v1470, %v1526
      %v1598 = vadd.f32 %v1471, %v1526
      %v1599 = vadd.f32 %v1472, %v1526
      %v1600 = vadd.f32 %v1473, %v1526
      %v1601 = vadd.f32 %v1474, %v1526
      %v1602 = vadd.f32 %v1475, %v1526
      %v1603 = vadd.f32 %v1476, %v1526
      %v1604 = vadd.f32 %v1477, %v1526
      %v1605 = vadd.f32 %v1478, %v1526
      %v1606 = vadd.f32 %v1479, %v1526
      %v1607 = vadd.f32 %v1480, %v1526
      %v1608 = vadd.f32 %v1481, %v1526
      %v1609 = vadd.f32 %v1482, %v1526
      %v1610 = vadd.f32 %v1483, %v1526
      %v1611 = vadd.f32 %v1484, %v1526
      %v1612 = vadd.f32 %v1485, %v1526
      %v1613 = vadd.f32 %v1486, %v1526
      %v1614 = vadd.f32 %v1487, %v1526
      %v1615 = vadd.f32 %v1488, %v1526
      %v1616 = vadd.f32 %v1489, %v1526
      %v1617 = vadd.f32 %v1490, %v1526
      %v1618 = vadd.f32 %v1491, %v1526
      %v1619 = vadd.f32 %v1492, %v1526
      %v1620 = vadd.f32 %v1493, %v1526
      %v1621 = vadd.f32 %v1494, %v1526
      %v1622 = vadd.f32 %v1495, %v1526
      %v1623 = vadd.f32 %v1496, %v1526
      %v1624 = vadd.f32 %v1497, %v1526
      %v1625 = vadd.f32 %v1498, %v1526
      %v1626 = vadd.f32 %v1499, %v1526
      %v1627 = vadd.f32 %v1500, %v1526
      %v1628 = vadd.f32 %v1501, %v1526
      %v1629 = vadd.f32 %v1502, %v1526
      %v1630 = vadd.f32 %v1503, %v1526
      %v1631 = vadd.f32 %v1504, %v1526
      %v1632 = vadd.f32 %v1505, %v1526
      %v1633 = vadd.f32 %v1506, %v1526
      %v1634 = vadd.f32 %v1507, %v1526
      %v1635 = vadd.f32 %v1508, %v1526
      %v1636 = vadd.f32 %v1509, %v1526
      %v1637 = vadd.f32 %v1510, %v1526
      %v1638 = vadd.f32 %v1511, %v1526
      %v1639 = vadd.f32 %v1512, %v1526
      %v1640 = vadd.f32 %v1513, %v1526
      %v1641 = vadd.f32 %v1514, %v1526
      %v1642 = vadd.f32 %v1515, %v1526
      %v1643 = vadd.f32 %v1516, %v1526
      %v1644 = vadd.f32 %v1517, %v1526
      %v1645 = vadd.f32 %v1518, %v1526
      %v1646 = vadd.f32 %v1519, %v1526
      %v1647 = vadd.f32 %v1520, %v1526
      %v1648 = vmax.f32 %v1528, 0.0
      %v1649 = vmax.f32 %v1529, 0.0
      %v1650 = vmax.f32 %v1530, 0.0
      %v1651 = vmax.f32 %v1531, 0.0
      %v1652 = vmax.f32 %v1532, 0.0
      %v1653 = vmax.f32 %v1533, 0.0
      %v1654 = vmax.f32 %v1534, 0.0
      %v1655 = vmax.f32 %v1535, 0.0
      %v1656 = vmax.f32 %v1536, 0.0
      %v1657 = vmax.f32 %v1537, 0.0
      %v1658 = vmax.f32 %v1538, 0.0
      %v1659 = vmax.f32 %v1539, 0.0
      %v1660 = vmax.f32 %v1540, 0.0
      %v1661 = vmax.f32 %v1541, 0.0
      %v1662 = vmax.f32 %v1542, 0.0
      %v1663 = vmax.f32 %v1543, 0.0
      %v1664 = vmax.f32 %v1544, 0.0
      %v1665 = vmax.f32 %v1545, 0.0
      %v1666 = vmax.f32 %v1546, 0.0
      %v1667 = vmax.f32 %v1547, 0.0
      %v1668 = vmax.f32 %v1548, 0.0
      %v1669 = vmax.f32 %v1549, 0.0
      %v1670 = vmax.f32 %v1550, 0.0
      %v1671 = vmax.f32 %v1551, 0.0
      %v1672 = vmax.f32 %v1552, 0.0
      %v1673 = vmax.f32 %v1553, 0.0
      %v1674 = vmax.f32 %v1554, 0.0
      %v1675 = vmax.f32 %v1555, 0.0
      %v1676 = vmax.f32 %v1556, 0.0
      %v1677 = vmax.f32 %v1557, 0.0
      %v1678 = vmax.f32 %v1558, 0.0
      %v1679 = vmax.f32 %v1559, 0.0
      %v1680 = vmax.f32 %v1560, 0.0
      %v1681 = vmax.f32 %v1561, 0.0
      %v1682 = vmax.f32 %v1562, 0.0
      %v1683 = vmax.f32 %v1563, 0.0
      %v1684 = vmax.f32 %v1564, 0.0
      %v1685 = vmax.f32 %v1565, 0.0
      %v1686 = vmax.f32 %v1566, 0.0
      %v1687 = vmax.f32 %v1567, 0.0
      %v1688 = vmax.f32 %v1568, 0.0
      %v1689 = vmax.f32 %v1569, 0.0
      %v1690 = vmax.f32 %v1570, 0.0
      %v1691 = vmax.f32 %v1571, 0.0
      %v1692 = vmax.f32 %v1572, 0.0
      %v1693 = vmax.f32 %v1573, 0.0
      %v1694 = vmax.f32 %v1574, 0.0
      %v1695 = vmax.f32 %v1575, 0.0
      %v1696 = vmax.f32 %v1576, 0.0
      %v1697 = vmax.f32 %v1577, 0.0
      %v1698 = vmax.f32 %v1578, 0.0
      %v1699 = vmax.f32 %v1579, 0.0
      %v1700 = vmax.f32 %v1580, 0.0
      %v1701 = vmax.f32 %v1581, 0.0
      %v1702 = vmax.f32 %v1582, 0.0
      %v1703 = vmax.f32 %v1583, 0.0
      %v1704 = vmax.f32 %v1584, 0.0
      %v1705 = vmax.f32 %v1585, 0.0
      %v1706 = vmax.f32 %v1586, 0.0
      %v1707 = vmax.f32 %v1587, 0.0
      %v1708 = vmax.f32 %v1588, 0.0
      %v1709 = vmax.f32 %v1589, 0.0
      %v1710 = vmax.f32 %v1590, 0.0
      %v1711 = vmax.f32 %v1591, 0.0
      %v1712 = vmax.f32 %v1592, 0.0
      %v1713 = vmax.f32 %v1593, 0.0
      %v1714 = vmax.f32 %v1594, 0.0
      %v1715 = vmax.f32 %v1595, 0.0
      %v1716 = vmax.f32 %v1596, 0.0
      %v1717 = vmax.f32 %v1597, 0.0
      %v1718 = vmax.f32 %v1598, 0.0
      %v1719 = vmax.f32 %v1599, 0.0
      %v1720 = vmax.f32 %v1600, 0.0
      %v1721 = vmax.f32 %v1601, 0.0
      %v1722 = vmax.f32 %v1602, 0.0
      %v1723 = vmax.f32 %v1603, 0.0
      %v1724 = vmax.f32 %v1604, 0.0
      %v1725 = vmax.f32 %v1605, 0.0
      %v1726 = vmax.f32 %v1606, 0.0
      %v1727 = vmax.f32 %v1607, 0.0
      %v1728 = vmax.f32 %v1608, 0.0
      %v1729 = vmax.f32 %v1609, 0.0
      %v1730 = vmax.f32 %v1610, 0.0
      %v1731 = vmax.f32 %v1611, 0.0
      %v1732 = vmax.f32 %v1612, 0.0
      %v1733 = vmax.f32 %v1613, 0.0
      %v1734 = vmax.f32 %v1614, 0.0
      %v1735 = vmax.f32 %v1615, 0.0
      %v1736 = vmax.f32 %v1616, 0.0
      %v1737 = vmax.f32 %v1617, 0.0
      %v1738 = vmax.f32 %v1618, 0.0
      %v1739 = vmax.f32 %v1619, 0.0
      %v1740 = vmax.f32 %v1620, 0.0
      %v1741 = vmax.f32 %v1621, 0.0
      %v1742 = vmax.f32 %v1622, 0.0
      %v1743 = vmax.f32 %v1623, 0.0
      %v1744 = vmax.f32 %v1624, 0.0
      %v1745 = vmax.f32 %v1625, 0.0
      %v1746 = vmax.f32 %v1626, 0.0
      %v1747 = vmax.f32 %v1627, 0.0
      %v1748 = vmax.f32 %v1628, 0.0
      %v1749 = vmax.f32 %v1629, 0.0
      %v1750 = vmax.f32 %v1630, 0.0
      %v1751 = vmax.f32 %v1631, 0.0
      %v1752 = vmax.f32 %v1632, 0.0
      %v1753 = vmax.f32 %v1633, 0.0
      %v1754 = vmax.f32 %v1634, 0.0
      %v1755 = vmax.f32 %v1635, 0.0
      %v1756 = vmax.f32 %v1636, 0.0
      %v1757 = vmax.f32 %v1637, 0.0
      %v1758 = vmax.f32 %v1638, 0.0
      %v1759 = vmax.f32 %v1639, 0.0
      %v1760 = vmax.f32 %v1640, 0.0
      %v1761 = vmax.f32 %v1641, 0.0
      %v1762 = vmax.f32 %v1642, 0.0
      %v1763 = vmax.f32 %v1643, 0.0
      %v1764 = vmax.f32 %v1644, 0.0
      %v1765 = vmax.f32 %v1645, 0.0
      %v1766 = vmax.f32 %v1646, 0.0
      %v1767 = vmax.f32 %v1647, 0.0
      %v1768 = vpack.c.bf16 %v1649, %v1648
      %v1769 = vpack.c.bf16 %v1651, %v1650
      %v1770 = vpack.c.bf16 %v1653, %v1652
      %v1771 = vpack.c.bf16 %v1655, %v1654
      %v1772 = vpack.c.bf16 %v1657, %v1656
      %v1773 = vpack.c.bf16 %v1659, %v1658
      %v1774 = vpack.c.bf16 %v1661, %v1660
      %v1775 = vpack.c.bf16 %v1663, %v1662
      %v1776 = vpack.c.bf16 %v1665, %v1664
      %v1777 = vpack.c.bf16 %v1667, %v1666
      %v1778 = vpack.c.bf16 %v1669, %v1668
      %v1779 = vpack.c.bf16 %v1671, %v1670
      %v1780 = vpack.c.bf16 %v1673, %v1672
      %v1781 = vpack.c.bf16 %v1675, %v1674
      %v1782 = vpack.c.bf16 %v1677, %v1676
      %v1783 = vpack.c.bf16 %v1679, %v1678
      %v1784 = vpack.c.bf16 %v1681, %v1680
      %v1785 = vpack.c.bf16 %v1683, %v1682
      %v1786 = vpack.c.bf16 %v1685, %v1684
      %v1787 = vpack.c.bf16 %v1687, %v1686
      %v1788 = vpack.c.bf16 %v1689, %v1688
      %v1789 = vpack.c.bf16 %v1691, %v1690
      %v1790 = vpack.c.bf16 %v1693, %v1692
      %v1791 = vpack.c.bf16 %v1695, %v1694
      %v1792 = vpack.c.bf16 %v1697, %v1696
      %v1793 = vpack.c.bf16 %v1699, %v1698
      %v1794 = vpack.c.bf16 %v1701, %v1700
      %v1795 = vpack.c.bf16 %v1703, %v1702
      %v1796 = vpack.c.bf16 %v1705, %v1704
      %v1797 = vpack.c.bf16 %v1707, %v1706
      %v1798 = vpack.c.bf16 %v1709, %v1708
      %v1799 = vpack.c.bf16 %v1711, %v1710
      %v1800 = vpack.c.bf16 %v1713, %v1712
      %v1801 = vpack.c.bf16 %v1715, %v1714
      %v1802 = vpack.c.bf16 %v1717, %v1716
      %v1803 = vpack.c.bf16 %v1719, %v1718
      %v1804 = vpack.c.bf16 %v1721, %v1720
      %v1805 = vpack.c.bf16 %v1723, %v1722
      %v1806 = vpack.c.bf16 %v1725, %v1724
      %v1807 = vpack.c.bf16 %v1727, %v1726
      %v1808 = vpack.c.bf16 %v1729, %v1728
      %v1809 = vpack.c.bf16 %v1731, %v1730
      %v1810 = vpack.c.bf16 %v1733, %v1732
      %v1811 = vpack.c.bf16 %v1735, %v1734
      %v1812 = vpack.c.bf16 %v1737, %v1736
      %v1813 = vpack.c.bf16 %v1739, %v1738
      %v1814 = vpack.c.bf16 %v1741, %v1740
      %v1815 = vpack.c.bf16 %v1743, %v1742
      %v1816 = vpack.c.bf16 %v1745, %v1744
      %v1817 = vpack.c.bf16 %v1747, %v1746
      %v1818 = vpack.c.bf16 %v1749, %v1748
      %v1819 = vpack.c.bf16 %v1751, %v1750
      %v1820 = vpack.c.bf16 %v1753, %v1752
      %v1821 = vpack.c.bf16 %v1755, %v1754
      %v1822 = vpack.c.bf16 %v1757, %v1756
      %v1823 = vpack.c.bf16 %v1759, %v1758
      %v1824 = vpack.c.bf16 %v1761, %v1760
      %v1825 = vpack.c.bf16 %v1763, %v1762
      %v1826 = vpack.c.bf16 %v1765, %v1764
      %v1827 = vpack.c.bf16 %v1767, %v1766
      %v1888 = vunpack.c.l.b16 %v1768
      %v1889 = vunpack.c.h.b16 %v1768
      %v1890 = vunpack.c.l.b16 %v1769
      %v1891 = vunpack.c.h.b16 %v1769
      %v1892 = vunpack.c.l.b16 %v1770
      %v1893 = vunpack.c.h.b16 %v1770
      %v1894 = vunpack.c.l.b16 %v1771
      %v1895 = vunpack.c.h.b16 %v1771
      %v1896 = vunpack.c.l.b16 %v1772
      %v1897 = vunpack.c.h.b16 %v1772
      %v1898 = vunpack.c.l.b16 %v1773
      %v1899 = vunpack.c.h.b16 %v1773
      %v1900 = vunpack.c.l.b16 %v1774
      %v1901 = vunpack.c.h.b16 %v1774
      %v1902 = vunpack.c.l.b16 %v1775
      %v1903 = vunpack.c.h.b16 %v1775
      %v1904 = vunpack.c.l.b16 %v1776
      %v1905 = vunpack.c.h.b16 %v1776
      %v1906 = vunpack.c.l.b16 %v1777
      %v1907 = vunpack.c.h.b16 %v1777
      %v1908 = vunpack.c.l.b16 %v1778
      %v1909 = vunpack.c.h.b16 %v1778
      %v1910 = vunpack.c.l.b16 %v1779
      %v1911 = vunpack.c.h.b16 %v1779
      %v1912 = vunpack.c.l.b16 %v1780
      %v1913 = vunpack.c.h.b16 %v1780
      %v1914 = vunpack.c.l.b16 %v1781
      %v1915 = vunpack.c.h.b16 %v1781
      %v1916 = vunpack.c.l.b16 %v1782
      %v1917 = vunpack.c.h.b16 %v1782
      %v1918 = vunpack.c.l.b16 %v1783
      %v1919 = vunpack.c.h.b16 %v1783
      %v1920 = vunpack.c.l.b16 %v1784
      %v1921 = vunpack.c.h.b16 %v1784
      %v1922 = vunpack.c.l.b16 %v1785
      %v1923 = vunpack.c.h.b16 %v1785
      %v1924 = vunpack.c.l.b16 %v1786
      %v1925 = vunpack.c.h.b16 %v1786
      %v1926 = vunpack.c.l.b16 %v1787
      %v1927 = vunpack.c.h.b16 %v1787
      %v1928 = vunpack.c.l.b16 %v1788
      %v1929 = vunpack.c.h.b16 %v1788
      %v1930 = vunpack.c.l.b16 %v1789
      %v1931 = vunpack.c.h.b16 %v1789
      %v1932 = vunpack.c.l.b16 %v1790
      %v1933 = vunpack.c.h.b16 %v1790
      %v1934 = vunpack.c.l.b16 %v1791
      %v1935 = vunpack.c.h.b16 %v1791
      %v1936 = vunpack.c.l.b16 %v1792
      %v1937 = vunpack.c.h.b16 %v1792
      %v1938 = vunpack.c.l.b16 %v1793
      %v1939 = vunpack.c.h.b16 %v1793
      %v1940 = vunpack.c.l.b16 %v1794
      %v1941 = vunpack.c.h.b16 %v1794
      %v1942 = vunpack.c.l.b16 %v1795
      %v1943 = vunpack.c.h.b16 %v1795
      %v1944 = vunpack.c.l.b16 %v1796
      %v1945 = vunpack.c.h.b16 %v1796
      %v1946 = vunpack.c.l.b16 %v1797
      %v1947 = vunpack.c.h.b16 %v1797
      %v1948 = vunpack.c.l.b16 %v1798
      %v1949 = vunpack.c.h.b16 %v1798
      %v1950 = vunpack.c.l.b16 %v1799
      %v1951 = vunpack.c.h.b16 %v1799
      %v1952 = vunpack.c.l.b16 %v1800
      %v1953 = vunpack.c.h.b16 %v1800
      %v1954 = vunpack.c.l.b16 %v1801
      %v1955 = vunpack.c.h.b16 %v1801
      %v1956 = vunpack.c.l.b16 %v1802
      %v1957 = vunpack.c.h.b16 %v1802
      %v1958 = vunpack.c.l.b16 %v1803
      %v1959 = vunpack.c.h.b16 %v1803
      %v1960 = vunpack.c.l.b16 %v1804
      %v1961 = vunpack.c.h.b16 %v1804
      %v1962 = vunpack.c.l.b16 %v1805
      %v1963 = vunpack.c.h.b16 %v1805
      %v1964 = vunpack.c.l.b16 %v1806
      %v1965 = vunpack.c.h.b16 %v1806
      %v1966 = vunpack.c.l.b16 %v1807
      %v1967 = vunpack.c.h.b16 %v1807
      %v1968 = vunpack.c.l.b16 %v1808
      %v1969 = vunpack.c.h.b16 %v1808
      %v1970 = vunpack.c.l.b16 %v1809
      %v1971 = vunpack.c.h.b16 %v1809
      %v1972 = vunpack.c.l.b16 %v1810
      %v1973 = vunpack.c.h.b16 %v1810
      %v1974 = vunpack.c.l.b16 %v1811
      %v1975 = vunpack.c.h.b16 %v1811
      %v1976 = vunpack.c.l.b16 %v1812
      %v1977 = vunpack.c.h.b16 %v1812
      %v1978 = vunpack.c.l.b16 %v1813
      %v1979 = vunpack.c.h.b16 %v1813
      %v1980 = vunpack.c.l.b16 %v1814
      %v1981 = vunpack.c.h.b16 %v1814
      %v1982 = vunpack.c.l.b16 %v1815
      %v1983 = vunpack.c.h.b16 %v1815
      %v1984 = vunpack.c.l.b16 %v1816
      %v1985 = vunpack.c.h.b16 %v1816
      %v1986 = vunpack.c.l.b16 %v1817
      %v1987 = vunpack.c.h.b16 %v1817
      %v1988 = vunpack.c.l.b16 %v1818
      %v1989 = vunpack.c.h.b16 %v1818
      %v1990 = vunpack.c.l.b16 %v1819
      %v1991 = vunpack.c.h.b16 %v1819
      %v1992 = vunpack.c.l.b16 %v1820
      %v1993 = vunpack.c.h.b16 %v1820
      %v1994 = vunpack.c.l.b16 %v1821
      %v1995 = vunpack.c.h.b16 %v1821
      %v1996 = vunpack.c.l.b16 %v1822
      %v1997 = vunpack.c.h.b16 %v1822
      %v1998 = vunpack.c.l.b16 %v1823
      %v1999 = vunpack.c.h.b16 %v1823
      %v2000 = vunpack.c.l.b16 %v1824
      %v2001 = vunpack.c.h.b16 %v1824
      %v2002 = vunpack.c.l.b16 %v1825
      %v2003 = vunpack.c.h.b16 %v1825
      %v2004 = vunpack.c.l.b16 %v1826
      %v2005 = vunpack.c.h.b16 %v1826
      %v2006 = vunpack.c.l.b16 %v1827
      %v2007 = vunpack.c.h.b16 %v1827
      %v2008 = vpack.c.b16 %v1888, %v1888
      %v2009 = vpack.c.b16 %v1889, %v1889
      %v2010 = vpack.c.b16 %v1890, %v1890
      %v2011 = vpack.c.b16 %v1891, %v1891
      %v2012 = vpack.c.b16 %v1892, %v1892
      %v2013 = vpack.c.b16 %v1893, %v1893
      %v2014 = vpack.c.b16 %v1894, %v1894
      %v2015 = vpack.c.b16 %v1895, %v1895
      %v2016 = vpack.c.b16 %v1896, %v1896
      %v2017 = vpack.c.b16 %v1897, %v1897
      %v2018 = vpack.c.b16 %v1898, %v1898
      %v2019 = vpack.c.b16 %v1899, %v1899
      %v2020 = vpack.c.b16 %v1900, %v1900
      %v2021 = vpack.c.b16 %v1901, %v1901
      %v2022 = vpack.c.b16 %v1902, %v1902
      %v2023 = vpack.c.b16 %v1903, %v1903
      %v2024 = vpack.c.b16 %v1904, %v1904
      %v2025 = vpack.c.b16 %v1905, %v1905
      %v2026 = vpack.c.b16 %v1906, %v1906
      %v2027 = vpack.c.b16 %v1907, %v1907
      %v2028 = vpack.c.b16 %v1908, %v1908
      %v2029 = vpack.c.b16 %v1909, %v1909
      %v2030 = vpack.c.b16 %v1910, %v1910
      %v2031 = vpack.c.b16 %v1911, %v1911
      %v2032 = vpack.c.b16 %v1912, %v1912
      %v2033 = vpack.c.b16 %v1913, %v1913
      %v2034 = vpack.c.b16 %v1914, %v1914
      %v2035 = vpack.c.b16 %v1915, %v1915
      %v2036 = vpack.c.b16 %v1916, %v1916
      %v2037 = vpack.c.b16 %v1917, %v1917
      %v2038 = vpack.c.b16 %v1918, %v1918
      %v2039 = vpack.c.b16 %v1919, %v1919
      %v2040 = vpack.c.b16 %v1920, %v1920
      %v2041 = vpack.c.b16 %v1921, %v1921
      %v2042 = vpack.c.b16 %v1922, %v1922
      %v2043 = vpack.c.b16 %v1923, %v1923
      %v2044 = vpack.c.b16 %v1924, %v1924
      %v2045 = vpack.c.b16 %v1925, %v1925
      %v2046 = vpack.c.b16 %v1926, %v1926
      %v2047 = vpack.c.b16 %v1927, %v1927
      %v2048 = vpack.c.b16 %v1928, %v1928
      %v2049 = vpack.c.b16 %v1929, %v1929
      %v2050 = vpack.c.b16 %v1930, %v1930
      %v2051 = vpack.c.b16 %v1931, %v1931
      %v2052 = vpack.c.b16 %v1932, %v1932
      %v2053 = vpack.c.b16 %v1933, %v1933
      %v2054 = vpack.c.b16 %v1934, %v1934
      %v2055 = vpack.c.b16 %v1935, %v1935
      %v2056 = vpack.c.b16 %v1936, %v1936
      %v2057 = vpack.c.b16 %v1937, %v1937
      %v2058 = vpack.c.b16 %v1938, %v1938
      %v2059 = vpack.c.b16 %v1939, %v1939
      %v2060 = vpack.c.b16 %v1940, %v1940
      %v2061 = vpack.c.b16 %v1941, %v1941
      %v2062 = vpack.c.b16 %v1942, %v1942
      %v2063 = vpack.c.b16 %v1943, %v1943
      %v2064 = vpack.c.b16 %v1944, %v1944
      %v2065 = vpack.c.b16 %v1945, %v1945
      %v2066 = vpack.c.b16 %v1946, %v1946
      %v2067 = vpack.c.b16 %v1947, %v1947
      %v2068 = vpack.c.b16 %v1948, %v1948
      %v2069 = vpack.c.b16 %v1949, %v1949
      %v2070 = vpack.c.b16 %v1950, %v1950
      %v2071 = vpack.c.b16 %v1951, %v1951
      %v2072 = vpack.c.b16 %v1952, %v1952
      %v2073 = vpack.c.b16 %v1953, %v1953
      %v2074 = vpack.c.b16 %v1954, %v1954
      %v2075 = vpack.c.b16 %v1955, %v1955
      %v2076 = vpack.c.b16 %v1956, %v1956
      %v2077 = vpack.c.b16 %v1957, %v1957
      %v2078 = vpack.c.b16 %v1958, %v1958
      %v2079 = vpack.c.b16 %v1959, %v1959
      %v2080 = vpack.c.b16 %v1960, %v1960
      %v2081 = vpack.c.b16 %v1961, %v1961
      %v2082 = vpack.c.b16 %v1962, %v1962
      %v2083 = vpack.c.b16 %v1963, %v1963
      %v2084 = vpack.c.b16 %v1964, %v1964
      %v2085 = vpack.c.b16 %v1965, %v1965
      %v2086 = vpack.c.b16 %v1966, %v1966
      %v2087 = vpack.c.b16 %v1967, %v1967
      %v2088 = vpack.c.b16 %v1968, %v1968
      %v2089 = vpack.c.b16 %v1969, %v1969
      %v2090 = vpack.c.b16 %v1970, %v1970
      %v2091 = vpack.c.b16 %v1971, %v1971
      %v2092 = vpack.c.b16 %v1972, %v1972
      %v2093 = vpack.c.b16 %v1973, %v1973
      %v2094 = vpack.c.b16 %v1974, %v1974
      %v2095 = vpack.c.b16 %v1975, %v1975
      %v2096 = vpack.c.b16 %v1976, %v1976
      %v2097 = vpack.c.b16 %v1977, %v1977
      %v2098 = vpack.c.b16 %v1978, %v1978
      %v2099 = vpack.c.b16 %v1979, %v1979
      %v2100 = vpack.c.b16 %v1980, %v1980
      %v2101 = vpack.c.b16 %v1981, %v1981
      %v2102 = vpack.c.b16 %v1982, %v1982
      %v2103 = vpack.c.b16 %v1983, %v1983
      %v2104 = vpack.c.b16 %v1984, %v1984
      %v2105 = vpack.c.b16 %v1985, %v1985
      %v2106 = vpack.c.b16 %v1986, %v1986
      %v2107 = vpack.c.b16 %v1987, %v1987
      %v2108 = vpack.c.b16 %v1988, %v1988
      %v2109 = vpack.c.b16 %v1989, %v1989
      %v2110 = vpack.c.b16 %v1990, %v1990
      %v2111 = vpack.c.b16 %v1991, %v1991
      %v2112 = vpack.c.b16 %v1992, %v1992
      %v2113 = vpack.c.b16 %v1993, %v1993
      %v2114 = vpack.c.b16 %v1994, %v1994
      %v2115 = vpack.c.b16 %v1995, %v1995
      %v2116 = vpack.c.b16 %v1996, %v1996
      %v2117 = vpack.c.b16 %v1997, %v1997
      %v2118 = vpack.c.b16 %v1998, %v1998
      %v2119 = vpack.c.b16 %v1999, %v1999
      %v2120 = vpack.c.b16 %v2000, %v2000
      %v2121 = vpack.c.b16 %v2001, %v2001
      %v2122 = vpack.c.b16 %v2002, %v2002
      %v2123 = vpack.c.b16 %v2003, %v2003
      %v2124 = vpack.c.b16 %v2004, %v2004
      %v2125 = vpack.c.b16 %v2005, %v2005
      %v2126 = vpack.c.b16 %v2006, %v2006
      %v2127 = vpack.c.b16 %v2007, %v2007
      %vm2248 = vcmask 519168
      %2249 = vst.msk [vmem:[%s242] sm:$0xf] %vm2248, %v2008
      %2250 = vst.msk [vmem:[%s242 + $0x4] sm:$0xf] %vm2248, %v2009
      %2251 = vst.msk [vmem:[%s242 + $0x8] sm:$0xf] %vm2248, %v2010
      %2252 = vst.msk [vmem:[%s242 + $0xc] sm:$0xf] %vm2248, %v2011
      %2253 = vst.msk [vmem:[%s242 + $0x10] sm:$0xf] %vm2248, %v2012
      %2254 = vst.msk [vmem:[%s242 + $0x14] sm:$0xf] %vm2248, %v2013
      %2255 = vst.msk [vmem:[%s242 + $0x18] sm:$0xf] %vm2248, %v2014
      %2256 = vst.msk [vmem:[%s242 + $0x1c] sm:$0xf] %vm2248, %v2015
      %2257 = vst.msk [vmem:[%s242 + $0x20] sm:$0xf] %vm2248, %v2016
      %2258 = vst.msk [vmem:[%s242 + $0x24] sm:$0xf] %vm2248, %v2017
      %2259 = vst.msk [vmem:[%s242 + $0x28] sm:$0xf] %vm2248, %v2018
      %2260 = vst.msk [vmem:[%s242 + $0x2c] sm:$0xf] %vm2248, %v2019
      %2261 = vst.msk [vmem:[%s242 + $0x30] sm:$0xf] %vm2248, %v2020
      %2262 = vst.msk [vmem:[%s242 + $0x34] sm:$0xf] %vm2248, %v2021
      %2263 = vst.msk [vmem:[%s242 + $0x38] sm:$0xf] %vm2248, %v2022
      %2264 = vst.msk [vmem:[%s242 + $0x3c] sm:$0xf] %vm2248, %v2023
      %2265 = vst.msk [vmem:[%s242 + $0x40] sm:$0xf] %vm2248, %v2024
      %2266 = vst.msk [vmem:[%s242 + $0x44] sm:$0xf] %vm2248, %v2025
      %2267 = vst.msk [vmem:[%s242 + $0x48] sm:$0xf] %vm2248, %v2026
      %2268 = vst.msk [vmem:[%s242 + $0x4c] sm:$0xf] %vm2248, %v2027
      %2269 = vst.msk [vmem:[%s242 + $0x50] sm:$0xf] %vm2248, %v2028
      %2270 = vst.msk [vmem:[%s242 + $0x54] sm:$0xf] %vm2248, %v2029
      %2271 = vst.msk [vmem:[%s242 + $0x58] sm:$0xf] %vm2248, %v2030
      %2272 = vst.msk [vmem:[%s242 + $0x5c] sm:$0xf] %vm2248, %v2031
      %2273 = vst.msk [vmem:[%s242 + $0x60] sm:$0xf] %vm2248, %v2032
      %2274 = vst.msk [vmem:[%s242 + $0x64] sm:$0xf] %vm2248, %v2033
      %2275 = vst.msk [vmem:[%s242 + $0x68] sm:$0xf] %vm2248, %v2034
      %2276 = vst.msk [vmem:[%s242 + $0x6c] sm:$0xf] %vm2248, %v2035
      %2277 = vst.msk [vmem:[%s242 + $0x70] sm:$0xf] %vm2248, %v2036
      %2278 = vst.msk [vmem:[%s242 + $0x74] sm:$0xf] %vm2248, %v2037
      %2279 = vst.msk [vmem:[%s242 + $0x78] sm:$0xf] %vm2248, %v2038
      %2280 = vst.msk [vmem:[%s242 + $0x7c] sm:$0xf] %vm2248, %v2039
      %2281 = vst.msk [vmem:[%s242 + $0x80] sm:$0xf] %vm2248, %v2040
      %2282 = vst.msk [vmem:[%s242 + $0x84] sm:$0xf] %vm2248, %v2041
      %2283 = vst.msk [vmem:[%s242 + $0x88] sm:$0xf] %vm2248, %v2042
      %2284 = vst.msk [vmem:[%s242 + $0x8c] sm:$0xf] %vm2248, %v2043
      %2285 = vst.msk [vmem:[%s242 + $0x90] sm:$0xf] %vm2248, %v2044
      %2286 = vst.msk [vmem:[%s242 + $0x94] sm:$0xf] %vm2248, %v2045
      %2287 = vst.msk [vmem:[%s242 + $0x98] sm:$0xf] %vm2248, %v2046
      %2288 = vst.msk [vmem:[%s242 + $0x9c] sm:$0xf] %vm2248, %v2047
      %2289 = vst.msk [vmem:[%s242 + $0xa0] sm:$0xf] %vm2248, %v2048
      %2290 = vst.msk [vmem:[%s242 + $0xa4] sm:$0xf] %vm2248, %v2049
      %2291 = vst.msk [vmem:[%s242 + $0xa8] sm:$0xf] %vm2248, %v2050
      %2292 = vst.msk [vmem:[%s242 + $0xac] sm:$0xf] %vm2248, %v2051
      %2293 = vst.msk [vmem:[%s242 + $0xb0] sm:$0xf] %vm2248, %v2052
      %2294 = vst.msk [vmem:[%s242 + $0xb4] sm:$0xf] %vm2248, %v2053
      %2295 = vst.msk [vmem:[%s242 + $0xb8] sm:$0xf] %vm2248, %v2054
      %2296 = vst.msk [vmem:[%s242 + $0xbc] sm:$0xf] %vm2248, %v2055
      %2297 = vst.msk [vmem:[%s242 + $0xc0] sm:$0xf] %vm2248, %v2056
      %2298 = vst.msk [vmem:[%s242 + $0xc4] sm:$0xf] %vm2248, %v2057
      %2299 = vst.msk [vmem:[%s242 + $0xc8] sm:$0xf] %vm2248, %v2058
      %2300 = vst.msk [vmem:[%s242 + $0xcc] sm:$0xf] %vm2248, %v2059
      %2301 = vst.msk [vmem:[%s242 + $0xd0] sm:$0xf] %vm2248, %v2060
      %2302 = vst.msk [vmem:[%s242 + $0xd4] sm:$0xf] %vm2248, %v2061
      %2303 = vst.msk [vmem:[%s242 + $0xd8] sm:$0xf] %vm2248, %v2062
      %2304 = vst.msk [vmem:[%s242 + $0xdc] sm:$0xf] %vm2248, %v2063
      %2305 = vst.msk [vmem:[%s242 + $0xe0] sm:$0xf] %vm2248, %v2064
      %2306 = vst.msk [vmem:[%s242 + $0xe4] sm:$0xf] %vm2248, %v2065
      %2307 = vst.msk [vmem:[%s242 + $0xe8] sm:$0xf] %vm2248, %v2066
      %2308 = vst.msk [vmem:[%s242 + $0xec] sm:$0xf] %vm2248, %v2067
      %2309 = vst.msk [vmem:[%s242 + $0xf0] sm:$0xf] %vm2248, %v2068
      %2310 = vst.msk [vmem:[%s242 + $0xf4] sm:$0xf] %vm2248, %v2069
      %2311 = vst.msk [vmem:[%s242 + $0xf8] sm:$0xf] %vm2248, %v2070
      %2312 = vst.msk [vmem:[%s242 + $0xfc] sm:$0xf] %vm2248, %v2071
      %2313 = vst.msk [vmem:[%s242 + $0x100] sm:$0xf] %vm2248, %v2072
      %2314 = vst.msk [vmem:[%s242 + $0x104] sm:$0xf] %vm2248, %v2073
      %2315 = vst.msk [vmem:[%s242 + $0x108] sm:$0xf] %vm2248, %v2074
      %2316 = vst.msk [vmem:[%s242 + $0x10c] sm:$0xf] %vm2248, %v2075
      %2317 = vst.msk [vmem:[%s242 + $0x110] sm:$0xf] %vm2248, %v2076
      %2318 = vst.msk [vmem:[%s242 + $0x114] sm:$0xf] %vm2248, %v2077
      %2319 = vst.msk [vmem:[%s242 + $0x118] sm:$0xf] %vm2248, %v2078
      %2320 = vst.msk [vmem:[%s242 + $0x11c] sm:$0xf] %vm2248, %v2079
      %2321 = vst.msk [vmem:[%s242 + $0x120] sm:$0xf] %vm2248, %v2080
      %2322 = vst.msk [vmem:[%s242 + $0x124] sm:$0xf] %vm2248, %v2081
      %2323 = vst.msk [vmem:[%s242 + $0x128] sm:$0xf] %vm2248, %v2082
      %2324 = vst.msk [vmem:[%s242 + $0x12c] sm:$0xf] %vm2248, %v2083
      %2325 = vst.msk [vmem:[%s242 + $0x130] sm:$0xf] %vm2248, %v2084
      %2326 = vst.msk [vmem:[%s242 + $0x134] sm:$0xf] %vm2248, %v2085
      %2327 = vst.msk [vmem:[%s242 + $0x138] sm:$0xf] %vm2248, %v2086
      %2328 = vst.msk [vmem:[%s242 + $0x13c] sm:$0xf] %vm2248, %v2087
      %2329 = vst.msk [vmem:[%s242 + $0x140] sm:$0xf] %vm2248, %v2088
      %2330 = vst.msk [vmem:[%s242 + $0x144] sm:$0xf] %vm2248, %v2089
      %2331 = vst.msk [vmem:[%s242 + $0x148] sm:$0xf] %vm2248, %v2090
      %2332 = vst.msk [vmem:[%s242 + $0x14c] sm:$0xf] %vm2248, %v2091
      %2333 = vst.msk [vmem:[%s242 + $0x150] sm:$0xf] %vm2248, %v2092
      %2334 = vst.msk [vmem:[%s242 + $0x154] sm:$0xf] %vm2248, %v2093
      %2335 = vst.msk [vmem:[%s242 + $0x158] sm:$0xf] %vm2248, %v2094
      %2336 = vst.msk [vmem:[%s242 + $0x15c] sm:$0xf] %vm2248, %v2095
      %2337 = vst.msk [vmem:[%s242 + $0x160] sm:$0xf] %vm2248, %v2096
      %2338 = vst.msk [vmem:[%s242 + $0x164] sm:$0xf] %vm2248, %v2097
      %2339 = vst.msk [vmem:[%s242 + $0x168] sm:$0xf] %vm2248, %v2098
      %2340 = vst.msk [vmem:[%s242 + $0x16c] sm:$0xf] %vm2248, %v2099
      %2341 = vst.msk [vmem:[%s242 + $0x170] sm:$0xf] %vm2248, %v2100
      %2342 = vst.msk [vmem:[%s242 + $0x174] sm:$0xf] %vm2248, %v2101
      %2343 = vst.msk [vmem:[%s242 + $0x178] sm:$0xf] %vm2248, %v2102
      %2344 = vst.msk [vmem:[%s242 + $0x17c] sm:$0xf] %vm2248, %v2103
      %2345 = vst.msk [vmem:[%s242 + $0x180] sm:$0xf] %vm2248, %v2104
      %2346 = vst.msk [vmem:[%s242 + $0x184] sm:$0xf] %vm2248, %v2105
      %2347 = vst.msk [vmem:[%s242 + $0x188] sm:$0xf] %vm2248, %v2106
      %2348 = vst.msk [vmem:[%s242 + $0x18c] sm:$0xf] %vm2248, %v2107
      %2349 = vst.msk [vmem:[%s242 + $0x190] sm:$0xf] %vm2248, %v2108
      %2350 = vst.msk [vmem:[%s242 + $0x194] sm:$0xf] %vm2248, %v2109
      %2351 = vst.msk [vmem:[%s242 + $0x198] sm:$0xf] %vm2248, %v2110
      %2352 = vst.msk [vmem:[%s242 + $0x19c] sm:$0xf] %vm2248, %v2111
      %2353 = vst.msk [vmem:[%s242 + $0x1a0] sm:$0xf] %vm2248, %v2112
      %2354 = vst.msk [vmem:[%s242 + $0x1a4] sm:$0xf] %vm2248, %v2113
      %2355 = vst.msk [vmem:[%s242 + $0x1a8] sm:$0xf] %vm2248, %v2114
      %2356 = vst.msk [vmem:[%s242 + $0x1ac] sm:$0xf] %vm2248, %v2115
      %2357 = vst.msk [vmem:[%s242 + $0x1b0] sm:$0xf] %vm2248, %v2116
      %2358 = vst.msk [vmem:[%s242 + $0x1b4] sm:$0xf] %vm2248, %v2117
      %2359 = vst.msk [vmem:[%s242 + $0x1b8] sm:$0xf] %vm2248, %v2118
      %2360 = vst.msk [vmem:[%s242 + $0x1bc] sm:$0xf] %vm2248, %v2119
      %2361 = vst.msk [vmem:[%s242 + $0x1c0] sm:$0xf] %vm2248, %v2120
      %2362 = vst.msk [vmem:[%s242 + $0x1c4] sm:$0xf] %vm2248, %v2121
      %2363 = vst.msk [vmem:[%s242 + $0x1c8] sm:$0xf] %vm2248, %v2122
      %2364 = vst.msk [vmem:[%s242 + $0x1cc] sm:$0xf] %vm2248, %v2123
      %2365 = vst.msk [vmem:[%s242 + $0x1d0] sm:$0xf] %vm2248, %v2124
      %2366 = vst.msk [vmem:[%s242 + $0x1d4] sm:$0xf] %vm2248, %v2125
      %2367 = vst.msk [vmem:[%s242 + $0x1d8] sm:$0xf] %vm2248, %v2126
      %2368 = vst.msk [vmem:[%s242 + $0x1dc] sm:$0xf] %vm2248, %v2127
      %p2369 = scmp.lt.s32.totalorder %s15, 1
      %s2370 = scalar_select %p2369, %s15, 1
      %s2371 = smul.addr %s2370, 120
      %s2372 = smul.addr %s2371, 4
      %s2373 = scalar_lea.vmem %s4, %s2372
      // Predicated region
      $region37: #{model_forward.4} parent=35 // pred_check
        %p2374 = pneg %p137
      $region38: #{model_forward.4} parent=35 // pred_check_branch
        %2376 = sbr.rel (%p2374) target = $region40
      $region39: #{model_forward.4} parent=35 // pred_region
        _
      $region40: #{model_forward.4} parent=35 // pred_fallthru
        _
    $region36: #{model_forward.4} parent=5 // pred_fallthru
      _
    %p2377 = scmp.le.s32.totalorder 2, %s10
    // Predicated region
    $region41: #{model_forward.4} parent=5 // pred_check
      %p2378 = pneg %p2377
    $region42: #{model_forward.4} parent=5 // pred_check_branch
      %2380 = sbr.rel (%p2378) target = $region44
    $region43: #{model_forward.4} parent=5 // pred_region
      %s2381 = ssub.s32 %s10, 2
      // Predicated region
      $region45: #{model_forward.4} parent=43 // pred_check
        %p2382 = pneg %p143
      $region46: #{model_forward.4} parent=43 // pred_check_branch
        %2384 = sbr.rel (%p2382) target = $region48
      $region47: #{model_forward.4} parent=43 // pred_region
        %p2385 = scmp.lt.s32.totalorder %s16, 1
        %s2386 = scalar_select %p2385, %s16, 1
        %s2387 = smul.addr %s2386, 120
        %s2388 = smul.addr %s2387, 4
        %s2389 = scalar_lea.vmem %s4, %s2388
      $region48: #{model_forward.4} parent=43 // pred_fallthru
        _
    $region44: #{model_forward.4} parent=5 // pred_fallthru
      _
  $region6: #{model_forward.4} parent=0 // loop_footer
    %s14 = sadd.s32 1, %s10
  $region7: #{model_forward.4} parent=0 // loop_footer_branch
    %9 = sbr.rel target = $region3
  $region8: #{model_forward.4} parent=0 // loop_exit
    _

// kernel: model_forward.5
$region0: #{model_forward.5}
  #allocation0 [shape = 'u32[]', space=smem, size = 0x4, offset = 0x4, fixed_abs, tag = 'smem constant byte address 0x4 - core index']
  #allocation1 [shape = 'u32[144,128]{1,0:T(1,128)}', space=vmem, size = 0x12000, scoped, tag = 'internal scratch']
  %s0 = inlined_call_operand.vmem [shape: bf16[2,240,256], index: 0, kind: input, shape index: {}]
  %s1 = inlined_call_operand.vmem [shape: bf16[2,256,64], index: 1, kind: input, shape index: {}]
  %s2 = inlined_call_operand.vmem [shape: f32[2,1,64], index: 2, kind: input, shape index: {}]
  %s3 = inlined_call_operand.vmem [shape: f32[2,1,64], index: 3, kind: input, shape index: {}]
  %s4 = inlined_call_operand.vmem [shape: bf16[2,240,64], index: 4, kind: output, shape index: {}]
  %s5 = sld [smem:[#allocation0]]
  $region49: #{model_forward.5} parent=0
    _
  %s7 = ssub.s32 1, %s5
  %s8 = scalar_select 0, %s7, %s5
  loop: start=0, step=1, limit=4
  $region2: #{model_forward.5} parent=0 // loop_pre_header
    _
  $region3: #{model_forward.5} parent=0 // loop_header
    %s10 = sphi 0, %s14
    %p11 = scmp.ge.s32.totalorder %s10, 4
    %s20 = sphi 0, %s22
    %s23 = sphi 0, %s20
    %s24 = sphi 0, %s23
    %s40 = sphi 0, %s24
    %s46 = sphi 0, %s48
    %s49 = sphi 0, %s46
    %s50 = sphi 0, %s49
    %s66 = sphi 0, %s50
    %s72 = sphi 0, %s74
    %s75 = sphi 0, %s72
    %s76 = sphi 0, %s75
    %s92 = sphi 0, %s76
    %s98 = sphi 0, %s100
    %s101 = sphi 0, %s98
    %s102 = sphi 0, %s101
    %s118 = sphi 0, %s102
    %s124 = sphi 0, %s126
    %s127 = sphi 0, %s124
    %s128 = sphi 0, %s127
    %s144 = sphi 0, %s128
  $region4: #{model_forward.5} parent=0 // loop_header_branch
    %13 = sbr.rel (%p11) target = $region8
  $region5: #{model_forward.5} parent=0 // loop_body
    %s15 = ssub.s32 %s10, 1
    %s16 = ssub.s32 %s10, 2
    %s17 = sadd.s32 %s10, 1
    %s18 = ssub.s32 %s10, %s17
    %p19 = scmp.eq.s32.totalorder %s18, 0
    %s21 = sadd.s32 %s20, 1
    %s22 = scalar_select %p19, %s20, %s21
    %p25 = pneg %p19
    %p26 = scmp.eq.s32.totalorder %s10, 1
    %p27 = por %p25, %p26
    %p28 = scmp.ne.s32.totalorder %s20, %s23
    %p29 = scmp.eq.s32.totalorder %s10, 0
    %p30 = por %p28, %p29
    %p31 = scmp.ne.s32.totalorder %s20, %s23
    %p32 = scmp.eq.s32.totalorder %s15, 1
    %p33 = por %p31, %p32
    %p34 = scmp.ne.s32.totalorder %s23, %s24
    %p35 = scmp.eq.s32.totalorder %s15, 0
    %p36 = por %p34, %p35
    %p37 = scmp.ne.s32.totalorder %s23, %s24
    %p38 = scmp.eq.s32.totalorder %s16, 1
    %p39 = por %p37, %p38
    %p41 = scmp.ne.s32.totalorder %s24, %s40
    %p42 = scmp.eq.s32.totalorder %s16, 0
    %p43 = por %p41, %p42
    %s44 = ssub.s32 %s10, %s17
    %p45 = scmp.eq.s32.totalorder %s44, 0
    %s47 = sadd.s32 %s46, 1
    %s48 = scalar_select %p45, %s46, %s47
    %p51 = pneg %p45
    %p52 = scmp.eq.s32.totalorder %s10, 1
    %p53 = por %p51, %p52
    %p54 = scmp.ne.s32.totalorder %s46, %s49
    %p55 = scmp.eq.s32.totalorder %s10, 0
    %p56 = por %p54, %p55
    %p57 = scmp.ne.s32.totalorder %s46, %s49
    %p58 = scmp.eq.s32.totalorder %s15, 1
    %p59 = por %p57, %p58
    %p60 = scmp.ne.s32.totalorder %s49, %s50
    %p61 = scmp.eq.s32.totalorder %s15, 0
    %p62 = por %p60, %p61
    %p63 = scmp.ne.s32.totalorder %s49, %s50
    %p64 = scmp.eq.s32.totalorder %s16, 1
    %p65 = por %p63, %p64
    %p67 = scmp.ne.s32.totalorder %s50, %s66
    %p68 = scmp.eq.s32.totalorder %s16, 0
    %p69 = por %p67, %p68
    %s70 = ssub.s32 %s10, %s17
    %p71 = scmp.eq.s32.totalorder %s70, 0
    %s73 = sadd.s32 %s72, 1
    %s74 = scalar_select %p71, %s72, %s73
    %p77 = pneg %p71
    %p78 = scmp.eq.s32.totalorder %s10, 1
    %p79 = por %p77, %p78
    %p80 = scmp.ne.s32.totalorder %s72, %s75
    %p81 = scmp.eq.s32.totalorder %s10, 0
    %p82 = por %p80, %p81
    %p83 = scmp.ne.s32.totalorder %s72, %s75
    %p84 = scmp.eq.s32.totalorder %s15, 1
    %p85 = por %p83, %p84
    %p86 = scmp.ne.s32.totalorder %s75, %s76
    %p87 = scmp.eq.s32.totalorder %s15, 0
    %p88 = por %p86, %p87
    %p89 = scmp.ne.s32.totalorder %s75, %s76
    %p90 = scmp.eq.s32.totalorder %s16, 1
    %p91 = por %p89, %p90
    %p93 = scmp.ne.s32.totalorder %s76, %s92
    %p94 = scmp.eq.s32.totalorder %s16, 0
    %p95 = por %p93, %p94
    %s96 = ssub.s32 %s10, %s17
    %p97 = scmp.eq.s32.totalorder %s96, 0
    %s99 = sadd.s32 %s98, 1
    %s100 = scalar_select %p97, %s98, %s99
    %p103 = pneg %p97
    %p104 = scmp.eq.s32.totalorder %s10, 1
    %p105 = por %p103, %p104
    %p106 = scmp.ne.s32.totalorder %s98, %s101
    %p107 = scmp.eq.s32.totalorder %s10, 0
    %p108 = por %p106, %p107
    %p109 = scmp.ne.s32.totalorder %s98, %s101
    %p110 = scmp.eq.s32.totalorder %s15, 1
    %p111 = por %p109, %p110
    %p112 = scmp.ne.s32.totalorder %s101, %s102
    %p113 = scmp.eq.s32.totalorder %s15, 0
    %p114 = por %p112, %p113
    %p115 = scmp.ne.s32.totalorder %s101, %s102
    %p116 = scmp.eq.s32.totalorder %s16, 1
    %p117 = por %p115, %p116
    %p119 = scmp.ne.s32.totalorder %s102, %s118
    %p120 = scmp.eq.s32.totalorder %s16, 0
    %p121 = por %p119, %p120
    %s122 = ssub.s32 %s10, %s17
    %p123 = scmp.eq.s32.totalorder %s122, 0
    %s125 = sadd.s32 %s124, 1
    %s126 = scalar_select %p123, %s124, %s125
    %p129 = pneg %p123
    %p130 = scmp.eq.s32.totalorder %s10, 1
    %p131 = por %p129, %p130
    %p132 = scmp.ne.s32.totalorder %s124, %s127
    %p133 = scmp.eq.s32.totalorder %s10, 0
    %p134 = por %p132, %p133
    %p135 = scmp.ne.s32.totalorder %s124, %s127
    %p136 = scmp.eq.s32.totalorder %s15, 1
    %p137 = por %p135, %p136
    %p138 = scmp.ne.s32.totalorder %s127, %s128
    %p139 = scmp.eq.s32.totalorder %s15, 0
    %p140 = por %p138, %p139
    %p141 = scmp.ne.s32.totalorder %s127, %s128
    %p142 = scmp.eq.s32.totalorder %s16, 1
    %p143 = por %p141, %p142
    %p145 = scmp.ne.s32.totalorder %s128, %s144
    %p146 = scmp.eq.s32.totalorder %s16, 0
    %p147 = por %p145, %p146
    %p148 = scmp.le.s32.totalorder 1, %s10
    %p149 = scmp.lt.s32.totalorder %s10, 3
    %p150 = pnand %p148, %p149
    %p151 = pneg %p150
    // Predicated region
    $region9: #{model_forward.5} parent=5 // pred_check
      _
    $region10: #{model_forward.5} parent=5 // pred_check_branch
      %153 = sbr.rel (%p150) target = $region12
    $region11: #{model_forward.5} parent=5 // pred_region
      %s154 = ssub.s32 %s10, 1
    $region12: #{model_forward.5} parent=5 // pred_fallthru
      _
    %p155 = scmp.lt.s32.totalorder %s10, 2
    // Predicated region
    $region13: #{model_forward.5} parent=5 // pred_check
      %p156 = pneg %p155
    $region14: #{model_forward.5} parent=5 // pred_check_branch
      %158 = sbr.rel (%p156) target = $region16
    $region15: #{model_forward.5} parent=5 // pred_region
      // Predicated region
      $region17: #{model_forward.5} parent=15 // pred_check
        %p159 = pneg %p30
      $region18: #{model_forward.5} parent=15 // pred_check_branch
        %161 = sbr.rel (%p159) target = $region20
      $region19: #{model_forward.5} parent=15 // pred_region
        %p162 = scmp.lt.s32.totalorder %s10, 1
        %s163 = scalar_select %p162, %s10, 1
        %s164 = smul.addr %s163, 60
        %s165 = smul.addr %s164, 4
        %s166 = scalar_lea.vmem %s0, %s165
      $region20: #{model_forward.5} parent=15 // pred_fallthru
        _
      // Predicated region
      $region21: #{model_forward.5} parent=15 // pred_check
        %p167 = pneg %p56
      $region22: #{model_forward.5} parent=15 // pred_check_branch
        %169 = sbr.rel (%p167) target = $region24
      $region23: #{model_forward.5} parent=15 // pred_region
        %p170 = scmp.lt.s32.totalorder %s10, 1
        %s171 = scalar_select %p170, %s10, 1
        %s172 = smul.addr %s171, 32
        %s173 = smul.addr %s172, 4
        %s174 = scalar_lea.vmem %s1, %s173
      $region24: #{model_forward.5} parent=15 // pred_fallthru
        _
      // Predicated region
      $region25: #{model_forward.5} parent=15 // pred_check
        %p175 = pneg %p82
      $region26: #{model_forward.5} parent=15 // pred_check_branch
        %177 = sbr.rel (%p175) target = $region28
      $region27: #{model_forward.5} parent=15 // pred_region
        %p178 = scmp.lt.s32.totalorder %s10, 1
        %s179 = scalar_select %p178, %s10, 1
        %s180 = scalar_lea.vmem %s2, %s179
      $region28: #{model_forward.5} parent=15 // pred_fallthru
        _
      // Predicated region
      $region29: #{model_forward.5} parent=15 // pred_check
        %p181 = pneg %p108
      $region30: #{model_forward.5} parent=15 // pred_check_branch
        %183 = sbr.rel (%p181) target = $region32
      $region31: #{model_forward.5} parent=15 // pred_region
        %p184 = scmp.lt.s32.totalorder %s10, 1
        %s185 = scalar_select %p184, %s10, 1
        %s186 = scalar_lea.vmem %s3, %s185
      $region32: #{model_forward.5} parent=15 // pred_fallthru
        _
    $region16: #{model_forward.5} parent=5 // pred_fallthru
      _
    %p187 = scmp.le.s32.totalorder 1, %s10
    %p188 = scmp.lt.s32.totalorder %s10, 3
    %p189 = pnand %p187, %p188
    %p190 = pneg %p189
    // Predicated region
    $region33: #{model_forward.5} parent=5 // pred_check
      _
    $region34: #{model_forward.5} parent=5 // pred_check_branch
      %192 = sbr.rel (%p189) target = $region36
    $region35: #{model_forward.5} parent=5 // pred_region
      %s193 = ssub.s32 %s10, 1
      %p194 = scmp.lt.s32.totalorder %s15, 1
      %s195 = scalar_select %p194, %s15, 1
      %s196 = smul.addr %s195, 60
      %s197 = smul.addr %s196, 4
      %s198 = scalar_lea.vmem %s0, %s197
      %p199 = pneg %p36
      %p200 = pneg %p33
      %p201 = scmp.lt.s32.totalorder %s15, 1
      %s202 = scalar_select %p201, %s15, 1
      %s203 = smul.addr %s202, 32
      %s204 = smul.addr %s203, 4
      %s205 = scalar_lea.vmem %s1, %s204
      %p206 = pneg %p62
      %p207 = pneg %p59
      %p208 = scmp.lt.s32.totalorder %s15, 1
      %s209 = scalar_select %p208, %s15, 1
      %s210 = scalar_lea.vmem %s2, %s209
      %p211 = pneg %p88
      %p212 = pneg %p85
      %p213 = scmp.lt.s32.totalorder %s15, 1
      %s214 = scalar_select %p213, %s15, 1
      %s215 = scalar_lea.vmem %s3, %s214
      %p216 = pneg %p114
      %p217 = pneg %p111
      %p218 = pneg %p140
      %p219 = pneg %p137
      %p220 = scmp.lt.s32.totalorder %s15, 1
      %s221 = scalar_select %p220, %s15, 1
      %s222 = smul.addr %s221, 30
      %s223 = smul.addr %s222, 4
      %s224 = scalar_lea.vmem %s4, %s223
      %p225 = scmp.lt.s32.totalorder %s15, 1
      %s226 = scalar_select %p225, %s15, 1
      %s227 = smul.addr %s226, 60
      %s228 = smul.addr %s227, 4
      %s229 = scalar_lea.vmem %s0, %s228
      %p230 = scmp.lt.s32.totalorder %s15, 1
      %s231 = scalar_select %p230, %s15, 1
      %s232 = smul.addr %s231, 32
      %s233 = smul.addr %s232, 4
      %s234 = scalar_lea.vmem %s1, %s233
      %p235 = scmp.lt.s32.totalorder %s15, 1
      %s236 = scalar_select %p235, %s15, 1
      %s237 = scalar_lea.vmem %s2, %s236
      %p238 = scmp.lt.s32.totalorder %s15, 1
      %s239 = scalar_select %p238, %s15, 1
      %s240 = scalar_lea.vmem %s3, %s239
      %p241 = scmp.lt.s32.totalorder %s15, 1
      %s242 = scalar_select %p241, %s15, 1
      %s243 = smul.addr %s242, 30
      %s244 = smul.addr %s243, 4
      %s245 = scalar_lea.vmem %s4, %s244
      %v247 = vld [vmem:[%s229] sm:$0xff]
      %v248 = vld [vmem:[%s229 + $0x8] sm:$0xff]
      %v249 = vld [vmem:[%s229 + $0x10] sm:$0xff]
      %v250 = vld [vmem:[%s229 + $0x18] sm:$0xff]
      %v251 = vld [vmem:[%s229 + $0x20] sm:$0xff]
      %v252 = vld [vmem:[%s229 + $0x28] sm:$0xff]
      %v253 = vld [vmem:[%s229 + $0x30] sm:$0xff]
      %v254 = vld [vmem:[%s229 + $0x38] sm:$0xff]
      %v255 = vld [vmem:[%s229 + $0x40] sm:$0xff]
      %v256 = vld [vmem:[%s229 + $0x48] sm:$0xff]
      %v257 = vld [vmem:[%s229 + $0x50] sm:$0xff]
      %v258 = vld [vmem:[%s229 + $0x58] sm:$0xff]
      %v259 = vld [vmem:[%s229 + $0x60] sm:$0xff]
      %v260 = vld [vmem:[%s229 + $0x68] sm:$0xff]
      %v261 = vld [vmem:[%s229 + $0x70] sm:$0xff]
      %v262 = vld [vmem:[%s229 + $0x78] sm:$0xff]
      %v263 = vld [vmem:[%s229 + $0x80] sm:$0xff]
      %v264 = vld [vmem:[%s229 + $0x88] sm:$0xff]
      %v265 = vld [vmem:[%s229 + $0x90] sm:$0xff]
      %v266 = vld [vmem:[%s229 + $0x98] sm:$0xff]
      %v267 = vld [vmem:[%s229 + $0xa0] sm:$0xff]
      %v268 = vld [vmem:[%s229 + $0xa8] sm:$0xff]
      %v269 = vld [vmem:[%s229 + $0xb0] sm:$0xff]
      %v270 = vld [vmem:[%s229 + $0xb8] sm:$0xff]
      %v271 = vld [vmem:[%s229 + $0xc0] sm:$0xff]
      %v272 = vld [vmem:[%s229 + $0xc8] sm:$0xff]
      %v273 = vld [vmem:[%s229 + $0xd0] sm:$0xff]
      %v274 = vld [vmem:[%s229 + $0xd8] sm:$0xff]
      %v275 = vld [vmem:[%s229 + $0xe0] sm:$0xff]
      %v276 = vld [vmem:[%s229 + $0xe8] sm:$0xff]
      %v277 = vld [vmem:[%s234] sm:$0xf]
      %v278 = vld [vmem:[%s234 + $0x4] sm:$0xf]
      %v279 = vld [vmem:[%s234 + $0x8] sm:$0xf]
      %v280 = vld [vmem:[%s234 + $0xc] sm:$0xf]
      %v281 = vld [vmem:[%s234 + $0x10] sm:$0xf]
      %v282 = vld [vmem:[%s234 + $0x14] sm:$0xf]
      %v283 = vld [vmem:[%s234 + $0x18] sm:$0xf]
      %v284 = vld [vmem:[%s234 + $0x1c] sm:$0xf]
      %v285 = vld [vmem:[%s234 + $0x20] sm:$0xf]
      %v286 = vld [vmem:[%s234 + $0x24] sm:$0xf]
      %v287 = vld [vmem:[%s234 + $0x28] sm:$0xf]
      %v288 = vld [vmem:[%s234 + $0x2c] sm:$0xf]
      %v289 = vld [vmem:[%s234 + $0x30] sm:$0xf]
      %v290 = vld [vmem:[%s234 + $0x34] sm:$0xf]
      %v291 = vld [vmem:[%s234 + $0x38] sm:$0xf]
      %v292 = vld [vmem:[%s234 + $0x3c] sm:$0xf]
      %v293 = vld [vmem:[%s234 + $0x40] sm:$0xf]
      %v294 = vld [vmem:[%s234 + $0x44] sm:$0xf]
      %v295 = vld [vmem:[%s234 + $0x48] sm:$0xf]
      %v296 = vld [vmem:[%s234 + $0x4c] sm:$0xf]
      %v297 = vld [vmem:[%s234 + $0x50] sm:$0xf]
      %v298 = vld [vmem:[%s234 + $0x54] sm:$0xf]
      %v299 = vld [vmem:[%s234 + $0x58] sm:$0xf]
      %v300 = vld [vmem:[%s234 + $0x5c] sm:$0xf]
      %v301 = vld [vmem:[%s234 + $0x60] sm:$0xf]
      %v302 = vld [vmem:[%s234 + $0x64] sm:$0xf]
      %v303 = vld [vmem:[%s234 + $0x68] sm:$0xf]
      %v304 = vld [vmem:[%s234 + $0x6c] sm:$0xf]
      %v305 = vld [vmem:[%s234 + $0x70] sm:$0xf]
      %v306 = vld [vmem:[%s234 + $0x74] sm:$0xf]
      %v307 = vld [vmem:[%s234 + $0x78] sm:$0xf]
      %v308 = vld [vmem:[%s234 + $0x7c] sm:$0xf]
      %v339 = vunpack.c.l.b16 %v247
      %v340 = vunpack.c.h.b16 %v247
      %v341 = vunpack.c.l.b16 %v248
      %v342 = vunpack.c.h.b16 %v248
      %v343 = vunpack.c.l.b16 %v249
      %v344 = vunpack.c.h.b16 %v249
      %v345 = vunpack.c.l.b16 %v250
      %v346 = vunpack.c.h.b16 %v250
      %v347 = vunpack.c.l.b16 %v251
      %v348 = vunpack.c.h.b16 %v251
      %v349 = vunpack.c.l.b16 %v252
      %v350 = vunpack.c.h.b16 %v252
      %v351 = vunpack.c.l.b16 %v253
      %v352 = vunpack.c.h.b16 %v253
      %v353 = vunpack.c.l.b16 %v254
      %v354 = vunpack.c.h.b16 %v254
      %v355 = vunpack.c.l.b16 %v255
      %v356 = vunpack.c.h.b16 %v255
      %v357 = vunpack.c.l.b16 %v256
      %v358 = vunpack.c.h.b16 %v256
      %v359 = vunpack.c.l.b16 %v257
      %v360 = vunpack.c.h.b16 %v257
      %v361 = vunpack.c.l.b16 %v258
      %v362 = vunpack.c.h.b16 %v258
      %v363 = vunpack.c.l.b16 %v259
      %v364 = vunpack.c.h.b16 %v259
      %v365 = vunpack.c.l.b16 %v260
      %v366 = vunpack.c.h.b16 %v260
      %v367 = vunpack.c.l.b16 %v261
      %v368 = vunpack.c.h.b16 %v261
      %v369 = vunpack.c.l.b16 %v262
      %v370 = vunpack.c.h.b16 %v262
      %v371 = vunpack.c.l.b16 %v263
      %v372 = vunpack.c.h.b16 %v263
      %v373 = vunpack.c.l.b16 %v264
      %v374 = vunpack.c.h.b16 %v264
      %v375 = vunpack.c.l.b16 %v265
      %v376 = vunpack.c.h.b16 %v265
      %v377 = vunpack.c.l.b16 %v266
      %v378 = vunpack.c.h.b16 %v266
      %v379 = vunpack.c.l.b16 %v267
      %v380 = vunpack.c.h.b16 %v267
      %v381 = vunpack.c.l.b16 %v268
      %v382 = vunpack.c.h.b16 %v268
      %v383 = vunpack.c.l.b16 %v269
      %v384 = vunpack.c.h.b16 %v269
      %v385 = vunpack.c.l.b16 %v270
      %v386 = vunpack.c.h.b16 %v270
      %v387 = vunpack.c.l.b16 %v271
      %v388 = vunpack.c.h.b16 %v271
      %v389 = vunpack.c.l.b16 %v272
      %v390 = vunpack.c.h.b16 %v272
      %v391 = vunpack.c.l.b16 %v273
      %v392 = vunpack.c.h.b16 %v273
      %v393 = vunpack.c.l.b16 %v274
      %v394 = vunpack.c.h.b16 %v274
      %v395 = vunpack.c.l.b16 %v275
      %v396 = vunpack.c.h.b16 %v275
      %v397 = vunpack.c.l.b16 %v276
      %v398 = vunpack.c.h.b16 %v276
      %v399 = vpack.c.b16 %v341, %v339
      %v400 = vpack.c.b16 %v342, %v340
      %v401 = vpack.c.b16 %v345, %v343
      %v402 = vpack.c.b16 %v346, %v344
      %v403 = vpack.c.b16 %v349, %v347
      %v404 = vpack.c.b16 %v350, %v348
      %v405 = vpack.c.b16 %v353, %v351
      %v406 = vpack.c.b16 %v354, %v352
      %v407 = vpack.c.b16 %v357, %v355
      %v408 = vpack.c.b16 %v358, %v356
      %v409 = vpack.c.b16 %v361, %v359
      %v410 = vpack.c.b16 %v362, %v360
      %v411 = vpack.c.b16 %v365, %v363
      %v412 = vpack.c.b16 %v366, %v364
      %v413 = vpack.c.b16 %v369, %v367
      %v414 = vpack.c.b16 %v370, %v368
      %v415 = vpack.c.b16 %v373, %v371
      %v416 = vpack.c.b16 %v374, %v372
      %v417 = vpack.c.b16 %v377, %v375
      %v418 = vpack.c.b16 %v378, %v376
      %v419 = vpack.c.b16 %v381, %v379
      %v420 = vpack.c.b16 %v382, %v380
      %v421 = vpack.c.b16 %v385, %v383
      %v422 = vpack.c.b16 %v386, %v384
      %v423 = vpack.c.b16 %v389, %v387
      %v424 = vpack.c.b16 %v390, %v388
      %v425 = vpack.c.b16 %v393, %v391
      %v426 = vpack.c.b16 %v394, %v392
      %v427 = vpack.c.b16 %v397, %v395
      %v428 = vpack.c.b16 %v398, %v396
      %v491 = vunpack.c.l.b16 %v277
      %v492 = vunpack.c.l.b16 %v278
      %v493 = vunpack.c.l.b16 %v279
      %v494 = vunpack.c.l.b16 %v280
      %v495 = vunpack.c.l.b16 %v281
      %v496 = vunpack.c.l.b16 %v282
      %v497 = vunpack.c.l.b16 %v283
      %v498 = vunpack.c.l.b16 %v284
      %v499 = vunpack.c.l.b16 %v285
      %v500 = vunpack.c.l.b16 %v286
      %v501 = vunpack.c.l.b16 %v287
      %v502 = vunpack.c.l.b16 %v288
      %v503 = vunpack.c.l.b16 %v289
      %v504 = vunpack.c.l.b16 %v290
      %v505 = vunpack.c.l.b16 %v291
      %v506 = vunpack.c.l.b16 %v292
      %v507 = vunpack.c.l.b16 %v293
      %v508 = vunpack.c.l.b16 %v294
      %v509 = vunpack.c.l.b16 %v295
      %v510 = vunpack.c.l.b16 %v296
      %v511 = vunpack.c.l.b16 %v297
      %v512 = vunpack.c.l.b16 %v298
      %v513 = vunpack.c.l.b16 %v299
      %v514 = vunpack.c.l.b16 %v300
      %v515 = vunpack.c.l.b16 %v301
      %v516 = vunpack.c.l.b16 %v302
      %v517 = vunpack.c.l.b16 %v303
      %v518 = vunpack.c.l.b16 %v304
      %v519 = vunpack.c.l.b16 %v305
      %v520 = vunpack.c.l.b16 %v306
      %v521 = vunpack.c.l.b16 %v307
      %v522 = vunpack.c.l.b16 %v308
      %v523 = vpack.c.b16 %v492, %v491
      %v524 = vpack.c.b16 %v494, %v493
      %v525 = vpack.c.b16 %v496, %v495
      %v526 = vpack.c.b16 %v498, %v497
      %v527 = vpack.c.b16 %v500, %v499
      %v528 = vpack.c.b16 %v502, %v501
      %v529 = vpack.c.b16 %v504, %v503
      %v530 = vpack.c.b16 %v506, %v505
      %v531 = vpack.c.b16 %v508, %v507
      %v532 = vpack.c.b16 %v510, %v509
      %v533 = vpack.c.b16 %v512, %v511
      %v534 = vpack.c.b16 %v514, %v513
      %v535 = vpack.c.b16 %v516, %v515
      %v536 = vpack.c.b16 %v518, %v517
      %v537 = vpack.c.b16 %v520, %v519
      %v538 = vpack.c.b16 %v522, %v521
      %555 = vmatprep.subr.bf16.mxu0 0
      %556 = vmatpush1.bf16.msra.mxu0 %v523
      %557 = vmatprep.subr.bf16.mxu0 0
      %558 = vmatpush1.bf16.msra.mxu0 %v524
      %559 = vmatprep.subr.bf16.mxu0 0
      %560 = vmatpush1.bf16.msra.mxu0 %v525
      %561 = vmatprep.subr.bf16.mxu0 0
      %562 = vmatpush1.bf16.msra.mxu0 %v526
      %563 = vmatprep.subr.bf16.mxu0 0
      %564 = vmatpush1.bf16.msra.mxu0 %v527
      %565 = vmatprep.subr.bf16.mxu0 0
      %566 = vmatpush1.bf16.msra.mxu0 %v528
      %567 = vmatprep.subr.bf16.mxu0 0
      %568 = vmatpush1.bf16.msra.mxu0 %v529
      %569 = vmatprep.subr.bf16.mxu0 0
      %570 = vmatpush1.bf16.msra.mxu0 %v530
      %571 = vmatprep.subr.bf16.mxu0 0
      %572 = vmatpush1.bf16.msra.mxu0 %v531
      %573 = vmatprep.subr.bf16.mxu0 0
      %574 = vmatpush1.bf16.msra.mxu0 %v532
      %575 = vmatprep.subr.bf16.mxu0 0
      %576 = vmatpush1.bf16.msra.mxu0 %v533
      %577 = vmatprep.subr.bf16.mxu0 0
      %578 = vmatpush1.bf16.msra.mxu0 %v534
      %579 = vmatprep.subr.bf16.mxu0 0
      %580 = vmatpush1.bf16.msra.mxu0 %v535
      %581 = vmatprep.subr.bf16.mxu0 0
      %582 = vmatpush1.bf16.msra.mxu0 %v536
      %583 = vmatprep.subr.bf16.mxu0 0
      %584 = vmatpush1.bf16.msra.mxu0 %v537
      %585 = vmatprep.subr.bf16.mxu0 0
      %586 = vmatpush1.bf16.msra.mxu0 %v538
      %587 = vmatprep.mubr.bf16.mxu0 %v400
      %588 = vmatmul.mubr.bf16.gmra.mrb[0].mxu0 %v399
      %v589 = vpop.f32.mrb[0].mxu0
      %v590 = vadd.f32 0.0, %v589
      %v591 = vpop.f32.mrb[0].mxu0
      %v592 = vpop.f32.mrb[0].mxu0
      %v593 = vadd.f32 0.0, %v592
      %v594 = vpop.f32.mrb[0].mxu0
      %595 = vmatprep.mubr.bf16.mxu0 %v402
      %596 = vmatmul.mubr.bf16.gmra.mrb[0].mxu0 %v401
      %v597 = vpop.f32.mrb[0].mxu0
      %v598 = vadd.f32 0.0, %v597
      %v599 = vpop.f32.mrb[0].mxu0
      %v600 = vpop.f32.mrb[0].mxu0
      %v601 = vadd.f32 0.0, %v600
      %v602 = vpop.f32.mrb[0].mxu0
      %603 = vmatprep.mubr.bf16.mxu0 %v404
      %604 = vmatmul.mubr.bf16.gmra.mrb[0].mxu0 %v403
      %v605 = vpop.f32.mrb[0].mxu0
      %v606 = vadd.f32 0.0, %v605
      %v607 = vpop.f32.mrb[0].mxu0
      %v608 = vpop.f32.mrb[0].mxu0
      %v609 = vadd.f32 0.0, %v608
      %v610 = vpop.f32.mrb[0].mxu0
      %611 = vmatprep.mubr.bf16.mxu0 %v406
      %612 = vmatmul.mubr.bf16.gmra.mrb[0].mxu0 %v405
      %v613 = vpop.f32.mrb[0].mxu0
      %v614 = vadd.f32 0.0, %v613
      %v615 = vpop.f32.mrb[0].mxu0
      %v616 = vpop.f32.mrb[0].mxu0
      %v617 = vadd.f32 0.0, %v616
      %v618 = vpop.f32.mrb[0].mxu0
      %619 = vmatprep.mubr.bf16.mxu0 %v408
      %620 = vmatmul.mubr.bf16.gmra.mrb[0].mxu0 %v407
      %v621 = vpop.f32.mrb[0].mxu0
      %v622 = vadd.f32 0.0, %v621
      %v623 = vpop.f32.mrb[0].mxu0
      %v624 = vpop.f32.mrb[0].mxu0
      %v625 = vadd.f32 0.0, %v624
      %v626 = vpop.f32.mrb[0].mxu0
      %627 = vmatprep.mubr.bf16.mxu0 %v410
      %628 = vmatmul.mubr.bf16.gmra.mrb[0].mxu0 %v409
      %v629 = vpop.f32.mrb[0].mxu0
      %v630 = vadd.f32 0.0, %v629
      %v631 = vpop.f32.mrb[0].mxu0
      %v632 = vpop.f32.mrb[0].mxu0
      %v633 = vadd.f32 0.0, %v632
      %v634 = vpop.f32.mrb[0].mxu0
      %635 = vmatprep.mubr.bf16.mxu0 %v412
      %636 = vmatmul.mubr.bf16.gmra.mrb[0].mxu0 %v411
      %v637 = vpop.f32.mrb[0].mxu0
      %v638 = vadd.f32 0.0, %v637
      %v639 = vpop.f32.mrb[0].mxu0
      %v640 = vpop.f32.mrb[0].mxu0
      %v641 = vadd.f32 0.0, %v640
      %v642 = vpop.f32.mrb[0].mxu0
      %643 = vmatprep.mubr.bf16.mxu0 %v414
      %644 = vmatmul.mubr.bf16.gmra.mrb[0].mxu0 %v413
      %v645 = vpop.f32.mrb[0].mxu0
      %v646 = vadd.f32 0.0, %v645
      %v647 = vpop.f32.mrb[0].mxu0
      %v648 = vpop.f32.mrb[0].mxu0
      %v649 = vadd.f32 0.0, %v648
      %v650 = vpop.f32.mrb[0].mxu0
      %651 = vmatprep.mubr.bf16.mxu0 %v416
      %652 = vmatmul.mubr.bf16.gmra.mrb[0].mxu0 %v415
      %v653 = vpop.f32.mrb[0].mxu0
      %v654 = vadd.f32 0.0, %v653
      %v655 = vpop.f32.mrb[0].mxu0
      %v656 = vpop.f32.mrb[0].mxu0
      %v657 = vadd.f32 0.0, %v656
      %v658 = vpop.f32.mrb[0].mxu0
      %659 = vmatprep.mubr.bf16.mxu0 %v418
      %660 = vmatmul.mubr.bf16.gmra.mrb[0].mxu0 %v417
      %v661 = vpop.f32.mrb[0].mxu0
      %v662 = vadd.f32 0.0, %v661
      %v663 = vpop.f32.mrb[0].mxu0
      %v664 = vpop.f32.mrb[0].mxu0
      %v665 = vadd.f32 0.0, %v664
      %v666 = vpop.f32.mrb[0].mxu0
      %667 = vmatprep.mubr.bf16.mxu0 %v420
      %668 = vmatmul.mubr.bf16.gmra.mrb[0].mxu0 %v419
      %v669 = vpop.f32.mrb[0].mxu0
      %v670 = vadd.f32 0.0, %v669
      %v671 = vpop.f32.mrb[0].mxu0
      %v672 = vpop.f32.mrb[0].mxu0
      %v673 = vadd.f32 0.0, %v672
      %v674 = vpop.f32.mrb[0].mxu0
      %675 = vmatprep.mubr.bf16.mxu0 %v422
      %676 = vmatmul.mubr.bf16.gmra.mrb[0].mxu0 %v421
      %v677 = vpop.f32.mrb[0].mxu0
      %v678 = vadd.f32 0.0, %v677
      %v679 = vpop.f32.mrb[0].mxu0
      %v680 = vpop.f32.mrb[0].mxu0
      %v681 = vadd.f32 0.0, %v680
      %v682 = vpop.f32.mrb[0].mxu0
      %683 = vmatprep.mubr.bf16.mxu0 %v424
      %684 = vmatmul.mubr.bf16.gmra.mrb[0].mxu0 %v423
      %v685 = vpop.f32.mrb[0].mxu0
      %v686 = vadd.f32 0.0, %v685
      %v687 = vpop.f32.mrb[0].mxu0
      %v688 = vpop.f32.mrb[0].mxu0
      %v689 = vadd.f32 0.0, %v688
      %v690 = vpop.f32.mrb[0].mxu0
      %691 = vmatprep.mubr.bf16.mxu0 %v426
      %692 = vmatmul.mubr.bf16.gmra.mrb[0].mxu0 %v425
      %v693 = vpop.f32.mrb[0].mxu0
      %v694 = vadd.f32 0.0, %v693
      %v695 = vpop.f32.mrb[0].mxu0
      %v696 = vpop.f32.mrb[0].mxu0
      %v697 = vadd.f32 0.0, %v696
      %v698 = vpop.f32.mrb[0].mxu0
      %699 = vmatprep.mubr.bf16.mxu0 %v428
      %700 = vmatmul.mubr.bf16.gmra.mrb[0].mxu0 %v427
      %v701 = vpop.f32.mrb[0].mxu0
      %v702 = vadd.f32 0.0, %v701
      %v703 = vpop.f32.mrb[0].mxu0
      %v704 = vpop.f32.mrb[0].mxu0
      %v705 = vadd.f32 0.0, %v704
      %v706 = vpop.f32.mrb[0].mxu0
      %707 = vdwg.mxu0
      %v708 = vld [vmem:[%s237] sm:$0x1]
      %v710 = vlaneseq
      %v711 = vshrl.u32 %v710, 7
      %v712 = vsub.s32 0, %v711
      %v713 = vrot.slane %v708, %v712
      %v715 = vmul.f32 %v590, %v713
      %v716 = vmul.f32 %v593, %v713
      %v717 = vmul.f32 %v598, %v713
      %v718 = vmul.f32 %v601, %v713
      %v719 = vmul.f32 %v606, %v713
      %v720 = vmul.f32 %v609, %v713
      %v721 = vmul.f32 %v614, %v713
      %v722 = vmul.f32 %v617, %v713
      %v723 = vmul.f32 %v622, %v713
      %v724 = vmul.f32 %v625, %v713
      %v725 = vmul.f32 %v630, %v713
      %v726 = vmul.f32 %v633, %v713
      %v727 = vmul.f32 %v638, %v713
      %v728 = vmul.f32 %v641, %v713
      %v729 = vmul.f32 %v646, %v713
      %v730 = vmul.f32 %v649, %v713
      %v731 = vmul.f32 %v654, %v713
      %v732 = vmul.f32 %v657, %v713
      %v733 = vmul.f32 %v662, %v713
      %v734 = vmul.f32 %v665, %v713
      %v735 = vmul.f32 %v670, %v713
      %v736 = vmul.f32 %v673, %v713
      %v737 = vmul.f32 %v678, %v713
      %v738 = vmul.f32 %v681, %v713
      %v739 = vmul.f32 %v686, %v713
      %v740 = vmul.f32 %v689, %v713
      %v741 = vmul.f32 %v694, %v713
      %v742 = vmul.f32 %v697, %v713
      %v743 = vmul.f32 %v702, %v713
      %v744 = vmul.f32 %v705, %v713
      %v745 = vld [vmem:[%s240] sm:$0x1]
      %v747 = vlaneseq
      %v748 = vshrl.u32 %v747, 7
      %v749 = vsub.s32 0, %v748
      %v750 = vrot.slane %v745, %v749
      %v752 = vadd.f32 %v715, %v750
      %v753 = vadd.f32 %v716, %v750
      %v754 = vadd.f32 %v717, %v750
      %v755 = vadd.f32 %v718, %v750
      %v756 = vadd.f32 %v719, %v750
      %v757 = vadd.f32 %v720, %v750
      %v758 = vadd.f32 %v721, %v750
      %v759 = vadd.f32 %v722, %v750
      %v760 = vadd.f32 %v723, %v750
      %v761 = vadd.f32 %v724, %v750
      %v762 = vadd.f32 %v725, %v750
      %v763 = vadd.f32 %v726, %v750
      %v764 = vadd.f32 %v727, %v750
      %v765 = vadd.f32 %v728, %v750
      %v766 = vadd.f32 %v729, %v750
      %v767 = vadd.f32 %v730, %v750
      %v768 = vadd.f32 %v731, %v750
      %v769 = vadd.f32 %v732, %v750
      %v770 = vadd.f32 %v733, %v750
      %v771 = vadd.f32 %v734, %v750
      %v772 = vadd.f32 %v735, %v750
      %v773 = vadd.f32 %v736, %v750
      %v774 = vadd.f32 %v737, %v750
      %v775 = vadd.f32 %v738, %v750
      %v776 = vadd.f32 %v739, %v750
      %v777 = vadd.f32 %v740, %v750
      %v778 = vadd.f32 %v741, %v750
      %v779 = vadd.f32 %v742, %v750
      %v780 = vadd.f32 %v743, %v750
      %v781 = vadd.f32 %v744, %v750
      %v782 = vmax.f32 %v752, 0.0
      %v783 = vmax.f32 %v753, 0.0
      %v784 = vmax.f32 %v754, 0.0
      %v785 = vmax.f32 %v755, 0.0
      %v786 = vmax.f32 %v756, 0.0
      %v787 = vmax.f32 %v757, 0.0
      %v788 = vmax.f32 %v758, 0.0
      %v789 = vmax.f32 %v759, 0.0
      %v790 = vmax.f32 %v760, 0.0
      %v791 = vmax.f32 %v761, 0.0
      %v792 = vmax.f32 %v762, 0.0
      %v793 = vmax.f32 %v763, 0.0
      %v794 = vmax.f32 %v764, 0.0
      %v795 = vmax.f32 %v765, 0.0
      %v796 = vmax.f32 %v766, 0.0
      %v797 = vmax.f32 %v767, 0.0
      %v798 = vmax.f32 %v768, 0.0
      %v799 = vmax.f32 %v769, 0.0
      %v800 = vmax.f32 %v770, 0.0
      %v801 = vmax.f32 %v771, 0.0
      %v802 = vmax.f32 %v772, 0.0
      %v803 = vmax.f32 %v773, 0.0
      %v804 = vmax.f32 %v774, 0.0
      %v805 = vmax.f32 %v775, 0.0
      %v806 = vmax.f32 %v776, 0.0
      %v807 = vmax.f32 %v777, 0.0
      %v808 = vmax.f32 %v778, 0.0
      %v809 = vmax.f32 %v779, 0.0
      %v810 = vmax.f32 %v780, 0.0
      %v811 = vmax.f32 %v781, 0.0
      %v812 = vpack.c.bf16 %v783, %v782
      %v813 = vpack.c.bf16 %v785, %v784
      %v814 = vpack.c.bf16 %v787, %v786
      %v815 = vpack.c.bf16 %v789, %v788
      %v816 = vpack.c.bf16 %v791, %v790
      %v817 = vpack.c.bf16 %v793, %v792
      %v818 = vpack.c.bf16 %v795, %v794
      %v819 = vpack.c.bf16 %v797, %v796
      %v820 = vpack.c.bf16 %v799, %v798
      %v821 = vpack.c.bf16 %v801, %v800
      %v822 = vpack.c.bf16 %v803, %v802
      %v823 = vpack.c.bf16 %v805, %v804
      %v824 = vpack.c.bf16 %v807, %v806
      %v825 = vpack.c.bf16 %v809, %v808
      %v826 = vpack.c.bf16 %v811, %v810
      %v842 = vunpack.c.l.b16 %v812
      %v843 = vunpack.c.h.b16 %v812
      %v844 = vunpack.c.l.b16 %v813
      %v845 = vunpack.c.h.b16 %v813
      %v846 = vunpack.c.l.b16 %v814
      %v847 = vunpack.c.h.b16 %v814
      %v848 = vunpack.c.l.b16 %v815
      %v849 = vunpack.c.h.b16 %v815
      %v850 = vunpack.c.l.b16 %v816
      %v851 = vunpack.c.h.b16 %v816
      %v852 = vunpack.c.l.b16 %v817
      %v853 = vunpack.c.h.b16 %v817
      %v854 = vunpack.c.l.b16 %v818
      %v855 = vunpack.c.h.b16 %v818
      %v856 = vunpack.c.l.b16 %v819
      %v857 = vunpack.c.h.b16 %v819
      %v858 = vunpack.c.l.b16 %v820
      %v859 = vunpack.c.h.b16 %v820
      %v860 = vunpack.c.l.b16 %v821
      %v861 = vunpack.c.h.b16 %v821
      %v862 = vunpack.c.l.b16 %v822
      %v863 = vunpack.c.h.b16 %v822
      %v864 = vunpack.c.l.b16 %v823
      %v865 = vunpack.c.h.b16 %v823
      %v866 = vunpack.c.l.b16 %v824
      %v867 = vunpack.c.h.b16 %v824
      %v868 = vunpack.c.l.b16 %v825
      %v869 = vunpack.c.h.b16 %v825
      %v870 = vunpack.c.l.b16 %v826
      %v871 = vunpack.c.h.b16 %v826
      %v872 = vpack.c.b16 %v842, %v842
      %v873 = vpack.c.b16 %v843, %v843
      %v874 = vpack.c.b16 %v844, %v844
      %v875 = vpack.c.b16 %v845, %v845
      %v876 = vpack.c.b16 %v846, %v846
      %v877 = vpack.c.b16 %v847, %v847
      %v878 = vpack.c.b16 %v848, %v848
      %v879 = vpack.c.b16 %v849, %v849
      %v880 = vpack.c.b16 %v850, %v850
      %v881 = vpack.c.b16 %v851, %v851
      %v882 = vpack.c.b16 %v852, %v852
      %v883 = vpack.c.b16 %v853, %v853
      %v884 = vpack.c.b16 %v854, %v854
      %v885 = vpack.c.b16 %v855, %v855
      %v886 = vpack.c.b16 %v856, %v856
      %v887 = vpack.c.b16 %v857, %v857
      %v888 = vpack.c.b16 %v858, %v858
      %v889 = vpack.c.b16 %v859, %v859
      %v890 = vpack.c.b16 %v860, %v860
      %v891 = vpack.c.b16 %v861, %v861
      %v892 = vpack.c.b16 %v862, %v862
      %v893 = vpack.c.b16 %v863, %v863
      %v894 = vpack.c.b16 %v864, %v864
      %v895 = vpack.c.b16 %v865, %v865
      %v896 = vpack.c.b16 %v866, %v866
      %v897 = vpack.c.b16 %v867, %v867
      %v898 = vpack.c.b16 %v868, %v868
      %v899 = vpack.c.b16 %v869, %v869
      %v900 = vpack.c.b16 %v870, %v870
      %v901 = vpack.c.b16 %v871, %v871
      %vm932 = vcmask 519168
      %933 = vst.msk [vmem:[%s245] sm:$0xf] %vm932, %v872
      %934 = vst.msk [vmem:[%s245 + $0x4] sm:$0xf] %vm932, %v873
      %935 = vst.msk [vmem:[%s245 + $0x8] sm:$0xf] %vm932, %v874
      %936 = vst.msk [vmem:[%s245 + $0xc] sm:$0xf] %vm932, %v875
      %937 = vst.msk [vmem:[%s245 + $0x10] sm:$0xf] %vm932, %v876
      %938 = vst.msk [vmem:[%s245 + $0x14] sm:$0xf] %vm932, %v877
      %939 = vst.msk [vmem:[%s245 + $0x18] sm:$0xf] %vm932, %v878
      %940 = vst.msk [vmem:[%s245 + $0x1c] sm:$0xf] %vm932, %v879
      %941 = vst.msk [vmem:[%s245 + $0x20] sm:$0xf] %vm932, %v880
      %942 = vst.msk [vmem:[%s245 + $0x24] sm:$0xf] %vm932, %v881
      %943 = vst.msk [vmem:[%s245 + $0x28] sm:$0xf] %vm932, %v882
      %944 = vst.msk [vmem:[%s245 + $0x2c] sm:$0xf] %vm932, %v883
      %945 = vst.msk [vmem:[%s245 + $0x30] sm:$0xf] %vm932, %v884
      %946 = vst.msk [vmem:[%s245 + $0x34] sm:$0xf] %vm932, %v885
      %947 = vst.msk [vmem:[%s245 + $0x38] sm:$0xf] %vm932, %v886
      %948 = vst.msk [vmem:[%s245 + $0x3c] sm:$0xf] %vm932, %v887
      %949 = vst.msk [vmem:[%s245 + $0x40] sm:$0xf] %vm932, %v888
      %950 = vst.msk [vmem:[%s245 + $0x44] sm:$0xf] %vm932, %v889
      %951 = vst.msk [vmem:[%s245 + $0x48] sm:$0xf] %vm932, %v890
      %952 = vst.msk [vmem:[%s245 + $0x4c] sm:$0xf] %vm932, %v891
      %953 = vst.msk [vmem:[%s245 + $0x50] sm:$0xf] %vm932, %v892
      %954 = vst.msk [vmem:[%s245 + $0x54] sm:$0xf] %vm932, %v893
      %955 = vst.msk [vmem:[%s245 + $0x58] sm:$0xf] %vm932, %v894
      %956 = vst.msk [vmem:[%s245 + $0x5c] sm:$0xf] %vm932, %v895
      %957 = vst.msk [vmem:[%s245 + $0x60] sm:$0xf] %vm932, %v896
      %958 = vst.msk [vmem:[%s245 + $0x64] sm:$0xf] %vm932, %v897
      %959 = vst.msk [vmem:[%s245 + $0x68] sm:$0xf] %vm932, %v898
      %960 = vst.msk [vmem:[%s245 + $0x6c] sm:$0xf] %vm932, %v899
      %961 = vst.msk [vmem:[%s245 + $0x70] sm:$0xf] %vm932, %v900
      %962 = vst.msk [vmem:[%s245 + $0x74] sm:$0xf] %vm932, %v901
      %p963 = scmp.lt.s32.totalorder %s15, 1
      %s964 = scalar_select %p963, %s15, 1
      %s965 = smul.addr %s964, 30
      %s966 = smul.addr %s965, 4
      %s967 = scalar_lea.vmem %s4, %s966
      // Predicated region
      $region37: #{model_forward.5} parent=35 // pred_check
        %p968 = pneg %p137
      $region38: #{model_forward.5} parent=35 // pred_check_branch
        %970 = sbr.rel (%p968) target = $region40
      $region39: #{model_forward.5} parent=35 // pred_region
        _
      $region40: #{model_forward.5} parent=35 // pred_fallthru
        _
    $region36: #{model_forward.5} parent=5 // pred_fallthru
      _
    %p971 = scmp.le.s32.totalorder 2, %s10
    // Predicated region
    $region41: #{model_forward.5} parent=5 // pred_check
      %p972 = pneg %p971
    $region42: #{model_forward.5} parent=5 // pred_check_branch
      %974 = sbr.rel (%p972) target = $region44
    $region43: #{model_forward.5} parent=5 // pred_region
      %s975 = ssub.s32 %s10, 2
      // Predicated region
      $region45: #{model_forward.5} parent=43 // pred_check
        %p976 = pneg %p143
      $region46: #{model_forward.5} parent=43 // pred_check_branch
        %978 = sbr.rel (%p976) target = $region48
      $region47: #{model_forward.5} parent=43 // pred_region
        %p979 = scmp.lt.s32.totalorder %s16, 1
        %s980 = scalar_select %p979, %s16, 1
        %s981 = smul.addr %s980, 30
        %s982 = smul.addr %s981, 4
        %s983 = scalar_lea.vmem %s4, %s982
      $region48: #{model_forward.5} parent=43 // pred_fallthru
        _
    $region44: #{model_forward.5} parent=5 // pred_fallthru
      _
  $region6: #{model_forward.5} parent=0 // loop_footer
    %s14 = sadd.s32 1, %s10
  $region7: #{model_forward.5} parent=0 // loop_footer_branch
    %9 = sbr.rel target = $region3
  $region8: #{model_forward.5} parent=0 // loop_exit
    _

// kernel: squeeze.10
$region0: #{squeeze.10}
  %s0 = inlined_call_operand.vmem [shape: bf16[1,60,64], index: 0, kind: input, shape index: {}]
  %s1 = inlined_call_operand.vmem [shape: bf16[2,6,5,64], index: 1, kind: output, shape index: {}]
  $region1: #{squeeze.10} parent=0
    #allocation0 [shape = 'u8[49152]{0}', space=vmem, size = 0xc000, scoped, tag = 'scoped mem for output reshape']
    #allocation1 [shape = 'u8[32768]{0}', space=vmem, size = 0x8000, scoped, tag = 'scoped mem for input reshape']
    %s3 = smul.u32 4, 2
    %s4 = sshllo.u32 0, %s3
    %s5 = smul.addr 4, 7
    %s6 = scalar_lea.vmem %s0, %s5
    %s7 = sshrl.u32 %s4, 1
    %s8 = sor.u32 %s4, %s7
    %s9 = sand.u32 %s8, 85
    %s10 = sshrl.u32 %s9, 1
    %s11 = sor.u32 %s9, %s10
    %s12 = sand.u32 51, %s11
    %s13 = sshrl.u32 %s12, 2
    %s14 = sor.u32 %s12, %s13
    %s15 = sand.u32 15, %s14
    %v16 = vld [vmem:[%s6] sm:%s15]
    %v17 = vunpack.c.l.bf16 %v16
    %v18 = vunpack.c.h.bf16 %v16
    %s19 = scalar_lea.vmem [#allocation1], 56
    %20 = vst [vmem:[%s19] sm:%s4] %v17
    %s21 = smul.addr 4, 6
    %s22 = scalar_lea.vmem %s0, %s21
    %s23 = sshrl.u32 %s4, 1
    %s24 = sor.u32 %s4, %s23
    %s25 = sand.u32 %s24, 85
    %s26 = sshrl.u32 %s25, 1
    %s27 = sor.u32 %s25, %s26
    %s28 = sand.u32 51, %s27
    %s29 = sshrl.u32 %s28, 2
    %s30 = sor.u32 %s28, %s29
    %s31 = sand.u32 15, %s30
    %v32 = vld [vmem:[%s22] sm:%s31]
    %v33 = vunpack.c.l.bf16 %v32
    %v34 = vunpack.c.h.bf16 %v32
    %s35 = scalar_lea.vmem [#allocation1], 48
    %36 = vst [vmem:[%s35] sm:%s4] %v33
    %s37 = smul.addr 4, 5
    %s38 = scalar_lea.vmem %s0, %s37
    %s39 = sshrl.u32 %s4, 1
    %s40 = sor.u32 %s4, %s39
    %s41 = sand.u32 %s40, 85
    %s42 = sshrl.u32 %s41, 1
    %s43 = sor.u32 %s41, %s42
    %s44 = sand.u32 51, %s43
    %s45 = sshrl.u32 %s44, 2
    %s46 = sor.u32 %s44, %s45
    %s47 = sand.u32 15, %s46
    %v48 = vld [vmem:[%s38] sm:%s47]
    %v49 = vunpack.c.l.bf16 %v48
    %v50 = vunpack.c.h.bf16 %v48
    %s51 = scalar_lea.vmem [#allocation1], 40
    %52 = vst [vmem:[%s51] sm:%s4] %v49
    %s53 = smul.addr 4, 4
    %s54 = scalar_lea.vmem %s0, %s53
    %s55 = sshrl.u32 %s4, 1
    %s56 = sor.u32 %s4, %s55
    %s57 = sand.u32 %s56, 85
    %s58 = sshrl.u32 %s57, 1
    %s59 = sor.u32 %s57, %s58
    %s60 = sand.u32 51, %s59
    %s61 = sshrl.u32 %s60, 2
    %s62 = sor.u32 %s60, %s61
    %s63 = sand.u32 15, %s62
    %v64 = vld [vmem:[%s54] sm:%s63]
    %v65 = vunpack.c.l.bf16 %v64
    %v66 = vunpack.c.h.bf16 %v64
    %s67 = scalar_lea.vmem [#allocation1], 32
    %68 = vst [vmem:[%s67] sm:%s4] %v65
    %s69 = smul.addr 4, 3
    %s70 = scalar_lea.vmem %s0, %s69
    %s71 = sshrl.u32 %s4, 1
    %s72 = sor.u32 %s4, %s71
    %s73 = sand.u32 %s72, 85
    %s74 = sshrl.u32 %s73, 1
    %s75 = sor.u32 %s73, %s74
    %s76 = sand.u32 51, %s75
    %s77 = sshrl.u32 %s76, 2
    %s78 = sor.u32 %s76, %s77
    %s79 = sand.u32 15, %s78
    %v80 = vld [vmem:[%s70] sm:%s79]
    %v81 = vunpack.c.l.bf16 %v80
    %v82 = vunpack.c.h.bf16 %v80
    %s83 = scalar_lea.vmem [#allocation1], 24
    %84 = vst [vmem:[%s83] sm:%s4] %v81
    %s85 = smul.addr 4, 2
    %s86 = scalar_lea.vmem %s0, %s85
    %s87 = sshrl.u32 %s4, 1
    %s88 = sor.u32 %s4, %s87
    %s89 = sand.u32 %s88, 85
    %s90 = sshrl.u32 %s89, 1
    %s91 = sor.u32 %s89, %s90
    %s92 = sand.u32 51, %s91
    %s93 = sshrl.u32 %s92, 2
    %s94 = sor.u32 %s92, %s93
    %s95 = sand.u32 15, %s94
    %v96 = vld [vmem:[%s86] sm:%s95]
    %v97 = vunpack.c.l.bf16 %v96
    %v98 = vunpack.c.h.bf16 %v96
    %s99 = scalar_lea.vmem [#allocation1], 16
    %100 = vst [vmem:[%s99] sm:%s4] %v97
    %s101 = scalar_lea.vmem %s0, 4
    %s102 = sshrl.u32 %s4, 1
    %s103 = sor.u32 %s4, %s102
    %s104 = sand.u32 %s103, 85
    %s105 = sshrl.u32 %s104, 1
    %s106 = sor.u32 %s104, %s105
    %s107 = sand.u32 51, %s106
    %s108 = sshrl.u32 %s107, 2
    %s109 = sor.u32 %s107, %s108
    %s110 = sand.u32 15, %s109
    %v111 = vld [vmem:[%s101] sm:%s110]
    %v112 = vunpack.c.l.bf16 %v111
    %v113 = vunpack.c.h.bf16 %v111
    %s114 = scalar_lea.vmem [#allocation1], 8
    %115 = vst [vmem:[%s114] sm:%s4] %v112
    %s116 = sshrl.u32 %s4, 1
    %s117 = sor.u32 %s4, %s116
    %s118 = sand.u32 %s117, 85
    %s119 = sshrl.u32 %s118, 1
    %s120 = sor.u32 %s118, %s119
    %s121 = sand.u32 51, %s120
    %s122 = sshrl.u32 %s121, 2
    %s123 = sor.u32 %s121, %s122
    %s124 = sand.u32 15, %s123
    %v125 = vld [vmem:[%s0] sm:%s124]
    %v126 = vunpack.c.l.bf16 %v125
    %v127 = vunpack.c.h.bf16 %v125
    %128 = vst [vmem:[#allocation1] sm:%s4] %v126
    %v129 = vld [vmem:[#allocation1] sm:$0xff]
    %vm130 = vcmask 523264
    %131 = vst.msk [vmem:[#allocation0] sm:$0x1f] %vm130, %v129
    %s132 = scalar_lea.vmem [#allocation0], 3
    %133 = vst.msk [vmem:[%s132] sm:$0xe0] %vm130, %v129
    %s134 = scalar_lea.vmem [#allocation1], 8
    %v135 = vld [vmem:[%s134] sm:$0xff]
    %vm136 = vcmask 523264
    %s137 = scalar_lea.vmem [#allocation0], 11
    %138 = vst.msk [vmem:[%s137] sm:$0x3] %vm136, %v135
    %s139 = scalar_lea.vmem [#allocation0], 14
    %140 = vst.msk [vmem:[%s139] sm:$0x7c] %vm136, %v135
    %s141 = scalar_lea.vmem [#allocation0], 17
    %142 = vst.msk [vmem:[%s141] sm:$0x80] %vm136, %v135
    %s143 = scalar_lea.vmem [#allocation1], 16
    %v144 = vld [vmem:[%s143] sm:$0xff]
    %vm145 = vcmask 523264
    %s146 = scalar_lea.vmem [#allocation0], 25
    %147 = vst.msk [vmem:[%s146] sm:$0xf] %vm145, %v144
    %s148 = scalar_lea.vmem [#allocation0], 28
    %149 = vst.msk [vmem:[%s148] sm:$0xf0] %vm145, %v144
    %s150 = scalar_lea.vmem [#allocation1], 24
    %v151 = vld [vmem:[%s150] sm:$0xff]
    %vm152 = vcmask 523264
    %s153 = scalar_lea.vmem [#allocation0], 36
    %154 = vst.msk [vmem:[%s153] ss:$4 sm:$0x3] %vm152, %v151
    %s155 = scalar_lea.vmem [#allocation0], 39
    %156 = vst.msk [vmem:[%s155] sm:$0x3c] %vm152, %v151
    %s157 = scalar_lea.vmem [#allocation0], 42
    %158 = vst.msk [vmem:[%s157] sm:$0xc0] %vm152, %v151
    %s159 = scalar_lea.vmem [#allocation1], 32
    %v160 = vld [vmem:[%s159] sm:$0xff]
    %vm161 = vcmask 523264
    %s162 = scalar_lea.vmem [#allocation0], 50
    %163 = vst.msk [vmem:[%s162] sm:$0x7] %vm161, %v160
    %s164 = scalar_lea.vmem [#allocation0], 53
    %165 = vst.msk [vmem:[%s164] sm:$0xf8] %vm161, %v160
    %s166 = scalar_lea.vmem [#allocation1], 40
    %v167 = vld [vmem:[%s166] sm:$0xff]
    %vm168 = vcmask 523264
    %s169 = scalar_lea.vmem [#allocation0], 64
    %170 = vst.msk [vmem:[%s169] sm:$0x1f] %vm168, %v167
    %s171 = scalar_lea.vmem [#allocation0], 67
    %172 = vst.msk [vmem:[%s171] sm:$0xe0] %vm168, %v167
    %s173 = scalar_lea.vmem [#allocation1], 48
    %v174 = vld [vmem:[%s173] sm:$0xff]
    %vm175 = vcmask 523264
    %s176 = scalar_lea.vmem [#allocation0], 75
    %177 = vst.msk [vmem:[%s176] sm:$0x3] %vm175, %v174
    %s178 = scalar_lea.vmem [#allocation0], 78
    %179 = vst.msk [vmem:[%s178] sm:$0x7c] %vm175, %v174
    %s180 = scalar_lea.vmem [#allocation0], 81
    %181 = vst.msk [vmem:[%s180] sm:$0x80] %vm175, %v174
    %s182 = scalar_lea.vmem [#allocation1], 56
    %v183 = vld [vmem:[%s182] sm:$0xf]
    %vm184 = vcmask 523264
    %s185 = scalar_lea.vmem [#allocation0], 89
    %186 = vst.msk [vmem:[%s185] sm:$0xf] %vm184, %v183
    %s188 = smul.u32 4, 2
    %s189 = sshllo.u32 0, %s188
    %s190 = sshrl.u32 %s188, 1
    %v191 = vld [vmem:[#allocation0] sm:%s189]
    %v192 = vpack.c.bf16 0.0, %v191
    %s193 = sshllo.u32 0, %s190
    %194 = vst [vmem:[%s1] sm:%s193] %v192
    %s195 = scalar_lea.vmem [#allocation0], 8
    %v196 = vld [vmem:[%s195] sm:%s189]
    %v197 = vpack.c.bf16 0.0, %v196
    %s198 = sshllo.u32 0, %s190
    %s199 = scalar_lea.vmem %s1, 4
    %200 = vst [vmem:[%s199] sm:%s198] %v197
    %s201 = scalar_lea.vmem [#allocation0], 16
    %v202 = vld [vmem:[%s201] sm:%s189]
    %v203 = vpack.c.bf16 0.0, %v202
    %s204 = sshllo.u32 0, %s190
    %s205 = smul.addr 4, 2
    %s206 = scalar_lea.vmem %s1, %s205
    %207 = vst [vmem:[%s206] sm:%s204] %v203
    %s208 = scalar_lea.vmem [#allocation0], 24
    %v209 = vld [vmem:[%s208] sm:%s189]
    %v210 = vpack.c.bf16 0.0, %v209
    %s211 = sshllo.u32 0, %s190
    %s212 = smul.addr 4, 3
    %s213 = scalar_lea.vmem %s1, %s212
    %214 = vst [vmem:[%s213] sm:%s211] %v210
    %s215 = scalar_lea.vmem [#allocation0], 32
    %v216 = vld [vmem:[%s215] sm:%s189]
    %v217 = vpack.c.bf16 0.0, %v216
    %s218 = sshllo.u32 0, %s190
    %s219 = smul.addr 4, 4
    %s220 = scalar_lea.vmem %s1, %s219
    %221 = vst [vmem:[%s220] sm:%s218] %v217
    %s222 = scalar_lea.vmem [#allocation0], 40
    %v223 = vld [vmem:[%s222] sm:%s189]
    %v224 = vpack.c.bf16 0.0, %v223
    %s225 = sshllo.u32 0, %s190
    %s226 = smul.addr 4, 5
    %s227 = scalar_lea.vmem %s1, %s226
    %228 = vst [vmem:[%s227] sm:%s225] %v224
    %s229 = scalar_lea.vmem [#allocation0], 48
    %v230 = vld [vmem:[%s229] sm:%s189]
    %v231 = vpack.c.bf16 0.0, %v230
    %s232 = sshllo.u32 0, %s190
    %s233 = smul.addr 4, 6
    %s234 = scalar_lea.vmem %s1, %s233
    %235 = vst [vmem:[%s234] sm:%s232] %v231
    %s236 = scalar_lea.vmem [#allocation0], 56
    %v237 = vld [vmem:[%s236] sm:%s189]
    %v238 = vpack.c.bf16 0.0, %v237
    %s239 = sshllo.u32 0, %s190
    %s240 = smul.addr 4, 7
    %s241 = scalar_lea.vmem %s1, %s240
    %242 = vst [vmem:[%s241] sm:%s239] %v238
    %s243 = scalar_lea.vmem [#allocation0], 64
    %v244 = vld [vmem:[%s243] sm:%s189]
    %v245 = vpack.c.bf16 0.0, %v244
    %s246 = sshllo.u32 0, %s190
    %s247 = smul.addr 4, 8
    %s248 = scalar_lea.vmem %s1, %s247
    %249 = vst [vmem:[%s248] sm:%s246] %v245
    %s250 = scalar_lea.vmem [#allocation0], 72
    %v251 = vld [vmem:[%s250] sm:%s189]
    %v252 = vpack.c.bf16 0.0, %v251
    %s253 = sshllo.u32 0, %s190
    %s254 = smul.addr 4, 9
    %s255 = scalar_lea.vmem %s1, %s254
    %256 = vst [vmem:[%s255] sm:%s253] %v252
    %s257 = scalar_lea.vmem [#allocation0], 80
    %v258 = vld [vmem:[%s257] sm:%s189]
    %v259 = vpack.c.bf16 0.0, %v258
    %s260 = sshllo.u32 0, %s190
    %s261 = smul.addr 4, 10
    %s262 = scalar_lea.vmem %s1, %s261
    %263 = vst [vmem:[%s262] sm:%s260] %v259
    %s264 = scalar_lea.vmem [#allocation0], 88
    %v265 = vld [vmem:[%s264] sm:%s189]
    %v266 = vpack.c.bf16 0.0, %v265
    %s267 = sshllo.u32 0, %s190
    %s268 = smul.addr 4, 11
    %s269 = scalar_lea.vmem %s1, %s268
    %270 = vst [vmem:[%s269] sm:%s267] %v266

// kernel: squeeze.11
$region0: #{squeeze.11}
  %s0 = inlined_call_operand.vmem [shape: bf16[1,60,64], index: 0, kind: input, shape index: {}]
  %s1 = inlined_call_operand.vmem [shape: bf16[2,5,6,64], index: 1, kind: output, shape index: {}]
  $region1: #{squeeze.11} parent=0
    #allocation0 [shape = 'u8[40960]{0}', space=vmem, size = 0xa000, scoped, tag = 'scoped mem for output reshape']
    #allocation1 [shape = 'u8[32768]{0}', space=vmem, size = 0x8000, scoped, tag = 'scoped mem for input reshape']
    %s3 = smul.u32 4, 2
    %s4 = sshllo.u32 0, %s3
    %s5 = smul.addr 4, 7
    %s6 = scalar_lea.vmem %s0, %s5
    %s7 = sshrl.u32 %s4, 1
    %s8 = sor.u32 %s4, %s7
    %s9 = sand.u32 %s8, 85
    %s10 = sshrl.u32 %s9, 1
    %s11 = sor.u32 %s9, %s10
    %s12 = sand.u32 51, %s11
    %s13 = sshrl.u32 %s12, 2
    %s14 = sor.u32 %s12, %s13
    %s15 = sand.u32 15, %s14
    %v16 = vld [vmem:[%s6] sm:%s15]
    %v17 = vunpack.c.l.bf16 %v16
    %v18 = vunpack.c.h.bf16 %v16
    %s19 = scalar_lea.vmem [#allocation1], 56
    %20 = vst [vmem:[%s19] sm:%s4] %v17
    %s21 = smul.addr 4, 6
    %s22 = scalar_lea.vmem %s0, %s21
    %s23 = sshrl.u32 %s4, 1
    %s24 = sor.u32 %s4, %s23
    %s25 = sand.u32 %s24, 85
    %s26 = sshrl.u32 %s25, 1
    %s27 = sor.u32 %s25, %s26
    %s28 = sand.u32 51, %s27
    %s29 = sshrl.u32 %s28, 2
    %s30 = sor.u32 %s28, %s29
    %s31 = sand.u32 15, %s30
    %v32 = vld [vmem:[%s22] sm:%s31]
    %v33 = vunpack.c.l.bf16 %v32
    %v34 = vunpack.c.h.bf16 %v32
    %s35 = scalar_lea.vmem [#allocation1], 48
    %36 = vst [vmem:[%s35] sm:%s4] %v33
    %s37 = smul.addr 4, 5
    %s38 = scalar_lea.vmem %s0, %s37
    %s39 = sshrl.u32 %s4, 1
    %s40 = sor.u32 %s4, %s39
    %s41 = sand.u32 %s40, 85
    %s42 = sshrl.u32 %s41, 1
    %s43 = sor.u32 %s41, %s42
    %s44 = sand.u32 51, %s43
    %s45 = sshrl.u32 %s44, 2
    %s46 = sor.u32 %s44, %s45
    %s47 = sand.u32 15, %s46
    %v48 = vld [vmem:[%s38] sm:%s47]
    %v49 = vunpack.c.l.bf16 %v48
    %v50 = vunpack.c.h.bf16 %v48
    %s51 = scalar_lea.vmem [#allocation1], 40
    %52 = vst [vmem:[%s51] sm:%s4] %v49
    %s53 = smul.addr 4, 4
    %s54 = scalar_lea.vmem %s0, %s53
    %s55 = sshrl.u32 %s4, 1
    %s56 = sor.u32 %s4, %s55
    %s57 = sand.u32 %s56, 85
    %s58 = sshrl.u32 %s57, 1
    %s59 = sor.u32 %s57, %s58
    %s60 = sand.u32 51, %s59
    %s61 = sshrl.u32 %s60, 2
    %s62 = sor.u32 %s60, %s61
    %s63 = sand.u32 15, %s62
    %v64 = vld [vmem:[%s54] sm:%s63]
    %v65 = vunpack.c.l.bf16 %v64
    %v66 = vunpack.c.h.bf16 %v64
    %s67 = scalar_lea.vmem [#allocation1], 32
    %68 = vst [vmem:[%s67] sm:%s4] %v65
    %s69 = smul.addr 4, 3
    %s70 = scalar_lea.vmem %s0, %s69
    %s71 = sshrl.u32 %s4, 1
    %s72 = sor.u32 %s4, %s71
    %s73 = sand.u32 %s72, 85
    %s74 = sshrl.u32 %s73, 1
    %s75 = sor.u32 %s73, %s74
    %s76 = sand.u32 51, %s75
    %s77 = sshrl.u32 %s76, 2
    %s78 = sor.u32 %s76, %s77
    %s79 = sand.u32 15, %s78
    %v80 = vld [vmem:[%s70] sm:%s79]
    %v81 = vunpack.c.l.bf16 %v80
    %v82 = vunpack.c.h.bf16 %v80
    %s83 = scalar_lea.vmem [#allocation1], 24
    %84 = vst [vmem:[%s83] sm:%s4] %v81
    %s85 = smul.addr 4, 2
    %s86 = scalar_lea.vmem %s0, %s85
    %s87 = sshrl.u32 %s4, 1
    %s88 = sor.u32 %s4, %s87
    %s89 = sand.u32 %s88, 85
    %s90 = sshrl.u32 %s89, 1
    %s91 = sor.u32 %s89, %s90
    %s92 = sand.u32 51, %s91
    %s93 = sshrl.u32 %s92, 2
    %s94 = sor.u32 %s92, %s93
    %s95 = sand.u32 15, %s94
    %v96 = vld [vmem:[%s86] sm:%s95]
    %v97 = vunpack.c.l.bf16 %v96
    %v98 = vunpack.c.h.bf16 %v96
    %s99 = scalar_lea.vmem [#allocation1], 16
    %100 = vst [vmem:[%s99] sm:%s4] %v97
    %s101 = scalar_lea.vmem %s0, 4
    %s102 = sshrl.u32 %s4, 1
    %s103 = sor.u32 %s4, %s102
    %s104 = sand.u32 %s103, 85
    %s105 = sshrl.u32 %s104, 1
    %s106 = sor.u32 %s104, %s105
    %s107 = sand.u32 51, %s106
    %s108 = sshrl.u32 %s107, 2
    %s109 = sor.u32 %s107, %s108
    %s110 = sand.u32 15, %s109
    %v111 = vld [vmem:[%s101] sm:%s110]
    %v112 = vunpack.c.l.bf16 %v111
    %v113 = vunpack.c.h.bf16 %v111
    %s114 = scalar_lea.vmem [#allocation1], 8
    %115 = vst [vmem:[%s114] sm:%s4] %v112
    %s116 = sshrl.u32 %s4, 1
    %s117 = sor.u32 %s4, %s116
    %s118 = sand.u32 %s117, 85
    %s119 = sshrl.u32 %s118, 1
    %s120 = sor.u32 %s118, %s119
    %s121 = sand.u32 51, %s120
    %s122 = sshrl.u32 %s121, 2
    %s123 = sor.u32 %s121, %s122
    %s124 = sand.u32 15, %s123
    %v125 = vld [vmem:[%s0] sm:%s124]
    %v126 = vunpack.c.l.bf16 %v125
    %v127 = vunpack.c.h.bf16 %v125
    %128 = vst [vmem:[#allocation1] sm:%s4] %v126
    %v129 = vld [vmem:[#allocation1] sm:$0xff]
    %vm130 = vcmask 523264
    %131 = vst.msk [vmem:[#allocation0] sm:$0x3f] %vm130, %v129
    %s132 = scalar_lea.vmem [#allocation0], 2
    %133 = vst.msk [vmem:[%s132] sm:$0xc0] %vm130, %v129
    %s134 = scalar_lea.vmem [#allocation1], 8
    %v135 = vld [vmem:[%s134] sm:$0xff]
    %vm136 = vcmask 523264
    %s137 = scalar_lea.vmem [#allocation0], 10
    %138 = vst.msk [vmem:[%s137] sm:$0xf] %vm136, %v135
    %s139 = scalar_lea.vmem [#allocation0], 12
    %140 = vst.msk [vmem:[%s139] sm:$0xf0] %vm136, %v135
    %s141 = scalar_lea.vmem [#allocation1], 16
    %v142 = vld [vmem:[%s141] sm:$0xff]
    %vm143 = vcmask 523264
    %s144 = scalar_lea.vmem [#allocation0], 20
    %145 = vst.msk [vmem:[%s144] sm:$0x3] %vm143, %v142
    %s146 = scalar_lea.vmem [#allocation0], 22
    %147 = vst.msk [vmem:[%s146] sm:$0xfc] %vm143, %v142
    %s148 = scalar_lea.vmem [#allocation1], 24
    %v149 = vld [vmem:[%s148] sm:$0xff]
    %vm150 = vcmask 523264
    %s151 = scalar_lea.vmem [#allocation0], 32
    %152 = vst.msk [vmem:[%s151] sm:$0x3f] %vm150, %v149
    %s153 = scalar_lea.vmem [#allocation0], 34
    %154 = vst.msk [vmem:[%s153] sm:$0xc0] %vm150, %v149
    %s155 = scalar_lea.vmem [#allocation1], 32
    %v156 = vld [vmem:[%s155] sm:$0xff]
    %vm157 = vcmask 523264
    %s158 = scalar_lea.vmem [#allocation0], 42
    %159 = vst.msk [vmem:[%s158] sm:$0xf] %vm157, %v156
    %s160 = scalar_lea.vmem [#allocation0], 44
    %161 = vst.msk [vmem:[%s160] sm:$0xf0] %vm157, %v156
    %s162 = scalar_lea.vmem [#allocation1], 40
    %v163 = vld [vmem:[%s162] sm:$0xff]
    %vm164 = vcmask 523264
    %s165 = scalar_lea.vmem [#allocation0], 52
    %166 = vst.msk [vmem:[%s165] sm:$0x3] %vm164, %v163
    %s167 = scalar_lea.vmem [#allocation0], 54
    %168 = vst.msk [vmem:[%s167] sm:$0xfc] %vm164, %v163
    %s169 = scalar_lea.vmem [#allocation1], 48
    %v170 = vld [vmem:[%s169] sm:$0xff]
    %vm171 = vcmask 523264
    %s172 = scalar_lea.vmem [#allocation0], 64
    %173 = vst.msk [vmem:[%s172] sm:$0x3f] %vm171, %v170
    %s174 = scalar_lea.vmem [#allocation0], 66
    %175 = vst.msk [vmem:[%s174] sm:$0xc0] %vm171, %v170
    %s176 = scalar_lea.vmem [#allocation1], 56
    %v177 = vld [vmem:[%s176] sm:$0xf]
    %vm178 = vcmask 523264
    %s179 = scalar_lea.vmem [#allocation0], 74
    %180 = vst.msk [vmem:[%s179] sm:$0xf] %vm178, %v177
    %s182 = smul.u32 4, 2
    %s183 = sshllo.u32 0, %s182
    %s184 = sshrl.u32 %s182, 1
    %v185 = vld [vmem:[#allocation0] sm:%s183]
    %v186 = vpack.c.bf16 0.0, %v185
    %s187 = sshllo.u32 0, %s184
    %188 = vst [vmem:[%s1] sm:%s187] %v186
    %s189 = scalar_lea.vmem [#allocation0], 8
    %v190 = vld [vmem:[%s189] sm:%s183]
    %v191 = vpack.c.bf16 0.0, %v190
    %s192 = sshllo.u32 0, %s184
    %s193 = scalar_lea.vmem %s1, 4
    %194 = vst [vmem:[%s193] sm:%s192] %v191
    %s195 = scalar_lea.vmem [#allocation0], 16
    %v196 = vld [vmem:[%s195] sm:%s183]
    %v197 = vpack.c.bf16 0.0, %v196
    %s198 = sshllo.u32 0, %s184
    %s199 = smul.addr 4, 2
    %s200 = scalar_lea.vmem %s1, %s199
    %201 = vst [vmem:[%s200] sm:%s198] %v197
    %s202 = scalar_lea.vmem [#allocation0], 24
    %v203 = vld [vmem:[%s202] sm:%s183]
    %v204 = vpack.c.bf16 0.0, %v203
    %s205 = sshllo.u32 0, %s184
    %s206 = smul.addr 4, 3
    %s207 = scalar_lea.vmem %s1, %s206
    %208 = vst [vmem:[%s207] sm:%s205] %v204
    %s209 = scalar_lea.vmem [#allocation0], 32
    %v210 = vld [vmem:[%s209] sm:%s183]
    %v211 = vpack.c.bf16 0.0, %v210
    %s212 = sshllo.u32 0, %s184
    %s213 = smul.addr 4, 4
    %s214 = scalar_lea.vmem %s1, %s213
    %215 = vst [vmem:[%s214] sm:%s212] %v211
    %s216 = scalar_lea.vmem [#allocation0], 40
    %v217 = vld [vmem:[%s216] sm:%s183]
    %v218 = vpack.c.bf16 0.0, %v217
    %s219 = sshllo.u32 0, %s184
    %s220 = smul.addr 4, 5
    %s221 = scalar_lea.vmem %s1, %s220
    %222 = vst [vmem:[%s221] sm:%s219] %v218
    %s223 = scalar_lea.vmem [#allocation0], 48
    %v224 = vld [vmem:[%s223] sm:%s183]
    %v225 = vpack.c.bf16 0.0, %v224
    %s226 = sshllo.u32 0, %s184
    %s227 = smul.addr 4, 6
    %s228 = scalar_lea.vmem %s1, %s227
    %229 = vst [vmem:[%s228] sm:%s226] %v225
    %s230 = scalar_lea.vmem [#allocation0], 56
    %v231 = vld [vmem:[%s230] sm:%s183]
    %v232 = vpack.c.bf16 0.0, %v231
    %s233 = sshllo.u32 0, %s184
    %s234 = smul.addr 4, 7
    %s235 = scalar_lea.vmem %s1, %s234
    %236 = vst [vmem:[%s235] sm:%s233] %v232
    %s237 = scalar_lea.vmem [#allocation0], 64
    %v238 = vld [vmem:[%s237] sm:%s183]
    %v239 = vpack.c.bf16 0.0, %v238
    %s240 = sshllo.u32 0, %s184
    %s241 = smul.addr 4, 8
    %s242 = scalar_lea.vmem %s1, %s241
    %243 = vst [vmem:[%s242] sm:%s240] %v239
    %s244 = scalar_lea.vmem [#allocation0], 72
    %v245 = vld [vmem:[%s244] sm:%s183]
    %v246 = vpack.c.bf16 0.0, %v245
    %s247 = sshllo.u32 0, %s184
    %s248 = smul.addr 4, 9
    %s249 = scalar_lea.vmem %s1, %s248
    %250 = vst [vmem:[%s249] sm:%s247] %v246

// kernel: model_forward.6
$region0: #{model_forward.6}
  #allocation0 [shape = 'u32[]', space=smem, size = 0x4, offset = 0x4, fixed_abs, tag = 'smem constant byte address 0x4 - core index']
  #allocation1 [shape = 'u32[144,128]{1,0:T(1,128)}', space=vmem, size = 0x12000, scoped, tag = 'internal scratch']
  %s0 = inlined_call_operand.vmem [shape: bf16[2,64,256], index: 0, kind: input, shape index: {}]
  %s1 = inlined_call_operand.vmem [shape: bf16[2,256,64], index: 1, kind: input, shape index: {}]
  %s2 = inlined_call_operand.vmem [shape: f32[2,1,64], index: 2, kind: input, shape index: {}]
  %s3 = inlined_call_operand.vmem [shape: f32[2,1,64], index: 3, kind: input, shape index: {}]
  %s4 = inlined_call_operand.vmem [shape: bf16[2,64,64], index: 4, kind: output, shape index: {}]
  %s5 = sld [smem:[#allocation0]]
  $region49: #{model_forward.6} parent=0
    _
  %s7 = ssub.s32 1, %s5
  %s8 = scalar_select 0, %s7, %s5
  loop: start=0, step=1, limit=4
  $region2: #{model_forward.6} parent=0 // loop_pre_header
    _
  $region3: #{model_forward.6} parent=0 // loop_header
    %s10 = sphi 0, %s14
    %p11 = scmp.ge.s32.totalorder %s10, 4
    %s20 = sphi 0, %s22
    %s23 = sphi 0, %s20
    %s24 = sphi 0, %s23
    %s40 = sphi 0, %s24
    %s46 = sphi 0, %s48
    %s49 = sphi 0, %s46
    %s50 = sphi 0, %s49
    %s66 = sphi 0, %s50
    %s72 = sphi 0, %s74
    %s75 = sphi 0, %s72
    %s76 = sphi 0, %s75
    %s92 = sphi 0, %s76
    %s98 = sphi 0, %s100
    %s101 = sphi 0, %s98
    %s102 = sphi 0, %s101
    %s118 = sphi 0, %s102
    %s124 = sphi 0, %s126
    %s127 = sphi 0, %s124
    %s128 = sphi 0, %s127
    %s144 = sphi 0, %s128
  $region4: #{model_forward.6} parent=0 // loop_header_branch
    %13 = sbr.rel (%p11) target = $region8
  $region5: #{model_forward.6} parent=0 // loop_body
    %s15 = ssub.s32 %s10, 1
    %s16 = ssub.s32 %s10, 2
    %s17 = sadd.s32 %s10, 1
    %s18 = ssub.s32 %s10, %s17
    %p19 = scmp.eq.s32.totalorder %s18, 0
    %s21 = sadd.s32 %s20, 1
    %s22 = scalar_select %p19, %s20, %s21
    %p25 = pneg %p19
    %p26 = scmp.eq.s32.totalorder %s10, 1
    %p27 = por %p25, %p26
    %p28 = scmp.ne.s32.totalorder %s20, %s23
    %p29 = scmp.eq.s32.totalorder %s10, 0
    %p30 = por %p28, %p29
    %p31 = scmp.ne.s32.totalorder %s20, %s23
    %p32 = scmp.eq.s32.totalorder %s15, 1
    %p33 = por %p31, %p32
    %p34 = scmp.ne.s32.totalorder %s23, %s24
    %p35 = scmp.eq.s32.totalorder %s15, 0
    %p36 = por %p34, %p35
    %p37 = scmp.ne.s32.totalorder %s23, %s24
    %p38 = scmp.eq.s32.totalorder %s16, 1
    %p39 = por %p37, %p38
    %p41 = scmp.ne.s32.totalorder %s24, %s40
    %p42 = scmp.eq.s32.totalorder %s16, 0
    %p43 = por %p41, %p42
    %s44 = ssub.s32 %s10, %s17
    %p45 = scmp.eq.s32.totalorder %s44, 0
    %s47 = sadd.s32 %s46, 1
    %s48 = scalar_select %p45, %s46, %s47
    %p51 = pneg %p45
    %p52 = scmp.eq.s32.totalorder %s10, 1
    %p53 = por %p51, %p52
    %p54 = scmp.ne.s32.totalorder %s46, %s49
    %p55 = scmp.eq.s32.totalorder %s10, 0
    %p56 = por %p54, %p55
    %p57 = scmp.ne.s32.totalorder %s46, %s49
    %p58 = scmp.eq.s32.totalorder %s15, 1
    %p59 = por %p57, %p58
    %p60 = scmp.ne.s32.totalorder %s49, %s50
    %p61 = scmp.eq.s32.totalorder %s15, 0
    %p62 = por %p60, %p61
    %p63 = scmp.ne.s32.totalorder %s49, %s50
    %p64 = scmp.eq.s32.totalorder %s16, 1
    %p65 = por %p63, %p64
    %p67 = scmp.ne.s32.totalorder %s50, %s66
    %p68 = scmp.eq.s32.totalorder %s16, 0
    %p69 = por %p67, %p68
    %s70 = ssub.s32 %s10, %s17
    %p71 = scmp.eq.s32.totalorder %s70, 0
    %s73 = sadd.s32 %s72, 1
    %s74 = scalar_select %p71, %s72, %s73
    %p77 = pneg %p71
    %p78 = scmp.eq.s32.totalorder %s10, 1
    %p79 = por %p77, %p78
    %p80 = scmp.ne.s32.totalorder %s72, %s75
    %p81 = scmp.eq.s32.totalorder %s10, 0
    %p82 = por %p80, %p81
    %p83 = scmp.ne.s32.totalorder %s72, %s75
    %p84 = scmp.eq.s32.totalorder %s15, 1
    %p85 = por %p83, %p84
    %p86 = scmp.ne.s32.totalorder %s75, %s76
    %p87 = scmp.eq.s32.totalorder %s15, 0
    %p88 = por %p86, %p87
    %p89 = scmp.ne.s32.totalorder %s75, %s76
    %p90 = scmp.eq.s32.totalorder %s16, 1
    %p91 = por %p89, %p90
    %p93 = scmp.ne.s32.totalorder %s76, %s92
    %p94 = scmp.eq.s32.totalorder %s16, 0
    %p95 = por %p93, %p94
    %s96 = ssub.s32 %s10, %s17
    %p97 = scmp.eq.s32.totalorder %s96, 0
    %s99 = sadd.s32 %s98, 1
    %s100 = scalar_select %p97, %s98, %s99
    %p103 = pneg %p97
    %p104 = scmp.eq.s32.totalorder %s10, 1
    %p105 = por %p103, %p104
    %p106 = scmp.ne.s32.totalorder %s98, %s101
    %p107 = scmp.eq.s32.totalorder %s10, 0
    %p108 = por %p106, %p107
    %p109 = scmp.ne.s32.totalorder %s98, %s101
    %p110 = scmp.eq.s32.totalorder %s15, 1
    %p111 = por %p109, %p110
    %p112 = scmp.ne.s32.totalorder %s101, %s102
    %p113 = scmp.eq.s32.totalorder %s15, 0
    %p114 = por %p112, %p113
    %p115 = scmp.ne.s32.totalorder %s101, %s102
    %p116 = scmp.eq.s32.totalorder %s16, 1
    %p117 = por %p115, %p116
    %p119 = scmp.ne.s32.totalorder %s102, %s118
    %p120 = scmp.eq.s32.totalorder %s16, 0
    %p121 = por %p119, %p120
    %s122 = ssub.s32 %s10, %s17
    %p123 = scmp.eq.s32.totalorder %s122, 0
    %s125 = sadd.s32 %s124, 1
    %s126 = scalar_select %p123, %s124, %s125
    %p129 = pneg %p123
    %p130 = scmp.eq.s32.totalorder %s10, 1
    %p131 = por %p129, %p130
    %p132 = scmp.ne.s32.totalorder %s124, %s127
    %p133 = scmp.eq.s32.totalorder %s10, 0
    %p134 = por %p132, %p133
    %p135 = scmp.ne.s32.totalorder %s124, %s127
    %p136 = scmp.eq.s32.totalorder %s15, 1
    %p137 = por %p135, %p136
    %p138 = scmp.ne.s32.totalorder %s127, %s128
    %p139 = scmp.eq.s32.totalorder %s15, 0
    %p140 = por %p138, %p139
    %p141 = scmp.ne.s32.totalorder %s127, %s128
    %p142 = scmp.eq.s32.totalorder %s16, 1
    %p143 = por %p141, %p142
    %p145 = scmp.ne.s32.totalorder %s128, %s144
    %p146 = scmp.eq.s32.totalorder %s16, 0
    %p147 = por %p145, %p146
    %p148 = scmp.le.s32.totalorder 1, %s10
    %p149 = scmp.lt.s32.totalorder %s10, 3
    %p150 = pnand %p148, %p149
    %p151 = pneg %p150
    // Predicated region
    $region9: #{model_forward.6} parent=5 // pred_check
      _
    $region10: #{model_forward.6} parent=5 // pred_check_branch
      %153 = sbr.rel (%p150) target = $region12
    $region11: #{model_forward.6} parent=5 // pred_region
      %s154 = ssub.s32 %s10, 1
    $region12: #{model_forward.6} parent=5 // pred_fallthru
      _
    %p155 = scmp.lt.s32.totalorder %s10, 2
    // Predicated region
    $region13: #{model_forward.6} parent=5 // pred_check
      %p156 = pneg %p155
    $region14: #{model_forward.6} parent=5 // pred_check_branch
      %158 = sbr.rel (%p156) target = $region16
    $region15: #{model_forward.6} parent=5 // pred_region
      // Predicated region
      $region17: #{model_forward.6} parent=15 // pred_check
        %p159 = pneg %p30
      $region18: #{model_forward.6} parent=15 // pred_check_branch
        %161 = sbr.rel (%p159) target = $region20
      $region19: #{model_forward.6} parent=15 // pred_region
        %p162 = scmp.lt.s32.totalorder %s10, 1
        %s163 = scalar_select %p162, %s10, 1
        %s164 = smul.addr %s163, 16
        %s165 = smul.addr %s164, 4
        %s166 = scalar_lea.vmem %s0, %s165
      $region20: #{model_forward.6} parent=15 // pred_fallthru
        _
      // Predicated region
      $region21: #{model_forward.6} parent=15 // pred_check
        %p167 = pneg %p56
      $region22: #{model_forward.6} parent=15 // pred_check_branch
        %169 = sbr.rel (%p167) target = $region24
      $region23: #{model_forward.6} parent=15 // pred_region
        %p170 = scmp.lt.s32.totalorder %s10, 1
        %s171 = scalar_select %p170, %s10, 1
        %s172 = smul.addr %s171, 32
        %s173 = smul.addr %s172, 4
        %s174 = scalar_lea.vmem %s1, %s173
      $region24: #{model_forward.6} parent=15 // pred_fallthru
        _
      // Predicated region
      $region25: #{model_forward.6} parent=15 // pred_check
        %p175 = pneg %p82
      $region26: #{model_forward.6} parent=15 // pred_check_branch
        %177 = sbr.rel (%p175) target = $region28
      $region27: #{model_forward.6} parent=15 // pred_region
        %p178 = scmp.lt.s32.totalorder %s10, 1
        %s179 = scalar_select %p178, %s10, 1
        %s180 = scalar_lea.vmem %s2, %s179
      $region28: #{model_forward.6} parent=15 // pred_fallthru
        _
      // Predicated region
      $region29: #{model_forward.6} parent=15 // pred_check
        %p181 = pneg %p108
      $region30: #{model_forward.6} parent=15 // pred_check_branch
        %183 = sbr.rel (%p181) target = $region32
      $region31: #{model_forward.6} parent=15 // pred_region
        %p184 = scmp.lt.s32.totalorder %s10, 1
        %s185 = scalar_select %p184, %s10, 1
        %s186 = scalar_lea.vmem %s3, %s185
      $region32: #{model_forward.6} parent=15 // pred_fallthru
        _
    $region16: #{model_forward.6} parent=5 // pred_fallthru
      _
    %p187 = scmp.le.s32.totalorder 1, %s10
    %p188 = scmp.lt.s32.totalorder %s10, 3
    %p189 = pnand %p187, %p188
    %p190 = pneg %p189
    // Predicated region
    $region33: #{model_forward.6} parent=5 // pred_check
      _
    $region34: #{model_forward.6} parent=5 // pred_check_branch
      %192 = sbr.rel (%p189) target = $region36
    $region35: #{model_forward.6} parent=5 // pred_region
      %s193 = ssub.s32 %s10, 1
      %p194 = scmp.lt.s32.totalorder %s15, 1
      %s195 = scalar_select %p194, %s15, 1
      %s196 = smul.addr %s195, 16
      %s197 = smul.addr %s196, 4
      %s198 = scalar_lea.vmem %s0, %s197
      %p199 = pneg %p36
      %p200 = pneg %p33
      %p201 = scmp.lt.s32.totalorder %s15, 1
      %s202 = scalar_select %p201, %s15, 1
      %s203 = smul.addr %s202, 32
      %s204 = smul.addr %s203, 4
      %s205 = scalar_lea.vmem %s1, %s204
      %p206 = pneg %p62
      %p207 = pneg %p59
      %p208 = scmp.lt.s32.totalorder %s15, 1
      %s209 = scalar_select %p208, %s15, 1
      %s210 = scalar_lea.vmem %s2, %s209
      %p211 = pneg %p88
      %p212 = pneg %p85
      %p213 = scmp.lt.s32.totalorder %s15, 1
      %s214 = scalar_select %p213, %s15, 1
      %s215 = scalar_lea.vmem %s3, %s214
      %p216 = pneg %p114
      %p217 = pneg %p111
      %p218 = pneg %p140
      %p219 = pneg %p137
      %p220 = scmp.lt.s32.totalorder %s15, 1
      %s221 = scalar_select %p220, %s15, 1
      %s222 = smul.addr %s221, 8
      %s223 = smul.addr %s222, 4
      %s224 = scalar_lea.vmem %s4, %s223
      %p225 = scmp.lt.s32.totalorder %s15, 1
      %s226 = scalar_select %p225, %s15, 1
      %s227 = smul.addr %s226, 16
      %s228 = smul.addr %s227, 4
      %s229 = scalar_lea.vmem %s0, %s228
      %p230 = scmp.lt.s32.totalorder %s15, 1
      %s231 = scalar_select %p230, %s15, 1
      %s232 = smul.addr %s231, 32
      %s233 = smul.addr %s232, 4
      %s234 = scalar_lea.vmem %s1, %s233
      %p235 = scmp.lt.s32.totalorder %s15, 1
      %s236 = scalar_select %p235, %s15, 1
      %s237 = scalar_lea.vmem %s2, %s236
      %p238 = scmp.lt.s32.totalorder %s15, 1
      %s239 = scalar_select %p238, %s15, 1
      %s240 = scalar_lea.vmem %s3, %s239
      %p241 = scmp.lt.s32.totalorder %s15, 1
      %s242 = scalar_select %p241, %s15, 1
      %s243 = smul.addr %s242, 8
      %s244 = smul.addr %s243, 4
      %s245 = scalar_lea.vmem %s4, %s244
      %v247 = vld [vmem:[%s229] sm:$0xff]
      %v248 = vld [vmem:[%s229 + $0x8] sm:$0xff]
      %v249 = vld [vmem:[%s229 + $0x10] sm:$0xff]
      %v250 = vld [vmem:[%s229 + $0x18] sm:$0xff]
      %v251 = vld [vmem:[%s229 + $0x20] sm:$0xff]
      %v252 = vld [vmem:[%s229 + $0x28] sm:$0xff]
      %v253 = vld [vmem:[%s229 + $0x30] sm:$0xff]
      %v254 = vld [vmem:[%s229 + $0x38] sm:$0xff]
      %v255 = vld [vmem:[%s234] sm:$0xf]
      %v256 = vld [vmem:[%s234 + $0x4] sm:$0xf]
      %v257 = vld [vmem:[%s234 + $0x8] sm:$0xf]
      %v258 = vld [vmem:[%s234 + $0xc] sm:$0xf]
      %v259 = vld [vmem:[%s234 + $0x10] sm:$0xf]
      %v260 = vld [vmem:[%s234 + $0x14] sm:$0xf]
      %v261 = vld [vmem:[%s234 + $0x18] sm:$0xf]
      %v262 = vld [vmem:[%s234 + $0x1c] sm:$0xf]
      %v263 = vld [vmem:[%s234 + $0x20] sm:$0xf]
      %v264 = vld [vmem:[%s234 + $0x24] sm:$0xf]
      %v265 = vld [vmem:[%s234 + $0x28] sm:$0xf]
      %v266 = vld [vmem:[%s234 + $0x2c] sm:$0xf]
      %v267 = vld [vmem:[%s234 + $0x30] sm:$0xf]
      %v268 = vld [vmem:[%s234 + $0x34] sm:$0xf]
      %v269 = vld [vmem:[%s234 + $0x38] sm:$0xf]
      %v270 = vld [vmem:[%s234 + $0x3c] sm:$0xf]
      %v271 = vld [vmem:[%s234 + $0x40] sm:$0xf]
      %v272 = vld [vmem:[%s234 + $0x44] sm:$0xf]
      %v273 = vld [vmem:[%s234 + $0x48] sm:$0xf]
      %v274 = vld [vmem:[%s234 + $0x4c] sm:$0xf]
      %v275 = vld [vmem:[%s234 + $0x50] sm:$0xf]
      %v276 = vld [vmem:[%s234 + $0x54] sm:$0xf]
      %v277 = vld [vmem:[%s234 + $0x58] sm:$0xf]
      %v278 = vld [vmem:[%s234 + $0x5c] sm:$0xf]
      %v279 = vld [vmem:[%s234 + $0x60] sm:$0xf]
      %v280 = vld [vmem:[%s234 + $0x64] sm:$0xf]
      %v281 = vld [vmem:[%s234 + $0x68] sm:$0xf]
      %v282 = vld [vmem:[%s234 + $0x6c] sm:$0xf]
      %v283 = vld [vmem:[%s234 + $0x70] sm:$0xf]
      %v284 = vld [vmem:[%s234 + $0x74] sm:$0xf]
      %v285 = vld [vmem:[%s234 + $0x78] sm:$0xf]
      %v286 = vld [vmem:[%s234 + $0x7c] sm:$0xf]
      %v295 = vunpack.c.l.b16 %v247
      %v296 = vunpack.c.h.b16 %v247
      %v297 = vunpack.c.l.b16 %v248
      %v298 = vunpack.c.h.b16 %v248
      %v299 = vunpack.c.l.b16 %v249
      %v300 = vunpack.c.h.b16 %v249
      %v301 = vunpack.c.l.b16 %v250
      %v302 = vunpack.c.h.b16 %v250
      %v303 = vunpack.c.l.b16 %v251
      %v304 = vunpack.c.h.b16 %v251
      %v305 = vunpack.c.l.b16 %v252
      %v306 = vunpack.c.h.b16 %v252
      %v307 = vunpack.c.l.b16 %v253
      %v308 = vunpack.c.h.b16 %v253
      %v309 = vunpack.c.l.b16 %v254
      %v310 = vunpack.c.h.b16 %v254
      %v311 = vpack.c.b16 %v297, %v295
      %v312 = vpack.c.b16 %v298, %v296
      %v313 = vpack.c.b16 %v301, %v299
      %v314 = vpack.c.b16 %v302, %v300
      %v315 = vpack.c.b16 %v305, %v303
      %v316 = vpack.c.b16 %v306, %v304
      %v317 = vpack.c.b16 %v309, %v307
      %v318 = vpack.c.b16 %v310, %v308
      %v359 = vunpack.c.l.b16 %v255
      %v360 = vunpack.c.l.b16 %v256
      %v361 = vunpack.c.l.b16 %v257
      %v362 = vunpack.c.l.b16 %v258
      %v363 = vunpack.c.l.b16 %v259
      %v364 = vunpack.c.l.b16 %v260
      %v365 = vunpack.c.l.b16 %v261
      %v366 = vunpack.c.l.b16 %v262
      %v367 = vunpack.c.l.b16 %v263
      %v368 = vunpack.c.l.b16 %v264
      %v369 = vunpack.c.l.b16 %v265
      %v370 = vunpack.c.l.b16 %v266
      %v371 = vunpack.c.l.b16 %v267
      %v372 = vunpack.c.l.b16 %v268
      %v373 = vunpack.c.l.b16 %v269
      %v374 = vunpack.c.l.b16 %v270
      %v375 = vunpack.c.l.b16 %v271
      %v376 = vunpack.c.l.b16 %v272
      %v377 = vunpack.c.l.b16 %v273
      %v378 = vunpack.c.l.b16 %v274
      %v379 = vunpack.c.l.b16 %v275
      %v380 = vunpack.c.l.b16 %v276
      %v381 = vunpack.c.l.b16 %v277
      %v382 = vunpack.c.l.b16 %v278
      %v383 = vunpack.c.l.b16 %v279
      %v384 = vunpack.c.l.b16 %v280
      %v385 = vunpack.c.l.b16 %v281
      %v386 = vunpack.c.l.b16 %v282
      %v387 = vunpack.c.l.b16 %v283
      %v388 = vunpack.c.l.b16 %v284
      %v389 = vunpack.c.l.b16 %v285
      %v390 = vunpack.c.l.b16 %v286
      %v391 = vpack.c.b16 %v360, %v359
      %v392 = vpack.c.b16 %v362, %v361
      %v393 = vpack.c.b16 %v364, %v363
      %v394 = vpack.c.b16 %v366, %v365
      %v395 = vpack.c.b16 %v368, %v367
      %v396 = vpack.c.b16 %v370, %v369
      %v397 = vpack.c.b16 %v372, %v371
      %v398 = vpack.c.b16 %v374, %v373
      %v399 = vpack.c.b16 %v376, %v375
      %v400 = vpack.c.b16 %v378, %v377
      %v401 = vpack.c.b16 %v380, %v379
      %v402 = vpack.c.b16 %v382, %v381
      %v403 = vpack.c.b16 %v384, %v383
      %v404 = vpack.c.b16 %v386, %v385
      %v405 = vpack.c.b16 %v388, %v387
      %v406 = vpack.c.b16 %v390, %v389
      %423 = vmatprep.subr.bf16.mxu0 0
      %424 = vmatpush1.bf16.msra.mxu0 %v391
      %425 = vmatprep.subr.bf16.mxu0 0
      %426 = vmatpush1.bf16.msra.mxu0 %v392
      %427 = vmatprep.subr.bf16.mxu0 0
      %428 = vmatpush1.bf16.msra.mxu0 %v393
      %429 = vmatprep.subr.bf16.mxu0 0
      %430 = vmatpush1.bf16.msra.mxu0 %v394
      %431 = vmatprep.subr.bf16.mxu0 0
      %432 = vmatpush1.bf16.msra.mxu0 %v395
      %433 = vmatprep.subr.bf16.mxu0 0
      %434 = vmatpush1.bf16.msra.mxu0 %v396
      %435 = vmatprep.subr.bf16.mxu0 0
      %436 = vmatpush1.bf16.msra.mxu0 %v397
      %437 = vmatprep.subr.bf16.mxu0 0
      %438 = vmatpush1.bf16.msra.mxu0 %v398
      %439 = vmatprep.subr.bf16.mxu0 0
      %440 = vmatpush1.bf16.msra.mxu0 %v399
      %441 = vmatprep.subr.bf16.mxu0 0
      %442 = vmatpush1.bf16.msra.mxu0 %v400
      %443 = vmatprep.subr.bf16.mxu0 0
      %444 = vmatpush1.bf16.msra.mxu0 %v401
      %445 = vmatprep.subr.bf16.mxu0 0
      %446 = vmatpush1.bf16.msra.mxu0 %v402
      %447 = vmatprep.subr.bf16.mxu0 0
      %448 = vmatpush1.bf16.msra.mxu0 %v403
      %449 = vmatprep.subr.bf16.mxu0 0
      %450 = vmatpush1.bf16.msra.mxu0 %v404
      %451 = vmatprep.subr.bf16.mxu0 0
      %452 = vmatpush1.bf16.msra.mxu0 %v405
      %453 = vmatprep.subr.bf16.mxu0 0
      %454 = vmatpush1.bf16.msra.mxu0 %v406
      %455 = vmatprep.mubr.bf16.mxu0 %v312
      %456 = vmatmul.mubr.bf16.gmra.mrb[0].mxu0 %v311
      %v457 = vpop.f32.mrb[0].mxu0
      %v458 = vadd.f32 0.0, %v457
      %v459 = vpop.f32.mrb[0].mxu0
      %v460 = vpop.f32.mrb[0].mxu0
      %v461 = vadd.f32 0.0, %v460
      %v462 = vpop.f32.mrb[0].mxu0
      %463 = vmatprep.mubr.bf16.mxu0 %v314
      %464 = vmatmul.mubr.bf16.gmra.mrb[0].mxu0 %v313
      %v465 = vpop.f32.mrb[0].mxu0
      %v466 = vadd.f32 0.0, %v465
      %v467 = vpop.f32.mrb[0].mxu0
      %v468 = vpop.f32.mrb[0].mxu0
      %v469 = vadd.f32 0.0, %v468
      %v470 = vpop.f32.mrb[0].mxu0
      %471 = vmatprep.mubr.bf16.mxu0 %v316
      %472 = vmatmul.mubr.bf16.gmra.mrb[0].mxu0 %v315
      %v473 = vpop.f32.mrb[0].mxu0
      %v474 = vadd.f32 0.0, %v473
      %v475 = vpop.f32.mrb[0].mxu0
      %v476 = vpop.f32.mrb[0].mxu0
      %v477 = vadd.f32 0.0, %v476
      %v478 = vpop.f32.mrb[0].mxu0
      %479 = vmatprep.mubr.bf16.mxu0 %v318
      %480 = vmatmul.mubr.bf16.gmra.mrb[0].mxu0 %v317
      %v481 = vpop.f32.mrb[0].mxu0
      %v482 = vadd.f32 0.0, %v481
      %v483 = vpop.f32.mrb[0].mxu0
      %v484 = vpop.f32.mrb[0].mxu0
      %v485 = vadd.f32 0.0, %v484
      %v486 = vpop.f32.mrb[0].mxu0
      %487 = vdwg.mxu0
      %v488 = vld [vmem:[%s237] sm:$0x1]
      %v490 = vlaneseq
      %v491 = vshrl.u32 %v490, 7
      %v492 = vsub.s32 0, %v491
      %v493 = vrot.slane %v488, %v492
      %v495 = vmul.f32 %v458, %v493
      %v496 = vmul.f32 %v461, %v493
      %v497 = vmul.f32 %v466, %v493
      %v498 = vmul.f32 %v469, %v493
      %v499 = vmul.f32 %v474, %v493
      %v500 = vmul.f32 %v477, %v493
      %v501 = vmul.f32 %v482, %v493
      %v502 = vmul.f32 %v485, %v493
      %v503 = vld [vmem:[%s240] sm:$0x1]
      %v505 = vlaneseq
      %v506 = vshrl.u32 %v505, 7
      %v507 = vsub.s32 0, %v506
      %v508 = vrot.slane %v503, %v507
      %v510 = vadd.f32 %v495, %v508
      %v511 = vadd.f32 %v496, %v508
      %v512 = vadd.f32 %v497, %v508
      %v513 = vadd.f32 %v498, %v508
      %v514 = vadd.f32 %v499, %v508
      %v515 = vadd.f32 %v500, %v508
      %v516 = vadd.f32 %v501, %v508
      %v517 = vadd.f32 %v502, %v508
      %v518 = vmax.f32 %v510, 0.0
      %v519 = vmax.f32 %v511, 0.0
      %v520 = vmax.f32 %v512, 0.0
      %v521 = vmax.f32 %v513, 0.0
      %v522 = vmax.f32 %v514, 0.0
      %v523 = vmax.f32 %v515, 0.0
      %v524 = vmax.f32 %v516, 0.0
      %v525 = vmax.f32 %v517, 0.0
      %v526 = vpack.c.bf16 %v519, %v518
      %v527 = vpack.c.bf16 %v521, %v520
      %v528 = vpack.c.bf16 %v523, %v522
      %v529 = vpack.c.bf16 %v525, %v524
      %v534 = vunpack.c.l.b16 %v526
      %v535 = vunpack.c.h.b16 %v526
      %v536 = vunpack.c.l.b16 %v527
      %v537 = vunpack.c.h.b16 %v527
      %v538 = vunpack.c.l.b16 %v528
      %v539 = vunpack.c.h.b16 %v528
      %v540 = vunpack.c.l.b16 %v529
      %v541 = vunpack.c.h.b16 %v529
      %v542 = vpack.c.b16 %v534, %v534
      %v543 = vpack.c.b16 %v535, %v535
      %v544 = vpack.c.b16 %v536, %v536
      %v545 = vpack.c.b16 %v537, %v537
      %v546 = vpack.c.b16 %v538, %v538
      %v547 = vpack.c.b16 %v539, %v539
      %v548 = vpack.c.b16 %v540, %v540
      %v549 = vpack.c.b16 %v541, %v541
      %vm558 = vcmask 519168
      %559 = vst.msk [vmem:[%s245] sm:$0xf] %vm558, %v542
      %560 = vst.msk [vmem:[%s245 + $0x4] sm:$0xf] %vm558, %v543
      %561 = vst.msk [vmem:[%s245 + $0x8] sm:$0xf] %vm558, %v544
      %562 = vst.msk [vmem:[%s245 + $0xc] sm:$0xf] %vm558, %v545
      %563 = vst.msk [vmem:[%s245 + $0x10] sm:$0xf] %vm558, %v546
      %564 = vst.msk [vmem:[%s245 + $0x14] sm:$0xf] %vm558, %v547
      %565 = vst.msk [vmem:[%s245 + $0x18] sm:$0xf] %vm558, %v548
      %566 = vst.msk [vmem:[%s245 + $0x1c] sm:$0xf] %vm558, %v549
      %p567 = scmp.lt.s32.totalorder %s15, 1
      %s568 = scalar_select %p567, %s15, 1
      %s569 = smul.addr %s568, 8
      %s570 = smul.addr %s569, 4
      %s571 = scalar_lea.vmem %s4, %s570
      // Predicated region
      $region37: #{model_forward.6} parent=35 // pred_check
        %p572 = pneg %p137
      $region38: #{model_forward.6} parent=35 // pred_check_branch
        %574 = sbr.rel (%p572) target = $region40
      $region39: #{model_forward.6} parent=35 // pred_region
        _
      $region40: #{model_forward.6} parent=35 // pred_fallthru
        _
    $region36: #{model_forward.6} parent=5 // pred_fallthru
      _
    %p575 = scmp.le.s32.totalorder 2, %s10
    // Predicated region
    $region41: #{model_forward.6} parent=5 // pred_check
      %p576 = pneg %p575
    $region42: #{model_forward.6} parent=5 // pred_check_branch
      %578 = sbr.rel (%p576) target = $region44
    $region43: #{model_forward.6} parent=5 // pred_region
      %s579 = ssub.s32 %s10, 2
      // Predicated region
      $region45: #{model_forward.6} parent=43 // pred_check
        %p580 = pneg %p143
      $region46: #{model_forward.6} parent=43 // pred_check_branch
        %582 = sbr.rel (%p580) target = $region48
      $region47: #{model_forward.6} parent=43 // pred_region
        %p583 = scmp.lt.s32.totalorder %s16, 1
        %s584 = scalar_select %p583, %s16, 1
        %s585 = smul.addr %s584, 8
        %s586 = smul.addr %s585, 4
        %s587 = scalar_lea.vmem %s4, %s586
      $region48: #{model_forward.6} parent=43 // pred_fallthru
        _
    $region44: #{model_forward.6} parent=5 // pred_fallthru
      _
  $region6: #{model_forward.6} parent=0 // loop_footer
    %s14 = sadd.s32 1, %s10
  $region7: #{model_forward.6} parent=0 // loop_footer_branch
    %9 = sbr.rel target = $region3
  $region8: #{model_forward.6} parent=0 // loop_exit
    _

// kernel: model_forward.7
$region0: #{model_forward.7}
  #allocation0 [shape = 'u32[]', space=smem, size = 0x4, offset = 0x4, fixed_abs, tag = 'smem constant byte address 0x4 - core index']
  #allocation1 [shape = 'u32[144,128]{1,0:T(1,128)}', space=vmem, size = 0x12000, scoped, tag = 'internal scratch']
  #allocation2 [shape = 'f32[8,1280]{1,0:T(8,128)}', space=vmem, size = 0xa000, scoped, tag = 'scratch operand']
  %s0 = inlined_call_operand.vmem [shape: bf16[8,3840], index: 0, kind: input, shape index: {}]
  %s1 = inlined_call_operand.vmem [shape: bf16[3840,1280], index: 1, kind: input, shape index: {}]
  %s2 = inlined_call_operand.vmem [shape: f32[1,1280], index: 2, kind: input, shape index: {}]
  %s3 = inlined_call_operand.vmem [shape: f32[1,1280], index: 3, kind: input, shape index: {}]
  %s4 = inlined_call_operand.vmem [shape: bf16[1280,128], index: 4, kind: input, shape index: {}]
  %s5 = inlined_call_operand.vmem [shape: f32[1,128], index: 5, kind: input, shape index: {}]
  %s6 = inlined_call_operand.vmem [shape: f32[1,128], index: 6, kind: input, shape index: {}]
  %s7 = inlined_call_operand.vmem [shape: bf16[128,128], index: 7, kind: input, shape index: {}]
  %s8 = inlined_call_operand.vmem [shape: f32[1,128], index: 8, kind: input, shape index: {}]
  %s9 = inlined_call_operand.vmem [shape: f32[8,128], index: 9, kind: output, shape index: {}]
  %s10 = sld [smem:[#allocation0]]
  $region77: #{model_forward.7} parent=0
    _
  %s12 = ssub.s32 1, %s10
  %s13 = scalar_select 0, %s12, %s10
  loop: start=0, step=1, limit=5
  $region2: #{model_forward.7} parent=0 // loop_pre_header
    _
  $region3: #{model_forward.7} parent=0 // loop_header
    %s15 = sphi 0, %s19
    %p16 = scmp.ge.s32.totalorder %s15, 5
    %s25 = sphi 0, %s27
    %s28 = sphi 0, %s25
    %s29 = sphi 0, %s28
    %s45 = sphi 0, %s29
    %s51 = sphi 0, %s53
    %s54 = sphi 0, %s51
    %s55 = sphi 0, %s54
    %s71 = sphi 0, %s55
    %s75 = sphi 0, %s75
    %s77 = sphi 0, %s75
    %s78 = sphi 0, %s77
    %s92 = sphi 0, %s78
    %s96 = sphi 0, %s96
    %s98 = sphi 0, %s96
    %s99 = sphi 0, %s98
    %s113 = sphi 0, %s99
    %s117 = sphi 0, %s117
    %s119 = sphi 0, %s117
    %s120 = sphi 0, %s119
    %s134 = sphi 0, %s120
    %s138 = sphi 0, %s138
    %s140 = sphi 0, %s138
    %s141 = sphi 0, %s140
    %s155 = sphi 0, %s141
    %s159 = sphi 0, %s159
    %s161 = sphi 0, %s159
    %s162 = sphi 0, %s161
    %s176 = sphi 0, %s162
    %s180 = sphi 0, %s180
    %s182 = sphi 0, %s180
    %s183 = sphi 0, %s182
    %s197 = sphi 0, %s183
    %s201 = sphi 0, %s201
    %s203 = sphi 0, %s201
    %s204 = sphi 0, %s203
    %s218 = sphi 0, %s204
    %s222 = sphi 0, %s222
    %s224 = sphi 0, %s222
    %s225 = sphi 0, %s224
    %s239 = sphi 0, %s225
  $region4: #{model_forward.7} parent=0 // loop_header_branch
    %18 = sbr.rel (%p16) target = $region8
  $region5: #{model_forward.7} parent=0 // loop_body
    %s20 = ssub.s32 %s15, 1
    %s21 = ssub.s32 %s15, 2
    %s22 = sadd.s32 %s15, 1
    %s23 = ssub.s32 %s15, %s22
    %p24 = scmp.eq.s32.totalorder %s23, 0
    %s26 = sadd.s32 %s25, 1
    %s27 = scalar_select %p24, %s25, %s26
    %p30 = pneg %p24
    %p31 = scmp.eq.s32.totalorder %s15, 2
    %p32 = por %p30, %p31
    %p33 = scmp.ne.s32.totalorder %s25, %s28
    %p34 = scmp.eq.s32.totalorder %s15, 0
    %p35 = por %p33, %p34
    %p36 = scmp.ne.s32.totalorder %s25, %s28
    %p37 = scmp.eq.s32.totalorder %s20, 2
    %p38 = por %p36, %p37
    %p39 = scmp.ne.s32.totalorder %s28, %s29
    %p40 = scmp.eq.s32.totalorder %s20, 0
    %p41 = por %p39, %p40
    %p42 = scmp.ne.s32.totalorder %s28, %s29
    %p43 = scmp.eq.s32.totalorder %s21, 2
    %p44 = por %p42, %p43
    %p46 = scmp.ne.s32.totalorder %s29, %s45
    %p47 = scmp.eq.s32.totalorder %s21, 0
    %p48 = por %p46, %p47
    %s49 = ssub.s32 %s15, %s22
    %p50 = scmp.eq.s32.totalorder %s49, 0
    %s52 = sadd.s32 %s51, 1
    %s53 = scalar_select %p50, %s51, %s52
    %p56 = pneg %p50
    %p57 = scmp.eq.s32.totalorder %s15, 2
    %p58 = por %p56, %p57
    %p59 = scmp.ne.s32.totalorder %s51, %s54
    %p60 = scmp.eq.s32.totalorder %s15, 0
    %p61 = por %p59, %p60
    %p62 = scmp.ne.s32.totalorder %s51, %s54
    %p63 = scmp.eq.s32.totalorder %s20, 2
    %p64 = por %p62, %p63
    %p65 = scmp.ne.s32.totalorder %s54, %s55
    %p66 = scmp.eq.s32.totalorder %s20, 0
    %p67 = por %p65, %p66
    %p68 = scmp.ne.s32.totalorder %s54, %s55
    %p69 = scmp.eq.s32.totalorder %s21, 2
    %p70 = por %p68, %p69
    %p72 = scmp.ne.s32.totalorder %s55, %s71
    %p73 = scmp.eq.s32.totalorder %s21, 0
    %p74 = por %p72, %p73
    %s76 = sadd.s32 %s75, 1
    %p79 = scmp.eq.s32.totalorder %s15, 2
    %p80 = scmp.ne.s32.totalorder %s75, %s77
    %p81 = scmp.eq.s32.totalorder %s15, 0
    %p82 = por %p80, %p81
    %p83 = scmp.ne.s32.totalorder %s75, %s77
    %p84 = scmp.eq.s32.totalorder %s20, 2
    %p85 = por %p83, %p84
    %p86 = scmp.ne.s32.totalorder %s77, %s78
    %p87 = scmp.eq.s32.totalorder %s20, 0
    %p88 = por %p86, %p87
    %p89 = scmp.ne.s32.totalorder %s77, %s78
    %p90 = scmp.eq.s32.totalorder %s21, 2
    %p91 = por %p89, %p90
    %p93 = scmp.ne.s32.totalorder %s78, %s92
    %p94 = scmp.eq.s32.totalorder %s21, 0
    %p95 = por %p93, %p94
    %s97 = sadd.s32 %s96, 1
    %p100 = scmp.eq.s32.totalorder %s15, 2
    %p101 = scmp.ne.s32.totalorder %s96, %s98
    %p102 = scmp.eq.s32.totalorder %s15, 0
    %p103 = por %p101, %p102
    %p104 = scmp.ne.s32.totalorder %s96, %s98
    %p105 = scmp.eq.s32.totalorder %s20, 2
    %p106 = por %p104, %p105
    %p107 = scmp.ne.s32.totalorder %s98, %s99
    %p108 = scmp.eq.s32.totalorder %s20, 0
    %p109 = por %p107, %p108
    %p110 = scmp.ne.s32.totalorder %s98, %s99
    %p111 = scmp.eq.s32.totalorder %s21, 2
    %p112 = por %p110, %p111
    %p114 = scmp.ne.s32.totalorder %s99, %s113
    %p115 = scmp.eq.s32.totalorder %s21, 0
    %p116 = por %p114, %p115
    %s118 = sadd.s32 %s117, 1
    %p121 = scmp.eq.s32.totalorder %s15, 2
    %p122 = scmp.ne.s32.totalorder %s117, %s119
    %p123 = scmp.eq.s32.totalorder %s15, 0
    %p124 = por %p122, %p123
    %p125 = scmp.ne.s32.totalorder %s117, %s119
    %p126 = scmp.eq.s32.totalorder %s20, 2
    %p127 = por %p125, %p126
    %p128 = scmp.ne.s32.totalorder %s119, %s120
    %p129 = scmp.eq.s32.totalorder %s20, 0
    %p130 = por %p128, %p129
    %p131 = scmp.ne.s32.totalorder %s119, %s120
    %p132 = scmp.eq.s32.totalorder %s21, 2
    %p133 = por %p131, %p132
    %p135 = scmp.ne.s32.totalorder %s120, %s134
    %p136 = scmp.eq.s32.totalorder %s21, 0
    %p137 = por %p135, %p136
    %s139 = sadd.s32 %s138, 1
    %p142 = scmp.eq.s32.totalorder %s15, 2
    %p143 = scmp.ne.s32.totalorder %s138, %s140
    %p144 = scmp.eq.s32.totalorder %s15, 0
    %p145 = por %p143, %p144
    %p146 = scmp.ne.s32.totalorder %s138, %s140
    %p147 = scmp.eq.s32.totalorder %s20, 2
    %p148 = por %p146, %p147
    %p149 = scmp.ne.s32.totalorder %s140, %s141
    %p150 = scmp.eq.s32.totalorder %s20, 0
    %p151 = por %p149, %p150
    %p152 = scmp.ne.s32.totalorder %s140, %s141
    %p153 = scmp.eq.s32.totalorder %s21, 2
    %p154 = por %p152, %p153
    %p156 = scmp.ne.s32.totalorder %s141, %s155
    %p157 = scmp.eq.s32.totalorder %s21, 0
    %p158 = por %p156, %p157
    %s160 = sadd.s32 %s159, 1
    %p163 = scmp.eq.s32.totalorder %s15, 2
    %p164 = scmp.ne.s32.totalorder %s159, %s161
    %p165 = scmp.eq.s32.totalorder %s15, 0
    %p166 = por %p164, %p165
    %p167 = scmp.ne.s32.totalorder %s159, %s161
    %p168 = scmp.eq.s32.totalorder %s20, 2
    %p169 = por %p167, %p168
    %p170 = scmp.ne.s32.totalorder %s161, %s162
    %p171 = scmp.eq.s32.totalorder %s20, 0
    %p172 = por %p170, %p171
    %p173 = scmp.ne.s32.totalorder %s161, %s162
    %p174 = scmp.eq.s32.totalorder %s21, 2
    %p175 = por %p173, %p174
    %p177 = scmp.ne.s32.totalorder %s162, %s176
    %p178 = scmp.eq.s32.totalorder %s21, 0
    %p179 = por %p177, %p178
    %s181 = sadd.s32 %s180, 1
    %p184 = scmp.eq.s32.totalorder %s15, 2
    %p185 = scmp.ne.s32.totalorder %s180, %s182
    %p186 = scmp.eq.s32.totalorder %s15, 0
    %p187 = por %p185, %p186
    %p188 = scmp.ne.s32.totalorder %s180, %s182
    %p189 = scmp.eq.s32.totalorder %s20, 2
    %p190 = por %p188, %p189
    %p191 = scmp.ne.s32.totalorder %s182, %s183
    %p192 = scmp.eq.s32.totalorder %s20, 0
    %p193 = por %p191, %p192
    %p194 = scmp.ne.s32.totalorder %s182, %s183
    %p195 = scmp.eq.s32.totalorder %s21, 2
    %p196 = por %p194, %p195
    %p198 = scmp.ne.s32.totalorder %s183, %s197
    %p199 = scmp.eq.s32.totalorder %s21, 0
    %p200 = por %p198, %p199
    %s202 = sadd.s32 %s201, 1
    %p205 = scmp.eq.s32.totalorder %s15, 2
    %p206 = scmp.ne.s32.totalorder %s201, %s203
    %p207 = scmp.eq.s32.totalorder %s15, 0
    %p208 = por %p206, %p207
    %p209 = scmp.ne.s32.totalorder %s201, %s203
    %p210 = scmp.eq.s32.totalorder %s20, 2
    %p211 = por %p209, %p210
    %p212 = scmp.ne.s32.totalorder %s203, %s204
    %p213 = scmp.eq.s32.totalorder %s20, 0
    %p214 = por %p212, %p213
    %p215 = scmp.ne.s32.totalorder %s203, %s204
    %p216 = scmp.eq.s32.totalorder %s21, 2
    %p217 = por %p215, %p216
    %p219 = scmp.ne.s32.totalorder %s204, %s218
    %p220 = scmp.eq.s32.totalorder %s21, 0
    %p221 = por %p219, %p220
    %s223 = sadd.s32 %s222, 1
    %p226 = scmp.eq.s32.totalorder %s15, 2
    %p227 = scmp.ne.s32.totalorder %s222, %s224
    %p228 = scmp.eq.s32.totalorder %s15, 0
    %p229 = por %p227, %p228
    %p230 = scmp.ne.s32.totalorder %s222, %s224
    %p231 = scmp.eq.s32.totalorder %s20, 2
    %p232 = por %p230, %p231
    %p233 = scmp.ne.s32.totalorder %s224, %s225
    %p234 = scmp.eq.s32.totalorder %s20, 0
    %p235 = por %p233, %p234
    %p236 = scmp.ne.s32.totalorder %s224, %s225
    %p237 = scmp.eq.s32.totalorder %s21, 2
    %p238 = por %p236, %p237
    %p240 = scmp.ne.s32.totalorder %s225, %s239
    %p241 = scmp.eq.s32.totalorder %s21, 0
    %p242 = por %p240, %p241
    %p243 = scmp.le.s32.totalorder 1, %s15
    %p244 = scmp.lt.s32.totalorder %s15, 4
    %p245 = pnand %p243, %p244
    %p246 = pneg %p245
    // Predicated region
    $region9: #{model_forward.7} parent=5 // pred_check
      _
    $region10: #{model_forward.7} parent=5 // pred_check_branch
      %248 = sbr.rel (%p245) target = $region12
    $region11: #{model_forward.7} parent=5 // pred_region
      %s249 = ssub.s32 %s15, 1
      // Predicated region
      $region13: #{model_forward.7} parent=11 // pred_check
        %p250 = pneg %p88
      $region14: #{model_forward.7} parent=11 // pred_check_branch
        %252 = sbr.rel (%p250) target = $region16
      $region15: #{model_forward.7} parent=11 // pred_region
        _
      $region16: #{model_forward.7} parent=11 // pred_fallthru
        _
      // Predicated region
      $region17: #{model_forward.7} parent=11 // pred_check
        %p253 = pneg %p109
      $region18: #{model_forward.7} parent=11 // pred_check_branch
        %255 = sbr.rel (%p253) target = $region20
      $region19: #{model_forward.7} parent=11 // pred_region
        _
      $region20: #{model_forward.7} parent=11 // pred_fallthru
        _
      // Predicated region
      $region21: #{model_forward.7} parent=11 // pred_check
        %p256 = pneg %p130
      $region22: #{model_forward.7} parent=11 // pred_check_branch
        %258 = sbr.rel (%p256) target = $region24
      $region23: #{model_forward.7} parent=11 // pred_region
        _
      $region24: #{model_forward.7} parent=11 // pred_fallthru
        _
      // Predicated region
      $region25: #{model_forward.7} parent=11 // pred_check
        %p259 = pneg %p151
      $region26: #{model_forward.7} parent=11 // pred_check_branch
        %261 = sbr.rel (%p259) target = $region28
      $region27: #{model_forward.7} parent=11 // pred_region
        _
      $region28: #{model_forward.7} parent=11 // pred_fallthru
        _
      // Predicated region
      $region29: #{model_forward.7} parent=11 // pred_check
        %p262 = pneg %p172
      $region30: #{model_forward.7} parent=11 // pred_check_branch
        %264 = sbr.rel (%p262) target = $region32
      $region31: #{model_forward.7} parent=11 // pred_region
        _
      $region32: #{model_forward.7} parent=11 // pred_fallthru
        _
      // Predicated region
      $region33: #{model_forward.7} parent=11 // pred_check
        %p265 = pneg %p193
      $region34: #{model_forward.7} parent=11 // pred_check_branch
        %267 = sbr.rel (%p265) target = $region36
      $region35: #{model_forward.7} parent=11 // pred_region
        _
      $region36: #{model_forward.7} parent=11 // pred_fallthru
        _
      // Predicated region
      $region37: #{model_forward.7} parent=11 // pred_check
        %p268 = pneg %p214
      $region38: #{model_forward.7} parent=11 // pred_check_branch
        %270 = sbr.rel (%p268) target = $region40
      $region39: #{model_forward.7} parent=11 // pred_region
        _
      $region40: #{model_forward.7} parent=11 // pred_fallthru
        _
    $region12: #{model_forward.7} parent=5 // pred_fallthru
      _
    %p271 = scmp.lt.s32.totalorder %s15, 3
    // Predicated region
    $region41: #{model_forward.7} parent=5 // pred_check
      %p272 = pneg %p271
    $region42: #{model_forward.7} parent=5 // pred_check_branch
      %274 = sbr.rel (%p272) target = $region44
    $region43: #{model_forward.7} parent=5 // pred_region
      // Predicated region
      $region45: #{model_forward.7} parent=43 // pred_check
        %p275 = pneg %p35
      $region46: #{model_forward.7} parent=43 // pred_check_branch
        %277 = sbr.rel (%p275) target = $region48
      $region47: #{model_forward.7} parent=43 // pred_region
        %s278 = smul.u32 10, %s15
        %p279 = scmp.lt.s32.totalorder %s278, 29
        %s280 = scalar_select %p279, %s278, 29
        %s281 = smul.addr %s280, 4
        %s282 = scalar_lea.vmem %s0, %s281
        %s283 = smul.u32 10, %s15
      $region48: #{model_forward.7} parent=43 // pred_fallthru
        _
      // Predicated region
      $region49: #{model_forward.7} parent=43 // pred_check
        %p284 = pneg %p61
      $region50: #{model_forward.7} parent=43 // pred_check_branch
        %286 = sbr.rel (%p284) target = $region52
      $region51: #{model_forward.7} parent=43 // pred_region
        %s287 = smul.u32 160, %s15
        %p288 = scmp.lt.s32.totalorder %s287, 479
        %s289 = scalar_select %p288, %s287, 479
        %s290 = smul.addr %s289, 10
        %s291 = smul.addr %s290, 4
        %s292 = scalar_lea.vmem %s1, %s291
        %s293 = smul.u32 160, %s15
      $region52: #{model_forward.7} parent=43 // pred_fallthru
        _
    $region44: #{model_forward.7} parent=5 // pred_fallthru
      _
    %p294 = scmp.le.s32.totalorder 1, %s15
    %p295 = scmp.lt.s32.totalorder %s15, 4
    %p296 = pnand %p294, %p295
    %p297 = pneg %p296
    // Predicated region
    $region53: #{model_forward.7} parent=5 // pred_check
      _
    $region54: #{model_forward.7} parent=5 // pred_check_branch
      %299 = sbr.rel (%p296) target = $region56
    $region55: #{model_forward.7} parent=5 // pred_region
      %s300 = ssub.s32 %s15, 1
      %s301 = smul.u32 10, %s20
      %p302 = scmp.lt.s32.totalorder %s301, 29
      %s303 = scalar_select %p302, %s301, 29
      %s304 = smul.addr %s303, 4
      %s305 = scalar_lea.vmem %s0, %s304
      %p306 = pneg %p41
      %p307 = pneg %p38
      %s308 = smul.u32 160, %s20
      %p309 = scmp.lt.s32.totalorder %s308, 479
      %s310 = scalar_select %p309, %s308, 479
      %s311 = smul.addr %s310, 10
      %s312 = smul.addr %s311, 4
      %s313 = scalar_lea.vmem %s1, %s312
      %p314 = pneg %p67
      %p315 = pneg %p64
      %p316 = pneg %p88
      %p317 = pneg %p85
      %p318 = pneg %p109
      %p319 = pneg %p106
      %p320 = pneg %p130
      %p321 = pneg %p127
      %p322 = pneg %p151
      %p323 = pneg %p148
      %p324 = pneg %p172
      %p325 = pneg %p169
      %p326 = pneg %p193
      %p327 = pneg %p190
      %p328 = pneg %p214
      %p329 = pneg %p211
      %p330 = pneg %p235
      %p331 = pneg %p232
      %s332 = smul.u32 10, %s20
      %p333 = scmp.lt.s32.totalorder %s332, 29
      %s334 = scalar_select %p333, %s332, 29
      %s335 = smul.addr %s334, 4
      %s336 = scalar_lea.vmem %s0, %s335
      %s337 = smul.u32 10, %s20
      %s338 = smul.u32 160, %s20
      %p339 = scmp.lt.s32.totalorder %s338, 479
      %s340 = scalar_select %p339, %s338, 479
      %s341 = smul.addr %s340, 10
      %s342 = smul.addr %s341, 4
      %s343 = scalar_lea.vmem %s1, %s342
      %s344 = smul.u32 160, %s20
      %p346 = scmp.eq.s32.totalorder %s20, 0
      // Predicated region
      $region57: #{model_forward.7} parent=55 // pred_check
        %p347 = pneg %p346
      $region58: #{model_forward.7} parent=55 // pred_check_branch
        %349 = sbr.rel (%p347) target = $region60
      $region59: #{model_forward.7} parent=55 // pred_region
        %350 = vst [vmem:[#allocation2] sm:$0xff] 0.0
        %351 = vst [vmem:[#allocation2 + $0x8] sm:$0xff] 0.0
        %352 = vst [vmem:[#allocation2 + $0x10] sm:$0xff] 0.0
        %353 = vst [vmem:[#allocation2 + $0x18] sm:$0xff] 0.0
        %354 = vst [vmem:[#allocation2 + $0x20] sm:$0xff] 0.0
        %355 = vst [vmem:[#allocation2 + $0x28] sm:$0xff] 0.0
        %356 = vst [vmem:[#allocation2 + $0x30] sm:$0xff] 0.0
        %357 = vst [vmem:[#allocation2 + $0x38] sm:$0xff] 0.0
        %358 = vst [vmem:[#allocation2 + $0x40] sm:$0xff] 0.0
        %359 = vst [vmem:[#allocation2 + $0x48] sm:$0xff] 0.0
      $region60: #{model_forward.7} parent=55 // pred_fallthru
        _
      %v360 = vld [vmem:[#allocation2] sm:$0xff]
      %v361 = vld [vmem:[#allocation2 + $0x8] sm:$0xff]
      %v362 = vld [vmem:[#allocation2 + $0x10] sm:$0xff]
      %v363 = vld [vmem:[#allocation2 + $0x18] sm:$0xff]
      %v364 = vld [vmem:[#allocation2 + $0x20] sm:$0xff]
      %v365 = vld [vmem:[#allocation2 + $0x28] sm:$0xff]
      %v366 = vld [vmem:[#allocation2 + $0x30] sm:$0xff]
      %v367 = vld [vmem:[#allocation2 + $0x38] sm:$0xff]
      %v368 = vld [vmem:[#allocation2 + $0x40] sm:$0xff]
      %v369 = vld [vmem:[#allocation2 + $0x48] sm:$0xff]
      %v370 = vld [vmem:[%s336] sm:$0xff]
      %v371 = vld [vmem:[%s336 + $0x8] sm:$0xff]
      %v372 = vld [vmem:[%s336 + $0x10] sm:$0xff]
      %v373 = vld [vmem:[%s336 + $0x18] sm:$0xff]
      %v374 = vld [vmem:[%s336 + $0x20] sm:$0xff]
      %v375 = vld [vmem:[%s343] sm:$0xff]
      %v376 = vld [vmem:[%s343 + $0x8] sm:$0xff]
      %v377 = vld [vmem:[%s343 + $0x10] sm:$0xff]
      %v378 = vld [vmem:[%s343 + $0x18] sm:$0xff]
      %v379 = vld [vmem:[%s343 + $0x20] sm:$0xff]
      %v380 = vld [vmem:[%s343 + $0x28] sm:$0xff]
      %v381 = vld [vmem:[%s343 + $0x30] sm:$0xff]
      %v382 = vld [vmem:[%s343 + $0x38] sm:$0xff]
      %v383 = vld [vmem:[%s343 + $0x40] sm:$0xff]
      %v384 = vld [vmem:[%s343 + $0x48] sm:$0xff]
      %v385 = vld [vmem:[%s343 + $0x50] sm:$0xff]
      %v386 = vld [vmem:[%s343 + $0x58] sm:$0xff]
      %v387 = vld [vmem:[%s343 + $0x60] sm:$0xff]
      %v388 = vld [vmem:[%s343 + $0x68] sm:$0xff]
      %v389 = vld [vmem:[%s343 + $0x70] sm:$0xff]
      %v390 = vld [vmem:[%s343 + $0x78] sm:$0xff]
      %v391 = vld [vmem:[%s343 + $0x80] sm:$0xff]
      %v392 = vld [vmem:[%s343 + $0x88] sm:$0xff]
      %v393 = vld [vmem:[%s343 + $0x90] sm:$0xff]
      %v394 = vld [vmem:[%s343 + $0x98] sm:$0xff]
      %v395 = vld [vmem:[%s343 + $0xa0] sm:$0xff]
      %v396 = vld [vmem:[%s343 + $0xa8] sm:$0xff]
      %v397 = vld [vmem:[%s343 + $0xb0] sm:$0xff]
      %v398 = vld [vmem:[%s343 + $0xb8] sm:$0xff]
      %v399 = vld [vmem:[%s343 + $0xc0] sm:$0xff]
      %v400 = vld [vmem:[%s343 + $0xc8] sm:$0xff]
      %v401 = vld [vmem:[%s343 + $0xd0] sm:$0xff]
      %v402 = vld [vmem:[%s343 + $0xd8] sm:$0xff]
      %v403 = vld [vmem:[%s343 + $0xe0] sm:$0xff]
      %v404 = vld [vmem:[%s343 + $0xe8] sm:$0xff]
      %v405 = vld [vmem:[%s343 + $0xf0] sm:$0xff]
      %v406 = vld [vmem:[%s343 + $0xf8] sm:$0xff]
      %v407 = vld [vmem:[%s343 + $0x100] sm:$0xff]
      %v408 = vld [vmem:[%s343 + $0x108] sm:$0xff]
      %v409 = vld [vmem:[%s343 + $0x110] sm:$0xff]
      %v410 = vld [vmem:[%s343 + $0x118] sm:$0xff]
      %v411 = vld [vmem:[%s343 + $0x120] sm:$0xff]
      %v412 = vld [vmem:[%s343 + $0x128] sm:$0xff]
      %v413 = vld [vmem:[%s343 + $0x130] sm:$0xff]
      %v414 = vld [vmem:[%s343 + $0x138] sm:$0xff]
      %v415 = vld [vmem:[%s343 + $0x140] sm:$0xff]
      %v416 = vld [vmem:[%s343 + $0x148] sm:$0xff]
      %v417 = vld [vmem:[%s343 + $0x150] sm:$0xff]
      %v418 = vld [vmem:[%s343 + $0x158] sm:$0xff]
      %v419 = vld [vmem:[%s343 + $0x160] sm:$0xff]
      %v420 = vld [vmem:[%s343 + $0x168] sm:$0xff]
      %v421 = vld [vmem:[%s343 + $0x170] sm:$0xff]
      %v422 = vld [vmem:[%s343 + $0x178] sm:$0xff]
      %v423 = vld [vmem:[%s343 + $0x180] sm:$0xff]
      %v424 = vld [vmem:[%s343 + $0x188] sm:$0xff]
      %v425 = vld [vmem:[%s343 + $0x190] sm:$0xff]
      %v426 = vld [vmem:[%s343 + $0x198] sm:$0xff]
      %v427 = vld [vmem:[%s343 + $0x1a0] sm:$0xff]
      %v428 = vld [vmem:[%s343 + $0x1a8] sm:$0xff]
      %v429 = vld [vmem:[%s343 + $0x1b0] sm:$0xff]
      %v430 = vld [vmem:[%s343 + $0x1b8] sm:$0xff]
      %v431 = vld [vmem:[%s343 + $0x1c0] sm:$0xff]
      %v432 = vld [vmem:[%s343 + $0x1c8] sm:$0xff]
      %v433 = vld [vmem:[%s343 + $0x1d0] sm:$0xff]
      %v434 = vld [vmem:[%s343 + $0x1d8] sm:$0xff]
      %v435 = vld [vmem:[%s343 + $0x1e0] sm:$0xff]
      %v436 = vld [vmem:[%s343 + $0x1e8] sm:$0xff]
      %v437 = vld [vmem:[%s343 + $0x1f0] sm:$0xff]
      %v438 = vld [vmem:[%s343 + $0x1f8] sm:$0xff]
      %v439 = vld [vmem:[%s343 + $0x200] sm:$0xff]
      %v440 = vld [vmem:[%s343 + $0x208] sm:$0xff]
      %v441 = vld [vmem:[%s343 + $0x210] sm:$0xff]
      %v442 = vld [vmem:[%s343 + $0x218] sm:$0xff]
      %v443 = vld [vmem:[%s343 + $0x220] sm:$0xff]
      %v444 = vld [vmem:[%s343 + $0x228] sm:$0xff]
      %v445 = vld [vmem:[%s343 + $0x230] sm:$0xff]
      %v446 = vld [vmem:[%s343 + $0x238] sm:$0xff]
      %v447 = vld [vmem:[%s343 + $0x240] sm:$0xff]
      %v448 = vld [vmem:[%s343 + $0x248] sm:$0xff]
      %v449 = vld [vmem:[%s343 + $0x250] sm:$0xff]
      %v450 = vld [vmem:[%s343 + $0x258] sm:$0xff]
      %v451 = vld [vmem:[%s343 + $0x260] sm:$0xff]
      %v452 = vld [vmem:[%s343 + $0x268] sm:$0xff]
      %v453 = vld [vmem:[%s343 + $0x270] sm:$0xff]
      %v454 = vld [vmem:[%s343 + $0x278] sm:$0xff]
      %v455 = vld [vmem:[%s343 + $0x280] sm:$0xff]
      %v456 = vld [vmem:[%s343 + $0x288] sm:$0xff]
      %v457 = vld [vmem:[%s343 + $0x290] sm:$0xff]
      %v458 = vld [vmem:[%s343 + $0x298] sm:$0xff]
      %v459 = vld [vmem:[%s343 + $0x2a0] sm:$0xff]
      %v460 = vld [vmem:[%s343 + $0x2a8] sm:$0xff]
      %v461 = vld [vmem:[%s343 + $0x2b0] sm:$0xff]
      %v462 = vld [vmem:[%s343 + $0x2b8] sm:$0xff]
      %v463 = vld [vmem:[%s343 + $0x2c0] sm:$0xff]
      %v464 = vld [vmem:[%s343 + $0x2c8] sm:$0xff]
      %v465 = vld [vmem:[%s343 + $0x2d0] sm:$0xff]
      %v466 = vld [vmem:[%s343 + $0x2d8] sm:$0xff]
      %v467 = vld [vmem:[%s343 + $0x2e0] sm:$0xff]
      %v468 = vld [vmem:[%s343 + $0x2e8] sm:$0xff]
      %v469 = vld [vmem:[%s343 + $0x2f0] sm:$0xff]
      %v470 = vld [vmem:[%s343 + $0x2f8] sm:$0xff]
      %v471 = vld [vmem:[%s343 + $0x300] sm:$0xff]
      %v472 = vld [vmem:[%s343 + $0x308] sm:$0xff]
      %v473 = vld [vmem:[%s343 + $0x310] sm:$0xff]
      %v474 = vld [vmem:[%s343 + $0x318] sm:$0xff]
      %v475 = vld [vmem:[%s343 + $0x320] sm:$0xff]
      %v476 = vld [vmem:[%s343 + $0x328] sm:$0xff]
      %v477 = vld [vmem:[%s343 + $0x330] sm:$0xff]
      %v478 = vld [vmem:[%s343 + $0x338] sm:$0xff]
      %v479 = vld [vmem:[%s343 + $0x340] sm:$0xff]
      %v480 = vld [vmem:[%s343 + $0x348] sm:$0xff]
      %v481 = vld [vmem:[%s343 + $0x350] sm:$0xff]
      %v482 = vld [vmem:[%s343 + $0x358] sm:$0xff]
      %v483 = vld [vmem:[%s343 + $0x360] sm:$0xff]
      %v484 = vld [vmem:[%s343 + $0x368] sm:$0xff]
      %v485 = vld [vmem:[%s343 + $0x370] sm:$0xff]
      %v486 = vld [vmem:[%s343 + $0x378] sm:$0xff]
      %v487 = vld [vmem:[%s343 + $0x380] sm:$0xff]
      %v488 = vld [vmem:[%s343 + $0x388] sm:$0xff]
      %v489 = vld [vmem:[%s343 + $0x390] sm:$0xff]
      %v490 = vld [vmem:[%s343 + $0x398] sm:$0xff]
      %v491 = vld [vmem:[%s343 + $0x3a0] sm:$0xff]
      %v492 = vld [vmem:[%s343 + $0x3a8] sm:$0xff]
      %v493 = vld [vmem:[%s343 + $0x3b0] sm:$0xff]
      %v494 = vld [vmem:[%s343 + $0x3b8] sm:$0xff]
      %v495 = vld [vmem:[%s343 + $0x3c0] sm:$0xff]
      %v496 = vld [vmem:[%s343 + $0x3c8] sm:$0xff]
      %v497 = vld [vmem:[%s343 + $0x3d0] sm:$0xff]
      %v498 = vld [vmem:[%s343 + $0x3d8] sm:$0xff]
      %v499 = vld [vmem:[%s343 + $0x3e0] sm:$0xff]
      %v500 = vld [vmem:[%s343 + $0x3e8] sm:$0xff]
      %v501 = vld [vmem:[%s343 + $0x3f0] sm:$0xff]
      %v502 = vld [vmem:[%s343 + $0x3f8] sm:$0xff]
      %v503 = vld [vmem:[%s343 + $0x400] sm:$0xff]
      %v504 = vld [vmem:[%s343 + $0x408] sm:$0xff]
      %v505 = vld [vmem:[%s343 + $0x410] sm:$0xff]
      %v506 = vld [vmem:[%s343 + $0x418] sm:$0xff]
      %v507 = vld [vmem:[%s343 + $0x420] sm:$0xff]
      %v508 = vld [vmem:[%s343 + $0x428] sm:$0xff]
      %v509 = vld [vmem:[%s343 + $0x430] sm:$0xff]
      %v510 = vld [vmem:[%s343 + $0x438] sm:$0xff]
      %v511 = vld [vmem:[%s343 + $0x440] sm:$0xff]
      %v512 = vld [vmem:[%s343 + $0x448] sm:$0xff]
      %v513 = vld [vmem:[%s343 + $0x450] sm:$0xff]
      %v514 = vld [vmem:[%s343 + $0x458] sm:$0xff]
      %v515 = vld [vmem:[%s343 + $0x460] sm:$0xff]
      %v516 = vld [vmem:[%s343 + $0x468] sm:$0xff]
      %v517 = vld [vmem:[%s343 + $0x470] sm:$0xff]
      %v518 = vld [vmem:[%s343 + $0x478] sm:$0xff]
      %v519 = vld [vmem:[%s343 + $0x480] sm:$0xff]
      %v520 = vld [vmem:[%s343 + $0x488] sm:$0xff]
      %v521 = vld [vmem:[%s343 + $0x490] sm:$0xff]
      %v522 = vld [vmem:[%s343 + $0x498] sm:$0xff]
      %v523 = vld [vmem:[%s343 + $0x4a0] sm:$0xff]
      %v524 = vld [vmem:[%s343 + $0x4a8] sm:$0xff]
      %v525 = vld [vmem:[%s343 + $0x4b0] sm:$0xff]
      %v526 = vld [vmem:[%s343 + $0x4b8] sm:$0xff]
      %v527 = vld [vmem:[%s343 + $0x4c0] sm:$0xff]
      %v528 = vld [vmem:[%s343 + $0x4c8] sm:$0xff]
      %v529 = vld [vmem:[%s343 + $0x4d0] sm:$0xff]
      %v530 = vld [vmem:[%s343 + $0x4d8] sm:$0xff]
      %v531 = vld [vmem:[%s343 + $0x4e0] sm:$0xff]
      %v532 = vld [vmem:[%s343 + $0x4e8] sm:$0xff]
      %v533 = vld [vmem:[%s343 + $0x4f0] sm:$0xff]
      %v534 = vld [vmem:[%s343 + $0x4f8] sm:$0xff]
      %v535 = vld [vmem:[%s343 + $0x500] sm:$0xff]
      %v536 = vld [vmem:[%s343 + $0x508] sm:$0xff]
      %v537 = vld [vmem:[%s343 + $0x510] sm:$0xff]
      %v538 = vld [vmem:[%s343 + $0x518] sm:$0xff]
      %v539 = vld [vmem:[%s343 + $0x520] sm:$0xff]
      %v540 = vld [vmem:[%s343 + $0x528] sm:$0xff]
      %v541 = vld [vmem:[%s343 + $0x530] sm:$0xff]
      %v542 = vld [vmem:[%s343 + $0x538] sm:$0xff]
      %v543 = vld [vmem:[%s343 + $0x540] sm:$0xff]
      %v544 = vld [vmem:[%s343 + $0x548] sm:$0xff]
      %v545 = vld [vmem:[%s343 + $0x550] sm:$0xff]
      %v546 = vld [vmem:[%s343 + $0x558] sm:$0xff]
      %v547 = vld [vmem:[%s343 + $0x560] sm:$0xff]
      %v548 = vld [vmem:[%s343 + $0x568] sm:$0xff]
      %v549 = vld [vmem:[%s343 + $0x570] sm:$0xff]
      %v550 = vld [vmem:[%s343 + $0x578] sm:$0xff]
      %v551 = vld [vmem:[%s343 + $0x580] sm:$0xff]
      %v552 = vld [vmem:[%s343 + $0x588] sm:$0xff]
      %v553 = vld [vmem:[%s343 + $0x590] sm:$0xff]
      %v554 = vld [vmem:[%s343 + $0x598] sm:$0xff]
      %v555 = vld [vmem:[%s343 + $0x5a0] sm:$0xff]
      %v556 = vld [vmem:[%s343 + $0x5a8] sm:$0xff]
      %v557 = vld [vmem:[%s343 + $0x5b0] sm:$0xff]
      %v558 = vld [vmem:[%s343 + $0x5b8] sm:$0xff]
      %v559 = vld [vmem:[%s343 + $0x5c0] sm:$0xff]
      %v560 = vld [vmem:[%s343 + $0x5c8] sm:$0xff]
      %v561 = vld [vmem:[%s343 + $0x5d0] sm:$0xff]
      %v562 = vld [vmem:[%s343 + $0x5d8] sm:$0xff]
      %v563 = vld [vmem:[%s343 + $0x5e0] sm:$0xff]
      %v564 = vld [vmem:[%s343 + $0x5e8] sm:$0xff]
      %v565 = vld [vmem:[%s343 + $0x5f0] sm:$0xff]
      %v566 = vld [vmem:[%s343 + $0x5f8] sm:$0xff]
      %v567 = vld [vmem:[%s343 + $0x600] sm:$0xff]
      %v568 = vld [vmem:[%s343 + $0x608] sm:$0xff]
      %v569 = vld [vmem:[%s343 + $0x610] sm:$0xff]
      %v570 = vld [vmem:[%s343 + $0x618] sm:$0xff]
      %v571 = vld [vmem:[%s343 + $0x620] sm:$0xff]
      %v572 = vld [vmem:[%s343 + $0x628] sm:$0xff]
      %v573 = vld [vmem:[%s343 + $0x630] sm:$0xff]
      %v574 = vld [vmem:[%s343 + $0x638] sm:$0xff]
      %v575 = vld [vmem:[%s343 + $0x640] sm:$0xff]
      %v576 = vld [vmem:[%s343 + $0x648] sm:$0xff]
      %v577 = vld [vmem:[%s343 + $0x650] sm:$0xff]
      %v578 = vld [vmem:[%s343 + $0x658] sm:$0xff]
      %v579 = vld [vmem:[%s343 + $0x660] sm:$0xff]
      %v580 = vld [vmem:[%s343 + $0x668] sm:$0xff]
      %v581 = vld [vmem:[%s343 + $0x670] sm:$0xff]
      %v582 = vld [vmem:[%s343 + $0x678] sm:$0xff]
      %v583 = vld [vmem:[%s343 + $0x680] sm:$0xff]
      %v584 = vld [vmem:[%s343 + $0x688] sm:$0xff]
      %v585 = vld [vmem:[%s343 + $0x690] sm:$0xff]
      %v586 = vld [vmem:[%s343 + $0x698] sm:$0xff]
      %v587 = vld [vmem:[%s343 + $0x6a0] sm:$0xff]
      %v588 = vld [vmem:[%s343 + $0x6a8] sm:$0xff]
      %v589 = vld [vmem:[%s343 + $0x6b0] sm:$0xff]
      %v590 = vld [vmem:[%s343 + $0x6b8] sm:$0xff]
      %v591 = vld [vmem:[%s343 + $0x6c0] sm:$0xff]
      %v592 = vld [vmem:[%s343 + $0x6c8] sm:$0xff]
      %v593 = vld [vmem:[%s343 + $0x6d0] sm:$0xff]
      %v594 = vld [vmem:[%s343 + $0x6d8] sm:$0xff]
      %v595 = vld [vmem:[%s343 + $0x6e0] sm:$0xff]
      %v596 = vld [vmem:[%s343 + $0x6e8] sm:$0xff]
      %v597 = vld [vmem:[%s343 + $0x6f0] sm:$0xff]
      %v598 = vld [vmem:[%s343 + $0x6f8] sm:$0xff]
      %v599 = vld [vmem:[%s343 + $0x700] sm:$0xff]
      %v600 = vld [vmem:[%s343 + $0x708] sm:$0xff]
      %v601 = vld [vmem:[%s343 + $0x710] sm:$0xff]
      %v602 = vld [vmem:[%s343 + $0x718] sm:$0xff]
      %v603 = vld [vmem:[%s343 + $0x720] sm:$0xff]
      %v604 = vld [vmem:[%s343 + $0x728] sm:$0xff]
      %v605 = vld [vmem:[%s343 + $0x730] sm:$0xff]
      %v606 = vld [vmem:[%s343 + $0x738] sm:$0xff]
      %v607 = vld [vmem:[%s343 + $0x740] sm:$0xff]
      %v608 = vld [vmem:[%s343 + $0x748] sm:$0xff]
      %v609 = vld [vmem:[%s343 + $0x750] sm:$0xff]
      %v610 = vld [vmem:[%s343 + $0x758] sm:$0xff]
      %v611 = vld [vmem:[%s343 + $0x760] sm:$0xff]
      %v612 = vld [vmem:[%s343 + $0x768] sm:$0xff]
      %v613 = vld [vmem:[%s343 + $0x770] sm:$0xff]
      %v614 = vld [vmem:[%s343 + $0x778] sm:$0xff]
      %v615 = vld [vmem:[%s343 + $0x780] sm:$0xff]
      %v616 = vld [vmem:[%s343 + $0x788] sm:$0xff]
      %v617 = vld [vmem:[%s343 + $0x790] sm:$0xff]
      %v618 = vld [vmem:[%s343 + $0x798] sm:$0xff]
      %v619 = vld [vmem:[%s343 + $0x7a0] sm:$0xff]
      %v620 = vld [vmem:[%s343 + $0x7a8] sm:$0xff]
      %v621 = vld [vmem:[%s343 + $0x7b0] sm:$0xff]
      %v622 = vld [vmem:[%s343 + $0x7b8] sm:$0xff]
      %v623 = vld [vmem:[%s343 + $0x7c0] sm:$0xff]
      %v624 = vld [vmem:[%s343 + $0x7c8] sm:$0xff]
      %v625 = vld [vmem:[%s343 + $0x7d0] sm:$0xff]
      %v626 = vld [vmem:[%s343 + $0x7d8] sm:$0xff]
      %v627 = vld [vmem:[%s343 + $0x7e0] sm:$0xff]
      %v628 = vld [vmem:[%s343 + $0x7e8] sm:$0xff]
      %v629 = vld [vmem:[%s343 + $0x7f0] sm:$0xff]
      %v630 = vld [vmem:[%s343 + $0x7f8] sm:$0xff]
      %v631 = vld [vmem:[%s343 + $0x800] sm:$0xff]
      %v632 = vld [vmem:[%s343 + $0x808] sm:$0xff]
      %v633 = vld [vmem:[%s343 + $0x810] sm:$0xff]
      %v634 = vld [vmem:[%s343 + $0x818] sm:$0xff]
      %v635 = vld [vmem:[%s343 + $0x820] sm:$0xff]
      %v636 = vld [vmem:[%s343 + $0x828] sm:$0xff]
      %v637 = vld [vmem:[%s343 + $0x830] sm:$0xff]
      %v638 = vld [vmem:[%s343 + $0x838] sm:$0xff]
      %v639 = vld [vmem:[%s343 + $0x840] sm:$0xff]
      %v640 = vld [vmem:[%s343 + $0x848] sm:$0xff]
      %v641 = vld [vmem:[%s343 + $0x850] sm:$0xff]
      %v642 = vld [vmem:[%s343 + $0x858] sm:$0xff]
      %v643 = vld [vmem:[%s343 + $0x860] sm:$0xff]
      %v644 = vld [vmem:[%s343 + $0x868] sm:$0xff]
      %v645 = vld [vmem:[%s343 + $0x870] sm:$0xff]
      %v646 = vld [vmem:[%s343 + $0x878] sm:$0xff]
      %v647 = vld [vmem:[%s343 + $0x880] sm:$0xff]
      %v648 = vld [vmem:[%s343 + $0x888] sm:$0xff]
      %v649 = vld [vmem:[%s343 + $0x890] sm:$0xff]
      %v650 = vld [vmem:[%s343 + $0x898] sm:$0xff]
      %v651 = vld [vmem:[%s343 + $0x8a0] sm:$0xff]
      %v652 = vld [vmem:[%s343 + $0x8a8] sm:$0xff]
      %v653 = vld [vmem:[%s343 + $0x8b0] sm:$0xff]
      %v654 = vld [vmem:[%s343 + $0x8b8] sm:$0xff]
      %v655 = vld [vmem:[%s343 + $0x8c0] sm:$0xff]
      %v656 = vld [vmem:[%s343 + $0x8c8] sm:$0xff]
      %v657 = vld [vmem:[%s343 + $0x8d0] sm:$0xff]
      %v658 = vld [vmem:[%s343 + $0x8d8] sm:$0xff]
      %v659 = vld [vmem:[%s343 + $0x8e0] sm:$0xff]
      %v660 = vld [vmem:[%s343 + $0x8e8] sm:$0xff]
      %v661 = vld [vmem:[%s343 + $0x8f0] sm:$0xff]
      %v662 = vld [vmem:[%s343 + $0x8f8] sm:$0xff]
      %v663 = vld [vmem:[%s343 + $0x900] sm:$0xff]
      %v664 = vld [vmem:[%s343 + $0x908] sm:$0xff]
      %v665 = vld [vmem:[%s343 + $0x910] sm:$0xff]
      %v666 = vld [vmem:[%s343 + $0x918] sm:$0xff]
      %v667 = vld [vmem:[%s343 + $0x920] sm:$0xff]
      %v668 = vld [vmem:[%s343 + $0x928] sm:$0xff]
      %v669 = vld [vmem:[%s343 + $0x930] sm:$0xff]
      %v670 = vld [vmem:[%s343 + $0x938] sm:$0xff]
      %v671 = vld [vmem:[%s343 + $0x940] sm:$0xff]
      %v672 = vld [vmem:[%s343 + $0x948] sm:$0xff]
      %v673 = vld [vmem:[%s343 + $0x950] sm:$0xff]
      %v674 = vld [vmem:[%s343 + $0x958] sm:$0xff]
      %v675 = vld [vmem:[%s343 + $0x960] sm:$0xff]
      %v676 = vld [vmem:[%s343 + $0x968] sm:$0xff]
      %v677 = vld [vmem:[%s343 + $0x970] sm:$0xff]
      %v678 = vld [vmem:[%s343 + $0x978] sm:$0xff]
      %v679 = vld [vmem:[%s343 + $0x980] sm:$0xff]
      %v680 = vld [vmem:[%s343 + $0x988] sm:$0xff]
      %v681 = vld [vmem:[%s343 + $0x990] sm:$0xff]
      %v682 = vld [vmem:[%s343 + $0x998] sm:$0xff]
      %v683 = vld [vmem:[%s343 + $0x9a0] sm:$0xff]
      %v684 = vld [vmem:[%s343 + $0x9a8] sm:$0xff]
      %v685 = vld [vmem:[%s343 + $0x9b0] sm:$0xff]
      %v686 = vld [vmem:[%s343 + $0x9b8] sm:$0xff]
      %v687 = vld [vmem:[%s343 + $0x9c0] sm:$0xff]
      %v688 = vld [vmem:[%s343 + $0x9c8] sm:$0xff]
      %v689 = vld [vmem:[%s343 + $0x9d0] sm:$0xff]
      %v690 = vld [vmem:[%s343 + $0x9d8] sm:$0xff]
      %v691 = vld [vmem:[%s343 + $0x9e0] sm:$0xff]
      %v692 = vld [vmem:[%s343 + $0x9e8] sm:$0xff]
      %v693 = vld [vmem:[%s343 + $0x9f0] sm:$0xff]
      %v694 = vld [vmem:[%s343 + $0x9f8] sm:$0xff]
      %v695 = vld [vmem:[%s343 + $0xa00] sm:$0xff]
      %v696 = vld [vmem:[%s343 + $0xa08] sm:$0xff]
      %v697 = vld [vmem:[%s343 + $0xa10] sm:$0xff]
      %v698 = vld [vmem:[%s343 + $0xa18] sm:$0xff]
      %v699 = vld [vmem:[%s343 + $0xa20] sm:$0xff]
      %v700 = vld [vmem:[%s343 + $0xa28] sm:$0xff]
      %v701 = vld [vmem:[%s343 + $0xa30] sm:$0xff]
      %v702 = vld [vmem:[%s343 + $0xa38] sm:$0xff]
      %v703 = vld [vmem:[%s343 + $0xa40] sm:$0xff]
      %v704 = vld [vmem:[%s343 + $0xa48] sm:$0xff]
      %v705 = vld [vmem:[%s343 + $0xa50] sm:$0xff]
      %v706 = vld [vmem:[%s343 + $0xa58] sm:$0xff]
      %v707 = vld [vmem:[%s343 + $0xa60] sm:$0xff]
      %v708 = vld [vmem:[%s343 + $0xa68] sm:$0xff]
      %v709 = vld [vmem:[%s343 + $0xa70] sm:$0xff]
      %v710 = vld [vmem:[%s343 + $0xa78] sm:$0xff]
      %v711 = vld [vmem:[%s343 + $0xa80] sm:$0xff]
      %v712 = vld [vmem:[%s343 + $0xa88] sm:$0xff]
      %v713 = vld [vmem:[%s343 + $0xa90] sm:$0xff]
      %v714 = vld [vmem:[%s343 + $0xa98] sm:$0xff]
      %v715 = vld [vmem:[%s343 + $0xaa0] sm:$0xff]
      %v716 = vld [vmem:[%s343 + $0xaa8] sm:$0xff]
      %v717 = vld [vmem:[%s343 + $0xab0] sm:$0xff]
      %v718 = vld [vmem:[%s343 + $0xab8] sm:$0xff]
      %v719 = vld [vmem:[%s343 + $0xac0] sm:$0xff]
      %v720 = vld [vmem:[%s343 + $0xac8] sm:$0xff]
      %v721 = vld [vmem:[%s343 + $0xad0] sm:$0xff]
      %v722 = vld [vmem:[%s343 + $0xad8] sm:$0xff]
      %v723 = vld [vmem:[%s343 + $0xae0] sm:$0xff]
      %v724 = vld [vmem:[%s343 + $0xae8] sm:$0xff]
      %v725 = vld [vmem:[%s343 + $0xaf0] sm:$0xff]
      %v726 = vld [vmem:[%s343 + $0xaf8] sm:$0xff]
      %v727 = vld [vmem:[%s343 + $0xb00] sm:$0xff]
      %v728 = vld [vmem:[%s343 + $0xb08] sm:$0xff]
      %v729 = vld [vmem:[%s343 + $0xb10] sm:$0xff]
      %v730 = vld [vmem:[%s343 + $0xb18] sm:$0xff]
      %v731 = vld [vmem:[%s343 + $0xb20] sm:$0xff]
      %v732 = vld [vmem:[%s343 + $0xb28] sm:$0xff]
      %v733 = vld [vmem:[%s343 + $0xb30] sm:$0xff]
      %v734 = vld [vmem:[%s343 + $0xb38] sm:$0xff]
      %v735 = vld [vmem:[%s343 + $0xb40] sm:$0xff]
      %v736 = vld [vmem:[%s343 + $0xb48] sm:$0xff]
      %v737 = vld [vmem:[%s343 + $0xb50] sm:$0xff]
      %v738 = vld [vmem:[%s343 + $0xb58] sm:$0xff]
      %v739 = vld [vmem:[%s343 + $0xb60] sm:$0xff]
      %v740 = vld [vmem:[%s343 + $0xb68] sm:$0xff]
      %v741 = vld [vmem:[%s343 + $0xb70] sm:$0xff]
      %v742 = vld [vmem:[%s343 + $0xb78] sm:$0xff]
      %v743 = vld [vmem:[%s343 + $0xb80] sm:$0xff]
      %v744 = vld [vmem:[%s343 + $0xb88] sm:$0xff]
      %v745 = vld [vmem:[%s343 + $0xb90] sm:$0xff]
      %v746 = vld [vmem:[%s343 + $0xb98] sm:$0xff]
      %v747 = vld [vmem:[%s343 + $0xba0] sm:$0xff]
      %v748 = vld [vmem:[%s343 + $0xba8] sm:$0xff]
      %v749 = vld [vmem:[%s343 + $0xbb0] sm:$0xff]
      %v750 = vld [vmem:[%s343 + $0xbb8] sm:$0xff]
      %v751 = vld [vmem:[%s343 + $0xbc0] sm:$0xff]
      %v752 = vld [vmem:[%s343 + $0xbc8] sm:$0xff]
      %v753 = vld [vmem:[%s343 + $0xbd0] sm:$0xff]
      %v754 = vld [vmem:[%s343 + $0xbd8] sm:$0xff]
      %v755 = vld [vmem:[%s343 + $0xbe0] sm:$0xff]
      %v756 = vld [vmem:[%s343 + $0xbe8] sm:$0xff]
      %v757 = vld [vmem:[%s343 + $0xbf0] sm:$0xff]
      %v758 = vld [vmem:[%s343 + $0xbf8] sm:$0xff]
      %v759 = vld [vmem:[%s343 + $0xc00] sm:$0xff]
      %v760 = vld [vmem:[%s343 + $0xc08] sm:$0xff]
      %v761 = vld [vmem:[%s343 + $0xc10] sm:$0xff]
      %v762 = vld [vmem:[%s343 + $0xc18] sm:$0xff]
      %v763 = vld [vmem:[%s343 + $0xc20] sm:$0xff]
      %v764 = vld [vmem:[%s343 + $0xc28] sm:$0xff]
      %v765 = vld [vmem:[%s343 + $0xc30] sm:$0xff]
      %v766 = vld [vmem:[%s343 + $0xc38] sm:$0xff]
      %v767 = vld [vmem:[%s343 + $0xc40] sm:$0xff]
      %v768 = vld [vmem:[%s343 + $0xc48] sm:$0xff]
      %v769 = vld [vmem:[%s343 + $0xc50] sm:$0xff]
      %v770 = vld [vmem:[%s343 + $0xc58] sm:$0xff]
      %v771 = vld [vmem:[%s343 + $0xc60] sm:$0xff]
      %v772 = vld [vmem:[%s343 + $0xc68] sm:$0xff]
      %v773 = vld [vmem:[%s343 + $0xc70] sm:$0xff]
      %v774 = vld [vmem:[%s343 + $0xc78] sm:$0xff]
      %v775 = vld [vmem:[%s343 + $0xc80] sm:$0xff]
      %v776 = vld [vmem:[%s343 + $0xc88] sm:$0xff]
      %v777 = vld [vmem:[%s343 + $0xc90] sm:$0xff]
      %v778 = vld [vmem:[%s343 + $0xc98] sm:$0xff]
      %v779 = vld [vmem:[%s343 + $0xca0] sm:$0xff]
      %v780 = vld [vmem:[%s343 + $0xca8] sm:$0xff]
      %v781 = vld [vmem:[%s343 + $0xcb0] sm:$0xff]
      %v782 = vld [vmem:[%s343 + $0xcb8] sm:$0xff]
      %v783 = vld [vmem:[%s343 + $0xcc0] sm:$0xff]
      %v784 = vld [vmem:[%s343 + $0xcc8] sm:$0xff]
      %v785 = vld [vmem:[%s343 + $0xcd0] sm:$0xff]
      %v786 = vld [vmem:[%s343 + $0xcd8] sm:$0xff]
      %v787 = vld [vmem:[%s343 + $0xce0] sm:$0xff]
      %v788 = vld [vmem:[%s343 + $0xce8] sm:$0xff]
      %v789 = vld [vmem:[%s343 + $0xcf0] sm:$0xff]
      %v790 = vld [vmem:[%s343 + $0xcf8] sm:$0xff]
      %v791 = vld [vmem:[%s343 + $0xd00] sm:$0xff]
      %v792 = vld [vmem:[%s343 + $0xd08] sm:$0xff]
      %v793 = vld [vmem:[%s343 + $0xd10] sm:$0xff]
      %v794 = vld [vmem:[%s343 + $0xd18] sm:$0xff]
      %v795 = vld [vmem:[%s343 + $0xd20] sm:$0xff]
      %v796 = vld [vmem:[%s343 + $0xd28] sm:$0xff]
      %v797 = vld [vmem:[%s343 + $0xd30] sm:$0xff]
      %v798 = vld [vmem:[%s343 + $0xd38] sm:$0xff]
      %v799 = vld [vmem:[%s343 + $0xd40] sm:$0xff]
      %v800 = vld [vmem:[%s343 + $0xd48] sm:$0xff]
      %v801 = vld [vmem:[%s343 + $0xd50] sm:$0xff]
      %v802 = vld [vmem:[%s343 + $0xd58] sm:$0xff]
      %v803 = vld [vmem:[%s343 + $0xd60] sm:$0xff]
      %v804 = vld [vmem:[%s343 + $0xd68] sm:$0xff]
      %v805 = vld [vmem:[%s343 + $0xd70] sm:$0xff]
      %v806 = vld [vmem:[%s343 + $0xd78] sm:$0xff]
      %v807 = vld [vmem:[%s343 + $0xd80] sm:$0xff]
      %v808 = vld [vmem:[%s343 + $0xd88] sm:$0xff]
      %v809 = vld [vmem:[%s343 + $0xd90] sm:$0xff]
      %v810 = vld [vmem:[%s343 + $0xd98] sm:$0xff]
      %v811 = vld [vmem:[%s343 + $0xda0] sm:$0xff]
      %v812 = vld [vmem:[%s343 + $0xda8] sm:$0xff]
      %v813 = vld [vmem:[%s343 + $0xdb0] sm:$0xff]
      %v814 = vld [vmem:[%s343 + $0xdb8] sm:$0xff]
      %v815 = vld [vmem:[%s343 + $0xdc0] sm:$0xff]
      %v816 = vld [vmem:[%s343 + $0xdc8] sm:$0xff]
      %v817 = vld [vmem:[%s343 + $0xdd0] sm:$0xff]
      %v818 = vld [vmem:[%s343 + $0xdd8] sm:$0xff]
      %v819 = vld [vmem:[%s343 + $0xde0] sm:$0xff]
      %v820 = vld [vmem:[%s343 + $0xde8] sm:$0xff]
      %v821 = vld [vmem:[%s343 + $0xdf0] sm:$0xff]
      %v822 = vld [vmem:[%s343 + $0xdf8] sm:$0xff]
      %v823 = vld [vmem:[%s343 + $0xe00] sm:$0xff]
      %v824 = vld [vmem:[%s343 + $0xe08] sm:$0xff]
      %v825 = vld [vmem:[%s343 + $0xe10] sm:$0xff]
      %v826 = vld [vmem:[%s343 + $0xe18] sm:$0xff]
      %v827 = vld [vmem:[%s343 + $0xe20] sm:$0xff]
      %v828 = vld [vmem:[%s343 + $0xe28] sm:$0xff]
      %v829 = vld [vmem:[%s343 + $0xe30] sm:$0xff]
      %v830 = vld [vmem:[%s343 + $0xe38] sm:$0xff]
      %v831 = vld [vmem:[%s343 + $0xe40] sm:$0xff]
      %v832 = vld [vmem:[%s343 + $0xe48] sm:$0xff]
      %v833 = vld [vmem:[%s343 + $0xe50] sm:$0xff]
      %v834 = vld [vmem:[%s343 + $0xe58] sm:$0xff]
      %v835 = vld [vmem:[%s343 + $0xe60] sm:$0xff]
      %v836 = vld [vmem:[%s343 + $0xe68] sm:$0xff]
      %v837 = vld [vmem:[%s343 + $0xe70] sm:$0xff]
      %v838 = vld [vmem:[%s343 + $0xe78] sm:$0xff]
      %v839 = vld [vmem:[%s343 + $0xe80] sm:$0xff]
      %v840 = vld [vmem:[%s343 + $0xe88] sm:$0xff]
      %v841 = vld [vmem:[%s343 + $0xe90] sm:$0xff]
      %v842 = vld [vmem:[%s343 + $0xe98] sm:$0xff]
      %v843 = vld [vmem:[%s343 + $0xea0] sm:$0xff]
      %v844 = vld [vmem:[%s343 + $0xea8] sm:$0xff]
      %v845 = vld [vmem:[%s343 + $0xeb0] sm:$0xff]
      %v846 = vld [vmem:[%s343 + $0xeb8] sm:$0xff]
      %v847 = vld [vmem:[%s343 + $0xec0] sm:$0xff]
      %v848 = vld [vmem:[%s343 + $0xec8] sm:$0xff]
      %v849 = vld [vmem:[%s343 + $0xed0] sm:$0xff]
      %v850 = vld [vmem:[%s343 + $0xed8] sm:$0xff]
      %v851 = vld [vmem:[%s343 + $0xee0] sm:$0xff]
      %v852 = vld [vmem:[%s343 + $0xee8] sm:$0xff]
      %v853 = vld [vmem:[%s343 + $0xef0] sm:$0xff]
      %v854 = vld [vmem:[%s343 + $0xef8] sm:$0xff]
      %v855 = vld [vmem:[%s343 + $0xf00] sm:$0xff]
      %v856 = vld [vmem:[%s343 + $0xf08] sm:$0xff]
      %v857 = vld [vmem:[%s343 + $0xf10] sm:$0xff]
      %v858 = vld [vmem:[%s343 + $0xf18] sm:$0xff]
      %v859 = vld [vmem:[%s343 + $0xf20] sm:$0xff]
      %v860 = vld [vmem:[%s343 + $0xf28] sm:$0xff]
      %v861 = vld [vmem:[%s343 + $0xf30] sm:$0xff]
      %v862 = vld [vmem:[%s343 + $0xf38] sm:$0xff]
      %v863 = vld [vmem:[%s343 + $0xf40] sm:$0xff]
      %v864 = vld [vmem:[%s343 + $0xf48] sm:$0xff]
      %v865 = vld [vmem:[%s343 + $0xf50] sm:$0xff]
      %v866 = vld [vmem:[%s343 + $0xf58] sm:$0xff]
      %v867 = vld [vmem:[%s343 + $0xf60] sm:$0xff]
      %v868 = vld [vmem:[%s343 + $0xf68] sm:$0xff]
      %v869 = vld [vmem:[%s343 + $0xf70] sm:$0xff]
      %v870 = vld [vmem:[%s343 + $0xf78] sm:$0xff]
      %v871 = vld [vmem:[%s343 + $0xf80] sm:$0xff]
      %v872 = vld [vmem:[%s343 + $0xf88] sm:$0xff]
      %v873 = vld [vmem:[%s343 + $0xf90] sm:$0xff]
      %v874 = vld [vmem:[%s343 + $0xf98] sm:$0xff]
      %v875 = vld [vmem:[%s343 + $0xfa0] sm:$0xff]
      %v876 = vld [vmem:[%s343 + $0xfa8] sm:$0xff]
      %v877 = vld [vmem:[%s343 + $0xfb0] sm:$0xff]
      %v878 = vld [vmem:[%s343 + $0xfb8] sm:$0xff]
      %v879 = vld [vmem:[%s343 + $0xfc0] sm:$0xff]
      %v880 = vld [vmem:[%s343 + $0xfc8] sm:$0xff]
      %v881 = vld [vmem:[%s343 + $0xfd0] sm:$0xff]
      %v882 = vld [vmem:[%s343 + $0xfd8] sm:$0xff]
      %v883 = vld [vmem:[%s343 + $0xfe0] sm:$0xff]
      %v884 = vld [vmem:[%s343 + $0xfe8] sm:$0xff]
      %v885 = vld [vmem:[%s343 + $0xff0] sm:$0xff]
      %v886 = vld [vmem:[%s343 + $0xff8] sm:$0xff]
      %v887 = vld [vmem:[%s343 + $0x1000] sm:$0xff]
      %v888 = vld [vmem:[%s343 + $0x1008] sm:$0xff]
      %v889 = vld [vmem:[%s343 + $0x1010] sm:$0xff]
      %v890 = vld [vmem:[%s343 + $0x1018] sm:$0xff]
      %v891 = vld [vmem:[%s343 + $0x1020] sm:$0xff]
      %v892 = vld [vmem:[%s343 + $0x1028] sm:$0xff]
      %v893 = vld [vmem:[%s343 + $0x1030] sm:$0xff]
      %v894 = vld [vmem:[%s343 + $0x1038] sm:$0xff]
      %v895 = vld [vmem:[%s343 + $0x1040] sm:$0xff]
      %v896 = vld [vmem:[%s343 + $0x1048] sm:$0xff]
      %v897 = vld [vmem:[%s343 + $0x1050] sm:$0xff]
      %v898 = vld [vmem:[%s343 + $0x1058] sm:$0xff]
      %v899 = vld [vmem:[%s343 + $0x1060] sm:$0xff]
      %v900 = vld [vmem:[%s343 + $0x1068] sm:$0xff]
      %v901 = vld [vmem:[%s343 + $0x1070] sm:$0xff]
      %v902 = vld [vmem:[%s343 + $0x1078] sm:$0xff]
      %v903 = vld [vmem:[%s343 + $0x1080] sm:$0xff]
      %v904 = vld [vmem:[%s343 + $0x1088] sm:$0xff]
      %v905 = vld [vmem:[%s343 + $0x1090] sm:$0xff]
      %v906 = vld [vmem:[%s343 + $0x1098] sm:$0xff]
      %v907 = vld [vmem:[%s343 + $0x10a0] sm:$0xff]
      %v908 = vld [vmem:[%s343 + $0x10a8] sm:$0xff]
      %v909 = vld [vmem:[%s343 + $0x10b0] sm:$0xff]
      %v910 = vld [vmem:[%s343 + $0x10b8] sm:$0xff]
      %v911 = vld [vmem:[%s343 + $0x10c0] sm:$0xff]
      %v912 = vld [vmem:[%s343 + $0x10c8] sm:$0xff]
      %v913 = vld [vmem:[%s343 + $0x10d0] sm:$0xff]
      %v914 = vld [vmem:[%s343 + $0x10d8] sm:$0xff]
      %v915 = vld [vmem:[%s343 + $0x10e0] sm:$0xff]
      %v916 = vld [vmem:[%s343 + $0x10e8] sm:$0xff]
      %v917 = vld [vmem:[%s343 + $0x10f0] sm:$0xff]
      %v918 = vld [vmem:[%s343 + $0x10f8] sm:$0xff]
      %v919 = vld [vmem:[%s343 + $0x1100] sm:$0xff]
      %v920 = vld [vmem:[%s343 + $0x1108] sm:$0xff]
      %v921 = vld [vmem:[%s343 + $0x1110] sm:$0xff]
      %v922 = vld [vmem:[%s343 + $0x1118] sm:$0xff]
      %v923 = vld [vmem:[%s343 + $0x1120] sm:$0xff]
      %v924 = vld [vmem:[%s343 + $0x1128] sm:$0xff]
      %v925 = vld [vmem:[%s343 + $0x1130] sm:$0xff]
      %v926 = vld [vmem:[%s343 + $0x1138] sm:$0xff]
      %v927 = vld [vmem:[%s343 + $0x1140] sm:$0xff]
      %v928 = vld [vmem:[%s343 + $0x1148] sm:$0xff]
      %v929 = vld [vmem:[%s343 + $0x1150] sm:$0xff]
      %v930 = vld [vmem:[%s343 + $0x1158] sm:$0xff]
      %v931 = vld [vmem:[%s343 + $0x1160] sm:$0xff]
      %v932 = vld [vmem:[%s343 + $0x1168] sm:$0xff]
      %v933 = vld [vmem:[%s343 + $0x1170] sm:$0xff]
      %v934 = vld [vmem:[%s343 + $0x1178] sm:$0xff]
      %v935 = vld [vmem:[%s343 + $0x1180] sm:$0xff]
      %v936 = vld [vmem:[%s343 + $0x1188] sm:$0xff]
      %v937 = vld [vmem:[%s343 + $0x1190] sm:$0xff]
      %v938 = vld [vmem:[%s343 + $0x1198] sm:$0xff]
      %v939 = vld [vmem:[%s343 + $0x11a0] sm:$0xff]
      %v940 = vld [vmem:[%s343 + $0x11a8] sm:$0xff]
      %v941 = vld [vmem:[%s343 + $0x11b0] sm:$0xff]
      %v942 = vld [vmem:[%s343 + $0x11b8] sm:$0xff]
      %v943 = vld [vmem:[%s343 + $0x11c0] sm:$0xff]
      %v944 = vld [vmem:[%s343 + $0x11c8] sm:$0xff]
      %v945 = vld [vmem:[%s343 + $0x11d0] sm:$0xff]
      %v946 = vld [vmem:[%s343 + $0x11d8] sm:$0xff]
      %v947 = vld [vmem:[%s343 + $0x11e0] sm:$0xff]
      %v948 = vld [vmem:[%s343 + $0x11e8] sm:$0xff]
      %v949 = vld [vmem:[%s343 + $0x11f0] sm:$0xff]
      %v950 = vld [vmem:[%s343 + $0x11f8] sm:$0xff]
      %v951 = vld [vmem:[%s343 + $0x1200] sm:$0xff]
      %v952 = vld [vmem:[%s343 + $0x1208] sm:$0xff]
      %v953 = vld [vmem:[%s343 + $0x1210] sm:$0xff]
      %v954 = vld [vmem:[%s343 + $0x1218] sm:$0xff]
      %v955 = vld [vmem:[%s343 + $0x1220] sm:$0xff]
      %v956 = vld [vmem:[%s343 + $0x1228] sm:$0xff]
      %v957 = vld [vmem:[%s343 + $0x1230] sm:$0xff]
      %v958 = vld [vmem:[%s343 + $0x1238] sm:$0xff]
      %v959 = vld [vmem:[%s343 + $0x1240] sm:$0xff]
      %v960 = vld [vmem:[%s343 + $0x1248] sm:$0xff]
      %v961 = vld [vmem:[%s343 + $0x1250] sm:$0xff]
      %v962 = vld [vmem:[%s343 + $0x1258] sm:$0xff]
      %v963 = vld [vmem:[%s343 + $0x1260] sm:$0xff]
      %v964 = vld [vmem:[%s343 + $0x1268] sm:$0xff]
      %v965 = vld [vmem:[%s343 + $0x1270] sm:$0xff]
      %v966 = vld [vmem:[%s343 + $0x1278] sm:$0xff]
      %v967 = vld [vmem:[%s343 + $0x1280] sm:$0xff]
      %v968 = vld [vmem:[%s343 + $0x1288] sm:$0xff]
      %v969 = vld [vmem:[%s343 + $0x1290] sm:$0xff]
      %v970 = vld [vmem:[%s343 + $0x1298] sm:$0xff]
      %v971 = vld [vmem:[%s343 + $0x12a0] sm:$0xff]
      %v972 = vld [vmem:[%s343 + $0x12a8] sm:$0xff]
      %v973 = vld [vmem:[%s343 + $0x12b0] sm:$0xff]
      %v974 = vld [vmem:[%s343 + $0x12b8] sm:$0xff]
      %v975 = vld [vmem:[%s343 + $0x12c0] sm:$0xff]
      %v976 = vld [vmem:[%s343 + $0x12c8] sm:$0xff]
      %v977 = vld [vmem:[%s343 + $0x12d0] sm:$0xff]
      %v978 = vld [vmem:[%s343 + $0x12d8] sm:$0xff]
      %v979 = vld [vmem:[%s343 + $0x12e0] sm:$0xff]
      %v980 = vld [vmem:[%s343 + $0x12e8] sm:$0xff]
      %v981 = vld [vmem:[%s343 + $0x12f0] sm:$0xff]
      %v982 = vld [vmem:[%s343 + $0x12f8] sm:$0xff]
      %v983 = vld [vmem:[%s343 + $0x1300] sm:$0xff]
      %v984 = vld [vmem:[%s343 + $0x1308] sm:$0xff]
      %v985 = vld [vmem:[%s343 + $0x1310] sm:$0xff]
      %v986 = vld [vmem:[%s343 + $0x1318] sm:$0xff]
      %v987 = vld [vmem:[%s343 + $0x1320] sm:$0xff]
      %v988 = vld [vmem:[%s343 + $0x1328] sm:$0xff]
      %v989 = vld [vmem:[%s343 + $0x1330] sm:$0xff]
      %v990 = vld [vmem:[%s343 + $0x1338] sm:$0xff]
      %v991 = vld [vmem:[%s343 + $0x1340] sm:$0xff]
      %v992 = vld [vmem:[%s343 + $0x1348] sm:$0xff]
      %v993 = vld [vmem:[%s343 + $0x1350] sm:$0xff]
      %v994 = vld [vmem:[%s343 + $0x1358] sm:$0xff]
      %v995 = vld [vmem:[%s343 + $0x1360] sm:$0xff]
      %v996 = vld [vmem:[%s343 + $0x1368] sm:$0xff]
      %v997 = vld [vmem:[%s343 + $0x1370] sm:$0xff]
      %v998 = vld [vmem:[%s343 + $0x1378] sm:$0xff]
      %v999 = vld [vmem:[%s343 + $0x1380] sm:$0xff]
      %v1000 = vld [vmem:[%s343 + $0x1388] sm:$0xff]
      %v1001 = vld [vmem:[%s343 + $0x1390] sm:$0xff]
      %v1002 = vld [vmem:[%s343 + $0x1398] sm:$0xff]
      %v1003 = vld [vmem:[%s343 + $0x13a0] sm:$0xff]
      %v1004 = vld [vmem:[%s343 + $0x13a8] sm:$0xff]
      %v1005 = vld [vmem:[%s343 + $0x13b0] sm:$0xff]
      %v1006 = vld [vmem:[%s343 + $0x13b8] sm:$0xff]
      %v1007 = vld [vmem:[%s343 + $0x13c0] sm:$0xff]
      %v1008 = vld [vmem:[%s343 + $0x13c8] sm:$0xff]
      %v1009 = vld [vmem:[%s343 + $0x13d0] sm:$0xff]
      %v1010 = vld [vmem:[%s343 + $0x13d8] sm:$0xff]
      %v1011 = vld [vmem:[%s343 + $0x13e0] sm:$0xff]
      %v1012 = vld [vmem:[%s343 + $0x13e8] sm:$0xff]
      %v1013 = vld [vmem:[%s343 + $0x13f0] sm:$0xff]
      %v1014 = vld [vmem:[%s343 + $0x13f8] sm:$0xff]
      %v1015 = vld [vmem:[%s343 + $0x1400] sm:$0xff]
      %v1016 = vld [vmem:[%s343 + $0x1408] sm:$0xff]
      %v1017 = vld [vmem:[%s343 + $0x1410] sm:$0xff]
      %v1018 = vld [vmem:[%s343 + $0x1418] sm:$0xff]
      %v1019 = vld [vmem:[%s343 + $0x1420] sm:$0xff]
      %v1020 = vld [vmem:[%s343 + $0x1428] sm:$0xff]
      %v1021 = vld [vmem:[%s343 + $0x1430] sm:$0xff]
      %v1022 = vld [vmem:[%s343 + $0x1438] sm:$0xff]
      %v1023 = vld [vmem:[%s343 + $0x1440] sm:$0xff]
      %v1024 = vld [vmem:[%s343 + $0x1448] sm:$0xff]
      %v1025 = vld [vmem:[%s343 + $0x1450] sm:$0xff]
      %v1026 = vld [vmem:[%s343 + $0x1458] sm:$0xff]
      %v1027 = vld [vmem:[%s343 + $0x1460] sm:$0xff]
      %v1028 = vld [vmem:[%s343 + $0x1468] sm:$0xff]
      %v1029 = vld [vmem:[%s343 + $0x1470] sm:$0xff]
      %v1030 = vld [vmem:[%s343 + $0x1478] sm:$0xff]
      %v1031 = vld [vmem:[%s343 + $0x1480] sm:$0xff]
      %v1032 = vld [vmem:[%s343 + $0x1488] sm:$0xff]
      %v1033 = vld [vmem:[%s343 + $0x1490] sm:$0xff]
      %v1034 = vld [vmem:[%s343 + $0x1498] sm:$0xff]
      %v1035 = vld [vmem:[%s343 + $0x14a0] sm:$0xff]
      %v1036 = vld [vmem:[%s343 + $0x14a8] sm:$0xff]
      %v1037 = vld [vmem:[%s343 + $0x14b0] sm:$0xff]
      %v1038 = vld [vmem:[%s343 + $0x14b8] sm:$0xff]
      %v1039 = vld [vmem:[%s343 + $0x14c0] sm:$0xff]
      %v1040 = vld [vmem:[%s343 + $0x14c8] sm:$0xff]
      %v1041 = vld [vmem:[%s343 + $0x14d0] sm:$0xff]
      %v1042 = vld [vmem:[%s343 + $0x14d8] sm:$0xff]
      %v1043 = vld [vmem:[%s343 + $0x14e0] sm:$0xff]
      %v1044 = vld [vmem:[%s343 + $0x14e8] sm:$0xff]
      %v1045 = vld [vmem:[%s343 + $0x14f0] sm:$0xff]
      %v1046 = vld [vmem:[%s343 + $0x14f8] sm:$0xff]
      %v1047 = vld [vmem:[%s343 + $0x1500] sm:$0xff]
      %v1048 = vld [vmem:[%s343 + $0x1508] sm:$0xff]
      %v1049 = vld [vmem:[%s343 + $0x1510] sm:$0xff]
      %v1050 = vld [vmem:[%s343 + $0x1518] sm:$0xff]
      %v1051 = vld [vmem:[%s343 + $0x1520] sm:$0xff]
      %v1052 = vld [vmem:[%s343 + $0x1528] sm:$0xff]
      %v1053 = vld [vmem:[%s343 + $0x1530] sm:$0xff]
      %v1054 = vld [vmem:[%s343 + $0x1538] sm:$0xff]
      %v1055 = vld [vmem:[%s343 + $0x1540] sm:$0xff]
      %v1056 = vld [vmem:[%s343 + $0x1548] sm:$0xff]
      %v1057 = vld [vmem:[%s343 + $0x1550] sm:$0xff]
      %v1058 = vld [vmem:[%s343 + $0x1558] sm:$0xff]
      %v1059 = vld [vmem:[%s343 + $0x1560] sm:$0xff]
      %v1060 = vld [vmem:[%s343 + $0x1568] sm:$0xff]
      %v1061 = vld [vmem:[%s343 + $0x1570] sm:$0xff]
      %v1062 = vld [vmem:[%s343 + $0x1578] sm:$0xff]
      %v1063 = vld [vmem:[%s343 + $0x1580] sm:$0xff]
      %v1064 = vld [vmem:[%s343 + $0x1588] sm:$0xff]
      %v1065 = vld [vmem:[%s343 + $0x1590] sm:$0xff]
      %v1066 = vld [vmem:[%s343 + $0x1598] sm:$0xff]
      %v1067 = vld [vmem:[%s343 + $0x15a0] sm:$0xff]
      %v1068 = vld [vmem:[%s343 + $0x15a8] sm:$0xff]
      %v1069 = vld [vmem:[%s343 + $0x15b0] sm:$0xff]
      %v1070 = vld [vmem:[%s343 + $0x15b8] sm:$0xff]
      %v1071 = vld [vmem:[%s343 + $0x15c0] sm:$0xff]
      %v1072 = vld [vmem:[%s343 + $0x15c8] sm:$0xff]
      %v1073 = vld [vmem:[%s343 + $0x15d0] sm:$0xff]
      %v1074 = vld [vmem:[%s343 + $0x15d8] sm:$0xff]
      %v1075 = vld [vmem:[%s343 + $0x15e0] sm:$0xff]
      %v1076 = vld [vmem:[%s343 + $0x15e8] sm:$0xff]
      %v1077 = vld [vmem:[%s343 + $0x15f0] sm:$0xff]
      %v1078 = vld [vmem:[%s343 + $0x15f8] sm:$0xff]
      %v1079 = vld [vmem:[%s343 + $0x1600] sm:$0xff]
      %v1080 = vld [vmem:[%s343 + $0x1608] sm:$0xff]
      %v1081 = vld [vmem:[%s343 + $0x1610] sm:$0xff]
      %v1082 = vld [vmem:[%s343 + $0x1618] sm:$0xff]
      %v1083 = vld [vmem:[%s343 + $0x1620] sm:$0xff]
      %v1084 = vld [vmem:[%s343 + $0x1628] sm:$0xff]
      %v1085 = vld [vmem:[%s343 + $0x1630] sm:$0xff]
      %v1086 = vld [vmem:[%s343 + $0x1638] sm:$0xff]
      %v1087 = vld [vmem:[%s343 + $0x1640] sm:$0xff]
      %v1088 = vld [vmem:[%s343 + $0x1648] sm:$0xff]
      %v1089 = vld [vmem:[%s343 + $0x1650] sm:$0xff]
      %v1090 = vld [vmem:[%s343 + $0x1658] sm:$0xff]
      %v1091 = vld [vmem:[%s343 + $0x1660] sm:$0xff]
      %v1092 = vld [vmem:[%s343 + $0x1668] sm:$0xff]
      %v1093 = vld [vmem:[%s343 + $0x1670] sm:$0xff]
      %v1094 = vld [vmem:[%s343 + $0x1678] sm:$0xff]
      %v1095 = vld [vmem:[%s343 + $0x1680] sm:$0xff]
      %v1096 = vld [vmem:[%s343 + $0x1688] sm:$0xff]
      %v1097 = vld [vmem:[%s343 + $0x1690] sm:$0xff]
      %v1098 = vld [vmem:[%s343 + $0x1698] sm:$0xff]
      %v1099 = vld [vmem:[%s343 + $0x16a0] sm:$0xff]
      %v1100 = vld [vmem:[%s343 + $0x16a8] sm:$0xff]
      %v1101 = vld [vmem:[%s343 + $0x16b0] sm:$0xff]
      %v1102 = vld [vmem:[%s343 + $0x16b8] sm:$0xff]
      %v1103 = vld [vmem:[%s343 + $0x16c0] sm:$0xff]
      %v1104 = vld [vmem:[%s343 + $0x16c8] sm:$0xff]
      %v1105 = vld [vmem:[%s343 + $0x16d0] sm:$0xff]
      %v1106 = vld [vmem:[%s343 + $0x16d8] sm:$0xff]
      %v1107 = vld [vmem:[%s343 + $0x16e0] sm:$0xff]
      %v1108 = vld [vmem:[%s343 + $0x16e8] sm:$0xff]
      %v1109 = vld [vmem:[%s343 + $0x16f0] sm:$0xff]
      %v1110 = vld [vmem:[%s343 + $0x16f8] sm:$0xff]
      %v1111 = vld [vmem:[%s343 + $0x1700] sm:$0xff]
      %v1112 = vld [vmem:[%s343 + $0x1708] sm:$0xff]
      %v1113 = vld [vmem:[%s343 + $0x1710] sm:$0xff]
      %v1114 = vld [vmem:[%s343 + $0x1718] sm:$0xff]
      %v1115 = vld [vmem:[%s343 + $0x1720] sm:$0xff]
      %v1116 = vld [vmem:[%s343 + $0x1728] sm:$0xff]
      %v1117 = vld [vmem:[%s343 + $0x1730] sm:$0xff]
      %v1118 = vld [vmem:[%s343 + $0x1738] sm:$0xff]
      %v1119 = vld [vmem:[%s343 + $0x1740] sm:$0xff]
      %v1120 = vld [vmem:[%s343 + $0x1748] sm:$0xff]
      %v1121 = vld [vmem:[%s343 + $0x1750] sm:$0xff]
      %v1122 = vld [vmem:[%s343 + $0x1758] sm:$0xff]
      %v1123 = vld [vmem:[%s343 + $0x1760] sm:$0xff]
      %v1124 = vld [vmem:[%s343 + $0x1768] sm:$0xff]
      %v1125 = vld [vmem:[%s343 + $0x1770] sm:$0xff]
      %v1126 = vld [vmem:[%s343 + $0x1778] sm:$0xff]
      %v1127 = vld [vmem:[%s343 + $0x1780] sm:$0xff]
      %v1128 = vld [vmem:[%s343 + $0x1788] sm:$0xff]
      %v1129 = vld [vmem:[%s343 + $0x1790] sm:$0xff]
      %v1130 = vld [vmem:[%s343 + $0x1798] sm:$0xff]
      %v1131 = vld [vmem:[%s343 + $0x17a0] sm:$0xff]
      %v1132 = vld [vmem:[%s343 + $0x17a8] sm:$0xff]
      %v1133 = vld [vmem:[%s343 + $0x17b0] sm:$0xff]
      %v1134 = vld [vmem:[%s343 + $0x17b8] sm:$0xff]
      %v1135 = vld [vmem:[%s343 + $0x17c0] sm:$0xff]
      %v1136 = vld [vmem:[%s343 + $0x17c8] sm:$0xff]
      %v1137 = vld [vmem:[%s343 + $0x17d0] sm:$0xff]
      %v1138 = vld [vmem:[%s343 + $0x17d8] sm:$0xff]
      %v1139 = vld [vmem:[%s343 + $0x17e0] sm:$0xff]
      %v1140 = vld [vmem:[%s343 + $0x17e8] sm:$0xff]
      %v1141 = vld [vmem:[%s343 + $0x17f0] sm:$0xff]
      %v1142 = vld [vmem:[%s343 + $0x17f8] sm:$0xff]
      %v1143 = vld [vmem:[%s343 + $0x1800] sm:$0xff]
      %v1144 = vld [vmem:[%s343 + $0x1808] sm:$0xff]
      %v1145 = vld [vmem:[%s343 + $0x1810] sm:$0xff]
      %v1146 = vld [vmem:[%s343 + $0x1818] sm:$0xff]
      %v1147 = vld [vmem:[%s343 + $0x1820] sm:$0xff]
      %v1148 = vld [vmem:[%s343 + $0x1828] sm:$0xff]
      %v1149 = vld [vmem:[%s343 + $0x1830] sm:$0xff]
      %v1150 = vld [vmem:[%s343 + $0x1838] sm:$0xff]
      %v1151 = vld [vmem:[%s343 + $0x1840] sm:$0xff]
      %v1152 = vld [vmem:[%s343 + $0x1848] sm:$0xff]
      %v1153 = vld [vmem:[%s343 + $0x1850] sm:$0xff]
      %v1154 = vld [vmem:[%s343 + $0x1858] sm:$0xff]
      %v1155 = vld [vmem:[%s343 + $0x1860] sm:$0xff]
      %v1156 = vld [vmem:[%s343 + $0x1868] sm:$0xff]
      %v1157 = vld [vmem:[%s343 + $0x1870] sm:$0xff]
      %v1158 = vld [vmem:[%s343 + $0x1878] sm:$0xff]
      %v1159 = vld [vmem:[%s343 + $0x1880] sm:$0xff]
      %v1160 = vld [vmem:[%s343 + $0x1888] sm:$0xff]
      %v1161 = vld [vmem:[%s343 + $0x1890] sm:$0xff]
      %v1162 = vld [vmem:[%s343 + $0x1898] sm:$0xff]
      %v1163 = vld [vmem:[%s343 + $0x18a0] sm:$0xff]
      %v1164 = vld [vmem:[%s343 + $0x18a8] sm:$0xff]
      %v1165 = vld [vmem:[%s343 + $0x18b0] sm:$0xff]
      %v1166 = vld [vmem:[%s343 + $0x18b8] sm:$0xff]
      %v1167 = vld [vmem:[%s343 + $0x18c0] sm:$0xff]
      %v1168 = vld [vmem:[%s343 + $0x18c8] sm:$0xff]
      %v1169 = vld [vmem:[%s343 + $0x18d0] sm:$0xff]
      %v1170 = vld [vmem:[%s343 + $0x18d8] sm:$0xff]
      %v1171 = vld [vmem:[%s343 + $0x18e0] sm:$0xff]
      %v1172 = vld [vmem:[%s343 + $0x18e8] sm:$0xff]
      %v1173 = vld [vmem:[%s343 + $0x18f0] sm:$0xff]
      %v1174 = vld [vmem:[%s343 + $0x18f8] sm:$0xff]
      %v1180 = vunpack.c.l.b16 %v370
      %v1181 = vunpack.c.h.b16 %v370
      %v1182 = vunpack.c.l.b16 %v371
      %v1183 = vunpack.c.h.b16 %v371
      %v1184 = vunpack.c.l.b16 %v372
      %v1185 = vunpack.c.h.b16 %v372
      %v1186 = vunpack.c.l.b16 %v373
      %v1187 = vunpack.c.h.b16 %v373
      %v1188 = vunpack.c.l.b16 %v374
      %v1189 = vunpack.c.h.b16 %v374
      %v1190 = vpack.c.b16 %v1180, %v1180
      %v1191 = vpack.c.b16 %v1181, %v1181
      %v1192 = vpack.c.b16 %v1182, %v1182
      %v1193 = vpack.c.b16 %v1183, %v1183
      %v1194 = vpack.c.b16 %v1184, %v1184
      %v1195 = vpack.c.b16 %v1185, %v1185
      %v1196 = vpack.c.b16 %v1186, %v1186
      %v1197 = vpack.c.b16 %v1187, %v1187
      %v1198 = vpack.c.b16 %v1188, %v1188
      %v1199 = vpack.c.b16 %v1189, %v1189
      %v2010 = vunpack.c.l.b16 %v375
      %v2011 = vunpack.c.h.b16 %v375
      %v2012 = vunpack.c.l.b16 %v376
      %v2013 = vunpack.c.h.b16 %v376
      %v2014 = vunpack.c.l.b16 %v377
      %v2015 = vunpack.c.h.b16 %v377
      %v2016 = vunpack.c.l.b16 %v378
      %v2017 = vunpack.c.h.b16 %v378
      %v2018 = vunpack.c.l.b16 %v379
      %v2019 = vunpack.c.h.b16 %v379
      %v2020 = vunpack.c.l.b16 %v380
      %v2021 = vunpack.c.h.b16 %v380
      %v2022 = vunpack.c.l.b16 %v381
      %v2023 = vunpack.c.h.b16 %v381
      %v2024 = vunpack.c.l.b16 %v382
      %v2025 = vunpack.c.h.b16 %v382
      %v2026 = vunpack.c.l.b16 %v383
      %v2027 = vunpack.c.h.b16 %v383
      %v2028 = vunpack.c.l.b16 %v384
      %v2029 = vunpack.c.h.b16 %v384
      %v2030 = vunpack.c.l.b16 %v385
      %v2031 = vunpack.c.h.b16 %v385
      %v2032 = vunpack.c.l.b16 %v386
      %v2033 = vunpack.c.h.b16 %v386
      %v2034 = vunpack.c.l.b16 %v387
      %v2035 = vunpack.c.h.b16 %v387
      %v2036 = vunpack.c.l.b16 %v388
      %v2037 = vunpack.c.h.b16 %v388
      %v2038 = vunpack.c.l.b16 %v389
      %v2039 = vunpack.c.h.b16 %v389
      %v2040 = vunpack.c.l.b16 %v390
      %v2041 = vunpack.c.h.b16 %v390
      %v2042 = vunpack.c.l.b16 %v391
      %v2043 = vunpack.c.h.b16 %v391
      %v2044 = vunpack.c.l.b16 %v392
      %v2045 = vunpack.c.h.b16 %v392
      %v2046 = vunpack.c.l.b16 %v393
      %v2047 = vunpack.c.h.b16 %v393
      %v2048 = vunpack.c.l.b16 %v394
      %v2049 = vunpack.c.h.b16 %v394
      %v2050 = vunpack.c.l.b16 %v395
      %v2051 = vunpack.c.h.b16 %v395
      %v2052 = vunpack.c.l.b16 %v396
      %v2053 = vunpack.c.h.b16 %v396
      %v2054 = vunpack.c.l.b16 %v397
      %v2055 = vunpack.c.h.b16 %v397
      %v2056 = vunpack.c.l.b16 %v398
      %v2057 = vunpack.c.h.b16 %v398
      %v2058 = vunpack.c.l.b16 %v399
      %v2059 = vunpack.c.h.b16 %v399
      %v2060 = vunpack.c.l.b16 %v400
      %v2061 = vunpack.c.h.b16 %v400
      %v2062 = vunpack.c.l.b16 %v401
      %v2063 = vunpack.c.h.b16 %v401
      %v2064 = vunpack.c.l.b16 %v402
      %v2065 = vunpack.c.h.b16 %v402
      %v2066 = vunpack.c.l.b16 %v403
      %v2067 = vunpack.c.h.b16 %v403
      %v2068 = vunpack.c.l.b16 %v404
      %v2069 = vunpack.c.h.b16 %v404
      %v2070 = vunpack.c.l.b16 %v405
      %v2071 = vunpack.c.h.b16 %v405
      %v2072 = vunpack.c.l.b16 %v406
      %v2073 = vunpack.c.h.b16 %v406
      %v2074 = vunpack.c.l.b16 %v407
      %v2075 = vunpack.c.h.b16 %v407
      %v2076 = vunpack.c.l.b16 %v408
      %v2077 = vunpack.c.h.b16 %v408
      %v2078 = vunpack.c.l.b16 %v409
      %v2079 = vunpack.c.h.b16 %v409
      %v2080 = vunpack.c.l.b16 %v410
      %v2081 = vunpack.c.h.b16 %v410
      %v2082 = vunpack.c.l.b16 %v411
      %v2083 = vunpack.c.h.b16 %v411
      %v2084 = vunpack.c.l.b16 %v412
      %v2085 = vunpack.c.h.b16 %v412
      %v2086 = vunpack.c.l.b16 %v413
      %v2087 = vunpack.c.h.b16 %v413
      %v2088 = vunpack.c.l.b16 %v414
      %v2089 = vunpack.c.h.b16 %v414
      %v2090 = vunpack.c.l.b16 %v415
      %v2091 = vunpack.c.h.b16 %v415
      %v2092 = vunpack.c.l.b16 %v416
      %v2093 = vunpack.c.h.b16 %v416
      %v2094 = vunpack.c.l.b16 %v417
      %v2095 = vunpack.c.h.b16 %v417
      %v2096 = vunpack.c.l.b16 %v418
      %v2097 = vunpack.c.h.b16 %v418
      %v2098 = vunpack.c.l.b16 %v419
      %v2099 = vunpack.c.h.b16 %v419
      %v2100 = vunpack.c.l.b16 %v420
      %v2101 = vunpack.c.h.b16 %v420
      %v2102 = vunpack.c.l.b16 %v421
      %v2103 = vunpack.c.h.b16 %v421
      %v2104 = vunpack.c.l.b16 %v422
      %v2105 = vunpack.c.h.b16 %v422
      %v2106 = vunpack.c.l.b16 %v423
      %v2107 = vunpack.c.h.b16 %v423
      %v2108 = vunpack.c.l.b16 %v424
      %v2109 = vunpack.c.h.b16 %v424
      %v2110 = vunpack.c.l.b16 %v425
      %v2111 = vunpack.c.h.b16 %v425
      %v2112 = vunpack.c.l.b16 %v426
      %v2113 = vunpack.c.h.b16 %v426
      %v2114 = vunpack.c.l.b16 %v427
      %v2115 = vunpack.c.h.b16 %v427
      %v2116 = vunpack.c.l.b16 %v428
      %v2117 = vunpack.c.h.b16 %v428
      %v2118 = vunpack.c.l.b16 %v429
      %v2119 = vunpack.c.h.b16 %v429
      %v2120 = vunpack.c.l.b16 %v430
      %v2121 = vunpack.c.h.b16 %v430
      %v2122 = vunpack.c.l.b16 %v431
      %v2123 = vunpack.c.h.b16 %v431
      %v2124 = vunpack.c.l.b16 %v432
      %v2125 = vunpack.c.h.b16 %v432
      %v2126 = vunpack.c.l.b16 %v433
      %v2127 = vunpack.c.h.b16 %v433
      %v2128 = vunpack.c.l.b16 %v434
      %v2129 = vunpack.c.h.b16 %v434
      %v2130 = vunpack.c.l.b16 %v435
      %v2131 = vunpack.c.h.b16 %v435
      %v2132 = vunpack.c.l.b16 %v436
      %v2133 = vunpack.c.h.b16 %v436
      %v2134 = vunpack.c.l.b16 %v437
      %v2135 = vunpack.c.h.b16 %v437
      %v2136 = vunpack.c.l.b16 %v438
      %v2137 = vunpack.c.h.b16 %v438
      %v2138 = vunpack.c.l.b16 %v439
      %v2139 = vunpack.c.h.b16 %v439
      %v2140 = vunpack.c.l.b16 %v440
      %v2141 = vunpack.c.h.b16 %v440
      %v2142 = vunpack.c.l.b16 %v441
      %v2143 = vunpack.c.h.b16 %v441
      %v2144 = vunpack.c.l.b16 %v442
      %v2145 = vunpack.c.h.b16 %v442
      %v2146 = vunpack.c.l.b16 %v443
      %v2147 = vunpack.c.h.b16 %v443
      %v2148 = vunpack.c.l.b16 %v444
      %v2149 = vunpack.c.h.b16 %v444
      %v2150 = vunpack.c.l.b16 %v445
      %v2151 = vunpack.c.h.b16 %v445
      %v2152 = vunpack.c.l.b16 %v446
      %v2153 = vunpack.c.h.b16 %v446
      %v2154 = vunpack.c.l.b16 %v447
      %v2155 = vunpack.c.h.b16 %v447
      %v2156 = vunpack.c.l.b16 %v448
      %v2157 = vunpack.c.h.b16 %v448
      %v2158 = vunpack.c.l.b16 %v449
      %v2159 = vunpack.c.h.b16 %v449
      %v2160 = vunpack.c.l.b16 %v450
      %v2161 = vunpack.c.h.b16 %v450
      %v2162 = vunpack.c.l.b16 %v451
      %v2163 = vunpack.c.h.b16 %v451
      %v2164 = vunpack.c.l.b16 %v452
      %v2165 = vunpack.c.h.b16 %v452
      %v2166 = vunpack.c.l.b16 %v453
      %v2167 = vunpack.c.h.b16 %v453
      %v2168 = vunpack.c.l.b16 %v454
      %v2169 = vunpack.c.h.b16 %v454
      %v2170 = vunpack.c.l.b16 %v455
      %v2171 = vunpack.c.h.b16 %v455
      %v2172 = vunpack.c.l.b16 %v456
      %v2173 = vunpack.c.h.b16 %v456
      %v2174 = vunpack.c.l.b16 %v457
      %v2175 = vunpack.c.h.b16 %v457
      %v2176 = vunpack.c.l.b16 %v458
      %v2177 = vunpack.c.h.b16 %v458
      %v2178 = vunpack.c.l.b16 %v459
      %v2179 = vunpack.c.h.b16 %v459
      %v2180 = vunpack.c.l.b16 %v460
      %v2181 = vunpack.c.h.b16 %v460
      %v2182 = vunpack.c.l.b16 %v461
      %v2183 = vunpack.c.h.b16 %v461
      %v2184 = vunpack.c.l.b16 %v462
      %v2185 = vunpack.c.h.b16 %v462
      %v2186 = vunpack.c.l.b16 %v463
      %v2187 = vunpack.c.h.b16 %v463
      %v2188 = vunpack.c.l.b16 %v464
      %v2189 = vunpack.c.h.b16 %v464
      %v2190 = vunpack.c.l.b16 %v465
      %v2191 = vunpack.c.h.b16 %v465
      %v2192 = vunpack.c.l.b16 %v466
      %v2193 = vunpack.c.h.b16 %v466
      %v2194 = vunpack.c.l.b16 %v467
      %v2195 = vunpack.c.h.b16 %v467
      %v2196 = vunpack.c.l.b16 %v468
      %v2197 = vunpack.c.h.b16 %v468
      %v2198 = vunpack.c.l.b16 %v469
      %v2199 = vunpack.c.h.b16 %v469
      %v2200 = vunpack.c.l.b16 %v470
      %v2201 = vunpack.c.h.b16 %v470
      %v2202 = vunpack.c.l.b16 %v471
      %v2203 = vunpack.c.h.b16 %v471
      %v2204 = vunpack.c.l.b16 %v472
      %v2205 = vunpack.c.h.b16 %v472
      %v2206 = vunpack.c.l.b16 %v473
      %v2207 = vunpack.c.h.b16 %v473
      %v2208 = vunpack.c.l.b16 %v474
      %v2209 = vunpack.c.h.b16 %v474
      %v2210 = vunpack.c.l.b16 %v475
      %v2211 = vunpack.c.h.b16 %v475
      %v2212 = vunpack.c.l.b16 %v476
      %v2213 = vunpack.c.h.b16 %v476
      %v2214 = vunpack.c.l.b16 %v477
      %v2215 = vunpack.c.h.b16 %v477
      %v2216 = vunpack.c.l.b16 %v478
      %v2217 = vunpack.c.h.b16 %v478
      %v2218 = vunpack.c.l.b16 %v479
      %v2219 = vunpack.c.h.b16 %v479
      %v2220 = vunpack.c.l.b16 %v480
      %v2221 = vunpack.c.h.b16 %v480
      %v2222 = vunpack.c.l.b16 %v481
      %v2223 = vunpack.c.h.b16 %v481
      %v2224 = vunpack.c.l.b16 %v482
      %v2225 = vunpack.c.h.b16 %v482
      %v2226 = vunpack.c.l.b16 %v483
      %v2227 = vunpack.c.h.b16 %v483
      %v2228 = vunpack.c.l.b16 %v484
      %v2229 = vunpack.c.h.b16 %v484
      %v2230 = vunpack.c.l.b16 %v485
      %v2231 = vunpack.c.h.b16 %v485
      %v2232 = vunpack.c.l.b16 %v486
      %v2233 = vunpack.c.h.b16 %v486
      %v2234 = vunpack.c.l.b16 %v487
      %v2235 = vunpack.c.h.b16 %v487
      %v2236 = vunpack.c.l.b16 %v488
      %v2237 = vunpack.c.h.b16 %v488
      %v2238 = vunpack.c.l.b16 %v489
      %v2239 = vunpack.c.h.b16 %v489
      %v2240 = vunpack.c.l.b16 %v490
      %v2241 = vunpack.c.h.b16 %v490
      %v2242 = vunpack.c.l.b16 %v491
      %v2243 = vunpack.c.h.b16 %v491
      %v2244 = vunpack.c.l.b16 %v492
      %v2245 = vunpack.c.h.b16 %v492
      %v2246 = vunpack.c.l.b16 %v493
      %v2247 = vunpack.c.h.b16 %v493
      %v2248 = vunpack.c.l.b16 %v494
      %v2249 = vunpack.c.h.b16 %v494
      %v2250 = vunpack.c.l.b16 %v495
      %v2251 = vunpack.c.h.b16 %v495
      %v2252 = vunpack.c.l.b16 %v496
      %v2253 = vunpack.c.h.b16 %v496
      %v2254 = vunpack.c.l.b16 %v497
      %v2255 = vunpack.c.h.b16 %v497
      %v2256 = vunpack.c.l.b16 %v498
      %v2257 = vunpack.c.h.b16 %v498
      %v2258 = vunpack.c.l.b16 %v499
      %v2259 = vunpack.c.h.b16 %v499
      %v2260 = vunpack.c.l.b16 %v500
      %v2261 = vunpack.c.h.b16 %v500
      %v2262 = vunpack.c.l.b16 %v501
      %v2263 = vunpack.c.h.b16 %v501
      %v2264 = vunpack.c.l.b16 %v502
      %v2265 = vunpack.c.h.b16 %v502
      %v2266 = vunpack.c.l.b16 %v503
      %v2267 = vunpack.c.h.b16 %v503
      %v2268 = vunpack.c.l.b16 %v504
      %v2269 = vunpack.c.h.b16 %v504
      %v2270 = vunpack.c.l.b16 %v505
      %v2271 = vunpack.c.h.b16 %v505
      %v2272 = vunpack.c.l.b16 %v506
      %v2273 = vunpack.c.h.b16 %v506
      %v2274 = vunpack.c.l.b16 %v507
      %v2275 = vunpack.c.h.b16 %v507
      %v2276 = vunpack.c.l.b16 %v508
      %v2277 = vunpack.c.h.b16 %v508
      %v2278 = vunpack.c.l.b16 %v509
      %v2279 = vunpack.c.h.b16 %v509
      %v2280 = vunpack.c.l.b16 %v510
      %v2281 = vunpack.c.h.b16 %v510
      %v2282 = vunpack.c.l.b16 %v511
      %v2283 = vunpack.c.h.b16 %v511
      %v2284 = vunpack.c.l.b16 %v512
      %v2285 = vunpack.c.h.b16 %v512
      %v2286 = vunpack.c.l.b16 %v513
      %v2287 = vunpack.c.h.b16 %v513
      %v2288 = vunpack.c.l.b16 %v514
      %v2289 = vunpack.c.h.b16 %v514
      %v2290 = vunpack.c.l.b16 %v515
      %v2291 = vunpack.c.h.b16 %v515
      %v2292 = vunpack.c.l.b16 %v516
      %v2293 = vunpack.c.h.b16 %v516
      %v2294 = vunpack.c.l.b16 %v517
      %v2295 = vunpack.c.h.b16 %v517
      %v2296 = vunpack.c.l.b16 %v518
      %v2297 = vunpack.c.h.b16 %v518
      %v2298 = vunpack.c.l.b16 %v519
      %v2299 = vunpack.c.h.b16 %v519
      %v2300 = vunpack.c.l.b16 %v520
      %v2301 = vunpack.c.h.b16 %v520
      %v2302 = vunpack.c.l.b16 %v521
      %v2303 = vunpack.c.h.b16 %v521
      %v2304 = vunpack.c.l.b16 %v522
      %v2305 = vunpack.c.h.b16 %v522
      %v2306 = vunpack.c.l.b16 %v523
      %v2307 = vunpack.c.h.b16 %v523
      %v2308 = vunpack.c.l.b16 %v524
      %v2309 = vunpack.c.h.b16 %v524
      %v2310 = vunpack.c.l.b16 %v525
      %v2311 = vunpack.c.h.b16 %v525
      %v2312 = vunpack.c.l.b16 %v526
      %v2313 = vunpack.c.h.b16 %v526
      %v2314 = vunpack.c.l.b16 %v527
      %v2315 = vunpack.c.h.b16 %v527
      %v2316 = vunpack.c.l.b16 %v528
      %v2317 = vunpack.c.h.b16 %v528
      %v2318 = vunpack.c.l.b16 %v529
      %v2319 = vunpack.c.h.b16 %v529
      %v2320 = vunpack.c.l.b16 %v530
      %v2321 = vunpack.c.h.b16 %v530
      %v2322 = vunpack.c.l.b16 %v531
      %v2323 = vunpack.c.h.b16 %v531
      %v2324 = vunpack.c.l.b16 %v532
      %v2325 = vunpack.c.h.b16 %v532
      %v2326 = vunpack.c.l.b16 %v533
      %v2327 = vunpack.c.h.b16 %v533
      %v2328 = vunpack.c.l.b16 %v534
      %v2329 = vunpack.c.h.b16 %v534
      %v2330 = vunpack.c.l.b16 %v535
      %v2331 = vunpack.c.h.b16 %v535
      %v2332 = vunpack.c.l.b16 %v536
      %v2333 = vunpack.c.h.b16 %v536
      %v2334 = vunpack.c.l.b16 %v537
      %v2335 = vunpack.c.h.b16 %v537
      %v2336 = vunpack.c.l.b16 %v538
      %v2337 = vunpack.c.h.b16 %v538
      %v2338 = vunpack.c.l.b16 %v539
      %v2339 = vunpack.c.h.b16 %v539
      %v2340 = vunpack.c.l.b16 %v540
      %v2341 = vunpack.c.h.b16 %v540
      %v2342 = vunpack.c.l.b16 %v541
      %v2343 = vunpack.c.h.b16 %v541
      %v2344 = vunpack.c.l.b16 %v542
      %v2345 = vunpack.c.h.b16 %v542
      %v2346 = vunpack.c.l.b16 %v543
      %v2347 = vunpack.c.h.b16 %v543
      %v2348 = vunpack.c.l.b16 %v544
      %v2349 = vunpack.c.h.b16 %v544
      %v2350 = vunpack.c.l.b16 %v545
      %v2351 = vunpack.c.h.b16 %v545
      %v2352 = vunpack.c.l.b16 %v546
      %v2353 = vunpack.c.h.b16 %v546
      %v2354 = vunpack.c.l.b16 %v547
      %v2355 = vunpack.c.h.b16 %v547
      %v2356 = vunpack.c.l.b16 %v548
      %v2357 = vunpack.c.h.b16 %v548
      %v2358 = vunpack.c.l.b16 %v549
      %v2359 = vunpack.c.h.b16 %v549
      %v2360 = vunpack.c.l.b16 %v550
      %v2361 = vunpack.c.h.b16 %v550
      %v2362 = vunpack.c.l.b16 %v551
      %v2363 = vunpack.c.h.b16 %v551
      %v2364 = vunpack.c.l.b16 %v552
      %v2365 = vunpack.c.h.b16 %v552
      %v2366 = vunpack.c.l.b16 %v553
      %v2367 = vunpack.c.h.b16 %v553
      %v2368 = vunpack.c.l.b16 %v554
      %v2369 = vunpack.c.h.b16 %v554
      %v2370 = vunpack.c.l.b16 %v555
      %v2371 = vunpack.c.h.b16 %v555
      %v2372 = vunpack.c.l.b16 %v556
      %v2373 = vunpack.c.h.b16 %v556
      %v2374 = vunpack.c.l.b16 %v557
      %v2375 = vunpack.c.h.b16 %v557
      %v2376 = vunpack.c.l.b16 %v558
      %v2377 = vunpack.c.h.b16 %v558
      %v2378 = vunpack.c.l.b16 %v559
      %v2379 = vunpack.c.h.b16 %v559
      %v2380 = vunpack.c.l.b16 %v560
      %v2381 = vunpack.c.h.b16 %v560
      %v2382 = vunpack.c.l.b16 %v561
      %v2383 = vunpack.c.h.b16 %v561
      %v2384 = vunpack.c.l.b16 %v562
      %v2385 = vunpack.c.h.b16 %v562
      %v2386 = vunpack.c.l.b16 %v563
      %v2387 = vunpack.c.h.b16 %v563
      %v2388 = vunpack.c.l.b16 %v564
      %v2389 = vunpack.c.h.b16 %v564
      %v2390 = vunpack.c.l.b16 %v565
      %v2391 = vunpack.c.h.b16 %v565
      %v2392 = vunpack.c.l.b16 %v566
      %v2393 = vunpack.c.h.b16 %v566
      %v2394 = vunpack.c.l.b16 %v567
      %v2395 = vunpack.c.h.b16 %v567
      %v2396 = vunpack.c.l.b16 %v568
      %v2397 = vunpack.c.h.b16 %v568
      %v2398 = vunpack.c.l.b16 %v569
      %v2399 = vunpack.c.h.b16 %v569
      %v2400 = vunpack.c.l.b16 %v570
      %v2401 = vunpack.c.h.b16 %v570
      %v2402 = vunpack.c.l.b16 %v571
      %v2403 = vunpack.c.h.b16 %v571
      %v2404 = vunpack.c.l.b16 %v572
      %v2405 = vunpack.c.h.b16 %v572
      %v2406 = vunpack.c.l.b16 %v573
      %v2407 = vunpack.c.h.b16 %v573
      %v2408 = vunpack.c.l.b16 %v574
      %v2409 = vunpack.c.h.b16 %v574
      %v2410 = vunpack.c.l.b16 %v575
      %v2411 = vunpack.c.h.b16 %v575
      %v2412 = vunpack.c.l.b16 %v576
      %v2413 = vunpack.c.h.b16 %v576
      %v2414 = vunpack.c.l.b16 %v577
      %v2415 = vunpack.c.h.b16 %v577
      %v2416 = vunpack.c.l.b16 %v578
      %v2417 = vunpack.c.h.b16 %v578
      %v2418 = vunpack.c.l.b16 %v579
      %v2419 = vunpack.c.h.b16 %v579
      %v2420 = vunpack.c.l.b16 %v580
      %v2421 = vunpack.c.h.b16 %v580
      %v2422 = vunpack.c.l.b16 %v581
      %v2423 = vunpack.c.h.b16 %v581
      %v2424 = vunpack.c.l.b16 %v582
      %v2425 = vunpack.c.h.b16 %v582
      %v2426 = vunpack.c.l.b16 %v583
      %v2427 = vunpack.c.h.b16 %v583
      %v2428 = vunpack.c.l.b16 %v584
      %v2429 = vunpack.c.h.b16 %v584
      %v2430 = vunpack.c.l.b16 %v585
      %v2431 = vunpack.c.h.b16 %v585
      %v2432 = vunpack.c.l.b16 %v586
      %v2433 = vunpack.c.h.b16 %v586
      %v2434 = vunpack.c.l.b16 %v587
      %v2435 = vunpack.c.h.b16 %v587
      %v2436 = vunpack.c.l.b16 %v588
      %v2437 = vunpack.c.h.b16 %v588
      %v2438 = vunpack.c.l.b16 %v589
      %v2439 = vunpack.c.h.b16 %v589
      %v2440 = vunpack.c.l.b16 %v590
      %v2441 = vunpack.c.h.b16 %v590
      %v2442 = vunpack.c.l.b16 %v591
      %v2443 = vunpack.c.h.b16 %v591
      %v2444 = vunpack.c.l.b16 %v592
      %v2445 = vunpack.c.h.b16 %v592
      %v2446 = vunpack.c.l.b16 %v593
      %v2447 = vunpack.c.h.b16 %v593
      %v2448 = vunpack.c.l.b16 %v594
      %v2449 = vunpack.c.h.b16 %v594
      %v2450 = vunpack.c.l.b16 %v595
      %v2451 = vunpack.c.h.b16 %v595
      %v2452 = vunpack.c.l.b16 %v596
      %v2453 = vunpack.c.h.b16 %v596
      %v2454 = vunpack.c.l.b16 %v597
      %v2455 = vunpack.c.h.b16 %v597
      %v2456 = vunpack.c.l.b16 %v598
      %v2457 = vunpack.c.h.b16 %v598
      %v2458 = vunpack.c.l.b16 %v599
      %v2459 = vunpack.c.h.b16 %v599
      %v2460 = vunpack.c.l.b16 %v600
      %v2461 = vunpack.c.h.b16 %v600
      %v2462 = vunpack.c.l.b16 %v601
      %v2463 = vunpack.c.h.b16 %v601
      %v2464 = vunpack.c.l.b16 %v602
      %v2465 = vunpack.c.h.b16 %v602
      %v2466 = vunpack.c.l.b16 %v603
      %v2467 = vunpack.c.h.b16 %v603
      %v2468 = vunpack.c.l.b16 %v604
      %v2469 = vunpack.c.h.b16 %v604
      %v2470 = vunpack.c.l.b16 %v605
      %v2471 = vunpack.c.h.b16 %v605
      %v2472 = vunpack.c.l.b16 %v606
      %v2473 = vunpack.c.h.b16 %v606
      %v2474 = vunpack.c.l.b16 %v607
      %v2475 = vunpack.c.h.b16 %v607
      %v2476 = vunpack.c.l.b16 %v608
      %v2477 = vunpack.c.h.b16 %v608
      %v2478 = vunpack.c.l.b16 %v609
      %v2479 = vunpack.c.h.b16 %v609
      %v2480 = vunpack.c.l.b16 %v610
      %v2481 = vunpack.c.h.b16 %v610
      %v2482 = vunpack.c.l.b16 %v611
      %v2483 = vunpack.c.h.b16 %v611
      %v2484 = vunpack.c.l.b16 %v612
      %v2485 = vunpack.c.h.b16 %v612
      %v2486 = vunpack.c.l.b16 %v613
      %v2487 = vunpack.c.h.b16 %v613
      %v2488 = vunpack.c.l.b16 %v614
      %v2489 = vunpack.c.h.b16 %v614
      %v2490 = vunpack.c.l.b16 %v615
      %v2491 = vunpack.c.h.b16 %v615
      %v2492 = vunpack.c.l.b16 %v616
      %v2493 = vunpack.c.h.b16 %v616
      %v2494 = vunpack.c.l.b16 %v617
      %v2495 = vunpack.c.h.b16 %v617
      %v2496 = vunpack.c.l.b16 %v618
      %v2497 = vunpack.c.h.b16 %v618
      %v2498 = vunpack.c.l.b16 %v619
      %v2499 = vunpack.c.h.b16 %v619
      %v2500 = vunpack.c.l.b16 %v620
      %v2501 = vunpack.c.h.b16 %v620
      %v2502 = vunpack.c.l.b16 %v621
      %v2503 = vunpack.c.h.b16 %v621
      %v2504 = vunpack.c.l.b16 %v622
      %v2505 = vunpack.c.h.b16 %v622
      %v2506 = vunpack.c.l.b16 %v623
      %v2507 = vunpack.c.h.b16 %v623
      %v2508 = vunpack.c.l.b16 %v624
      %v2509 = vunpack.c.h.b16 %v624
      %v2510 = vunpack.c.l.b16 %v625
      %v2511 = vunpack.c.h.b16 %v625
      %v2512 = vunpack.c.l.b16 %v626
      %v2513 = vunpack.c.h.b16 %v626
      %v2514 = vunpack.c.l.b16 %v627
      %v2515 = vunpack.c.h.b16 %v627
      %v2516 = vunpack.c.l.b16 %v628
      %v2517 = vunpack.c.h.b16 %v628
      %v2518 = vunpack.c.l.b16 %v629
      %v2519 = vunpack.c.h.b16 %v629
      %v2520 = vunpack.c.l.b16 %v630
      %v2521 = vunpack.c.h.b16 %v630
      %v2522 = vunpack.c.l.b16 %v631
      %v2523 = vunpack.c.h.b16 %v631
      %v2524 = vunpack.c.l.b16 %v632
      %v2525 = vunpack.c.h.b16 %v632
      %v2526 = vunpack.c.l.b16 %v633
      %v2527 = vunpack.c.h.b16 %v633
      %v2528 = vunpack.c.l.b16 %v634
      %v2529 = vunpack.c.h.b16 %v634
      %v2530 = vunpack.c.l.b16 %v635
      %v2531 = vunpack.c.h.b16 %v635
      %v2532 = vunpack.c.l.b16 %v636
      %v2533 = vunpack.c.h.b16 %v636
      %v2534 = vunpack.c.l.b16 %v637
      %v2535 = vunpack.c.h.b16 %v637
      %v2536 = vunpack.c.l.b16 %v638
      %v2537 = vunpack.c.h.b16 %v638
      %v2538 = vunpack.c.l.b16 %v639
      %v2539 = vunpack.c.h.b16 %v639
      %v2540 = vunpack.c.l.b16 %v640
      %v2541 = vunpack.c.h.b16 %v640
      %v2542 = vunpack.c.l.b16 %v641
      %v2543 = vunpack.c.h.b16 %v641
      %v2544 = vunpack.c.l.b16 %v642
      %v2545 = vunpack.c.h.b16 %v642
      %v2546 = vunpack.c.l.b16 %v643
      %v2547 = vunpack.c.h.b16 %v643
      %v2548 = vunpack.c.l.b16 %v644
      %v2549 = vunpack.c.h.b16 %v644
      %v2550 = vunpack.c.l.b16 %v645
      %v2551 = vunpack.c.h.b16 %v645
      %v2552 = vunpack.c.l.b16 %v646
      %v2553 = vunpack.c.h.b16 %v646
      %v2554 = vunpack.c.l.b16 %v647
      %v2555 = vunpack.c.h.b16 %v647
      %v2556 = vunpack.c.l.b16 %v648
      %v2557 = vunpack.c.h.b16 %v648
      %v2558 = vunpack.c.l.b16 %v649
      %v2559 = vunpack.c.h.b16 %v649
      %v2560 = vunpack.c.l.b16 %v650
      %v2561 = vunpack.c.h.b16 %v650
      %v2562 = vunpack.c.l.b16 %v651
      %v2563 = vunpack.c.h.b16 %v651
      %v2564 = vunpack.c.l.b16 %v652
      %v2565 = vunpack.c.h.b16 %v652
      %v2566 = vunpack.c.l.b16 %v653
      %v2567 = vunpack.c.h.b16 %v653
      %v2568 = vunpack.c.l.b16 %v654
      %v2569 = vunpack.c.h.b16 %v654
      %v2570 = vunpack.c.l.b16 %v655
      %v2571 = vunpack.c.h.b16 %v655
      %v2572 = vunpack.c.l.b16 %v656
      %v2573 = vunpack.c.h.b16 %v656
      %v2574 = vunpack.c.l.b16 %v657
      %v2575 = vunpack.c.h.b16 %v657
      %v2576 = vunpack.c.l.b16 %v658
      %v2577 = vunpack.c.h.b16 %v658
      %v2578 = vunpack.c.l.b16 %v659
      %v2579 = vunpack.c.h.b16 %v659
      %v2580 = vunpack.c.l.b16 %v660
      %v2581 = vunpack.c.h.b16 %v660
      %v2582 = vunpack.c.l.b16 %v661
      %v2583 = vunpack.c.h.b16 %v661
      %v2584 = vunpack.c.l.b16 %v662
      %v2585 = vunpack.c.h.b16 %v662
      %v2586 = vunpack.c.l.b16 %v663
      %v2587 = vunpack.c.h.b16 %v663
      %v2588 = vunpack.c.l.b16 %v664
      %v2589 = vunpack.c.h.b16 %v664
      %v2590 = vunpack.c.l.b16 %v665
      %v2591 = vunpack.c.h.b16 %v665
      %v2592 = vunpack.c.l.b16 %v666
      %v2593 = vunpack.c.h.b16 %v666
      %v2594 = vunpack.c.l.b16 %v667
      %v2595 = vunpack.c.h.b16 %v667
      %v2596 = vunpack.c.l.b16 %v668
      %v2597 = vunpack.c.h.b16 %v668
      %v2598 = vunpack.c.l.b16 %v669
      %v2599 = vunpack.c.h.b16 %v669
      %v2600 = vunpack.c.l.b16 %v670
      %v2601 = vunpack.c.h.b16 %v670
      %v2602 = vunpack.c.l.b16 %v671
      %v2603 = vunpack.c.h.b16 %v671
      %v2604 = vunpack.c.l.b16 %v672
      %v2605 = vunpack.c.h.b16 %v672
      %v2606 = vunpack.c.l.b16 %v673
      %v2607 = vunpack.c.h.b16 %v673
      %v2608 = vunpack.c.l.b16 %v674
      %v2609 = vunpack.c.h.b16 %v674
      %v2610 = vunpack.c.l.b16 %v675
      %v2611 = vunpack.c.h.b16 %v675
      %v2612 = vunpack.c.l.b16 %v676
      %v2613 = vunpack.c.h.b16 %v676
      %v2614 = vunpack.c.l.b16 %v677
      %v2615 = vunpack.c.h.b16 %v677
      %v2616 = vunpack.c.l.b16 %v678
      %v2617 = vunpack.c.h.b16 %v678
      %v2618 = vunpack.c.l.b16 %v679
      %v2619 = vunpack.c.h.b16 %v679
      %v2620 = vunpack.c.l.b16 %v680
      %v2621 = vunpack.c.h.b16 %v680
      %v2622 = vunpack.c.l.b16 %v681
      %v2623 = vunpack.c.h.b16 %v681
      %v2624 = vunpack.c.l.b16 %v682
      %v2625 = vunpack.c.h.b16 %v682
      %v2626 = vunpack.c.l.b16 %v683
      %v2627 = vunpack.c.h.b16 %v683
      %v2628 = vunpack.c.l.b16 %v684
      %v2629 = vunpack.c.h.b16 %v684
      %v2630 = vunpack.c.l.b16 %v685
      %v2631 = vunpack.c.h.b16 %v685
      %v2632 = vunpack.c.l.b16 %v686
      %v2633 = vunpack.c.h.b16 %v686
      %v2634 = vunpack.c.l.b16 %v687
      %v2635 = vunpack.c.h.b16 %v687
      %v2636 = vunpack.c.l.b16 %v688
      %v2637 = vunpack.c.h.b16 %v688
      %v2638 = vunpack.c.l.b16 %v689
      %v2639 = vunpack.c.h.b16 %v689
      %v2640 = vunpack.c.l.b16 %v690
      %v2641 = vunpack.c.h.b16 %v690
      %v2642 = vunpack.c.l.b16 %v691
      %v2643 = vunpack.c.h.b16 %v691
      %v2644 = vunpack.c.l.b16 %v692
      %v2645 = vunpack.c.h.b16 %v692
      %v2646 = vunpack.c.l.b16 %v693
      %v2647 = vunpack.c.h.b16 %v693
      %v2648 = vunpack.c.l.b16 %v694
      %v2649 = vunpack.c.h.b16 %v694
      %v2650 = vunpack.c.l.b16 %v695
      %v2651 = vunpack.c.h.b16 %v695
      %v2652 = vunpack.c.l.b16 %v696
      %v2653 = vunpack.c.h.b16 %v696
      %v2654 = vunpack.c.l.b16 %v697
      %v2655 = vunpack.c.h.b16 %v697
      %v2656 = vunpack.c.l.b16 %v698
      %v2657 = vunpack.c.h.b16 %v698
      %v2658 = vunpack.c.l.b16 %v699
      %v2659 = vunpack.c.h.b16 %v699
      %v2660 = vunpack.c.l.b16 %v700
      %v2661 = vunpack.c.h.b16 %v700
      %v2662 = vunpack.c.l.b16 %v701
      %v2663 = vunpack.c.h.b16 %v701
      %v2664 = vunpack.c.l.b16 %v702
      %v2665 = vunpack.c.h.b16 %v702
      %v2666 = vunpack.c.l.b16 %v703
      %v2667 = vunpack.c.h.b16 %v703
      %v2668 = vunpack.c.l.b16 %v704
      %v2669 = vunpack.c.h.b16 %v704
      %v2670 = vunpack.c.l.b16 %v705
      %v2671 = vunpack.c.h.b16 %v705
      %v2672 = vunpack.c.l.b16 %v706
      %v2673 = vunpack.c.h.b16 %v706
      %v2674 = vunpack.c.l.b16 %v707
      %v2675 = vunpack.c.h.b16 %v707
      %v2676 = vunpack.c.l.b16 %v708
      %v2677 = vunpack.c.h.b16 %v708
      %v2678 = vunpack.c.l.b16 %v709
      %v2679 = vunpack.c.h.b16 %v709
      %v2680 = vunpack.c.l.b16 %v710
      %v2681 = vunpack.c.h.b16 %v710
      %v2682 = vunpack.c.l.b16 %v711
      %v2683 = vunpack.c.h.b16 %v711
      %v2684 = vunpack.c.l.b16 %v712
      %v2685 = vunpack.c.h.b16 %v712
      %v2686 = vunpack.c.l.b16 %v713
      %v2687 = vunpack.c.h.b16 %v713
      %v2688 = vunpack.c.l.b16 %v714
      %v2689 = vunpack.c.h.b16 %v714
      %v2690 = vunpack.c.l.b16 %v715
      %v2691 = vunpack.c.h.b16 %v715
      %v2692 = vunpack.c.l.b16 %v716
      %v2693 = vunpack.c.h.b16 %v716
      %v2694 = vunpack.c.l.b16 %v717
      %v2695 = vunpack.c.h.b16 %v717
      %v2696 = vunpack.c.l.b16 %v718
      %v2697 = vunpack.c.h.b16 %v718
      %v2698 = vunpack.c.l.b16 %v719
      %v2699 = vunpack.c.h.b16 %v719
      %v2700 = vunpack.c.l.b16 %v720
      %v2701 = vunpack.c.h.b16 %v720
      %v2702 = vunpack.c.l.b16 %v721
      %v2703 = vunpack.c.h.b16 %v721
      %v2704 = vunpack.c.l.b16 %v722
      %v2705 = vunpack.c.h.b16 %v722
      %v2706 = vunpack.c.l.b16 %v723
      %v2707 = vunpack.c.h.b16 %v723
      %v2708 = vunpack.c.l.b16 %v724
      %v2709 = vunpack.c.h.b16 %v724
      %v2710 = vunpack.c.l.b16 %v725
      %v2711 = vunpack.c.h.b16 %v725
      %v2712 = vunpack.c.l.b16 %v726
      %v2713 = vunpack.c.h.b16 %v726
      %v2714 = vunpack.c.l.b16 %v727
      %v2715 = vunpack.c.h.b16 %v727
      %v2716 = vunpack.c.l.b16 %v728
      %v2717 = vunpack.c.h.b16 %v728
      %v2718 = vunpack.c.l.b16 %v729
      %v2719 = vunpack.c.h.b16 %v729
      %v2720 = vunpack.c.l.b16 %v730
      %v2721 = vunpack.c.h.b16 %v730
      %v2722 = vunpack.c.l.b16 %v731
      %v2723 = vunpack.c.h.b16 %v731
      %v2724 = vunpack.c.l.b16 %v732
      %v2725 = vunpack.c.h.b16 %v732
      %v2726 = vunpack.c.l.b16 %v733
      %v2727 = vunpack.c.h.b16 %v733
      %v2728 = vunpack.c.l.b16 %v734
      %v2729 = vunpack.c.h.b16 %v734
      %v2730 = vunpack.c.l.b16 %v735
      %v2731 = vunpack.c.h.b16 %v735
      %v2732 = vunpack.c.l.b16 %v736
      %v2733 = vunpack.c.h.b16 %v736
      %v2734 = vunpack.c.l.b16 %v737
      %v2735 = vunpack.c.h.b16 %v737
      %v2736 = vunpack.c.l.b16 %v738
      %v2737 = vunpack.c.h.b16 %v738
      %v2738 = vunpack.c.l.b16 %v739
      %v2739 = vunpack.c.h.b16 %v739
      %v2740 = vunpack.c.l.b16 %v740
      %v2741 = vunpack.c.h.b16 %v740
      %v2742 = vunpack.c.l.b16 %v741
      %v2743 = vunpack.c.h.b16 %v741
      %v2744 = vunpack.c.l.b16 %v742
      %v2745 = vunpack.c.h.b16 %v742
      %v2746 = vunpack.c.l.b16 %v743
      %v2747 = vunpack.c.h.b16 %v743
      %v2748 = vunpack.c.l.b16 %v744
      %v2749 = vunpack.c.h.b16 %v744
      %v2750 = vunpack.c.l.b16 %v745
      %v2751 = vunpack.c.h.b16 %v745
      %v2752 = vunpack.c.l.b16 %v746
      %v2753 = vunpack.c.h.b16 %v746
      %v2754 = vunpack.c.l.b16 %v747
      %v2755 = vunpack.c.h.b16 %v747
      %v2756 = vunpack.c.l.b16 %v748
      %v2757 = vunpack.c.h.b16 %v748
      %v2758 = vunpack.c.l.b16 %v749
      %v2759 = vunpack.c.h.b16 %v749
      %v2760 = vunpack.c.l.b16 %v750
      %v2761 = vunpack.c.h.b16 %v750
      %v2762 = vunpack.c.l.b16 %v751
      %v2763 = vunpack.c.h.b16 %v751
      %v2764 = vunpack.c.l.b16 %v752
      %v2765 = vunpack.c.h.b16 %v752
      %v2766 = vunpack.c.l.b16 %v753
      %v2767 = vunpack.c.h.b16 %v753
      %v2768 = vunpack.c.l.b16 %v754
      %v2769 = vunpack.c.h.b16 %v754
      %v2770 = vunpack.c.l.b16 %v755
      %v2771 = vunpack.c.h.b16 %v755
      %v2772 = vunpack.c.l.b16 %v756
      %v2773 = vunpack.c.h.b16 %v756
      %v2774 = vunpack.c.l.b16 %v757
      %v2775 = vunpack.c.h.b16 %v757
      %v2776 = vunpack.c.l.b16 %v758
      %v2777 = vunpack.c.h.b16 %v758
      %v2778 = vunpack.c.l.b16 %v759
      %v2779 = vunpack.c.h.b16 %v759
      %v2780 = vunpack.c.l.b16 %v760
      %v2781 = vunpack.c.h.b16 %v760
      %v2782 = vunpack.c.l.b16 %v761
      %v2783 = vunpack.c.h.b16 %v761
      %v2784 = vunpack.c.l.b16 %v762
      %v2785 = vunpack.c.h.b16 %v762
      %v2786 = vunpack.c.l.b16 %v763
      %v2787 = vunpack.c.h.b16 %v763
      %v2788 = vunpack.c.l.b16 %v764
      %v2789 = vunpack.c.h.b16 %v764
      %v2790 = vunpack.c.l.b16 %v765
      %v2791 = vunpack.c.h.b16 %v765
      %v2792 = vunpack.c.l.b16 %v766
      %v2793 = vunpack.c.h.b16 %v766
      %v2794 = vunpack.c.l.b16 %v767
      %v2795 = vunpack.c.h.b16 %v767
      %v2796 = vunpack.c.l.b16 %v768
      %v2797 = vunpack.c.h.b16 %v768
      %v2798 = vunpack.c.l.b16 %v769
      %v2799 = vunpack.c.h.b16 %v769
      %v2800 = vunpack.c.l.b16 %v770
      %v2801 = vunpack.c.h.b16 %v770
      %v2802 = vunpack.c.l.b16 %v771
      %v2803 = vunpack.c.h.b16 %v771
      %v2804 = vunpack.c.l.b16 %v772
      %v2805 = vunpack.c.h.b16 %v772
      %v2806 = vunpack.c.l.b16 %v773
      %v2807 = vunpack.c.h.b16 %v773
      %v2808 = vunpack.c.l.b16 %v774
      %v2809 = vunpack.c.h.b16 %v774
      %v2810 = vunpack.c.l.b16 %v775
      %v2811 = vunpack.c.h.b16 %v775
      %v2812 = vunpack.c.l.b16 %v776
      %v2813 = vunpack.c.h.b16 %v776
      %v2814 = vunpack.c.l.b16 %v777
      %v2815 = vunpack.c.h.b16 %v777
      %v2816 = vunpack.c.l.b16 %v778
      %v2817 = vunpack.c.h.b16 %v778
      %v2818 = vunpack.c.l.b16 %v779
      %v2819 = vunpack.c.h.b16 %v779
      %v2820 = vunpack.c.l.b16 %v780
      %v2821 = vunpack.c.h.b16 %v780
      %v2822 = vunpack.c.l.b16 %v781
      %v2823 = vunpack.c.h.b16 %v781
      %v2824 = vunpack.c.l.b16 %v782
      %v2825 = vunpack.c.h.b16 %v782
      %v2826 = vunpack.c.l.b16 %v783
      %v2827 = vunpack.c.h.b16 %v783
      %v2828 = vunpack.c.l.b16 %v784
      %v2829 = vunpack.c.h.b16 %v784
      %v2830 = vunpack.c.l.b16 %v785
      %v2831 = vunpack.c.h.b16 %v785
      %v2832 = vunpack.c.l.b16 %v786
      %v2833 = vunpack.c.h.b16 %v786
      %v2834 = vunpack.c.l.b16 %v787
      %v2835 = vunpack.c.h.b16 %v787
      %v2836 = vunpack.c.l.b16 %v788
      %v2837 = vunpack.c.h.b16 %v788
      %v2838 = vunpack.c.l.b16 %v789
      %v2839 = vunpack.c.h.b16 %v789
      %v2840 = vunpack.c.l.b16 %v790
      %v2841 = vunpack.c.h.b16 %v790
      %v2842 = vunpack.c.l.b16 %v791
      %v2843 = vunpack.c.h.b16 %v791
      %v2844 = vunpack.c.l.b16 %v792
      %v2845 = vunpack.c.h.b16 %v792
      %v2846 = vunpack.c.l.b16 %v793
      %v2847 = vunpack.c.h.b16 %v793
      %v2848 = vunpack.c.l.b16 %v794
      %v2849 = vunpack.c.h.b16 %v794
      %v2850 = vunpack.c.l.b16 %v795
      %v2851 = vunpack.c.h.b16 %v795
      %v2852 = vunpack.c.l.b16 %v796
      %v2853 = vunpack.c.h.b16 %v796
      %v2854 = vunpack.c.l.b16 %v797
      %v2855 = vunpack.c.h.b16 %v797
      %v2856 = vunpack.c.l.b16 %v798
      %v2857 = vunpack.c.h.b16 %v798
      %v2858 = vunpack.c.l.b16 %v799
      %v2859 = vunpack.c.h.b16 %v799
      %v2860 = vunpack.c.l.b16 %v800
      %v2861 = vunpack.c.h.b16 %v800
      %v2862 = vunpack.c.l.b16 %v801
      %v2863 = vunpack.c.h.b16 %v801
      %v2864 = vunpack.c.l.b16 %v802
      %v2865 = vunpack.c.h.b16 %v802
      %v2866 = vunpack.c.l.b16 %v803
      %v2867 = vunpack.c.h.b16 %v803
      %v2868 = vunpack.c.l.b16 %v804
      %v2869 = vunpack.c.h.b16 %v804
      %v2870 = vunpack.c.l.b16 %v805
      %v2871 = vunpack.c.h.b16 %v805
      %v2872 = vunpack.c.l.b16 %v806
      %v2873 = vunpack.c.h.b16 %v806
      %v2874 = vunpack.c.l.b16 %v807
      %v2875 = vunpack.c.h.b16 %v807
      %v2876 = vunpack.c.l.b16 %v808
      %v2877 = vunpack.c.h.b16 %v808
      %v2878 = vunpack.c.l.b16 %v809
      %v2879 = vunpack.c.h.b16 %v809
      %v2880 = vunpack.c.l.b16 %v810
      %v2881 = vunpack.c.h.b16 %v810
      %v2882 = vunpack.c.l.b16 %v811
      %v2883 = vunpack.c.h.b16 %v811
      %v2884 = vunpack.c.l.b16 %v812
      %v2885 = vunpack.c.h.b16 %v812
      %v2886 = vunpack.c.l.b16 %v813
      %v2887 = vunpack.c.h.b16 %v813
      %v2888 = vunpack.c.l.b16 %v814
      %v2889 = vunpack.c.h.b16 %v814
      %v2890 = vunpack.c.l.b16 %v815
      %v2891 = vunpack.c.h.b16 %v815
      %v2892 = vunpack.c.l.b16 %v816
      %v2893 = vunpack.c.h.b16 %v816
      %v2894 = vunpack.c.l.b16 %v817
      %v2895 = vunpack.c.h.b16 %v817
      %v2896 = vunpack.c.l.b16 %v818
      %v2897 = vunpack.c.h.b16 %v818
      %v2898 = vunpack.c.l.b16 %v819
      %v2899 = vunpack.c.h.b16 %v819
      %v2900 = vunpack.c.l.b16 %v820
      %v2901 = vunpack.c.h.b16 %v820
      %v2902 = vunpack.c.l.b16 %v821
      %v2903 = vunpack.c.h.b16 %v821
      %v2904 = vunpack.c.l.b16 %v822
      %v2905 = vunpack.c.h.b16 %v822
      %v2906 = vunpack.c.l.b16 %v823
      %v2907 = vunpack.c.h.b16 %v823
      %v2908 = vunpack.c.l.b16 %v824
      %v2909 = vunpack.c.h.b16 %v824
      %v2910 = vunpack.c.l.b16 %v825
      %v2911 = vunpack.c.h.b16 %v825
      %v2912 = vunpack.c.l.b16 %v826
      %v2913 = vunpack.c.h.b16 %v826
      %v2914 = vunpack.c.l.b16 %v827
      %v2915 = vunpack.c.h.b16 %v827
      %v2916 = vunpack.c.l.b16 %v828
      %v2917 = vunpack.c.h.b16 %v828
      %v2918 = vunpack.c.l.b16 %v829
      %v2919 = vunpack.c.h.b16 %v829
      %v2920 = vunpack.c.l.b16 %v830
      %v2921 = vunpack.c.h.b16 %v830
      %v2922 = vunpack.c.l.b16 %v831
      %v2923 = vunpack.c.h.b16 %v831
      %v2924 = vunpack.c.l.b16 %v832
      %v2925 = vunpack.c.h.b16 %v832
      %v2926 = vunpack.c.l.b16 %v833
      %v2927 = vunpack.c.h.b16 %v833
      %v2928 = vunpack.c.l.b16 %v834
      %v2929 = vunpack.c.h.b16 %v834
      %v2930 = vunpack.c.l.b16 %v835
      %v2931 = vunpack.c.h.b16 %v835
      %v2932 = vunpack.c.l.b16 %v836
      %v2933 = vunpack.c.h.b16 %v836
      %v2934 = vunpack.c.l.b16 %v837
      %v2935 = vunpack.c.h.b16 %v837
      %v2936 = vunpack.c.l.b16 %v838
      %v2937 = vunpack.c.h.b16 %v838
      %v2938 = vunpack.c.l.b16 %v839
      %v2939 = vunpack.c.h.b16 %v839
      %v2940 = vunpack.c.l.b16 %v840
      %v2941 = vunpack.c.h.b16 %v840
      %v2942 = vunpack.c.l.b16 %v841
      %v2943 = vunpack.c.h.b16 %v841
      %v2944 = vunpack.c.l.b16 %v842
      %v2945 = vunpack.c.h.b16 %v842
      %v2946 = vunpack.c.l.b16 %v843
      %v2947 = vunpack.c.h.b16 %v843
      %v2948 = vunpack.c.l.b16 %v844
      %v2949 = vunpack.c.h.b16 %v844
      %v2950 = vunpack.c.l.b16 %v845
      %v2951 = vunpack.c.h.b16 %v845
      %v2952 = vunpack.c.l.b16 %v846
      %v2953 = vunpack.c.h.b16 %v846
      %v2954 = vunpack.c.l.b16 %v847
      %v2955 = vunpack.c.h.b16 %v847
      %v2956 = vunpack.c.l.b16 %v848
      %v2957 = vunpack.c.h.b16 %v848
      %v2958 = vunpack.c.l.b16 %v849
      %v2959 = vunpack.c.h.b16 %v849
      %v2960 = vunpack.c.l.b16 %v850
      %v2961 = vunpack.c.h.b16 %v850
      %v2962 = vunpack.c.l.b16 %v851
      %v2963 = vunpack.c.h.b16 %v851
      %v2964 = vunpack.c.l.b16 %v852
      %v2965 = vunpack.c.h.b16 %v852
      %v2966 = vunpack.c.l.b16 %v853
      %v2967 = vunpack.c.h.b16 %v853
      %v2968 = vunpack.c.l.b16 %v854
      %v2969 = vunpack.c.h.b16 %v854
      %v2970 = vunpack.c.l.b16 %v855
      %v2971 = vunpack.c.h.b16 %v855
      %v2972 = vunpack.c.l.b16 %v856
      %v2973 = vunpack.c.h.b16 %v856
      %v2974 = vunpack.c.l.b16 %v857
      %v2975 = vunpack.c.h.b16 %v857
      %v2976 = vunpack.c.l.b16 %v858
      %v2977 = vunpack.c.h.b16 %v858
      %v2978 = vunpack.c.l.b16 %v859
      %v2979 = vunpack.c.h.b16 %v859
      %v2980 = vunpack.c.l.b16 %v860
      %v2981 = vunpack.c.h.b16 %v860
      %v2982 = vunpack.c.l.b16 %v861
      %v2983 = vunpack.c.h.b16 %v861
      %v2984 = vunpack.c.l.b16 %v862
      %v2985 = vunpack.c.h.b16 %v862
      %v2986 = vunpack.c.l.b16 %v863
      %v2987 = vunpack.c.h.b16 %v863
      %v2988 = vunpack.c.l.b16 %v864
      %v2989 = vunpack.c.h.b16 %v864
      %v2990 = vunpack.c.l.b16 %v865
      %v2991 = vunpack.c.h.b16 %v865
      %v2992 = vunpack.c.l.b16 %v866
      %v2993 = vunpack.c.h.b16 %v866
      %v2994 = vunpack.c.l.b16 %v867
      %v2995 = vunpack.c.h.b16 %v867
      %v2996 = vunpack.c.l.b16 %v868
      %v2997 = vunpack.c.h.b16 %v868
      %v2998 = vunpack.c.l.b16 %v869
      %v2999 = vunpack.c.h.b16 %v869
      %v3000 = vunpack.c.l.b16 %v870
      %v3001 = vunpack.c.h.b16 %v870
      %v3002 = vunpack.c.l.b16 %v871
      %v3003 = vunpack.c.h.b16 %v871
      %v3004 = vunpack.c.l.b16 %v872
      %v3005 = vunpack.c.h.b16 %v872
      %v3006 = vunpack.c.l.b16 %v873
      %v3007 = vunpack.c.h.b16 %v873
      %v3008 = vunpack.c.l.b16 %v874
      %v3009 = vunpack.c.h.b16 %v874
      %v3010 = vunpack.c.l.b16 %v875
      %v3011 = vunpack.c.h.b16 %v875
      %v3012 = vunpack.c.l.b16 %v876
      %v3013 = vunpack.c.h.b16 %v876
      %v3014 = vunpack.c.l.b16 %v877
      %v3015 = vunpack.c.h.b16 %v877
      %v3016 = vunpack.c.l.b16 %v878
      %v3017 = vunpack.c.h.b16 %v878
      %v3018 = vunpack.c.l.b16 %v879
      %v3019 = vunpack.c.h.b16 %v879
      %v3020 = vunpack.c.l.b16 %v880
      %v3021 = vunpack.c.h.b16 %v880
      %v3022 = vunpack.c.l.b16 %v881
      %v3023 = vunpack.c.h.b16 %v881
      %v3024 = vunpack.c.l.b16 %v882
      %v3025 = vunpack.c.h.b16 %v882
      %v3026 = vunpack.c.l.b16 %v883
      %v3027 = vunpack.c.h.b16 %v883
      %v3028 = vunpack.c.l.b16 %v884
      %v3029 = vunpack.c.h.b16 %v884
      %v3030 = vunpack.c.l.b16 %v885
      %v3031 = vunpack.c.h.b16 %v885
      %v3032 = vunpack.c.l.b16 %v886
      %v3033 = vunpack.c.h.b16 %v886
      %v3034 = vunpack.c.l.b16 %v887
      %v3035 = vunpack.c.h.b16 %v887
      %v3036 = vunpack.c.l.b16 %v888
      %v3037 = vunpack.c.h.b16 %v888
      %v3038 = vunpack.c.l.b16 %v889
      %v3039 = vunpack.c.h.b16 %v889
      %v3040 = vunpack.c.l.b16 %v890
      %v3041 = vunpack.c.h.b16 %v890
      %v3042 = vunpack.c.l.b16 %v891
      %v3043 = vunpack.c.h.b16 %v891
      %v3044 = vunpack.c.l.b16 %v892
      %v3045 = vunpack.c.h.b16 %v892
      %v3046 = vunpack.c.l.b16 %v893
      %v3047 = vunpack.c.h.b16 %v893
      %v3048 = vunpack.c.l.b16 %v894
      %v3049 = vunpack.c.h.b16 %v894
      %v3050 = vunpack.c.l.b16 %v895
      %v3051 = vunpack.c.h.b16 %v895
      %v3052 = vunpack.c.l.b16 %v896
      %v3053 = vunpack.c.h.b16 %v896
      %v3054 = vunpack.c.l.b16 %v897
      %v3055 = vunpack.c.h.b16 %v897
      %v3056 = vunpack.c.l.b16 %v898
      %v3057 = vunpack.c.h.b16 %v898
      %v3058 = vunpack.c.l.b16 %v899
      %v3059 = vunpack.c.h.b16 %v899
      %v3060 = vunpack.c.l.b16 %v900
      %v3061 = vunpack.c.h.b16 %v900
      %v3062 = vunpack.c.l.b16 %v901
      %v3063 = vunpack.c.h.b16 %v901
      %v3064 = vunpack.c.l.b16 %v902
      %v3065 = vunpack.c.h.b16 %v902
      %v3066 = vunpack.c.l.b16 %v903
      %v3067 = vunpack.c.h.b16 %v903
      %v3068 = vunpack.c.l.b16 %v904
      %v3069 = vunpack.c.h.b16 %v904
      %v3070 = vunpack.c.l.b16 %v905
      %v3071 = vunpack.c.h.b16 %v905
      %v3072 = vunpack.c.l.b16 %v906
      %v3073 = vunpack.c.h.b16 %v906
      %v3074 = vunpack.c.l.b16 %v907
      %v3075 = vunpack.c.h.b16 %v907
      %v3076 = vunpack.c.l.b16 %v908
      %v3077 = vunpack.c.h.b16 %v908
      %v3078 = vunpack.c.l.b16 %v909
      %v3079 = vunpack.c.h.b16 %v909
      %v3080 = vunpack.c.l.b16 %v910
      %v3081 = vunpack.c.h.b16 %v910
      %v3082 = vunpack.c.l.b16 %v911
      %v3083 = vunpack.c.h.b16 %v911
      %v3084 = vunpack.c.l.b16 %v912
      %v3085 = vunpack.c.h.b16 %v912
      %v3086 = vunpack.c.l.b16 %v913
      %v3087 = vunpack.c.h.b16 %v913
      %v3088 = vunpack.c.l.b16 %v914
      %v3089 = vunpack.c.h.b16 %v914
      %v3090 = vunpack.c.l.b16 %v915
      %v3091 = vunpack.c.h.b16 %v915
      %v3092 = vunpack.c.l.b16 %v916
      %v3093 = vunpack.c.h.b16 %v916
      %v3094 = vunpack.c.l.b16 %v917
      %v3095 = vunpack.c.h.b16 %v917
      %v3096 = vunpack.c.l.b16 %v918
      %v3097 = vunpack.c.h.b16 %v918
      %v3098 = vunpack.c.l.b16 %v919
      %v3099 = vunpack.c.h.b16 %v919
      %v3100 = vunpack.c.l.b16 %v920
      %v3101 = vunpack.c.h.b16 %v920
      %v3102 = vunpack.c.l.b16 %v921
      %v3103 = vunpack.c.h.b16 %v921
      %v3104 = vunpack.c.l.b16 %v922
      %v3105 = vunpack.c.h.b16 %v922
      %v3106 = vunpack.c.l.b16 %v923
      %v3107 = vunpack.c.h.b16 %v923
      %v3108 = vunpack.c.l.b16 %v924
      %v3109 = vunpack.c.h.b16 %v924
      %v3110 = vunpack.c.l.b16 %v925
      %v3111 = vunpack.c.h.b16 %v925
      %v3112 = vunpack.c.l.b16 %v926
      %v3113 = vunpack.c.h.b16 %v926
      %v3114 = vunpack.c.l.b16 %v927
      %v3115 = vunpack.c.h.b16 %v927
      %v3116 = vunpack.c.l.b16 %v928
      %v3117 = vunpack.c.h.b16 %v928
      %v3118 = vunpack.c.l.b16 %v929
      %v3119 = vunpack.c.h.b16 %v929
      %v3120 = vunpack.c.l.b16 %v930
      %v3121 = vunpack.c.h.b16 %v930
      %v3122 = vunpack.c.l.b16 %v931
      %v3123 = vunpack.c.h.b16 %v931
      %v3124 = vunpack.c.l.b16 %v932
      %v3125 = vunpack.c.h.b16 %v932
      %v3126 = vunpack.c.l.b16 %v933
      %v3127 = vunpack.c.h.b16 %v933
      %v3128 = vunpack.c.l.b16 %v934
      %v3129 = vunpack.c.h.b16 %v934
      %v3130 = vunpack.c.l.b16 %v935
      %v3131 = vunpack.c.h.b16 %v935
      %v3132 = vunpack.c.l.b16 %v936
      %v3133 = vunpack.c.h.b16 %v936
      %v3134 = vunpack.c.l.b16 %v937
      %v3135 = vunpack.c.h.b16 %v937
      %v3136 = vunpack.c.l.b16 %v938
      %v3137 = vunpack.c.h.b16 %v938
      %v3138 = vunpack.c.l.b16 %v939
      %v3139 = vunpack.c.h.b16 %v939
      %v3140 = vunpack.c.l.b16 %v940
      %v3141 = vunpack.c.h.b16 %v940
      %v3142 = vunpack.c.l.b16 %v941
      %v3143 = vunpack.c.h.b16 %v941
      %v3144 = vunpack.c.l.b16 %v942
      %v3145 = vunpack.c.h.b16 %v942
      %v3146 = vunpack.c.l.b16 %v943
      %v3147 = vunpack.c.h.b16 %v943
      %v3148 = vunpack.c.l.b16 %v944
      %v3149 = vunpack.c.h.b16 %v944
      %v3150 = vunpack.c.l.b16 %v945
      %v3151 = vunpack.c.h.b16 %v945
      %v3152 = vunpack.c.l.b16 %v946
      %v3153 = vunpack.c.h.b16 %v946
      %v3154 = vunpack.c.l.b16 %v947
      %v3155 = vunpack.c.h.b16 %v947
      %v3156 = vunpack.c.l.b16 %v948
      %v3157 = vunpack.c.h.b16 %v948
      %v3158 = vunpack.c.l.b16 %v949
      %v3159 = vunpack.c.h.b16 %v949
      %v3160 = vunpack.c.l.b16 %v950
      %v3161 = vunpack.c.h.b16 %v950
      %v3162 = vunpack.c.l.b16 %v951
      %v3163 = vunpack.c.h.b16 %v951
      %v3164 = vunpack.c.l.b16 %v952
      %v3165 = vunpack.c.h.b16 %v952
      %v3166 = vunpack.c.l.b16 %v953
      %v3167 = vunpack.c.h.b16 %v953
      %v3168 = vunpack.c.l.b16 %v954
      %v3169 = vunpack.c.h.b16 %v954
      %v3170 = vunpack.c.l.b16 %v955
      %v3171 = vunpack.c.h.b16 %v955
      %v3172 = vunpack.c.l.b16 %v956
      %v3173 = vunpack.c.h.b16 %v956
      %v3174 = vunpack.c.l.b16 %v957
      %v3175 = vunpack.c.h.b16 %v957
      %v3176 = vunpack.c.l.b16 %v958
      %v3177 = vunpack.c.h.b16 %v958
      %v3178 = vunpack.c.l.b16 %v959
      %v3179 = vunpack.c.h.b16 %v959
      %v3180 = vunpack.c.l.b16 %v960
      %v3181 = vunpack.c.h.b16 %v960
      %v3182 = vunpack.c.l.b16 %v961
      %v3183 = vunpack.c.h.b16 %v961
      %v3184 = vunpack.c.l.b16 %v962
      %v3185 = vunpack.c.h.b16 %v962
      %v3186 = vunpack.c.l.b16 %v963
      %v3187 = vunpack.c.h.b16 %v963
      %v3188 = vunpack.c.l.b16 %v964
      %v3189 = vunpack.c.h.b16 %v964
      %v3190 = vunpack.c.l.b16 %v965
      %v3191 = vunpack.c.h.b16 %v965
      %v3192 = vunpack.c.l.b16 %v966
      %v3193 = vunpack.c.h.b16 %v966
      %v3194 = vunpack.c.l.b16 %v967
      %v3195 = vunpack.c.h.b16 %v967
      %v3196 = vunpack.c.l.b16 %v968
      %v3197 = vunpack.c.h.b16 %v968
      %v3198 = vunpack.c.l.b16 %v969
      %v3199 = vunpack.c.h.b16 %v969
      %v3200 = vunpack.c.l.b16 %v970
      %v3201 = vunpack.c.h.b16 %v970
      %v3202 = vunpack.c.l.b16 %v971
      %v3203 = vunpack.c.h.b16 %v971
      %v3204 = vunpack.c.l.b16 %v972
      %v3205 = vunpack.c.h.b16 %v972
      %v3206 = vunpack.c.l.b16 %v973
      %v3207 = vunpack.c.h.b16 %v973
      %v3208 = vunpack.c.l.b16 %v974
      %v3209 = vunpack.c.h.b16 %v974
      %v3210 = vunpack.c.l.b16 %v975
      %v3211 = vunpack.c.h.b16 %v975
      %v3212 = vunpack.c.l.b16 %v976
      %v3213 = vunpack.c.h.b16 %v976
      %v3214 = vunpack.c.l.b16 %v977
      %v3215 = vunpack.c.h.b16 %v977
      %v3216 = vunpack.c.l.b16 %v978
      %v3217 = vunpack.c.h.b16 %v978
      %v3218 = vunpack.c.l.b16 %v979
      %v3219 = vunpack.c.h.b16 %v979
      %v3220 = vunpack.c.l.b16 %v980
      %v3221 = vunpack.c.h.b16 %v980
      %v3222 = vunpack.c.l.b16 %v981
      %v3223 = vunpack.c.h.b16 %v981
      %v3224 = vunpack.c.l.b16 %v982
      %v3225 = vunpack.c.h.b16 %v982
      %v3226 = vunpack.c.l.b16 %v983
      %v3227 = vunpack.c.h.b16 %v983
      %v3228 = vunpack.c.l.b16 %v984
      %v3229 = vunpack.c.h.b16 %v984
      %v3230 = vunpack.c.l.b16 %v985
      %v3231 = vunpack.c.h.b16 %v985
      %v3232 = vunpack.c.l.b16 %v986
      %v3233 = vunpack.c.h.b16 %v986
      %v3234 = vunpack.c.l.b16 %v987
      %v3235 = vunpack.c.h.b16 %v987
      %v3236 = vunpack.c.l.b16 %v988
      %v3237 = vunpack.c.h.b16 %v988
      %v3238 = vunpack.c.l.b16 %v989
      %v3239 = vunpack.c.h.b16 %v989
      %v3240 = vunpack.c.l.b16 %v990
      %v3241 = vunpack.c.h.b16 %v990
      %v3242 = vunpack.c.l.b16 %v991
      %v3243 = vunpack.c.h.b16 %v991
      %v3244 = vunpack.c.l.b16 %v992
      %v3245 = vunpack.c.h.b16 %v992
      %v3246 = vunpack.c.l.b16 %v993
      %v3247 = vunpack.c.h.b16 %v993
      %v3248 = vunpack.c.l.b16 %v994
      %v3249 = vunpack.c.h.b16 %v994
      %v3250 = vunpack.c.l.b16 %v995
      %v3251 = vunpack.c.h.b16 %v995
      %v3252 = vunpack.c.l.b16 %v996
      %v3253 = vunpack.c.h.b16 %v996
      %v3254 = vunpack.c.l.b16 %v997
      %v3255 = vunpack.c.h.b16 %v997
      %v3256 = vunpack.c.l.b16 %v998
      %v3257 = vunpack.c.h.b16 %v998
      %v3258 = vunpack.c.l.b16 %v999
      %v3259 = vunpack.c.h.b16 %v999
      %v3260 = vunpack.c.l.b16 %v1000
      %v3261 = vunpack.c.h.b16 %v1000
      %v3262 = vunpack.c.l.b16 %v1001
      %v3263 = vunpack.c.h.b16 %v1001
      %v3264 = vunpack.c.l.b16 %v1002
      %v3265 = vunpack.c.h.b16 %v1002
      %v3266 = vunpack.c.l.b16 %v1003
      %v3267 = vunpack.c.h.b16 %v1003
      %v3268 = vunpack.c.l.b16 %v1004
      %v3269 = vunpack.c.h.b16 %v1004
      %v3270 = vunpack.c.l.b16 %v1005
      %v3271 = vunpack.c.h.b16 %v1005
      %v3272 = vunpack.c.l.b16 %v1006
      %v3273 = vunpack.c.h.b16 %v1006
      %v3274 = vunpack.c.l.b16 %v1007
      %v3275 = vunpack.c.h.b16 %v1007
      %v3276 = vunpack.c.l.b16 %v1008
      %v3277 = vunpack.c.h.b16 %v1008
      %v3278 = vunpack.c.l.b16 %v1009
      %v3279 = vunpack.c.h.b16 %v1009
      %v3280 = vunpack.c.l.b16 %v1010
      %v3281 = vunpack.c.h.b16 %v1010
      %v3282 = vunpack.c.l.b16 %v1011
      %v3283 = vunpack.c.h.b16 %v1011
      %v3284 = vunpack.c.l.b16 %v1012
      %v3285 = vunpack.c.h.b16 %v1012
      %v3286 = vunpack.c.l.b16 %v1013
      %v3287 = vunpack.c.h.b16 %v1013
      %v3288 = vunpack.c.l.b16 %v1014
      %v3289 = vunpack.c.h.b16 %v1014
      %v3290 = vunpack.c.l.b16 %v1015
      %v3291 = vunpack.c.h.b16 %v1015
      %v3292 = vunpack.c.l.b16 %v1016
      %v3293 = vunpack.c.h.b16 %v1016
      %v3294 = vunpack.c.l.b16 %v1017
      %v3295 = vunpack.c.h.b16 %v1017
      %v3296 = vunpack.c.l.b16 %v1018
      %v3297 = vunpack.c.h.b16 %v1018
      %v3298 = vunpack.c.l.b16 %v1019
      %v3299 = vunpack.c.h.b16 %v1019
      %v3300 = vunpack.c.l.b16 %v1020
      %v3301 = vunpack.c.h.b16 %v1020
      %v3302 = vunpack.c.l.b16 %v1021
      %v3303 = vunpack.c.h.b16 %v1021
      %v3304 = vunpack.c.l.b16 %v1022
      %v3305 = vunpack.c.h.b16 %v1022
      %v3306 = vunpack.c.l.b16 %v1023
      %v3307 = vunpack.c.h.b16 %v1023
      %v3308 = vunpack.c.l.b16 %v1024
      %v3309 = vunpack.c.h.b16 %v1024
      %v3310 = vunpack.c.l.b16 %v1025
      %v3311 = vunpack.c.h.b16 %v1025
      %v3312 = vunpack.c.l.b16 %v1026
      %v3313 = vunpack.c.h.b16 %v1026
      %v3314 = vunpack.c.l.b16 %v1027
      %v3315 = vunpack.c.h.b16 %v1027
      %v3316 = vunpack.c.l.b16 %v1028
      %v3317 = vunpack.c.h.b16 %v1028
      %v3318 = vunpack.c.l.b16 %v1029
      %v3319 = vunpack.c.h.b16 %v1029
      %v3320 = vunpack.c.l.b16 %v1030
      %v3321 = vunpack.c.h.b16 %v1030
      %v3322 = vunpack.c.l.b16 %v1031
      %v3323 = vunpack.c.h.b16 %v1031
      %v3324 = vunpack.c.l.b16 %v1032
      %v3325 = vunpack.c.h.b16 %v1032
      %v3326 = vunpack.c.l.b16 %v1033
      %v3327 = vunpack.c.h.b16 %v1033
      %v3328 = vunpack.c.l.b16 %v1034
      %v3329 = vunpack.c.h.b16 %v1034
      %v3330 = vunpack.c.l.b16 %v1035
      %v3331 = vunpack.c.h.b16 %v1035
      %v3332 = vunpack.c.l.b16 %v1036
      %v3333 = vunpack.c.h.b16 %v1036
      %v3334 = vunpack.c.l.b16 %v1037
      %v3335 = vunpack.c.h.b16 %v1037
      %v3336 = vunpack.c.l.b16 %v1038
      %v3337 = vunpack.c.h.b16 %v1038
      %v3338 = vunpack.c.l.b16 %v1039
      %v3339 = vunpack.c.h.b16 %v1039
      %v3340 = vunpack.c.l.b16 %v1040
      %v3341 = vunpack.c.h.b16 %v1040
      %v3342 = vunpack.c.l.b16 %v1041
      %v3343 = vunpack.c.h.b16 %v1041
      %v3344 = vunpack.c.l.b16 %v1042
      %v3345 = vunpack.c.h.b16 %v1042
      %v3346 = vunpack.c.l.b16 %v1043
      %v3347 = vunpack.c.h.b16 %v1043
      %v3348 = vunpack.c.l.b16 %v1044
      %v3349 = vunpack.c.h.b16 %v1044
      %v3350 = vunpack.c.l.b16 %v1045
      %v3351 = vunpack.c.h.b16 %v1045
      %v3352 = vunpack.c.l.b16 %v1046
      %v3353 = vunpack.c.h.b16 %v1046
      %v3354 = vunpack.c.l.b16 %v1047
      %v3355 = vunpack.c.h.b16 %v1047
      %v3356 = vunpack.c.l.b16 %v1048
      %v3357 = vunpack.c.h.b16 %v1048
      %v3358 = vunpack.c.l.b16 %v1049
      %v3359 = vunpack.c.h.b16 %v1049
      %v3360 = vunpack.c.l.b16 %v1050
      %v3361 = vunpack.c.h.b16 %v1050
      %v3362 = vunpack.c.l.b16 %v1051
      %v3363 = vunpack.c.h.b16 %v1051
      %v3364 = vunpack.c.l.b16 %v1052
      %v3365 = vunpack.c.h.b16 %v1052
      %v3366 = vunpack.c.l.b16 %v1053
      %v3367 = vunpack.c.h.b16 %v1053
      %v3368 = vunpack.c.l.b16 %v1054
      %v3369 = vunpack.c.h.b16 %v1054
      %v3370 = vunpack.c.l.b16 %v1055
      %v3371 = vunpack.c.h.b16 %v1055
      %v3372 = vunpack.c.l.b16 %v1056
      %v3373 = vunpack.c.h.b16 %v1056
      %v3374 = vunpack.c.l.b16 %v1057
      %v3375 = vunpack.c.h.b16 %v1057
      %v3376 = vunpack.c.l.b16 %v1058
      %v3377 = vunpack.c.h.b16 %v1058
      %v3378 = vunpack.c.l.b16 %v1059
      %v3379 = vunpack.c.h.b16 %v1059
      %v3380 = vunpack.c.l.b16 %v1060
      %v3381 = vunpack.c.h.b16 %v1060
      %v3382 = vunpack.c.l.b16 %v1061
      %v3383 = vunpack.c.h.b16 %v1061
      %v3384 = vunpack.c.l.b16 %v1062
      %v3385 = vunpack.c.h.b16 %v1062
      %v3386 = vunpack.c.l.b16 %v1063
      %v3387 = vunpack.c.h.b16 %v1063
      %v3388 = vunpack.c.l.b16 %v1064
      %v3389 = vunpack.c.h.b16 %v1064
      %v3390 = vunpack.c.l.b16 %v1065
      %v3391 = vunpack.c.h.b16 %v1065
      %v3392 = vunpack.c.l.b16 %v1066
      %v3393 = vunpack.c.h.b16 %v1066
      %v3394 = vunpack.c.l.b16 %v1067
      %v3395 = vunpack.c.h.b16 %v1067
      %v3396 = vunpack.c.l.b16 %v1068
      %v3397 = vunpack.c.h.b16 %v1068
      %v3398 = vunpack.c.l.b16 %v1069
      %v3399 = vunpack.c.h.b16 %v1069
      %v3400 = vunpack.c.l.b16 %v1070
      %v3401 = vunpack.c.h.b16 %v1070
      %v3402 = vunpack.c.l.b16 %v1071
      %v3403 = vunpack.c.h.b16 %v1071
      %v3404 = vunpack.c.l.b16 %v1072
      %v3405 = vunpack.c.h.b16 %v1072
      %v3406 = vunpack.c.l.b16 %v1073
      %v3407 = vunpack.c.h.b16 %v1073
      %v3408 = vunpack.c.l.b16 %v1074
      %v3409 = vunpack.c.h.b16 %v1074
      %v3410 = vunpack.c.l.b16 %v1075
      %v3411 = vunpack.c.h.b16 %v1075
      %v3412 = vunpack.c.l.b16 %v1076
      %v3413 = vunpack.c.h.b16 %v1076
      %v3414 = vunpack.c.l.b16 %v1077
      %v3415 = vunpack.c.h.b16 %v1077
      %v3416 = vunpack.c.l.b16 %v1078
      %v3417 = vunpack.c.h.b16 %v1078
      %v3418 = vunpack.c.l.b16 %v1079
      %v3419 = vunpack.c.h.b16 %v1079
      %v3420 = vunpack.c.l.b16 %v1080
      %v3421 = vunpack.c.h.b16 %v1080
      %v3422 = vunpack.c.l.b16 %v1081
      %v3423 = vunpack.c.h.b16 %v1081
      %v3424 = vunpack.c.l.b16 %v1082
      %v3425 = vunpack.c.h.b16 %v1082
      %v3426 = vunpack.c.l.b16 %v1083
      %v3427 = vunpack.c.h.b16 %v1083
      %v3428 = vunpack.c.l.b16 %v1084
      %v3429 = vunpack.c.h.b16 %v1084
      %v3430 = vunpack.c.l.b16 %v1085
      %v3431 = vunpack.c.h.b16 %v1085
      %v3432 = vunpack.c.l.b16 %v1086
      %v3433 = vunpack.c.h.b16 %v1086
      %v3434 = vunpack.c.l.b16 %v1087
      %v3435 = vunpack.c.h.b16 %v1087
      %v3436 = vunpack.c.l.b16 %v1088
      %v3437 = vunpack.c.h.b16 %v1088
      %v3438 = vunpack.c.l.b16 %v1089
      %v3439 = vunpack.c.h.b16 %v1089
      %v3440 = vunpack.c.l.b16 %v1090
      %v3441 = vunpack.c.h.b16 %v1090
      %v3442 = vunpack.c.l.b16 %v1091
      %v3443 = vunpack.c.h.b16 %v1091
      %v3444 = vunpack.c.l.b16 %v1092
      %v3445 = vunpack.c.h.b16 %v1092
      %v3446 = vunpack.c.l.b16 %v1093
      %v3447 = vunpack.c.h.b16 %v1093
      %v3448 = vunpack.c.l.b16 %v1094
      %v3449 = vunpack.c.h.b16 %v1094
      %v3450 = vunpack.c.l.b16 %v1095
      %v3451 = vunpack.c.h.b16 %v1095
      %v3452 = vunpack.c.l.b16 %v1096
      %v3453 = vunpack.c.h.b16 %v1096
      %v3454 = vunpack.c.l.b16 %v1097
      %v3455 = vunpack.c.h.b16 %v1097
      %v3456 = vunpack.c.l.b16 %v1098
      %v3457 = vunpack.c.h.b16 %v1098
      %v3458 = vunpack.c.l.b16 %v1099
      %v3459 = vunpack.c.h.b16 %v1099
      %v3460 = vunpack.c.l.b16 %v1100
      %v3461 = vunpack.c.h.b16 %v1100
      %v3462 = vunpack.c.l.b16 %v1101
      %v3463 = vunpack.c.h.b16 %v1101
      %v3464 = vunpack.c.l.b16 %v1102
      %v3465 = vunpack.c.h.b16 %v1102
      %v3466 = vunpack.c.l.b16 %v1103
      %v3467 = vunpack.c.h.b16 %v1103
      %v3468 = vunpack.c.l.b16 %v1104
      %v3469 = vunpack.c.h.b16 %v1104
      %v3470 = vunpack.c.l.b16 %v1105
      %v3471 = vunpack.c.h.b16 %v1105
      %v3472 = vunpack.c.l.b16 %v1106
      %v3473 = vunpack.c.h.b16 %v1106
      %v3474 = vunpack.c.l.b16 %v1107
      %v3475 = vunpack.c.h.b16 %v1107
      %v3476 = vunpack.c.l.b16 %v1108
      %v3477 = vunpack.c.h.b16 %v1108
      %v3478 = vunpack.c.l.b16 %v1109
      %v3479 = vunpack.c.h.b16 %v1109
      %v3480 = vunpack.c.l.b16 %v1110
      %v3481 = vunpack.c.h.b16 %v1110
      %v3482 = vunpack.c.l.b16 %v1111
      %v3483 = vunpack.c.h.b16 %v1111
      %v3484 = vunpack.c.l.b16 %v1112
      %v3485 = vunpack.c.h.b16 %v1112
      %v3486 = vunpack.c.l.b16 %v1113
      %v3487 = vunpack.c.h.b16 %v1113
      %v3488 = vunpack.c.l.b16 %v1114
      %v3489 = vunpack.c.h.b16 %v1114
      %v3490 = vunpack.c.l.b16 %v1115
      %v3491 = vunpack.c.h.b16 %v1115
      %v3492 = vunpack.c.l.b16 %v1116
      %v3493 = vunpack.c.h.b16 %v1116
      %v3494 = vunpack.c.l.b16 %v1117
      %v3495 = vunpack.c.h.b16 %v1117
      %v3496 = vunpack.c.l.b16 %v1118
      %v3497 = vunpack.c.h.b16 %v1118
      %v3498 = vunpack.c.l.b16 %v1119
      %v3499 = vunpack.c.h.b16 %v1119
      %v3500 = vunpack.c.l.b16 %v1120
      %v3501 = vunpack.c.h.b16 %v1120
      %v3502 = vunpack.c.l.b16 %v1121
      %v3503 = vunpack.c.h.b16 %v1121
      %v3504 = vunpack.c.l.b16 %v1122
      %v3505 = vunpack.c.h.b16 %v1122
      %v3506 = vunpack.c.l.b16 %v1123
      %v3507 = vunpack.c.h.b16 %v1123
      %v3508 = vunpack.c.l.b16 %v1124
      %v3509 = vunpack.c.h.b16 %v1124
      %v3510 = vunpack.c.l.b16 %v1125
      %v3511 = vunpack.c.h.b16 %v1125
      %v3512 = vunpack.c.l.b16 %v1126
      %v3513 = vunpack.c.h.b16 %v1126
      %v3514 = vunpack.c.l.b16 %v1127
      %v3515 = vunpack.c.h.b16 %v1127
      %v3516 = vunpack.c.l.b16 %v1128
      %v3517 = vunpack.c.h.b16 %v1128
      %v3518 = vunpack.c.l.b16 %v1129
      %v3519 = vunpack.c.h.b16 %v1129
      %v3520 = vunpack.c.l.b16 %v1130
      %v3521 = vunpack.c.h.b16 %v1130
      %v3522 = vunpack.c.l.b16 %v1131
      %v3523 = vunpack.c.h.b16 %v1131
      %v3524 = vunpack.c.l.b16 %v1132
      %v3525 = vunpack.c.h.b16 %v1132
      %v3526 = vunpack.c.l.b16 %v1133
      %v3527 = vunpack.c.h.b16 %v1133
      %v3528 = vunpack.c.l.b16 %v1134
      %v3529 = vunpack.c.h.b16 %v1134
      %v3530 = vunpack.c.l.b16 %v1135
      %v3531 = vunpack.c.h.b16 %v1135
      %v3532 = vunpack.c.l.b16 %v1136
      %v3533 = vunpack.c.h.b16 %v1136
      %v3534 = vunpack.c.l.b16 %v1137
      %v3535 = vunpack.c.h.b16 %v1137
      %v3536 = vunpack.c.l.b16 %v1138
      %v3537 = vunpack.c.h.b16 %v1138
      %v3538 = vunpack.c.l.b16 %v1139
      %v3539 = vunpack.c.h.b16 %v1139
      %v3540 = vunpack.c.l.b16 %v1140
      %v3541 = vunpack.c.h.b16 %v1140
      %v3542 = vunpack.c.l.b16 %v1141
      %v3543 = vunpack.c.h.b16 %v1141
      %v3544 = vunpack.c.l.b16 %v1142
      %v3545 = vunpack.c.h.b16 %v1142
      %v3546 = vunpack.c.l.b16 %v1143
      %v3547 = vunpack.c.h.b16 %v1143
      %v3548 = vunpack.c.l.b16 %v1144
      %v3549 = vunpack.c.h.b16 %v1144
      %v3550 = vunpack.c.l.b16 %v1145
      %v3551 = vunpack.c.h.b16 %v1145
      %v3552 = vunpack.c.l.b16 %v1146
      %v3553 = vunpack.c.h.b16 %v1146
      %v3554 = vunpack.c.l.b16 %v1147
      %v3555 = vunpack.c.h.b16 %v1147
      %v3556 = vunpack.c.l.b16 %v1148
      %v3557 = vunpack.c.h.b16 %v1148
      %v3558 = vunpack.c.l.b16 %v1149
      %v3559 = vunpack.c.h.b16 %v1149
      %v3560 = vunpack.c.l.b16 %v1150
      %v3561 = vunpack.c.h.b16 %v1150
      %v3562 = vunpack.c.l.b16 %v1151
      %v3563 = vunpack.c.h.b16 %v1151
      %v3564 = vunpack.c.l.b16 %v1152
      %v3565 = vunpack.c.h.b16 %v1152
      %v3566 = vunpack.c.l.b16 %v1153
      %v3567 = vunpack.c.h.b16 %v1153
      %v3568 = vunpack.c.l.b16 %v1154
      %v3569 = vunpack.c.h.b16 %v1154
      %v3570 = vunpack.c.l.b16 %v1155
      %v3571 = vunpack.c.h.b16 %v1155
      %v3572 = vunpack.c.l.b16 %v1156
      %v3573 = vunpack.c.h.b16 %v1156
      %v3574 = vunpack.c.l.b16 %v1157
      %v3575 = vunpack.c.h.b16 %v1157
      %v3576 = vunpack.c.l.b16 %v1158
      %v3577 = vunpack.c.h.b16 %v1158
      %v3578 = vunpack.c.l.b16 %v1159
      %v3579 = vunpack.c.h.b16 %v1159
      %v3580 = vunpack.c.l.b16 %v1160
      %v3581 = vunpack.c.h.b16 %v1160
      %v3582 = vunpack.c.l.b16 %v1161
      %v3583 = vunpack.c.h.b16 %v1161
      %v3584 = vunpack.c.l.b16 %v1162
      %v3585 = vunpack.c.h.b16 %v1162
      %v3586 = vunpack.c.l.b16 %v1163
      %v3587 = vunpack.c.h.b16 %v1163
      %v3588 = vunpack.c.l.b16 %v1164
      %v3589 = vunpack.c.h.b16 %v1164
      %v3590 = vunpack.c.l.b16 %v1165
      %v3591 = vunpack.c.h.b16 %v1165
      %v3592 = vunpack.c.l.b16 %v1166
      %v3593 = vunpack.c.h.b16 %v1166
      %v3594 = vunpack.c.l.b16 %v1167
      %v3595 = vunpack.c.h.b16 %v1167
      %v3596 = vunpack.c.l.b16 %v1168
      %v3597 = vunpack.c.h.b16 %v1168
      %v3598 = vunpack.c.l.b16 %v1169
      %v3599 = vunpack.c.h.b16 %v1169
      %v3600 = vunpack.c.l.b16 %v1170
      %v3601 = vunpack.c.h.b16 %v1170
      %v3602 = vunpack.c.l.b16 %v1171
      %v3603 = vunpack.c.h.b16 %v1171
      %v3604 = vunpack.c.l.b16 %v1172
      %v3605 = vunpack.c.h.b16 %v1172
      %v3606 = vunpack.c.l.b16 %v1173
      %v3607 = vunpack.c.h.b16 %v1173
      %v3608 = vunpack.c.l.b16 %v1174
      %v3609 = vunpack.c.h.b16 %v1174
      %v3610 = vpack.c.b16 %v2020, %v2010
      %v3611 = vpack.c.b16 %v2021, %v2011
      %v3612 = vpack.c.b16 %v2022, %v2012
      %v3613 = vpack.c.b16 %v2023, %v2013
      %v3614 = vpack.c.b16 %v2024, %v2014
      %v3615 = vpack.c.b16 %v2025, %v2015
      %v3616 = vpack.c.b16 %v2026, %v2016
      %v3617 = vpack.c.b16 %v2027, %v2017
      %v3618 = vpack.c.b16 %v2028, %v2018
      %v3619 = vpack.c.b16 %v2029, %v2019
      %v3620 = vpack.c.b16 %v2040, %v2030
      %v3621 = vpack.c.b16 %v2041, %v2031
      %v3622 = vpack.c.b16 %v2042, %v2032
      %v3623 = vpack.c.b16 %v2043, %v2033
      %v3624 = vpack.c.b16 %v2044, %v2034
      %v3625 = vpack.c.b16 %v2045, %v2035
      %v3626 = vpack.c.b16 %v2046, %v2036
      %v3627 = vpack.c.b16 %v2047, %v2037
      %v3628 = vpack.c.b16 %v2048, %v2038
      %v3629 = vpack.c.b16 %v2049, %v2039
      %v3630 = vpack.c.b16 %v2060, %v2050
      %v3631 = vpack.c.b16 %v2061, %v2051
      %v3632 = vpack.c.b16 %v2062, %v2052
      %v3633 = vpack.c.b16 %v2063, %v2053
      %v3634 = vpack.c.b16 %v2064, %v2054
      %v3635 = vpack.c.b16 %v2065, %v2055
      %v3636 = vpack.c.b16 %v2066, %v2056
      %v3637 = vpack.c.b16 %v2067, %v2057
      %v3638 = vpack.c.b16 %v2068, %v2058
      %v3639 = vpack.c.b16 %v2069, %v2059
      %v3640 = vpack.c.b16 %v2080, %v2070
      %v3641 = vpack.c.b16 %v2081, %v2071
      %v3642 = vpack.c.b16 %v2082, %v2072
      %v3643 = vpack.c.b16 %v2083, %v2073
      %v3644 = vpack.c.b16 %v2084, %v2074
      %v3645 = vpack.c.b16 %v2085, %v2075
      %v3646 = vpack.c.b16 %v2086, %v2076
      %v3647 = vpack.c.b16 %v2087, %v2077
      %v3648 = vpack.c.b16 %v2088, %v2078
      %v3649 = vpack.c.b16 %v2089, %v2079
      %v3650 = vpack.c.b16 %v2100, %v2090
      %v3651 = vpack.c.b16 %v2101, %v2091
      %v3652 = vpack.c.b16 %v2102, %v2092
      %v3653 = vpack.c.b16 %v2103, %v2093
      %v3654 = vpack.c.b16 %v2104, %v2094
      %v3655 = vpack.c.b16 %v2105, %v2095
      %v3656 = vpack.c.b16 %v2106, %v2096
      %v3657 = vpack.c.b16 %v2107, %v2097
      %v3658 = vpack.c.b16 %v2108, %v2098
      %v3659 = vpack.c.b16 %v2109, %v2099
      %v3660 = vpack.c.b16 %v2120, %v2110
      %v3661 = vpack.c.b16 %v2121, %v2111
      %v3662 = vpack.c.b16 %v2122, %v2112
      %v3663 = vpack.c.b16 %v2123, %v2113
      %v3664 = vpack.c.b16 %v2124, %v2114
      %v3665 = vpack.c.b16 %v2125, %v2115
      %v3666 = vpack.c.b16 %v2126, %v2116
      %v3667 = vpack.c.b16 %v2127, %v2117
      %v3668 = vpack.c.b16 %v2128, %v2118
      %v3669 = vpack.c.b16 %v2129, %v2119
      %v3670 = vpack.c.b16 %v2140, %v2130
      %v3671 = vpack.c.b16 %v2141, %v2131
      %v3672 = vpack.c.b16 %v2142, %v2132
      %v3673 = vpack.c.b16 %v2143, %v2133
      %v3674 = vpack.c.b16 %v2144, %v2134
      %v3675 = vpack.c.b16 %v2145, %v2135
      %v3676 = vpack.c.b16 %v2146, %v2136
      %v3677 = vpack.c.b16 %v2147, %v2137
      %v3678 = vpack.c.b16 %v2148, %v2138
      %v3679 = vpack.c.b16 %v2149, %v2139
      %v3680 = vpack.c.b16 %v2160, %v2150
      %v3681 = vpack.c.b16 %v2161, %v2151
      %v3682 = vpack.c.b16 %v2162, %v2152
      %v3683 = vpack.c.b16 %v2163, %v2153
      %v3684 = vpack.c.b16 %v2164, %v2154
      %v3685 = vpack.c.b16 %v2165, %v2155
      %v3686 = vpack.c.b16 %v2166, %v2156
      %v3687 = vpack.c.b16 %v2167, %v2157
      %v3688 = vpack.c.b16 %v2168, %v2158
      %v3689 = vpack.c.b16 %v2169, %v2159
      %v3690 = vpack.c.b16 %v2180, %v2170
      %v3691 = vpack.c.b16 %v2181, %v2171
      %v3692 = vpack.c.b16 %v2182, %v2172
      %v3693 = vpack.c.b16 %v2183, %v2173
      %v3694 = vpack.c.b16 %v2184, %v2174
      %v3695 = vpack.c.b16 %v2185, %v2175
      %v3696 = vpack.c.b16 %v2186, %v2176
      %v3697 = vpack.c.b16 %v2187, %v2177
      %v3698 = vpack.c.b16 %v2188, %v2178
      %v3699 = vpack.c.b16 %v2189, %v2179
      %v3700 = vpack.c.b16 %v2200, %v2190
      %v3701 = vpack.c.b16 %v2201, %v2191
      %v3702 = vpack.c.b16 %v2202, %v2192
      %v3703 = vpack.c.b16 %v2203, %v2193
      %v3704 = vpack.c.b16 %v2204, %v2194
      %v3705 = vpack.c.b16 %v2205, %v2195
      %v3706 = vpack.c.b16 %v2206, %v2196
      %v3707 = vpack.c.b16 %v2207, %v2197
      %v3708 = vpack.c.b16 %v2208, %v2198
      %v3709 = vpack.c.b16 %v2209, %v2199
      %v3710 = vpack.c.b16 %v2220, %v2210
      %v3711 = vpack.c.b16 %v2221, %v2211
      %v3712 = vpack.c.b16 %v2222, %v2212
      %v3713 = vpack.c.b16 %v2223, %v2213
      %v3714 = vpack.c.b16 %v2224, %v2214
      %v3715 = vpack.c.b16 %v2225, %v2215
      %v3716 = vpack.c.b16 %v2226, %v2216
      %v3717 = vpack.c.b16 %v2227, %v2217
      %v3718 = vpack.c.b16 %v2228, %v2218
      %v3719 = vpack.c.b16 %v2229, %v2219
      %v3720 = vpack.c.b16 %v2240, %v2230
      %v3721 = vpack.c.b16 %v2241, %v2231
      %v3722 = vpack.c.b16 %v2242, %v2232
      %v3723 = vpack.c.b16 %v2243, %v2233
      %v3724 = vpack.c.b16 %v2244, %v2234
      %v3725 = vpack.c.b16 %v2245, %v2235
      %v3726 = vpack.c.b16 %v2246, %v2236
      %v3727 = vpack.c.b16 %v2247, %v2237
      %v3728 = vpack.c.b16 %v2248, %v2238
      %v3729 = vpack.c.b16 %v2249, %v2239
      %v3730 = vpack.c.b16 %v2260, %v2250
      %v3731 = vpack.c.b16 %v2261, %v2251
      %v3732 = vpack.c.b16 %v2262, %v2252
      %v3733 = vpack.c.b16 %v2263, %v2253
      %v3734 = vpack.c.b16 %v2264, %v2254
      %v3735 = vpack.c.b16 %v2265, %v2255
      %v3736 = vpack.c.b16 %v2266, %v2256
      %v3737 = vpack.c.b16 %v2267, %v2257
      %v3738 = vpack.c.b16 %v2268, %v2258
      %v3739 = vpack.c.b16 %v2269, %v2259
      %v3740 = vpack.c.b16 %v2280, %v2270
      %v3741 = vpack.c.b16 %v2281, %v2271
      %v3742 = vpack.c.b16 %v2282, %v2272
      %v3743 = vpack.c.b16 %v2283, %v2273
      %v3744 = vpack.c.b16 %v2284, %v2274
      %v3745 = vpack.c.b16 %v2285, %v2275
      %v3746 = vpack.c.b16 %v2286, %v2276
      %v3747 = vpack.c.b16 %v2287, %v2277
      %v3748 = vpack.c.b16 %v2288, %v2278
      %v3749 = vpack.c.b16 %v2289, %v2279
      %v3750 = vpack.c.b16 %v2300, %v2290
      %v3751 = vpack.c.b16 %v2301, %v2291
      %v3752 = vpack.c.b16 %v2302, %v2292
      %v3753 = vpack.c.b16 %v2303, %v2293
      %v3754 = vpack.c.b16 %v2304, %v2294
      %v3755 = vpack.c.b16 %v2305, %v2295
      %v3756 = vpack.c.b16 %v2306, %v2296
      %v3757 = vpack.c.b16 %v2307, %v2297
      %v3758 = vpack.c.b16 %v2308, %v2298
      %v3759 = vpack.c.b16 %v2309, %v2299
      %v3760 = vpack.c.b16 %v2320, %v2310
      %v3761 = vpack.c.b16 %v2321, %v2311
      %v3762 = vpack.c.b16 %v2322, %v2312
      %v3763 = vpack.c.b16 %v2323, %v2313
      %v3764 = vpack.c.b16 %v2324, %v2314
      %v3765 = vpack.c.b16 %v2325, %v2315
      %v3766 = vpack.c.b16 %v2326, %v2316
      %v3767 = vpack.c.b16 %v2327, %v2317
      %v3768 = vpack.c.b16 %v2328, %v2318
      %v3769 = vpack.c.b16 %v2329, %v2319
      %v3770 = vpack.c.b16 %v2340, %v2330
      %v3771 = vpack.c.b16 %v2341, %v2331
      %v3772 = vpack.c.b16 %v2342, %v2332
      %v3773 = vpack.c.b16 %v2343, %v2333
      %v3774 = vpack.c.b16 %v2344, %v2334
      %v3775 = vpack.c.b16 %v2345, %v2335
      %v3776 = vpack.c.b16 %v2346, %v2336
      %v3777 = vpack.c.b16 %v2347, %v2337
      %v3778 = vpack.c.b16 %v2348, %v2338
      %v3779 = vpack.c.b16 %v2349, %v2339
      %v3780 = vpack.c.b16 %v2360, %v2350
      %v3781 = vpack.c.b16 %v2361, %v2351
      %v3782 = vpack.c.b16 %v2362, %v2352
      %v3783 = vpack.c.b16 %v2363, %v2353
      %v3784 = vpack.c.b16 %v2364, %v2354
      %v3785 = vpack.c.b16 %v2365, %v2355
      %v3786 = vpack.c.b16 %v2366, %v2356
      %v3787 = vpack.c.b16 %v2367, %v2357
      %v3788 = vpack.c.b16 %v2368, %v2358
      %v3789 = vpack.c.b16 %v2369, %v2359
      %v3790 = vpack.c.b16 %v2380, %v2370
      %v3791 = vpack.c.b16 %v2381, %v2371
      %v3792 = vpack.c.b16 %v2382, %v2372
      %v3793 = vpack.c.b16 %v2383, %v2373
      %v3794 = vpack.c.b16 %v2384, %v2374
      %v3795 = vpack.c.b16 %v2385, %v2375
      %v3796 = vpack.c.b16 %v2386, %v2376
      %v3797 = vpack.c.b16 %v2387, %v2377
      %v3798 = vpack.c.b16 %v2388, %v2378
      %v3799 = vpack.c.b16 %v2389, %v2379
      %v3800 = vpack.c.b16 %v2400, %v2390
      %v3801 = vpack.c.b16 %v2401, %v2391
      %v3802 = vpack.c.b16 %v2402, %v2392
      %v3803 = vpack.c.b16 %v2403, %v2393
      %v3804 = vpack.c.b16 %v2404, %v2394
      %v3805 = vpack.c.b16 %v2405, %v2395
      %v3806 = vpack.c.b16 %v2406, %v2396
      %v3807 = vpack.c.b16 %v2407, %v2397
      %v3808 = vpack.c.b16 %v2408, %v2398
      %v3809 = vpack.c.b16 %v2409, %v2399
      %v3810 = vpack.c.b16 %v2420, %v2410
      %v3811 = vpack.c.b16 %v2421, %v2411
      %v3812 = vpack.c.b16 %v2422, %v2412
      %v3813 = vpack.c.b16 %v2423, %v2413
      %v3814 = vpack.c.b16 %v2424, %v2414
      %v3815 = vpack.c.b16 %v2425, %v2415
      %v3816 = vpack.c.b16 %v2426, %v2416
      %v3817 = vpack.c.b16 %v2427, %v2417
      %v3818 = vpack.c.b16 %v2428, %v2418
      %v3819 = vpack.c.b16 %v2429, %v2419
      %v3820 = vpack.c.b16 %v2440, %v2430
      %v3821 = vpack.c.b16 %v2441, %v2431
      %v3822 = vpack.c.b16 %v2442, %v2432
      %v3823 = vpack.c.b16 %v2443, %v2433
      %v3824 = vpack.c.b16 %v2444, %v2434
      %v3825 = vpack.c.b16 %v2445, %v2435
      %v3826 = vpack.c.b16 %v2446, %v2436
      %v3827 = vpack.c.b16 %v2447, %v2437
      %v3828 = vpack.c.b16 %v2448, %v2438
      %v3829 = vpack.c.b16 %v2449, %v2439
      %v3830 = vpack.c.b16 %v2460, %v2450
      %v3831 = vpack.c.b16 %v2461, %v2451
      %v3832 = vpack.c.b16 %v2462, %v2452
      %v3833 = vpack.c.b16 %v2463, %v2453
      %v3834 = vpack.c.b16 %v2464, %v2454
      %v3835 = vpack.c.b16 %v2465, %v2455
      %v3836 = vpack.c.b16 %v2466, %v2456
      %v3837 = vpack.c.b16 %v2467, %v2457
      %v3838 = vpack.c.b16 %v2468, %v2458
      %v3839 = vpack.c.b16 %v2469, %v2459
      %v3840 = vpack.c.b16 %v2480, %v2470
      %v3841 = vpack.c.b16 %v2481, %v2471
      %v3842 = vpack.c.b16 %v2482, %v2472
      %v3843 = vpack.c.b16 %v2483, %v2473
      %v3844 = vpack.c.b16 %v2484, %v2474
      %v3845 = vpack.c.b16 %v2485, %v2475
      %v3846 = vpack.c.b16 %v2486, %v2476
      %v3847 = vpack.c.b16 %v2487, %v2477
      %v3848 = vpack.c.b16 %v2488, %v2478
      %v3849 = vpack.c.b16 %v2489, %v2479
      %v3850 = vpack.c.b16 %v2500, %v2490
      %v3851 = vpack.c.b16 %v2501, %v2491
      %v3852 = vpack.c.b16 %v2502, %v2492
      %v3853 = vpack.c.b16 %v2503, %v2493
      %v3854 = vpack.c.b16 %v2504, %v2494
      %v3855 = vpack.c.b16 %v2505, %v2495
      %v3856 = vpack.c.b16 %v2506, %v2496
      %v3857 = vpack.c.b16 %v2507, %v2497
      %v3858 = vpack.c.b16 %v2508, %v2498
      %v3859 = vpack.c.b16 %v2509, %v2499
      %v3860 = vpack.c.b16 %v2520, %v2510
      %v3861 = vpack.c.b16 %v2521, %v2511
      %v3862 = vpack.c.b16 %v2522, %v2512
      %v3863 = vpack.c.b16 %v2523, %v2513
      %v3864 = vpack.c.b16 %v2524, %v2514
      %v3865 = vpack.c.b16 %v2525, %v2515
      %v3866 = vpack.c.b16 %v2526, %v2516
      %v3867 = vpack.c.b16 %v2527, %v2517
      %v3868 = vpack.c.b16 %v2528, %v2518
      %v3869 = vpack.c.b16 %v2529, %v2519
      %v3870 = vpack.c.b16 %v2540, %v2530
      %v3871 = vpack.c.b16 %v2541, %v2531
      %v3872 = vpack.c.b16 %v2542, %v2532
      %v3873 = vpack.c.b16 %v2543, %v2533
      %v3874 = vpack.c.b16 %v2544, %v2534
      %v3875 = vpack.c.b16 %v2545, %v2535
      %v3876 = vpack.c.b16 %v2546, %v2536
      %v3877 = vpack.c.b16 %v2547, %v2537
      %v3878 = vpack.c.b16 %v2548, %v2538
      %v3879 = vpack.c.b16 %v2549, %v2539
      %v3880 = vpack.c.b16 %v2560, %v2550
      %v3881 = vpack.c.b16 %v2561, %v2551
      %v3882 = vpack.c.b16 %v2562, %v2552
      %v3883 = vpack.c.b16 %v2563, %v2553
      %v3884 = vpack.c.b16 %v2564, %v2554
      %v3885 = vpack.c.b16 %v2565, %v2555
      %v3886 = vpack.c.b16 %v2566, %v2556
      %v3887 = vpack.c.b16 %v2567, %v2557
      %v3888 = vpack.c.b16 %v2568, %v2558
      %v3889 = vpack.c.b16 %v2569, %v2559
      %v3890 = vpack.c.b16 %v2580, %v2570
      %v3891 = vpack.c.b16 %v2581, %v2571
      %v3892 = vpack.c.b16 %v2582, %v2572
      %v3893 = vpack.c.b16 %v2583, %v2573
      %v3894 = vpack.c.b16 %v2584, %v2574
      %v3895 = vpack.c.b16 %v2585, %v2575
      %v3896 = vpack.c.b16 %v2586, %v2576
      %v3897 = vpack.c.b16 %v2587, %v2577
      %v3898 = vpack.c.b16 %v2588, %v2578
      %v3899 = vpack.c.b16 %v2589, %v2579
      %v3900 = vpack.c.b16 %v2600, %v2590
      %v3901 = vpack.c.b16 %v2601, %v2591
      %v3902 = vpack.c.b16 %v2602, %v2592
      %v3903 = vpack.c.b16 %v2603, %v2593
      %v3904 = vpack.c.b16 %v2604, %v2594
      %v3905 = vpack.c.b16 %v2605, %v2595
      %v3906 = vpack.c.b16 %v2606, %v2596
      %v3907 = vpack.c.b16 %v2607, %v2597
      %v3908 = vpack.c.b16 %v2608, %v2598
      %v3909 = vpack.c.b16 %v2609, %v2599
      %v3910 = vpack.c.b16 %v2620, %v2610
      %v3911 = vpack.c.b16 %v2621, %v2611
      %v3912 = vpack.c.b16 %v2622, %v2612
      %v3913 = vpack.c.b16 %v2623, %v2613
      %v3914 = vpack.c.b16 %v2624, %v2614
      %v3915 = vpack.c.b16 %v2625, %v2615
      %v3916 = vpack.c.b16 %v2626, %v2616
      %v3917 = vpack.c.b16 %v2627, %v2617
      %v3918 = vpack.c.b16 %v2628, %v2618
      %v3919 = vpack.c.b16 %v2629, %v2619
      %v3920 = vpack.c.b16 %v2640, %v2630
      %v3921 = vpack.c.b16 %v2641, %v2631
      %v3922 = vpack.c.b16 %v2642, %v2632
      %v3923 = vpack.c.b16 %v2643, %v2633
      %v3924 = vpack.c.b16 %v2644, %v2634
      %v3925 = vpack.c.b16 %v2645, %v2635
      %v3926 = vpack.c.b16 %v2646, %v2636
      %v3927 = vpack.c.b16 %v2647, %v2637
      %v3928 = vpack.c.b16 %v2648, %v2638
      %v3929 = vpack.c.b16 %v2649, %v2639
      %v3930 = vpack.c.b16 %v2660, %v2650
      %v3931 = vpack.c.b16 %v2661, %v2651
      %v3932 = vpack.c.b16 %v2662, %v2652
      %v3933 = vpack.c.b16 %v2663, %v2653
      %v3934 = vpack.c.b16 %v2664, %v2654
      %v3935 = vpack.c.b16 %v2665, %v2655
      %v3936 = vpack.c.b16 %v2666, %v2656
      %v3937 = vpack.c.b16 %v2667, %v2657
      %v3938 = vpack.c.b16 %v2668, %v2658
      %v3939 = vpack.c.b16 %v2669, %v2659
      %v3940 = vpack.c.b16 %v2680, %v2670
      %v3941 = vpack.c.b16 %v2681, %v2671
      %v3942 = vpack.c.b16 %v2682, %v2672
      %v3943 = vpack.c.b16 %v2683, %v2673
      %v3944 = vpack.c.b16 %v2684, %v2674
      %v3945 = vpack.c.b16 %v2685, %v2675
      %v3946 = vpack.c.b16 %v2686, %v2676
      %v3947 = vpack.c.b16 %v2687, %v2677
      %v3948 = vpack.c.b16 %v2688, %v2678
      %v3949 = vpack.c.b16 %v2689, %v2679
      %v3950 = vpack.c.b16 %v2700, %v2690
      %v3951 = vpack.c.b16 %v2701, %v2691
      %v3952 = vpack.c.b16 %v2702, %v2692
      %v3953 = vpack.c.b16 %v2703, %v2693
      %v3954 = vpack.c.b16 %v2704, %v2694
      %v3955 = vpack.c.b16 %v2705, %v2695
      %v3956 = vpack.c.b16 %v2706, %v2696
      %v3957 = vpack.c.b16 %v2707, %v2697
      %v3958 = vpack.c.b16 %v2708, %v2698
      %v3959 = vpack.c.b16 %v2709, %v2699
      %v3960 = vpack.c.b16 %v2720, %v2710
      %v3961 = vpack.c.b16 %v2721, %v2711
      %v3962 = vpack.c.b16 %v2722, %v2712
      %v3963 = vpack.c.b16 %v2723, %v2713
      %v3964 = vpack.c.b16 %v2724, %v2714
      %v3965 = vpack.c.b16 %v2725, %v2715
      %v3966 = vpack.c.b16 %v2726, %v2716
      %v3967 = vpack.c.b16 %v2727, %v2717
      %v3968 = vpack.c.b16 %v2728, %v2718
      %v3969 = vpack.c.b16 %v2729, %v2719
      %v3970 = vpack.c.b16 %v2740, %v2730
      %v3971 = vpack.c.b16 %v2741, %v2731
      %v3972 = vpack.c.b16 %v2742, %v2732
      %v3973 = vpack.c.b16 %v2743, %v2733
      %v3974 = vpack.c.b16 %v2744, %v2734
      %v3975 = vpack.c.b16 %v2745, %v2735
      %v3976 = vpack.c.b16 %v2746, %v2736
      %v3977 = vpack.c.b16 %v2747, %v2737
      %v3978 = vpack.c.b16 %v2748, %v2738
      %v3979 = vpack.c.b16 %v2749, %v2739
      %v3980 = vpack.c.b16 %v2760, %v2750
      %v3981 = vpack.c.b16 %v2761, %v2751
      %v3982 = vpack.c.b16 %v2762, %v2752
      %v3983 = vpack.c.b16 %v2763, %v2753
      %v3984 = vpack.c.b16 %v2764, %v2754
      %v3985 = vpack.c.b16 %v2765, %v2755
      %v3986 = vpack.c.b16 %v2766, %v2756
      %v3987 = vpack.c.b16 %v2767, %v2757
      %v3988 = vpack.c.b16 %v2768, %v2758
      %v3989 = vpack.c.b16 %v2769, %v2759
      %v3990 = vpack.c.b16 %v2780, %v2770
      %v3991 = vpack.c.b16 %v2781, %v2771
      %v3992 = vpack.c.b16 %v2782, %v2772
      %v3993 = vpack.c.b16 %v2783, %v2773
      %v3994 = vpack.c.b16 %v2784, %v2774
      %v3995 = vpack.c.b16 %v2785, %v2775
      %v3996 = vpack.c.b16 %v2786, %v2776
      %v3997 = vpack.c.b16 %v2787, %v2777
      %v3998 = vpack.c.b16 %v2788, %v2778
      %v3999 = vpack.c.b16 %v2789, %v2779
      %v4000 = vpack.c.b16 %v2800, %v2790
      %v4001 = vpack.c.b16 %v2801, %v2791
      %v4002 = vpack.c.b16 %v2802, %v2792
      %v4003 = vpack.c.b16 %v2803, %v2793
      %v4004 = vpack.c.b16 %v2804, %v2794
      %v4005 = vpack.c.b16 %v2805, %v2795
      %v4006 = vpack.c.b16 %v2806, %v2796
      %v4007 = vpack.c.b16 %v2807, %v2797
      %v4008 = vpack.c.b16 %v2808, %v2798
      %v4009 = vpack.c.b16 %v2809, %v2799
      %v4010 = vpack.c.b16 %v2820, %v2810
      %v4011 = vpack.c.b16 %v2821, %v2811
      %v4012 = vpack.c.b16 %v2822, %v2812
      %v4013 = vpack.c.b16 %v2823, %v2813
      %v4014 = vpack.c.b16 %v2824, %v2814
      %v4015 = vpack.c.b16 %v2825, %v2815
      %v4016 = vpack.c.b16 %v2826, %v2816
      %v4017 = vpack.c.b16 %v2827, %v2817
      %v4018 = vpack.c.b16 %v2828, %v2818
      %v4019 = vpack.c.b16 %v2829, %v2819
      %v4020 = vpack.c.b16 %v2840, %v2830
      %v4021 = vpack.c.b16 %v2841, %v2831
      %v4022 = vpack.c.b16 %v2842, %v2832
      %v4023 = vpack.c.b16 %v2843, %v2833
      %v4024 = vpack.c.b16 %v2844, %v2834
      %v4025 = vpack.c.b16 %v2845, %v2835
      %v4026 = vpack.c.b16 %v2846, %v2836
      %v4027 = vpack.c.b16 %v2847, %v2837
      %v4028 = vpack.c.b16 %v2848, %v2838
      %v4029 = vpack.c.b16 %v2849, %v2839
      %v4030 = vpack.c.b16 %v2860, %v2850
      %v4031 = vpack.c.b16 %v2861, %v2851
      %v4032 = vpack.c.b16 %v2862, %v2852
      %v4033 = vpack.c.b16 %v2863, %v2853
      %v4034 = vpack.c.b16 %v2864, %v2854
      %v4035 = vpack.c.b16 %v2865, %v2855
      %v4036 = vpack.c.b16 %v2866, %v2856
      %v4037 = vpack.c.b16 %v2867, %v2857
      %v4038 = vpack.c.b16 %v2868, %v2858
      %v4039 = vpack.c.b16 %v2869, %v2859
      %v4040 = vpack.c.b16 %v2880, %v2870
      %v4041 = vpack.c.b16 %v2881, %v2871
      %v4042 = vpack.c.b16 %v2882, %v2872
      %v4043 = vpack.c.b16 %v2883, %v2873
      %v4044 = vpack.c.b16 %v2884, %v2874
      %v4045 = vpack.c.b16 %v2885, %v2875
      %v4046 = vpack.c.b16 %v2886, %v2876
      %v4047 = vpack.c.b16 %v2887, %v2877
      %v4048 = vpack.c.b16 %v2888, %v2878
      %v4049 = vpack.c.b16 %v2889, %v2879
      %v4050 = vpack.c.b16 %v2900, %v2890
      %v4051 = vpack.c.b16 %v2901, %v2891
      %v4052 = vpack.c.b16 %v2902, %v2892
      %v4053 = vpack.c.b16 %v2903, %v2893
      %v4054 = vpack.c.b16 %v2904, %v2894
      %v4055 = vpack.c.b16 %v2905, %v2895
      %v4056 = vpack.c.b16 %v2906, %v2896
      %v4057 = vpack.c.b16 %v2907, %v2897
      %v4058 = vpack.c.b16 %v2908, %v2898
      %v4059 = vpack.c.b16 %v2909, %v2899
      %v4060 = vpack.c.b16 %v2920, %v2910
      %v4061 = vpack.c.b16 %v2921, %v2911
      %v4062 = vpack.c.b16 %v2922, %v2912
      %v4063 = vpack.c.b16 %v2923, %v2913
      %v4064 = vpack.c.b16 %v2924, %v2914
      %v4065 = vpack.c.b16 %v2925, %v2915
      %v4066 = vpack.c.b16 %v2926, %v2916
      %v4067 = vpack.c.b16 %v2927, %v2917
      %v4068 = vpack.c.b16 %v2928, %v2918
      %v4069 = vpack.c.b16 %v2929, %v2919
      %v4070 = vpack.c.b16 %v2940, %v2930
      %v4071 = vpack.c.b16 %v2941, %v2931
      %v4072 = vpack.c.b16 %v2942, %v2932
      %v4073 = vpack.c.b16 %v2943, %v2933
      %v4074 = vpack.c.b16 %v2944, %v2934
      %v4075 = vpack.c.b16 %v2945, %v2935
      %v4076 = vpack.c.b16 %v2946, %v2936
      %v4077 = vpack.c.b16 %v2947, %v2937
      %v4078 = vpack.c.b16 %v2948, %v2938
      %v4079 = vpack.c.b16 %v2949, %v2939
      %v4080 = vpack.c.b16 %v2960, %v2950
      %v4081 = vpack.c.b16 %v2961, %v2951
      %v4082 = vpack.c.b16 %v2962, %v2952
      %v4083 = vpack.c.b16 %v2963, %v2953
      %v4084 = vpack.c.b16 %v2964, %v2954
      %v4085 = vpack.c.b16 %v2965, %v2955
      %v4086 = vpack.c.b16 %v2966, %v2956
      %v4087 = vpack.c.b16 %v2967, %v2957
      %v4088 = vpack.c.b16 %v2968, %v2958
      %v4089 = vpack.c.b16 %v2969, %v2959
      %v4090 = vpack.c.b16 %v2980, %v2970
      %v4091 = vpack.c.b16 %v2981, %v2971
      %v4092 = vpack.c.b16 %v2982, %v2972
      %v4093 = vpack.c.b16 %v2983, %v2973
      %v4094 = vpack.c.b16 %v2984, %v2974
      %v4095 = vpack.c.b16 %v2985, %v2975
      %v4096 = vpack.c.b16 %v2986, %v2976
      %v4097 = vpack.c.b16 %v2987, %v2977
      %v4098 = vpack.c.b16 %v2988, %v2978
      %v4099 = vpack.c.b16 %v2989, %v2979
      %v4100 = vpack.c.b16 %v3000, %v2990
      %v4101 = vpack.c.b16 %v3001, %v2991
      %v4102 = vpack.c.b16 %v3002, %v2992
      %v4103 = vpack.c.b16 %v3003, %v2993
      %v4104 = vpack.c.b16 %v3004, %v2994
      %v4105 = vpack.c.b16 %v3005, %v2995
      %v4106 = vpack.c.b16 %v3006, %v2996
      %v4107 = vpack.c.b16 %v3007, %v2997
      %v4108 = vpack.c.b16 %v3008, %v2998
      %v4109 = vpack.c.b16 %v3009, %v2999
      %v4110 = vpack.c.b16 %v3020, %v3010
      %v4111 = vpack.c.b16 %v3021, %v3011
      %v4112 = vpack.c.b16 %v3022, %v3012
      %v4113 = vpack.c.b16 %v3023, %v3013
      %v4114 = vpack.c.b16 %v3024, %v3014
      %v4115 = vpack.c.b16 %v3025, %v3015
      %v4116 = vpack.c.b16 %v3026, %v3016
      %v4117 = vpack.c.b16 %v3027, %v3017
      %v4118 = vpack.c.b16 %v3028, %v3018
      %v4119 = vpack.c.b16 %v3029, %v3019
      %v4120 = vpack.c.b16 %v3040, %v3030
      %v4121 = vpack.c.b16 %v3041, %v3031
      %v4122 = vpack.c.b16 %v3042, %v3032
      %v4123 = vpack.c.b16 %v3043, %v3033
      %v4124 = vpack.c.b16 %v3044, %v3034
      %v4125 = vpack.c.b16 %v3045, %v3035
      %v4126 = vpack.c.b16 %v3046, %v3036
      %v4127 = vpack.c.b16 %v3047, %v3037
      %v4128 = vpack.c.b16 %v3048, %v3038
      %v4129 = vpack.c.b16 %v3049, %v3039
      %v4130 = vpack.c.b16 %v3060, %v3050
      %v4131 = vpack.c.b16 %v3061, %v3051
      %v4132 = vpack.c.b16 %v3062, %v3052
      %v4133 = vpack.c.b16 %v3063, %v3053
      %v4134 = vpack.c.b16 %v3064, %v3054
      %v4135 = vpack.c.b16 %v3065, %v3055
      %v4136 = vpack.c.b16 %v3066, %v3056
      %v4137 = vpack.c.b16 %v3067, %v3057
      %v4138 = vpack.c.b16 %v3068, %v3058
      %v4139 = vpack.c.b16 %v3069, %v3059
      %v4140 = vpack.c.b16 %v3080, %v3070
      %v4141 = vpack.c.b16 %v3081, %v3071
      %v4142 = vpack.c.b16 %v3082, %v3072
      %v4143 = vpack.c.b16 %v3083, %v3073
      %v4144 = vpack.c.b16 %v3084, %v3074
      %v4145 = vpack.c.b16 %v3085, %v3075
      %v4146 = vpack.c.b16 %v3086, %v3076
      %v4147 = vpack.c.b16 %v3087, %v3077
      %v4148 = vpack.c.b16 %v3088, %v3078
      %v4149 = vpack.c.b16 %v3089, %v3079
      %v4150 = vpack.c.b16 %v3100, %v3090
      %v4151 = vpack.c.b16 %v3101, %v3091
      %v4152 = vpack.c.b16 %v3102, %v3092
      %v4153 = vpack.c.b16 %v3103, %v3093
      %v4154 = vpack.c.b16 %v3104, %v3094
      %v4155 = vpack.c.b16 %v3105, %v3095
      %v4156 = vpack.c.b16 %v3106, %v3096
      %v4157 = vpack.c.b16 %v3107, %v3097
      %v4158 = vpack.c.b16 %v3108, %v3098
      %v4159 = vpack.c.b16 %v3109, %v3099
      %v4160 = vpack.c.b16 %v3120, %v3110
      %v4161 = vpack.c.b16 %v3121, %v3111
      %v4162 = vpack.c.b16 %v3122, %v3112
      %v4163 = vpack.c.b16 %v3123, %v3113
      %v4164 = vpack.c.b16 %v3124, %v3114
      %v4165 = vpack.c.b16 %v3125, %v3115
      %v4166 = vpack.c.b16 %v3126, %v3116
      %v4167 = vpack.c.b16 %v3127, %v3117
      %v4168 = vpack.c.b16 %v3128, %v3118
      %v4169 = vpack.c.b16 %v3129, %v3119
      %v4170 = vpack.c.b16 %v3140, %v3130
      %v4171 = vpack.c.b16 %v3141, %v3131
      %v4172 = vpack.c.b16 %v3142, %v3132
      %v4173 = vpack.c.b16 %v3143, %v3133
      %v4174 = vpack.c.b16 %v3144, %v3134
      %v4175 = vpack.c.b16 %v3145, %v3135
      %v4176 = vpack.c.b16 %v3146, %v3136
      %v4177 = vpack.c.b16 %v3147, %v3137
      %v4178 = vpack.c.b16 %v3148, %v3138
      %v4179 = vpack.c.b16 %v3149, %v3139
      %v4180 = vpack.c.b16 %v3160, %v3150
      %v4181 = vpack.c.b16 %v3161, %v3151
      %v4182 = vpack.c.b16 %v3162, %v3152
      %v4183 = vpack.c.b16 %v3163, %v3153
      %v4184 = vpack.c.b16 %v3164, %v3154
      %v4185 = vpack.c.b16 %v3165, %v3155
      %v4186 = vpack.c.b16 %v3166, %v3156
      %v4187 = vpack.c.b16 %v3167, %v3157
      %v4188 = vpack.c.b16 %v3168, %v3158
      %v4189 = vpack.c.b16 %v3169, %v3159
      %v4190 = vpack.c.b16 %v3180, %v3170
      %v4191 = vpack.c.b16 %v3181, %v3171
      %v4192 = vpack.c.b16 %v3182, %v3172
      %v4193 = vpack.c.b16 %v3183, %v3173
      %v4194 = vpack.c.b16 %v3184, %v3174
      %v4195 = vpack.c.b16 %v3185, %v3175
      %v4196 = vpack.c.b16 %v3186, %v3176
      %v4197 = vpack.c.b16 %v3187, %v3177
      %v4198 = vpack.c.b16 %v3188, %v3178
      %v4199 = vpack.c.b16 %v3189, %v3179
      %v4200 = vpack.c.b16 %v3200, %v3190
      %v4201 = vpack.c.b16 %v3201, %v3191
      %v4202 = vpack.c.b16 %v3202, %v3192
      %v4203 = vpack.c.b16 %v3203, %v3193
      %v4204 = vpack.c.b16 %v3204, %v3194
      %v4205 = vpack.c.b16 %v3205, %v3195
      %v4206 = vpack.c.b16 %v3206, %v3196
      %v4207 = vpack.c.b16 %v3207, %v3197
      %v4208 = vpack.c.b16 %v3208, %v3198
      %v4209 = vpack.c.b16 %v3209, %v3199
      %v4210 = vpack.c.b16 %v3220, %v3210
      %v4211 = vpack.c.b16 %v3221, %v3211
      %v4212 = vpack.c.b16 %v3222, %v3212
      %v4213 = vpack.c.b16 %v3223, %v3213
      %v4214 = vpack.c.b16 %v3224, %v3214
      %v4215 = vpack.c.b16 %v3225, %v3215
      %v4216 = vpack.c.b16 %v3226, %v3216
      %v4217 = vpack.c.b16 %v3227, %v3217
      %v4218 = vpack.c.b16 %v3228, %v3218
      %v4219 = vpack.c.b16 %v3229, %v3219
      %v4220 = vpack.c.b16 %v3240, %v3230
      %v4221 = vpack.c.b16 %v3241, %v3231
      %v4222 = vpack.c.b16 %v3242, %v3232
      %v4223 = vpack.c.b16 %v3243, %v3233
      %v4224 = vpack.c.b16 %v3244, %v3234
      %v4225 = vpack.c.b16 %v3245, %v3235
      %v4226 = vpack.c.b16 %v3246, %v3236
      %v4227 = vpack.c.b16 %v3247, %v3237
      %v4228 = vpack.c.b16 %v3248, %v3238
      %v4229 = vpack.c.b16 %v3249, %v3239
      %v4230 = vpack.c.b16 %v3260, %v3250
      %v4231 = vpack.c.b16 %v3261, %v3251
      %v4232 = vpack.c.b16 %v3262, %v3252
      %v4233 = vpack.c.b16 %v3263, %v3253
      %v4234 = vpack.c.b16 %v3264, %v3254
      %v4235 = vpack.c.b16 %v3265, %v3255
      %v4236 = vpack.c.b16 %v3266, %v3256
      %v4237 = vpack.c.b16 %v3267, %v3257
      %v4238 = vpack.c.b16 %v3268, %v3258
      %v4239 = vpack.c.b16 %v3269, %v3259
      %v4240 = vpack.c.b16 %v3280, %v3270
      %v4241 = vpack.c.b16 %v3281, %v3271
      %v4242 = vpack.c.b16 %v3282, %v3272
      %v4243 = vpack.c.b16 %v3283, %v3273
      %v4244 = vpack.c.b16 %v3284, %v3274
      %v4245 = vpack.c.b16 %v3285, %v3275
      %v4246 = vpack.c.b16 %v3286, %v3276
      %v4247 = vpack.c.b16 %v3287, %v3277
      %v4248 = vpack.c.b16 %v3288, %v3278
      %v4249 = vpack.c.b16 %v3289, %v3279
      %v4250 = vpack.c.b16 %v3300, %v3290
      %v4251 = vpack.c.b16 %v3301, %v3291
      %v4252 = vpack.c.b16 %v3302, %v3292
      %v4253 = vpack.c.b16 %v3303, %v3293
      %v4254 = vpack.c.b16 %v3304, %v3294
      %v4255 = vpack.c.b16 %v3305, %v3295
      %v4256 = vpack.c.b16 %v3306, %v3296
      %v4257 = vpack.c.b16 %v3307, %v3297
      %v4258 = vpack.c.b16 %v3308, %v3298
      %v4259 = vpack.c.b16 %v3309, %v3299
      %v4260 = vpack.c.b16 %v3320, %v3310
      %v4261 = vpack.c.b16 %v3321, %v3311
      %v4262 = vpack.c.b16 %v3322, %v3312
      %v4263 = vpack.c.b16 %v3323, %v3313
      %v4264 = vpack.c.b16 %v3324, %v3314
      %v4265 = vpack.c.b16 %v3325, %v3315
      %v4266 = vpack.c.b16 %v3326, %v3316
      %v4267 = vpack.c.b16 %v3327, %v3317
      %v4268 = vpack.c.b16 %v3328, %v3318
      %v4269 = vpack.c.b16 %v3329, %v3319
      %v4270 = vpack.c.b16 %v3340, %v3330
      %v4271 = vpack.c.b16 %v3341, %v3331
      %v4272 = vpack.c.b16 %v3342, %v3332
      %v4273 = vpack.c.b16 %v3343, %v3333
      %v4274 = vpack.c.b16 %v3344, %v3334
      %v4275 = vpack.c.b16 %v3345, %v3335
      %v4276 = vpack.c.b16 %v3346, %v3336
      %v4277 = vpack.c.b16 %v3347, %v3337
      %v4278 = vpack.c.b16 %v3348, %v3338
      %v4279 = vpack.c.b16 %v3349, %v3339
      %v4280 = vpack.c.b16 %v3360, %v3350
      %v4281 = vpack.c.b16 %v3361, %v3351
      %v4282 = vpack.c.b16 %v3362, %v3352
      %v4283 = vpack.c.b16 %v3363, %v3353
      %v4284 = vpack.c.b16 %v3364, %v3354
      %v4285 = vpack.c.b16 %v3365, %v3355
      %v4286 = vpack.c.b16 %v3366, %v3356
      %v4287 = vpack.c.b16 %v3367, %v3357
      %v4288 = vpack.c.b16 %v3368, %v3358
      %v4289 = vpack.c.b16 %v3369, %v3359
      %v4290 = vpack.c.b16 %v3380, %v3370
      %v4291 = vpack.c.b16 %v3381, %v3371
      %v4292 = vpack.c.b16 %v3382, %v3372
      %v4293 = vpack.c.b16 %v3383, %v3373
      %v4294 = vpack.c.b16 %v3384, %v3374
      %v4295 = vpack.c.b16 %v3385, %v3375
      %v4296 = vpack.c.b16 %v3386, %v3376
      %v4297 = vpack.c.b16 %v3387, %v3377
      %v4298 = vpack.c.b16 %v3388, %v3378
      %v4299 = vpack.c.b16 %v3389, %v3379
      %v4300 = vpack.c.b16 %v3400, %v3390
      %v4301 = vpack.c.b16 %v3401, %v3391
      %v4302 = vpack.c.b16 %v3402, %v3392
      %v4303 = vpack.c.b16 %v3403, %v3393
      %v4304 = vpack.c.b16 %v3404, %v3394
      %v4305 = vpack.c.b16 %v3405, %v3395
      %v4306 = vpack.c.b16 %v3406, %v3396
      %v4307 = vpack.c.b16 %v3407, %v3397
      %v4308 = vpack.c.b16 %v3408, %v3398
      %v4309 = vpack.c.b16 %v3409, %v3399
      %v4310 = vpack.c.b16 %v3420, %v3410
      %v4311 = vpack.c.b16 %v3421, %v3411
      %v4312 = vpack.c.b16 %v3422, %v3412
      %v4313 = vpack.c.b16 %v3423, %v3413
      %v4314 = vpack.c.b16 %v3424, %v3414
      %v4315 = vpack.c.b16 %v3425, %v3415
      %v4316 = vpack.c.b16 %v3426, %v3416
      %v4317 = vpack.c.b16 %v3427, %v3417
      %v4318 = vpack.c.b16 %v3428, %v3418
      %v4319 = vpack.c.b16 %v3429, %v3419
      %v4320 = vpack.c.b16 %v3440, %v3430
      %v4321 = vpack.c.b16 %v3441, %v3431
      %v4322 = vpack.c.b16 %v3442, %v3432
      %v4323 = vpack.c.b16 %v3443, %v3433
      %v4324 = vpack.c.b16 %v3444, %v3434
      %v4325 = vpack.c.b16 %v3445, %v3435
      %v4326 = vpack.c.b16 %v3446, %v3436
      %v4327 = vpack.c.b16 %v3447, %v3437
      %v4328 = vpack.c.b16 %v3448, %v3438
      %v4329 = vpack.c.b16 %v3449, %v3439
      %v4330 = vpack.c.b16 %v3460, %v3450
      %v4331 = vpack.c.b16 %v3461, %v3451
      %v4332 = vpack.c.b16 %v3462, %v3452
      %v4333 = vpack.c.b16 %v3463, %v3453
      %v4334 = vpack.c.b16 %v3464, %v3454
      %v4335 = vpack.c.b16 %v3465, %v3455
      %v4336 = vpack.c.b16 %v3466, %v3456
      %v4337 = vpack.c.b16 %v3467, %v3457
      %v4338 = vpack.c.b16 %v3468, %v3458
      %v4339 = vpack.c.b16 %v3469, %v3459
      %v4340 = vpack.c.b16 %v3480, %v3470
      %v4341 = vpack.c.b16 %v3481, %v3471
      %v4342 = vpack.c.b16 %v3482, %v3472
      %v4343 = vpack.c.b16 %v3483, %v3473
      %v4344 = vpack.c.b16 %v3484, %v3474
      %v4345 = vpack.c.b16 %v3485, %v3475
      %v4346 = vpack.c.b16 %v3486, %v3476
      %v4347 = vpack.c.b16 %v3487, %v3477
      %v4348 = vpack.c.b16 %v3488, %v3478
      %v4349 = vpack.c.b16 %v3489, %v3479
      %v4350 = vpack.c.b16 %v3500, %v3490
      %v4351 = vpack.c.b16 %v3501, %v3491
      %v4352 = vpack.c.b16 %v3502, %v3492
      %v4353 = vpack.c.b16 %v3503, %v3493
      %v4354 = vpack.c.b16 %v3504, %v3494
      %v4355 = vpack.c.b16 %v3505, %v3495
      %v4356 = vpack.c.b16 %v3506, %v3496
      %v4357 = vpack.c.b16 %v3507, %v3497
      %v4358 = vpack.c.b16 %v3508, %v3498
      %v4359 = vpack.c.b16 %v3509, %v3499
      %v4360 = vpack.c.b16 %v3520, %v3510
      %v4361 = vpack.c.b16 %v3521, %v3511
      %v4362 = vpack.c.b16 %v3522, %v3512
      %v4363 = vpack.c.b16 %v3523, %v3513
      %v4364 = vpack.c.b16 %v3524, %v3514
      %v4365 = vpack.c.b16 %v3525, %v3515
      %v4366 = vpack.c.b16 %v3526, %v3516
      %v4367 = vpack.c.b16 %v3527, %v3517
      %v4368 = vpack.c.b16 %v3528, %v3518
      %v4369 = vpack.c.b16 %v3529, %v3519
      %v4370 = vpack.c.b16 %v3540, %v3530
      %v4371 = vpack.c.b16 %v3541, %v3531
      %v4372 = vpack.c.b16 %v3542, %v3532
      %v4373 = vpack.c.b16 %v3543, %v3533
      %v4374 = vpack.c.b16 %v3544, %v3534
      %v4375 = vpack.c.b16 %v3545, %v3535
      %v4376 = vpack.c.b16 %v3546, %v3536
      %v4377 = vpack.c.b16 %v3547, %v3537
      %v4378 = vpack.c.b16 %v3548, %v3538
      %v4379 = vpack.c.b16 %v3549, %v3539
      %v4380 = vpack.c.b16 %v3560, %v3550
      %v4381 = vpack.c.b16 %v3561, %v3551
      %v4382 = vpack.c.b16 %v3562, %v3552
      %v4383 = vpack.c.b16 %v3563, %v3553
      %v4384 = vpack.c.b16 %v3564, %v3554
      %v4385 = vpack.c.b16 %v3565, %v3555
      %v4386 = vpack.c.b16 %v3566, %v3556
      %v4387 = vpack.c.b16 %v3567, %v3557
      %v4388 = vpack.c.b16 %v3568, %v3558
      %v4389 = vpack.c.b16 %v3569, %v3559
      %v4390 = vpack.c.b16 %v3580, %v3570
      %v4391 = vpack.c.b16 %v3581, %v3571
      %v4392 = vpack.c.b16 %v3582, %v3572
      %v4393 = vpack.c.b16 %v3583, %v3573
      %v4394 = vpack.c.b16 %v3584, %v3574
      %v4395 = vpack.c.b16 %v3585, %v3575
      %v4396 = vpack.c.b16 %v3586, %v3576
      %v4397 = vpack.c.b16 %v3587, %v3577
      %v4398 = vpack.c.b16 %v3588, %v3578
      %v4399 = vpack.c.b16 %v3589, %v3579
      %v4400 = vpack.c.b16 %v3600, %v3590
      %v4401 = vpack.c.b16 %v3601, %v3591
      %v4402 = vpack.c.b16 %v3602, %v3592
      %v4403 = vpack.c.b16 %v3603, %v3593
      %v4404 = vpack.c.b16 %v3604, %v3594
      %v4405 = vpack.c.b16 %v3605, %v3595
      %v4406 = vpack.c.b16 %v3606, %v3596
      %v4407 = vpack.c.b16 %v3607, %v3597
      %v4408 = vpack.c.b16 %v3608, %v3598
      %v4409 = vpack.c.b16 %v3609, %v3599
      %5210 = vmatprep.subr.bf16.mxu0 %v3611
      %5211 = vmatpush1.bf16.msra.mxu0 %v3610
      %5212 = vmatprep.subr.bf16.mxu0 %v3621
      %5213 = vmatpush1.bf16.msra.mxu0 %v3620
      %5214 = vmatprep.subr.bf16.mxu0 %v3631
      %5215 = vmatpush1.bf16.msra.mxu0 %v3630
      %5216 = vmatprep.subr.bf16.mxu0 %v3641
      %5217 = vmatpush1.bf16.msra.mxu0 %v3640
      %5218 = vmatprep.subr.bf16.mxu0 %v3651
      %5219 = vmatpush1.bf16.msra.mxu0 %v3650
      %5220 = vmatprep.subr.bf16.mxu0 %v3661
      %5221 = vmatpush1.bf16.msra.mxu0 %v3660
      %5222 = vmatprep.subr.bf16.mxu0 %v3671
      %5223 = vmatpush1.bf16.msra.mxu0 %v3670
      %5224 = vmatprep.subr.bf16.mxu0 %v3681
      %5225 = vmatpush1.bf16.msra.mxu0 %v3680
      %5226 = vmatprep.subr.bf16.mxu0 %v3691
      %5227 = vmatpush1.bf16.msra.mxu0 %v3690
      %5228 = vmatprep.subr.bf16.mxu0 %v3701
      %5229 = vmatpush1.bf16.msra.mxu0 %v3700
      %5230 = vmatprep.subr.bf16.mxu0 %v3711
      %5231 = vmatpush1.bf16.msra.mxu0 %v3710
      %5232 = vmatprep.subr.bf16.mxu0 %v3721
      %5233 = vmatpush1.bf16.msra.mxu0 %v3720
      %5234 = vmatprep.subr.bf16.mxu0 %v3731
      %5235 = vmatpush1.bf16.msra.mxu0 %v3730
      %5236 = vmatprep.subr.bf16.mxu0 %v3741
      %5237 = vmatpush1.bf16.msra.mxu0 %v3740
      %5238 = vmatprep.subr.bf16.mxu0 %v3751
      %5239 = vmatpush1.bf16.msra.mxu0 %v3750
      %5240 = vmatprep.subr.bf16.mxu0 %v3761
      %5241 = vmatpush1.bf16.msra.mxu0 %v3760
      %5242 = vmatprep.mubr.bf16.mxu0 %v1191
      %5243 = vmatmul.mubr.bf16.gmra.mrb[0].mxu0 %v1190
      %v5244 = vpop.f32.mrb[0].mxu0
      %v5245 = vadd.f32 0.0, %v5244
      %v5246 = vpop.f32.mrb[0].mxu0
      %v5247 = vadd.f32 0.0, %v5246
      %v5248 = vpop.f32.mrb[0].mxu0
      %v5249 = vpop.f32.mrb[0].mxu0
      %5250 = vdwg.mxu0
      %5251 = vmatprep.subr.bf16.mxu0 %v3771
      %5252 = vmatpush1.bf16.msra.mxu0 %v3770
      %5253 = vmatprep.subr.bf16.mxu0 %v3781
      %5254 = vmatpush1.bf16.msra.mxu0 %v3780
      %5255 = vmatprep.subr.bf16.mxu0 %v3791
      %5256 = vmatpush1.bf16.msra.mxu0 %v3790
      %5257 = vmatprep.subr.bf16.mxu0 %v3801
      %5258 = vmatpush1.bf16.msra.mxu0 %v3800
      %5259 = vmatprep.subr.bf16.mxu0 %v3811
      %5260 = vmatpush1.bf16.msra.mxu0 %v3810
      %5261 = vmatprep.subr.bf16.mxu0 %v3821
      %5262 = vmatpush1.bf16.msra.mxu0 %v3820
      %5263 = vmatprep.subr.bf16.mxu0 %v3831
      %5264 = vmatpush1.bf16.msra.mxu0 %v3830
      %5265 = vmatprep.subr.bf16.mxu0 %v3841
      %5266 = vmatpush1.bf16.msra.mxu0 %v3840
      %5267 = vmatprep.subr.bf16.mxu0 %v3851
      %5268 = vmatpush1.bf16.msra.mxu0 %v3850
      %5269 = vmatprep.subr.bf16.mxu0 %v3861
      %5270 = vmatpush1.bf16.msra.mxu0 %v3860
      %5271 = vmatprep.subr.bf16.mxu0 %v3871
      %5272 = vmatpush1.bf16.msra.mxu0 %v3870
      %5273 = vmatprep.subr.bf16.mxu0 %v3881
      %5274 = vmatpush1.bf16.msra.mxu0 %v3880
      %5275 = vmatprep.subr.bf16.mxu0 %v3891
      %5276 = vmatpush1.bf16.msra.mxu0 %v3890
      %5277 = vmatprep.subr.bf16.mxu0 %v3901
      %5278 = vmatpush1.bf16.msra.mxu0 %v3900
      %5279 = vmatprep.subr.bf16.mxu0 %v3911
      %5280 = vmatpush1.bf16.msra.mxu0 %v3910
      %5281 = vmatprep.subr.bf16.mxu0 %v3921
      %5282 = vmatpush1.bf16.msra.mxu0 %v3920
      %5283 = vmatprep.mubr.bf16.mxu0 %v1193
      %5284 = vmatmul.mubr.bf16.gmra.mrb[0].mxu0 %v1192
      %v5285 = vpop.f32.mrb[0].mxu0
      %v5286 = vadd.f32 %v5245, %v5285
      %v5287 = vpop.f32.mrb[0].mxu0
      %v5288 = vadd.f32 %v5247, %v5287
      %v5289 = vpop.f32.mrb[0].mxu0
      %v5290 = vpop.f32.mrb[0].mxu0
      %5291 = vdwg.mxu0
      %5292 = vmatprep.subr.bf16.mxu0 %v3931
      %5293 = vmatpush1.bf16.msra.mxu0 %v3930
      %5294 = vmatprep.subr.bf16.mxu0 %v3941
      %5295 = vmatpush1.bf16.msra.mxu0 %v3940
      %5296 = vmatprep.subr.bf16.mxu0 %v3951
      %5297 = vmatpush1.bf16.msra.mxu0 %v3950
      %5298 = vmatprep.subr.bf16.mxu0 %v3961
      %5299 = vmatpush1.bf16.msra.mxu0 %v3960
      %5300 = vmatprep.subr.bf16.mxu0 %v3971
      %5301 = vmatpush1.bf16.msra.mxu0 %v3970
      %5302 = vmatprep.subr.bf16.mxu0 %v3981
      %5303 = vmatpush1.bf16.msra.mxu0 %v3980
      %5304 = vmatprep.subr.bf16.mxu0 %v3991
      %5305 = vmatpush1.bf16.msra.mxu0 %v3990
      %5306 = vmatprep.subr.bf16.mxu0 %v4001
      %5307 = vmatpush1.bf16.msra.mxu0 %v4000
      %5308 = vmatprep.subr.bf16.mxu0 %v4011
      %5309 = vmatpush1.bf16.msra.mxu0 %v4010
      %5310 = vmatprep.subr.bf16.mxu0 %v4021
      %5311 = vmatpush1.bf16.msra.mxu0 %v4020
      %5312 = vmatprep.subr.bf16.mxu0 %v4031
      %5313 = vmatpush1.bf16.msra.mxu0 %v4030
      %5314 = vmatprep.subr.bf16.mxu0 %v4041
      %5315 = vmatpush1.bf16.msra.mxu0 %v4040
      %5316 = vmatprep.subr.bf16.mxu0 %v4051
      %5317 = vmatpush1.bf16.msra.mxu0 %v4050
      %5318 = vmatprep.subr.bf16.mxu0 %v4061
      %5319 = vmatpush1.bf16.msra.mxu0 %v4060
      %5320 = vmatprep.subr.bf16.mxu0 %v4071
      %5321 = vmatpush1.bf16.msra.mxu0 %v4070
      %5322 = vmatprep.subr.bf16.mxu0 %v4081
      %5323 = vmatpush1.bf16.msra.mxu0 %v4080
      %5324 = vmatprep.mubr.bf16.mxu0 %v1195
      %5325 = vmatmul.mubr.bf16.gmra.mrb[0].mxu0 %v1194
      %v5326 = vpop.f32.mrb[0].mxu0
      %v5327 = vadd.f32 %v5286, %v5326
      %v5328 = vpop.f32.mrb[0].mxu0
      %v5329 = vadd.f32 %v5288, %v5328
      %v5330 = vpop.f32.mrb[0].mxu0
      %v5331 = vpop.f32.mrb[0].mxu0
      %5332 = vdwg.mxu0
      %5333 = vmatprep.subr.bf16.mxu0 %v4091
      %5334 = vmatpush1.bf16.msra.mxu0 %v4090
      %5335 = vmatprep.subr.bf16.mxu0 %v4101
      %5336 = vmatpush1.bf16.msra.mxu0 %v4100
      %5337 = vmatprep.subr.bf16.mxu0 %v4111
      %5338 = vmatpush1.bf16.msra.mxu0 %v4110
      %5339 = vmatprep.subr.bf16.mxu0 %v4121
      %5340 = vmatpush1.bf16.msra.mxu0 %v4120
      %5341 = vmatprep.subr.bf16.mxu0 %v4131
      %5342 = vmatpush1.bf16.msra.mxu0 %v4130
      %5343 = vmatprep.subr.bf16.mxu0 %v4141
      %5344 = vmatpush1.bf16.msra.mxu0 %v4140
      %5345 = vmatprep.subr.bf16.mxu0 %v4151
      %5346 = vmatpush1.bf16.msra.mxu0 %v4150
      %5347 = vmatprep.subr.bf16.mxu0 %v4161
      %5348 = vmatpush1.bf16.msra.mxu0 %v4160
      %5349 = vmatprep.subr.bf16.mxu0 %v4171
      %5350 = vmatpush1.bf16.msra.mxu0 %v4170
      %5351 = vmatprep.subr.bf16.mxu0 %v4181
      %5352 = vmatpush1.bf16.msra.mxu0 %v4180
      %5353 = vmatprep.subr.bf16.mxu0 %v4191
      %5354 = vmatpush1.bf16.msra.mxu0 %v4190
      %5355 = vmatprep.subr.bf16.mxu0 %v4201
      %5356 = vmatpush1.bf16.msra.mxu0 %v4200
      %5357 = vmatprep.subr.bf16.mxu0 %v4211
      %5358 = vmatpush1.bf16.msra.mxu0 %v4210
      %5359 = vmatprep.subr.bf16.mxu0 %v4221
      %5360 = vmatpush1.bf16.msra.mxu0 %v4220
      %5361 = vmatprep.subr.bf16.mxu0 %v4231
      %5362 = vmatpush1.bf16.msra.mxu0 %v4230
      %5363 = vmatprep.subr.bf16.mxu0 %v4241
      %5364 = vmatpush1.bf16.msra.mxu0 %v4240
      %5365 = vmatprep.mubr.bf16.mxu0 %v1197
      %5366 = vmatmul.mubr.bf16.gmra.mrb[0].mxu0 %v1196
      %v5367 = vpop.f32.mrb[0].mxu0
      %v5368 = vadd.f32 %v5327, %v5367
      %v5369 = vpop.f32.mrb[0].mxu0
      %v5370 = vadd.f32 %v5329, %v5369
      %v5371 = vpop.f32.mrb[0].mxu0
      %v5372 = vpop.f32.mrb[0].mxu0
      %5373 = vdwg.mxu0
      %5374 = vmatprep.subr.bf16.mxu0 %v4251
      %5375 = vmatpush1.bf16.msra.mxu0 %v4250
      %5376 = vmatprep.subr.bf16.mxu0 %v4261
      %5377 = vmatpush1.bf16.msra.mxu0 %v4260
      %5378 = vmatprep.subr.bf16.mxu0 %v4271
      %5379 = vmatpush1.bf16.msra.mxu0 %v4270
      %5380 = vmatprep.subr.bf16.mxu0 %v4281
      %5381 = vmatpush1.bf16.msra.mxu0 %v4280
      %5382 = vmatprep.subr.bf16.mxu0 %v4291
      %5383 = vmatpush1.bf16.msra.mxu0 %v4290
      %5384 = vmatprep.subr.bf16.mxu0 %v4301
      %5385 = vmatpush1.bf16.msra.mxu0 %v4300
      %5386 = vmatprep.subr.bf16.mxu0 %v4311
      %5387 = vmatpush1.bf16.msra.mxu0 %v4310
      %5388 = vmatprep.subr.bf16.mxu0 %v4321
      %5389 = vmatpush1.bf16.msra.mxu0 %v4320
      %5390 = vmatprep.subr.bf16.mxu0 %v4331
      %5391 = vmatpush1.bf16.msra.mxu0 %v4330
      %5392 = vmatprep.subr.bf16.mxu0 %v4341
      %5393 = vmatpush1.bf16.msra.mxu0 %v4340
      %5394 = vmatprep.subr.bf16.mxu0 %v4351
      %5395 = vmatpush1.bf16.msra.mxu0 %v4350
      %5396 = vmatprep.subr.bf16.mxu0 %v4361
      %5397 = vmatpush1.bf16.msra.mxu0 %v4360
      %5398 = vmatprep.subr.bf16.mxu0 %v4371
      %5399 = vmatpush1.bf16.msra.mxu0 %v4370
      %5400 = vmatprep.subr.bf16.mxu0 %v4381
      %5401 = vmatpush1.bf16.msra.mxu0 %v4380
      %5402 = vmatprep.subr.bf16.mxu0 %v4391
      %5403 = vmatpush1.bf16.msra.mxu0 %v4390
      %5404 = vmatprep.subr.bf16.mxu0 %v4401
      %5405 = vmatpush1.bf16.msra.mxu0 %v4400
      %5406 = vmatprep.mubr.bf16.mxu0 %v1199
      %5407 = vmatmul.mubr.bf16.gmra.mrb[0].mxu0 %v1198
      %v5408 = vpop.f32.mrb[0].mxu0
      %v5409 = vadd.f32 %v5368, %v5408
      %v5410 = vpop.f32.mrb[0].mxu0
      %v5411 = vadd.f32 %v5370, %v5410
      %v5412 = vpop.f32.mrb[0].mxu0
      %v5413 = vpop.f32.mrb[0].mxu0
      %5414 = vdwg.mxu0
      %5415 = vmatprep.subr.bf16.mxu0 %v3613
      %5416 = vmatpush1.bf16.msra.mxu0 %v3612
      %5417 = vmatprep.subr.bf16.mxu0 %v3623
      %5418 = vmatpush1.bf16.msra.mxu0 %v3622
      %5419 = vmatprep.subr.bf16.mxu0 %v3633
      %5420 = vmatpush1.bf16.msra.mxu0 %v3632
      %5421 = vmatprep.subr.bf16.mxu0 %v3643
      %5422 = vmatpush1.bf16.msra.mxu0 %v3642
      %5423 = vmatprep.subr.bf16.mxu0 %v3653
      %5424 = vmatpush1.bf16.msra.mxu0 %v3652
      %5425 = vmatprep.subr.bf16.mxu0 %v3663
      %5426 = vmatpush1.bf16.msra.mxu0 %v3662
      %5427 = vmatprep.subr.bf16.mxu0 %v3673
      %5428 = vmatpush1.bf16.msra.mxu0 %v3672
      %5429 = vmatprep.subr.bf16.mxu0 %v3683
      %5430 = vmatpush1.bf16.msra.mxu0 %v3682
      %5431 = vmatprep.subr.bf16.mxu0 %v3693
      %5432 = vmatpush1.bf16.msra.mxu0 %v3692
      %5433 = vmatprep.subr.bf16.mxu0 %v3703
      %5434 = vmatpush1.bf16.msra.mxu0 %v3702
      %5435 = vmatprep.subr.bf16.mxu0 %v3713
      %5436 = vmatpush1.bf16.msra.mxu0 %v3712
      %5437 = vmatprep.subr.bf16.mxu0 %v3723
      %5438 = vmatpush1.bf16.msra.mxu0 %v3722
      %5439 = vmatprep.subr.bf16.mxu0 %v3733
      %5440 = vmatpush1.bf16.msra.mxu0 %v3732
      %5441 = vmatprep.subr.bf16.mxu0 %v3743
      %5442 = vmatpush1.bf16.msra.mxu0 %v3742
      %5443 = vmatprep.subr.bf16.mxu0 %v3753
      %5444 = vmatpush1.bf16.msra.mxu0 %v3752
      %5445 = vmatprep.subr.bf16.mxu0 %v3763
      %5446 = vmatpush1.bf16.msra.mxu0 %v3762
      %5447 = vmatprep.mubr.bf16.mxu0 %v1191
      %5448 = vmatmul.mubr.bf16.gmra.mrb[0].mxu0 %v1190
      %v5449 = vpop.f32.mrb[0].mxu0
      %v5450 = vadd.f32 0.0, %v5449
      %v5451 = vpop.f32.mrb[0].mxu0
      %v5452 = vadd.f32 0.0, %v5451
      %v5453 = vpop.f32.mrb[0].mxu0
      %v5454 = vpop.f32.mrb[0].mxu0
      %5455 = vdwg.mxu0
      %5456 = vmatprep.subr.bf16.mxu0 %v3773
      %5457 = vmatpush1.bf16.msra.mxu0 %v3772
      %5458 = vmatprep.subr.bf16.mxu0 %v3783
      %5459 = vmatpush1.bf16.msra.mxu0 %v3782
      %5460 = vmatprep.subr.bf16.mxu0 %v3793
      %5461 = vmatpush1.bf16.msra.mxu0 %v3792
      %5462 = vmatprep.subr.bf16.mxu0 %v3803
      %5463 = vmatpush1.bf16.msra.mxu0 %v3802
      %5464 = vmatprep.subr.bf16.mxu0 %v3813
      %5465 = vmatpush1.bf16.msra.mxu0 %v3812
      %5466 = vmatprep.subr.bf16.mxu0 %v3823
      %5467 = vmatpush1.bf16.msra.mxu0 %v3822
      %5468 = vmatprep.subr.bf16.mxu0 %v3833
      %5469 = vmatpush1.bf16.msra.mxu0 %v3832
      %5470 = vmatprep.subr.bf16.mxu0 %v3843
      %5471 = vmatpush1.bf16.msra.mxu0 %v3842
      %5472 = vmatprep.subr.bf16.mxu0 %v3853
      %5473 = vmatpush1.bf16.msra.mxu0 %v3852
      %5474 = vmatprep.subr.bf16.mxu0 %v3863
      %5475 = vmatpush1.bf16.msra.mxu0 %v3862
      %5476 = vmatprep.subr.bf16.mxu0 %v3873
      %5477 = vmatpush1.bf16.msra.mxu0 %v3872
      %5478 = vmatprep.subr.bf16.mxu0 %v3883
      %5479 = vmatpush1.bf16.msra.mxu0 %v3882
      %5480 = vmatprep.subr.bf16.mxu0 %v3893
      %5481 = vmatpush1.bf16.msra.mxu0 %v3892
      %5482 = vmatprep.subr.bf16.mxu0 %v3903
      %5483 = vmatpush1.bf16.msra.mxu0 %v3902
      %5484 = vmatprep.subr.bf16.mxu0 %v3913
      %5485 = vmatpush1.bf16.msra.mxu0 %v3912
      %5486 = vmatprep.subr.bf16.mxu0 %v3923
      %5487 = vmatpush1.bf16.msra.mxu0 %v3922
      %5488 = vmatprep.mubr.bf16.mxu0 %v1193
      %5489 = vmatmul.mubr.bf16.gmra.mrb[0].mxu0 %v1192
      %v5490 = vpop.f32.mrb[0].mxu0
      %v5491 = vadd.f32 %v5450, %v5490
      %v5492 = vpop.f32.mrb[0].mxu0
      %v5493 = vadd.f32 %v5452, %v5492
      %v5494 = vpop.f32.mrb[0].mxu0
      %v5495 = vpop.f32.mrb[0].mxu0
      %5496 = vdwg.mxu0
      %5497 = vmatprep.subr.bf16.mxu0 %v3933
      %5498 = vmatpush1.bf16.msra.mxu0 %v3932
      %5499 = vmatprep.subr.bf16.mxu0 %v3943
      %5500 = vmatpush1.bf16.msra.mxu0 %v3942
      %5501 = vmatprep.subr.bf16.mxu0 %v3953
      %5502 = vmatpush1.bf16.msra.mxu0 %v3952
      %5503 = vmatprep.subr.bf16.mxu0 %v3963
      %5504 = vmatpush1.bf16.msra.mxu0 %v3962
      %5505 = vmatprep.subr.bf16.mxu0 %v3973
      %5506 = vmatpush1.bf16.msra.mxu0 %v3972
      %5507 = vmatprep.subr.bf16.mxu0 %v3983
      %5508 = vmatpush1.bf16.msra.mxu0 %v3982
      %5509 = vmatprep.subr.bf16.mxu0 %v3993
      %5510 = vmatpush1.bf16.msra.mxu0 %v3992
      %5511 = vmatprep.subr.bf16.mxu0 %v4003
      %5512 = vmatpush1.bf16.msra.mxu0 %v4002
      %5513 = vmatprep.subr.bf16.mxu0 %v4013
      %5514 = vmatpush1.bf16.msra.mxu0 %v4012
      %5515 = vmatprep.subr.bf16.mxu0 %v4023
      %5516 = vmatpush1.bf16.msra.mxu0 %v4022
      %5517 = vmatprep.subr.bf16.mxu0 %v4033
      %5518 = vmatpush1.bf16.msra.mxu0 %v4032
      %5519 = vmatprep.subr.bf16.mxu0 %v4043
      %5520 = vmatpush1.bf16.msra.mxu0 %v4042
      %5521 = vmatprep.subr.bf16.mxu0 %v4053
      %5522 = vmatpush1.bf16.msra.mxu0 %v4052
      %5523 = vmatprep.subr.bf16.mxu0 %v4063
      %5524 = vmatpush1.bf16.msra.mxu0 %v4062
      %5525 = vmatprep.subr.bf16.mxu0 %v4073
      %5526 = vmatpush1.bf16.msra.mxu0 %v4072
      %5527 = vmatprep.subr.bf16.mxu0 %v4083
      %5528 = vmatpush1.bf16.msra.mxu0 %v4082
      %5529 = vmatprep.mubr.bf16.mxu0 %v1195
      %5530 = vmatmul.mubr.bf16.gmra.mrb[0].mxu0 %v1194
      %v5531 = vpop.f32.mrb[0].mxu0
      %v5532 = vadd.f32 %v5491, %v5531
      %v5533 = vpop.f32.mrb[0].mxu0
      %v5534 = vadd.f32 %v5493, %v5533
      %v5535 = vpop.f32.mrb[0].mxu0
      %v5536 = vpop.f32.mrb[0].mxu0
      %5537 = vdwg.mxu0
      %5538 = vmatprep.subr.bf16.mxu0 %v4093
      %5539 = vmatpush1.bf16.msra.mxu0 %v4092
      %5540 = vmatprep.subr.bf16.mxu0 %v4103
      %5541 = vmatpush1.bf16.msra.mxu0 %v4102
      %5542 = vmatprep.subr.bf16.mxu0 %v4113
      %5543 = vmatpush1.bf16.msra.mxu0 %v4112
      %5544 = vmatprep.subr.bf16.mxu0 %v4123
      %5545 = vmatpush1.bf16.msra.mxu0 %v4122
      %5546 = vmatprep.subr.bf16.mxu0 %v4133
      %5547 = vmatpush1.bf16.msra.mxu0 %v4132
      %5548 = vmatprep.subr.bf16.mxu0 %v4143
      %5549 = vmatpush1.bf16.msra.mxu0 %v4142
      %5550 = vmatprep.subr.bf16.mxu0 %v4153
      %5551 = vmatpush1.bf16.msra.mxu0 %v4152
      %5552 = vmatprep.subr.bf16.mxu0 %v4163
      %5553 = vmatpush1.bf16.msra.mxu0 %v4162
      %5554 = vmatprep.subr.bf16.mxu0 %v4173
      %5555 = vmatpush1.bf16.msra.mxu0 %v4172
      %5556 = vmatprep.subr.bf16.mxu0 %v4183
      %5557 = vmatpush1.bf16.msra.mxu0 %v4182
      %5558 = vmatprep.subr.bf16.mxu0 %v4193
      %5559 = vmatpush1.bf16.msra.mxu0 %v4192
      %5560 = vmatprep.subr.bf16.mxu0 %v4203
      %5561 = vmatpush1.bf16.msra.mxu0 %v4202
      %5562 = vmatprep.subr.bf16.mxu0 %v4213
      %5563 = vmatpush1.bf16.msra.mxu0 %v4212
      %5564 = vmatprep.subr.bf16.mxu0 %v4223
      %5565 = vmatpush1.bf16.msra.mxu0 %v4222
      %5566 = vmatprep.subr.bf16.mxu0 %v4233
      %5567 = vmatpush1.bf16.msra.mxu0 %v4232
      %5568 = vmatprep.subr.bf16.mxu0 %v4243
      %5569 = vmatpush1.bf16.msra.mxu0 %v4242
      %5570 = vmatprep.mubr.bf16.mxu0 %v1197
      %5571 = vmatmul.mubr.bf16.gmra.mrb[0].mxu0 %v1196
      %v5572 = vpop.f32.mrb[0].mxu0
      %v5573 = vadd.f32 %v5532, %v5572
      %v5574 = vpop.f32.mrb[0].mxu0
      %v5575 = vadd.f32 %v5534, %v5574
      %v5576 = vpop.f32.mrb[0].mxu0
      %v5577 = vpop.f32.mrb[0].mxu0
      %5578 = vdwg.mxu0
      %5579 = vmatprep.subr.bf16.mxu0 %v4253
      %5580 = vmatpush1.bf16.msra.mxu0 %v4252
      %5581 = vmatprep.subr.bf16.mxu0 %v4263
      %5582 = vmatpush1.bf16.msra.mxu0 %v4262
      %5583 = vmatprep.subr.bf16.mxu0 %v4273
      %5584 = vmatpush1.bf16.msra.mxu0 %v4272
      %5585 = vmatprep.subr.bf16.mxu0 %v4283
      %5586 = vmatpush1.bf16.msra.mxu0 %v4282
      %5587 = vmatprep.subr.bf16.mxu0 %v4293
      %5588 = vmatpush1.bf16.msra.mxu0 %v4292
      %5589 = vmatprep.subr.bf16.mxu0 %v4303
      %5590 = vmatpush1.bf16.msra.mxu0 %v4302
      %5591 = vmatprep.subr.bf16.mxu0 %v4313
      %5592 = vmatpush1.bf16.msra.mxu0 %v4312
      %5593 = vmatprep.subr.bf16.mxu0 %v4323
      %5594 = vmatpush1.bf16.msra.mxu0 %v4322
      %5595 = vmatprep.subr.bf16.mxu0 %v4333
      %5596 = vmatpush1.bf16.msra.mxu0 %v4332
      %5597 = vmatprep.subr.bf16.mxu0 %v4343
      %5598 = vmatpush1.bf16.msra.mxu0 %v4342
      %5599 = vmatprep.subr.bf16.mxu0 %v4353
      %5600 = vmatpush1.bf16.msra.mxu0 %v4352
      %5601 = vmatprep.subr.bf16.mxu0 %v4363
      %5602 = vmatpush1.bf16.msra.mxu0 %v4362
      %5603 = vmatprep.subr.bf16.mxu0 %v4373
      %5604 = vmatpush1.bf16.msra.mxu0 %v4372
      %5605 = vmatprep.subr.bf16.mxu0 %v4383
      %5606 = vmatpush1.bf16.msra.mxu0 %v4382
      %5607 = vmatprep.subr.bf16.mxu0 %v4393
      %5608 = vmatpush1.bf16.msra.mxu0 %v4392
      %5609 = vmatprep.subr.bf16.mxu0 %v4403
      %5610 = vmatpush1.bf16.msra.mxu0 %v4402
      %5611 = vmatprep.mubr.bf16.mxu0 %v1199
      %5612 = vmatmul.mubr.bf16.gmra.mrb[0].mxu0 %v1198
      %v5613 = vpop.f32.mrb[0].mxu0
      %v5614 = vadd.f32 %v5573, %v5613
      %v5615 = vpop.f32.mrb[0].mxu0
      %v5616 = vadd.f32 %v5575, %v5615
      %v5617 = vpop.f32.mrb[0].mxu0
      %v5618 = vpop.f32.mrb[0].mxu0
      %5619 = vdwg.mxu0
      %5620 = vmatprep.subr.bf16.mxu0 %v3615
      %5621 = vmatpush1.bf16.msra.mxu0 %v3614
      %5622 = vmatprep.subr.bf16.mxu0 %v3625
      %5623 = vmatpush1.bf16.msra.mxu0 %v3624
      %5624 = vmatprep.subr.bf16.mxu0 %v3635
      %5625 = vmatpush1.bf16.msra.mxu0 %v3634
      %5626 = vmatprep.subr.bf16.mxu0 %v3645
      %5627 = vmatpush1.bf16.msra.mxu0 %v3644
      %5628 = vmatprep.subr.bf16.mxu0 %v3655
      %5629 = vmatpush1.bf16.msra.mxu0 %v3654
      %5630 = vmatprep.subr.bf16.mxu0 %v3665
      %5631 = vmatpush1.bf16.msra.mxu0 %v3664
      %5632 = vmatprep.subr.bf16.mxu0 %v3675
      %5633 = vmatpush1.bf16.msra.mxu0 %v3674
      %5634 = vmatprep.subr.bf16.mxu0 %v3685
      %5635 = vmatpush1.bf16.msra.mxu0 %v3684
      %5636 = vmatprep.subr.bf16.mxu0 %v3695
      %5637 = vmatpush1.bf16.msra.mxu0 %v3694
      %5638 = vmatprep.subr.bf16.mxu0 %v3705
      %5639 = vmatpush1.bf16.msra.mxu0 %v3704
      %5640 = vmatprep.subr.bf16.mxu0 %v3715
      %5641 = vmatpush1.bf16.msra.mxu0 %v3714
      %5642 = vmatprep.subr.bf16.mxu0 %v3725
      %5643 = vmatpush1.bf16.msra.mxu0 %v3724
      %5644 = vmatprep.subr.bf16.mxu0 %v3735
      %5645 = vmatpush1.bf16.msra.mxu0 %v3734
      %5646 = vmatprep.subr.bf16.mxu0 %v3745
      %5647 = vmatpush1.bf16.msra.mxu0 %v3744
      %5648 = vmatprep.subr.bf16.mxu0 %v3755
      %5649 = vmatpush1.bf16.msra.mxu0 %v3754
      %5650 = vmatprep.subr.bf16.mxu0 %v3765
      %5651 = vmatpush1.bf16.msra.mxu0 %v3764
      %5652 = vmatprep.mubr.bf16.mxu0 %v1191
      %5653 = vmatmul.mubr.bf16.gmra.mrb[0].mxu0 %v1190
      %v5654 = vpop.f32.mrb[0].mxu0
      %v5655 = vadd.f32 0.0, %v5654
      %v5656 = vpop.f32.mrb[0].mxu0
      %v5657 = vadd.f32 0.0, %v5656
      %v5658 = vpop.f32.mrb[0].mxu0
      %v5659 = vpop.f32.mrb[0].mxu0
      %5660 = vdwg.mxu0
      %5661 = vmatprep.subr.bf16.mxu0 %v3775
      %5662 = vmatpush1.bf16.msra.mxu0 %v3774
      %5663 = vmatprep.subr.bf16.mxu0 %v3785
      %5664 = vmatpush1.bf16.msra.mxu0 %v3784
      %5665 = vmatprep.subr.bf16.mxu0 %v3795
      %5666 = vmatpush1.bf16.msra.mxu0 %v3794
      %5667 = vmatprep.subr.bf16.mxu0 %v3805
      %5668 = vmatpush1.bf16.msra.mxu0 %v3804
      %5669 = vmatprep.subr.bf16.mxu0 %v3815
      %5670 = vmatpush1.bf16.msra.mxu0 %v3814
      %5671 = vmatprep.subr.bf16.mxu0 %v3825
      %5672 = vmatpush1.bf16.msra.mxu0 %v3824
      %5673 = vmatprep.subr.bf16.mxu0 %v3835
      %5674 = vmatpush1.bf16.msra.mxu0 %v3834
      %5675 = vmatprep.subr.bf16.mxu0 %v3845
      %5676 = vmatpush1.bf16.msra.mxu0 %v3844
      %5677 = vmatprep.subr.bf16.mxu0 %v3855
      %5678 = vmatpush1.bf16.msra.mxu0 %v3854
      %5679 = vmatprep.subr.bf16.mxu0 %v3865
      %5680 = vmatpush1.bf16.msra.mxu0 %v3864
      %5681 = vmatprep.subr.bf16.mxu0 %v3875
      %5682 = vmatpush1.bf16.msra.mxu0 %v3874
      %5683 = vmatprep.subr.bf16.mxu0 %v3885
      %5684 = vmatpush1.bf16.msra.mxu0 %v3884
      %5685 = vmatprep.subr.bf16.mxu0 %v3895
      %5686 = vmatpush1.bf16.msra.mxu0 %v3894
      %5687 = vmatprep.subr.bf16.mxu0 %v3905
      %5688 = vmatpush1.bf16.msra.mxu0 %v3904
      %5689 = vmatprep.subr.bf16.mxu0 %v3915
      %5690 = vmatpush1.bf16.msra.mxu0 %v3914
      %5691 = vmatprep.subr.bf16.mxu0 %v3925
      %5692 = vmatpush1.bf16.msra.mxu0 %v3924
      %5693 = vmatprep.mubr.bf16.mxu0 %v1193
      %5694 = vmatmul.mubr.bf16.gmra.mrb[0].mxu0 %v1192
      %v5695 = vpop.f32.mrb[0].mxu0
      %v5696 = vadd.f32 %v5655, %v5695
      %v5697 = vpop.f32.mrb[0].mxu0
      %v5698 = vadd.f32 %v5657, %v5697
      %v5699 = vpop.f32.mrb[0].mxu0
      %v5700 = vpop.f32.mrb[0].mxu0
      %5701 = vdwg.mxu0
      %5702 = vmatprep.subr.bf16.mxu0 %v3935
      %5703 = vmatpush1.bf16.msra.mxu0 %v3934
      %5704 = vmatprep.subr.bf16.mxu0 %v3945
      %5705 = vmatpush1.bf16.msra.mxu0 %v3944
      %5706 = vmatprep.subr.bf16.mxu0 %v3955
      %5707 = vmatpush1.bf16.msra.mxu0 %v3954
      %5708 = vmatprep.subr.bf16.mxu0 %v3965
      %5709 = vmatpush1.bf16.msra.mxu0 %v3964
      %5710 = vmatprep.subr.bf16.mxu0 %v3975
      %5711 = vmatpush1.bf16.msra.mxu0 %v3974
      %5712 = vmatprep.subr.bf16.mxu0 %v3985
      %5713 = vmatpush1.bf16.msra.mxu0 %v3984
      %5714 = vmatprep.subr.bf16.mxu0 %v3995
      %5715 = vmatpush1.bf16.msra.mxu0 %v3994
      %5716 = vmatprep.subr.bf16.mxu0 %v4005
      %5717 = vmatpush1.bf16.msra.mxu0 %v4004
      %5718 = vmatprep.subr.bf16.mxu0 %v4015
      %5719 = vmatpush1.bf16.msra.mxu0 %v4014
      %5720 = vmatprep.subr.bf16.mxu0 %v4025
      %5721 = vmatpush1.bf16.msra.mxu0 %v4024
      %5722 = vmatprep.subr.bf16.mxu0 %v4035
      %5723 = vmatpush1.bf16.msra.mxu0 %v4034
      %5724 = vmatprep.subr.bf16.mxu0 %v4045
      %5725 = vmatpush1.bf16.msra.mxu0 %v4044
      %5726 = vmatprep.subr.bf16.mxu0 %v4055
      %5727 = vmatpush1.bf16.msra.mxu0 %v4054
      %5728 = vmatprep.subr.bf16.mxu0 %v4065
      %5729 = vmatpush1.bf16.msra.mxu0 %v4064
      %5730 = vmatprep.subr.bf16.mxu0 %v4075
      %5731 = vmatpush1.bf16.msra.mxu0 %v4074
      %5732 = vmatprep.subr.bf16.mxu0 %v4085
      %5733 = vmatpush1.bf16.msra.mxu0 %v4084
      %5734 = vmatprep.mubr.bf16.mxu0 %v1195
      %5735 = vmatmul.mubr.bf16.gmra.mrb[0].mxu0 %v1194
      %v5736 = vpop.f32.mrb[0].mxu0
      %v5737 = vadd.f32 %v5696, %v5736
      %v5738 = vpop.f32.mrb[0].mxu0
      %v5739 = vadd.f32 %v5698, %v5738
      %v5740 = vpop.f32.mrb[0].mxu0
      %v5741 = vpop.f32.mrb[0].mxu0
      %5742 = vdwg.mxu0
      %5743 = vmatprep.subr.bf16.mxu0 %v4095
      %5744 = vmatpush1.bf16.msra.mxu0 %v4094
      %5745 = vmatprep.subr.bf16.mxu0 %v4105
      %5746 = vmatpush1.bf16.msra.mxu0 %v4104
      %5747 = vmatprep.subr.bf16.mxu0 %v4115
      %5748 = vmatpush1.bf16.msra.mxu0 %v4114
      %5749 = vmatprep.subr.bf16.mxu0 %v4125
      %5750 = vmatpush1.bf16.msra.mxu0 %v4124
      %5751 = vmatprep.subr.bf16.mxu0 %v4135
      %5752 = vmatpush1.bf16.msra.mxu0 %v4134
      %5753 = vmatprep.subr.bf16.mxu0 %v4145
      %5754 = vmatpush1.bf16.msra.mxu0 %v4144
      %5755 = vmatprep.subr.bf16.mxu0 %v4155
      %5756 = vmatpush1.bf16.msra.mxu0 %v4154
      %5757 = vmatprep.subr.bf16.mxu0 %v4165
      %5758 = vmatpush1.bf16.msra.mxu0 %v4164
      %5759 = vmatprep.subr.bf16.mxu0 %v4175
      %5760 = vmatpush1.bf16.msra.mxu0 %v4174
      %5761 = vmatprep.subr.bf16.mxu0 %v4185
      %5762 = vmatpush1.bf16.msra.mxu0 %v4184
      %5763 = vmatprep.subr.bf16.mxu0 %v4195
      %5764 = vmatpush1.bf16.msra.mxu0 %v4194
      %5765 = vmatprep.subr.bf16.mxu0 %v4205
      %5766 = vmatpush1.bf16.msra.mxu0 %v4204
      %5767 = vmatprep.subr.bf16.mxu0 %v4215
      %5768 = vmatpush1.bf16.msra.mxu0 %v4214
      %5769 = vmatprep.subr.bf16.mxu0 %v4225
      %5770 = vmatpush1.bf16.msra.mxu0 %v4224
      %5771 = vmatprep.subr.bf16.mxu0 %v4235
      %5772 = vmatpush1.bf16.msra.mxu0 %v4234
      %5773 = vmatprep.subr.bf16.mxu0 %v4245
      %5774 = vmatpush1.bf16.msra.mxu0 %v4244
      %5775 = vmatprep.mubr.bf16.mxu0 %v1197
      %5776 = vmatmul.mubr.bf16.gmra.mrb[0].mxu0 %v1196
      %v5777 = vpop.f32.mrb[0].mxu0
      %v5778 = vadd.f32 %v5737, %v5777
      %v5779 = vpop.f32.mrb[0].mxu0
      %v5780 = vadd.f32 %v5739, %v5779
      %v5781 = vpop.f32.mrb[0].mxu0
      %v5782 = vpop.f32.mrb[0].mxu0
      %5783 = vdwg.mxu0
      %5784 = vmatprep.subr.bf16.mxu0 %v4255
      %5785 = vmatpush1.bf16.msra.mxu0 %v4254
      %5786 = vmatprep.subr.bf16.mxu0 %v4265
      %5787 = vmatpush1.bf16.msra.mxu0 %v4264
      %5788 = vmatprep.subr.bf16.mxu0 %v4275
      %5789 = vmatpush1.bf16.msra.mxu0 %v4274
      %5790 = vmatprep.subr.bf16.mxu0 %v4285
      %5791 = vmatpush1.bf16.msra.mxu0 %v4284
      %5792 = vmatprep.subr.bf16.mxu0 %v4295
      %5793 = vmatpush1.bf16.msra.mxu0 %v4294
      %5794 = vmatprep.subr.bf16.mxu0 %v4305
      %5795 = vmatpush1.bf16.msra.mxu0 %v4304
      %5796 = vmatprep.subr.bf16.mxu0 %v4315
      %5797 = vmatpush1.bf16.msra.mxu0 %v4314
      %5798 = vmatprep.subr.bf16.mxu0 %v4325
      %5799 = vmatpush1.bf16.msra.mxu0 %v4324
      %5800 = vmatprep.subr.bf16.mxu0 %v4335
      %5801 = vmatpush1.bf16.msra.mxu0 %v4334
      %5802 = vmatprep.subr.bf16.mxu0 %v4345
      %5803 = vmatpush1.bf16.msra.mxu0 %v4344
      %5804 = vmatprep.subr.bf16.mxu0 %v4355
      %5805 = vmatpush1.bf16.msra.mxu0 %v4354
      %5806 = vmatprep.subr.bf16.mxu0 %v4365
      %5807 = vmatpush1.bf16.msra.mxu0 %v4364
      %5808 = vmatprep.subr.bf16.mxu0 %v4375
      %5809 = vmatpush1.bf16.msra.mxu0 %v4374
      %5810 = vmatprep.subr.bf16.mxu0 %v4385
      %5811 = vmatpush1.bf16.msra.mxu0 %v4384
      %5812 = vmatprep.subr.bf16.mxu0 %v4395
      %5813 = vmatpush1.bf16.msra.mxu0 %v4394
      %5814 = vmatprep.subr.bf16.mxu0 %v4405
      %5815 = vmatpush1.bf16.msra.mxu0 %v4404
      %5816 = vmatprep.mubr.bf16.mxu0 %v1199
      %5817 = vmatmul.mubr.bf16.gmra.mrb[0].mxu0 %v1198
      %v5818 = vpop.f32.mrb[0].mxu0
      %v5819 = vadd.f32 %v5778, %v5818
      %v5820 = vpop.f32.mrb[0].mxu0
      %v5821 = vadd.f32 %v5780, %v5820
      %v5822 = vpop.f32.mrb[0].mxu0
      %v5823 = vpop.f32.mrb[0].mxu0
      %5824 = vdwg.mxu0
      %5825 = vmatprep.subr.bf16.mxu0 %v3617
      %5826 = vmatpush1.bf16.msra.mxu0 %v3616
      %5827 = vmatprep.subr.bf16.mxu0 %v3627
      %5828 = vmatpush1.bf16.msra.mxu0 %v3626
      %5829 = vmatprep.subr.bf16.mxu0 %v3637
      %5830 = vmatpush1.bf16.msra.mxu0 %v3636
      %5831 = vmatprep.subr.bf16.mxu0 %v3647
      %5832 = vmatpush1.bf16.msra.mxu0 %v3646
      %5833 = vmatprep.subr.bf16.mxu0 %v3657
      %5834 = vmatpush1.bf16.msra.mxu0 %v3656
      %5835 = vmatprep.subr.bf16.mxu0 %v3667
      %5836 = vmatpush1.bf16.msra.mxu0 %v3666
      %5837 = vmatprep.subr.bf16.mxu0 %v3677
      %5838 = vmatpush1.bf16.msra.mxu0 %v3676
      %5839 = vmatprep.subr.bf16.mxu0 %v3687
      %5840 = vmatpush1.bf16.msra.mxu0 %v3686
      %5841 = vmatprep.subr.bf16.mxu0 %v3697
      %5842 = vmatpush1.bf16.msra.mxu0 %v3696
      %5843 = vmatprep.subr.bf16.mxu0 %v3707
      %5844 = vmatpush1.bf16.msra.mxu0 %v3706
      %5845 = vmatprep.subr.bf16.mxu0 %v3717
      %5846 = vmatpush1.bf16.msra.mxu0 %v3716
      %5847 = vmatprep.subr.bf16.mxu0 %v3727
      %5848 = vmatpush1.bf16.msra.mxu0 %v3726
      %5849 = vmatprep.subr.bf16.mxu0 %v3737
      %5850 = vmatpush1.bf16.msra.mxu0 %v3736
      %5851 = vmatprep.subr.bf16.mxu0 %v3747
      %5852 = vmatpush1.bf16.msra.mxu0 %v3746
      %5853 = vmatprep.subr.bf16.mxu0 %v3757
      %5854 = vmatpush1.bf16.msra.mxu0 %v3756
      %5855 = vmatprep.subr.bf16.mxu0 %v3767
      %5856 = vmatpush1.bf16.msra.mxu0 %v3766
      %5857 = vmatprep.mubr.bf16.mxu0 %v1191
      %5858 = vmatmul.mubr.bf16.gmra.mrb[0].mxu0 %v1190
      %v5859 = vpop.f32.mrb[0].mxu0
      %v5860 = vadd.f32 0.0, %v5859
      %v5861 = vpop.f32.mrb[0].mxu0
      %v5862 = vadd.f32 0.0, %v5861
      %v5863 = vpop.f32.mrb[0].mxu0
      %v5864 = vpop.f32.mrb[0].mxu0
      %5865 = vdwg.mxu0
      %5866 = vmatprep.subr.bf16.mxu0 %v3777
      %5867 = vmatpush1.bf16.msra.mxu0 %v3776
      %5868 = vmatprep.subr.bf16.mxu0 %v3787
      %5869 = vmatpush1.bf16.msra.mxu0 %v3786
      %5870 = vmatprep.subr.bf16.mxu0 %v3797
      %5871 = vmatpush1.bf16.msra.mxu0 %v3796
      %5872 = vmatprep.subr.bf16.mxu0 %v3807
      %5873 = vmatpush1.bf16.msra.mxu0 %v3806
      %5874 = vmatprep.subr.bf16.mxu0 %v3817
      %5875 = vmatpush1.bf16.msra.mxu0 %v3816
      %5876 = vmatprep.subr.bf16.mxu0 %v3827
      %5877 = vmatpush1.bf16.msra.mxu0 %v3826
      %5878 = vmatprep.subr.bf16.mxu0 %v3837
      %5879 = vmatpush1.bf16.msra.mxu0 %v3836
      %5880 = vmatprep.subr.bf16.mxu0 %v3847
      %5881 = vmatpush1.bf16.msra.mxu0 %v3846
      %5882 = vmatprep.subr.bf16.mxu0 %v3857
      %5883 = vmatpush1.bf16.msra.mxu0 %v3856
      %5884 = vmatprep.subr.bf16.mxu0 %v3867
      %5885 = vmatpush1.bf16.msra.mxu0 %v3866
      %5886 = vmatprep.subr.bf16.mxu0 %v3877
      %5887 = vmatpush1.bf16.msra.mxu0 %v3876
      %5888 = vmatprep.subr.bf16.mxu0 %v3887
      %5889 = vmatpush1.bf16.msra.mxu0 %v3886
      %5890 = vmatprep.subr.bf16.mxu0 %v3897
      %5891 = vmatpush1.bf16.msra.mxu0 %v3896
      %5892 = vmatprep.subr.bf16.mxu0 %v3907
      %5893 = vmatpush1.bf16.msra.mxu0 %v3906
      %5894 = vmatprep.subr.bf16.mxu0 %v3917
      %5895 = vmatpush1.bf16.msra.mxu0 %v3916
      %5896 = vmatprep.subr.bf16.mxu0 %v3927
      %5897 = vmatpush1.bf16.msra.mxu0 %v3926
      %5898 = vmatprep.mubr.bf16.mxu0 %v1193
      %5899 = vmatmul.mubr.bf16.gmra.mrb[0].mxu0 %v1192
      %v5900 = vpop.f32.mrb[0].mxu0
      %v5901 = vadd.f32 %v5860, %v5900
      %v5902 = vpop.f32.mrb[0].mxu0
      %v5903 = vadd.f32 %v5862, %v5902
      %v5904 = vpop.f32.mrb[0].mxu0
      %v5905 = vpop.f32.mrb[0].mxu0
      %5906 = vdwg.mxu0
      %5907 = vmatprep.subr.bf16.mxu0 %v3937
      %5908 = vmatpush1.bf16.msra.mxu0 %v3936
      %5909 = vmatprep.subr.bf16.mxu0 %v3947
      %5910 = vmatpush1.bf16.msra.mxu0 %v3946
      %5911 = vmatprep.subr.bf16.mxu0 %v3957
      %5912 = vmatpush1.bf16.msra.mxu0 %v3956
      %5913 = vmatprep.subr.bf16.mxu0 %v3967
      %5914 = vmatpush1.bf16.msra.mxu0 %v3966
      %5915 = vmatprep.subr.bf16.mxu0 %v3977
      %5916 = vmatpush1.bf16.msra.mxu0 %v3976
      %5917 = vmatprep.subr.bf16.mxu0 %v3987
      %5918 = vmatpush1.bf16.msra.mxu0 %v3986
      %5919 = vmatprep.subr.bf16.mxu0 %v3997
      %5920 = vmatpush1.bf16.msra.mxu0 %v3996
      %5921 = vmatprep.subr.bf16.mxu0 %v4007
      %5922 = vmatpush1.bf16.msra.mxu0 %v4006
      %5923 = vmatprep.subr.bf16.mxu0 %v4017
      %5924 = vmatpush1.bf16.msra.mxu0 %v4016
      %5925 = vmatprep.subr.bf16.mxu0 %v4027
      %5926 = vmatpush1.bf16.msra.mxu0 %v4026
      %5927 = vmatprep.subr.bf16.mxu0 %v4037
      %5928 = vmatpush1.bf16.msra.mxu0 %v4036
      %5929 = vmatprep.subr.bf16.mxu0 %v4047
      %5930 = vmatpush1.bf16.msra.mxu0 %v4046
      %5931 = vmatprep.subr.bf16.mxu0 %v4057
      %5932 = vmatpush1.bf16.msra.mxu0 %v4056
      %5933 = vmatprep.subr.bf16.mxu0 %v4067
      %5934 = vmatpush1.bf16.msra.mxu0 %v4066
      %5935 = vmatprep.subr.bf16.mxu0 %v4077
      %5936 = vmatpush1.bf16.msra.mxu0 %v4076
      %5937 = vmatprep.subr.bf16.mxu0 %v4087
      %5938 = vmatpush1.bf16.msra.mxu0 %v4086
      %5939 = vmatprep.mubr.bf16.mxu0 %v1195
      %5940 = vmatmul.mubr.bf16.gmra.mrb[0].mxu0 %v1194
      %v5941 = vpop.f32.mrb[0].mxu0
      %v5942 = vadd.f32 %v5901, %v5941
      %v5943 = vpop.f32.mrb[0].mxu0
      %v5944 = vadd.f32 %v5903, %v5943
      %v5945 = vpop.f32.mrb[0].mxu0
      %v5946 = vpop.f32.mrb[0].mxu0
      %5947 = vdwg.mxu0
      %5948 = vmatprep.subr.bf16.mxu0 %v4097
      %5949 = vmatpush1.bf16.msra.mxu0 %v4096
      %5950 = vmatprep.subr.bf16.mxu0 %v4107
      %5951 = vmatpush1.bf16.msra.mxu0 %v4106
      %5952 = vmatprep.subr.bf16.mxu0 %v4117
      %5953 = vmatpush1.bf16.msra.mxu0 %v4116
      %5954 = vmatprep.subr.bf16.mxu0 %v4127
      %5955 = vmatpush1.bf16.msra.mxu0 %v4126
      %5956 = vmatprep.subr.bf16.mxu0 %v4137
      %5957 = vmatpush1.bf16.msra.mxu0 %v4136
      %5958 = vmatprep.subr.bf16.mxu0 %v4147
      %5959 = vmatpush1.bf16.msra.mxu0 %v4146
      %5960 = vmatprep.subr.bf16.mxu0 %v4157
      %5961 = vmatpush1.bf16.msra.mxu0 %v4156
      %5962 = vmatprep.subr.bf16.mxu0 %v4167
      %5963 = vmatpush1.bf16.msra.mxu0 %v4166
      %5964 = vmatprep.subr.bf16.mxu0 %v4177
      %5965 = vmatpush1.bf16.msra.mxu0 %v4176
      %5966 = vmatprep.subr.bf16.mxu0 %v4187
      %5967 = vmatpush1.bf16.msra.mxu0 %v4186
      %5968 = vmatprep.subr.bf16.mxu0 %v4197
      %5969 = vmatpush1.bf16.msra.mxu0 %v4196
      %5970 = vmatprep.subr.bf16.mxu0 %v4207
      %5971 = vmatpush1.bf16.msra.mxu0 %v4206
      %5972 = vmatprep.subr.bf16.mxu0 %v4217
      %5973 = vmatpush1.bf16.msra.mxu0 %v4216
      %5974 = vmatprep.subr.bf16.mxu0 %v4227
      %5975 = vmatpush1.bf16.msra.mxu0 %v4226
      %5976 = vmatprep.subr.bf16.mxu0 %v4237
      %5977 = vmatpush1.bf16.msra.mxu0 %v4236
      %5978 = vmatprep.subr.bf16.mxu0 %v4247
      %5979 = vmatpush1.bf16.msra.mxu0 %v4246
      %5980 = vmatprep.mubr.bf16.mxu0 %v1197
      %5981 = vmatmul.mubr.bf16.gmra.mrb[0].mxu0 %v1196
      %v5982 = vpop.f32.mrb[0].mxu0
      %v5983 = vadd.f32 %v5942, %v5982
      %v5984 = vpop.f32.mrb[0].mxu0
      %v5985 = vadd.f32 %v5944, %v5984
      %v5986 = vpop.f32.mrb[0].mxu0
      %v5987 = vpop.f32.mrb[0].mxu0
      %5988 = vdwg.mxu0
      %5989 = vmatprep.subr.bf16.mxu0 %v4257
      %5990 = vmatpush1.bf16.msra.mxu0 %v4256
      %5991 = vmatprep.subr.bf16.mxu0 %v4267
      %5992 = vmatpush1.bf16.msra.mxu0 %v4266
      %5993 = vmatprep.subr.bf16.mxu0 %v4277
      %5994 = vmatpush1.bf16.msra.mxu0 %v4276
      %5995 = vmatprep.subr.bf16.mxu0 %v4287
      %5996 = vmatpush1.bf16.msra.mxu0 %v4286
      %5997 = vmatprep.subr.bf16.mxu0 %v4297
      %5998 = vmatpush1.bf16.msra.mxu0 %v4296
      %5999 = vmatprep.subr.bf16.mxu0 %v4307
      %6000 = vmatpush1.bf16.msra.mxu0 %v4306
      %6001 = vmatprep.subr.bf16.mxu0 %v4317
      %6002 = vmatpush1.bf16.msra.mxu0 %v4316
      %6003 = vmatprep.subr.bf16.mxu0 %v4327
      %6004 = vmatpush1.bf16.msra.mxu0 %v4326
      %6005 = vmatprep.subr.bf16.mxu0 %v4337
      %6006 = vmatpush1.bf16.msra.mxu0 %v4336
      %6007 = vmatprep.subr.bf16.mxu0 %v4347
      %6008 = vmatpush1.bf16.msra.mxu0 %v4346
      %6009 = vmatprep.subr.bf16.mxu0 %v4357
      %6010 = vmatpush1.bf16.msra.mxu0 %v4356
      %6011 = vmatprep.subr.bf16.mxu0 %v4367
      %6012 = vmatpush1.bf16.msra.mxu0 %v4366
      %6013 = vmatprep.subr.bf16.mxu0 %v4377
      %6014 = vmatpush1.bf16.msra.mxu0 %v4376
      %6015 = vmatprep.subr.bf16.mxu0 %v4387
      %6016 = vmatpush1.bf16.msra.mxu0 %v4386
      %6017 = vmatprep.subr.bf16.mxu0 %v4397
      %6018 = vmatpush1.bf16.msra.mxu0 %v4396
      %6019 = vmatprep.subr.bf16.mxu0 %v4407
      %6020 = vmatpush1.bf16.msra.mxu0 %v4406
      %6021 = vmatprep.mubr.bf16.mxu0 %v1199
      %6022 = vmatmul.mubr.bf16.gmra.mrb[0].mxu0 %v1198
      %v6023 = vpop.f32.mrb[0].mxu0
      %v6024 = vadd.f32 %v5983, %v6023
      %v6025 = vpop.f32.mrb[0].mxu0
      %v6026 = vadd.f32 %v5985, %v6025
      %v6027 = vpop.f32.mrb[0].mxu0
      %v6028 = vpop.f32.mrb[0].mxu0
      %6029 = vdwg.mxu0
      %6030 = vmatprep.subr.bf16.mxu0 %v3619
      %6031 = vmatpush1.bf16.msra.mxu0 %v3618
      %6032 = vmatprep.subr.bf16.mxu0 %v3629
      %6033 = vmatpush1.bf16.msra.mxu0 %v3628
      %6034 = vmatprep.subr.bf16.mxu0 %v3639
      %6035 = vmatpush1.bf16.msra.mxu0 %v3638
      %6036 = vmatprep.subr.bf16.mxu0 %v3649
      %6037 = vmatpush1.bf16.msra.mxu0 %v3648
      %6038 = vmatprep.subr.bf16.mxu0 %v3659
      %6039 = vmatpush1.bf16.msra.mxu0 %v3658
      %6040 = vmatprep.subr.bf16.mxu0 %v3669
      %6041 = vmatpush1.bf16.msra.mxu0 %v3668
      %6042 = vmatprep.subr.bf16.mxu0 %v3679
      %6043 = vmatpush1.bf16.msra.mxu0 %v3678
      %6044 = vmatprep.subr.bf16.mxu0 %v3689
      %6045 = vmatpush1.bf16.msra.mxu0 %v3688
      %6046 = vmatprep.subr.bf16.mxu0 %v3699
      %6047 = vmatpush1.bf16.msra.mxu0 %v3698
      %6048 = vmatprep.subr.bf16.mxu0 %v3709
      %6049 = vmatpush1.bf16.msra.mxu0 %v3708
      %6050 = vmatprep.subr.bf16.mxu0 %v3719
      %6051 = vmatpush1.bf16.msra.mxu0 %v3718
      %6052 = vmatprep.subr.bf16.mxu0 %v3729
      %6053 = vmatpush1.bf16.msra.mxu0 %v3728
      %6054 = vmatprep.subr.bf16.mxu0 %v3739
      %6055 = vmatpush1.bf16.msra.mxu0 %v3738
      %6056 = vmatprep.subr.bf16.mxu0 %v3749
      %6057 = vmatpush1.bf16.msra.mxu0 %v3748
      %6058 = vmatprep.subr.bf16.mxu0 %v3759
      %6059 = vmatpush1.bf16.msra.mxu0 %v3758
      %6060 = vmatprep.subr.bf16.mxu0 %v3769
      %6061 = vmatpush1.bf16.msra.mxu0 %v3768
      %6062 = vmatprep.mubr.bf16.mxu0 %v1191
      %6063 = vmatmul.mubr.bf16.gmra.mrb[0].mxu0 %v1190
      %v6064 = vpop.f32.mrb[0].mxu0
      %v6065 = vadd.f32 0.0, %v6064
      %v6066 = vpop.f32.mrb[0].mxu0
      %v6067 = vadd.f32 0.0, %v6066
      %v6068 = vpop.f32.mrb[0].mxu0
      %v6069 = vpop.f32.mrb[0].mxu0
      %6070 = vdwg.mxu0
      %6071 = vmatprep.subr.bf16.mxu0 %v3779
      %6072 = vmatpush1.bf16.msra.mxu0 %v3778
      %6073 = vmatprep.subr.bf16.mxu0 %v3789
      %6074 = vmatpush1.bf16.msra.mxu0 %v3788
      %6075 = vmatprep.subr.bf16.mxu0 %v3799
      %6076 = vmatpush1.bf16.msra.mxu0 %v3798
      %6077 = vmatprep.subr.bf16.mxu0 %v3809
      %6078 = vmatpush1.bf16.msra.mxu0 %v3808
      %6079 = vmatprep.subr.bf16.mxu0 %v3819
      %6080 = vmatpush1.bf16.msra.mxu0 %v3818
      %6081 = vmatprep.subr.bf16.mxu0 %v3829
      %6082 = vmatpush1.bf16.msra.mxu0 %v3828
      %6083 = vmatprep.subr.bf16.mxu0 %v3839
      %6084 = vmatpush1.bf16.msra.mxu0 %v3838
      %6085 = vmatprep.subr.bf16.mxu0 %v3849
      %6086 = vmatpush1.bf16.msra.mxu0 %v3848
      %6087 = vmatprep.subr.bf16.mxu0 %v3859
      %6088 = vmatpush1.bf16.msra.mxu0 %v3858
      %6089 = vmatprep.subr.bf16.mxu0 %v3869
      %6090 = vmatpush1.bf16.msra.mxu0 %v3868
      %6091 = vmatprep.subr.bf16.mxu0 %v3879
      %6092 = vmatpush1.bf16.msra.mxu0 %v3878
      %6093 = vmatprep.subr.bf16.mxu0 %v3889
      %6094 = vmatpush1.bf16.msra.mxu0 %v3888
      %6095 = vmatprep.subr.bf16.mxu0 %v3899
      %6096 = vmatpush1.bf16.msra.mxu0 %v3898
      %6097 = vmatprep.subr.bf16.mxu0 %v3909
      %6098 = vmatpush1.bf16.msra.mxu0 %v3908
      %6099 = vmatprep.subr.bf16.mxu0 %v3919
      %6100 = vmatpush1.bf16.msra.mxu0 %v3918
      %6101 = vmatprep.subr.bf16.mxu0 %v3929
      %6102 = vmatpush1.bf16.msra.mxu0 %v3928
      %6103 = vmatprep.mubr.bf16.mxu0 %v1193
      %6104 = vmatmul.mubr.bf16.gmra.mrb[0].mxu0 %v1192
      %v6105 = vpop.f32.mrb[0].mxu0
      %v6106 = vadd.f32 %v6065, %v6105
      %v6107 = vpop.f32.mrb[0].mxu0
      %v6108 = vadd.f32 %v6067, %v6107
      %v6109 = vpop.f32.mrb[0].mxu0
      %v6110 = vpop.f32.mrb[0].mxu0
      %6111 = vdwg.mxu0
      %6112 = vmatprep.subr.bf16.mxu0 %v3939
      %6113 = vmatpush1.bf16.msra.mxu0 %v3938
      %6114 = vmatprep.subr.bf16.mxu0 %v3949
      %6115 = vmatpush1.bf16.msra.mxu0 %v3948
      %6116 = vmatprep.subr.bf16.mxu0 %v3959
      %6117 = vmatpush1.bf16.msra.mxu0 %v3958
      %6118 = vmatprep.subr.bf16.mxu0 %v3969
      %6119 = vmatpush1.bf16.msra.mxu0 %v3968
      %6120 = vmatprep.subr.bf16.mxu0 %v3979
      %6121 = vmatpush1.bf16.msra.mxu0 %v3978
      %6122 = vmatprep.subr.bf16.mxu0 %v3989
      %6123 = vmatpush1.bf16.msra.mxu0 %v3988
      %6124 = vmatprep.subr.bf16.mxu0 %v3999
      %6125 = vmatpush1.bf16.msra.mxu0 %v3998
      %6126 = vmatprep.subr.bf16.mxu0 %v4009
      %6127 = vmatpush1.bf16.msra.mxu0 %v4008
      %6128 = vmatprep.subr.bf16.mxu0 %v4019
      %6129 = vmatpush1.bf16.msra.mxu0 %v4018
      %6130 = vmatprep.subr.bf16.mxu0 %v4029
      %6131 = vmatpush1.bf16.msra.mxu0 %v4028
      %6132 = vmatprep.subr.bf16.mxu0 %v4039
      %6133 = vmatpush1.bf16.msra.mxu0 %v4038
      %6134 = vmatprep.subr.bf16.mxu0 %v4049
      %6135 = vmatpush1.bf16.msra.mxu0 %v4048
      %6136 = vmatprep.subr.bf16.mxu0 %v4059
      %6137 = vmatpush1.bf16.msra.mxu0 %v4058
      %6138 = vmatprep.subr.bf16.mxu0 %v4069
      %6139 = vmatpush1.bf16.msra.mxu0 %v4068
      %6140 = vmatprep.subr.bf16.mxu0 %v4079
      %6141 = vmatpush1.bf16.msra.mxu0 %v4078
      %6142 = vmatprep.subr.bf16.mxu0 %v4089
      %6143 = vmatpush1.bf16.msra.mxu0 %v4088
      %6144 = vmatprep.mubr.bf16.mxu0 %v1195
      %6145 = vmatmul.mubr.bf16.gmra.mrb[0].mxu0 %v1194
      %v6146 = vpop.f32.mrb[0].mxu0
      %v6147 = vadd.f32 %v6106, %v6146
      %v6148 = vpop.f32.mrb[0].mxu0
      %v6149 = vadd.f32 %v6108, %v6148
      %v6150 = vpop.f32.mrb[0].mxu0
      %v6151 = vpop.f32.mrb[0].mxu0
      %6152 = vdwg.mxu0
      %6153 = vmatprep.subr.bf16.mxu0 %v4099
      %6154 = vmatpush1.bf16.msra.mxu0 %v4098
      %6155 = vmatprep.subr.bf16.mxu0 %v4109
      %6156 = vmatpush1.bf16.msra.mxu0 %v4108
      %6157 = vmatprep.subr.bf16.mxu0 %v4119
      %6158 = vmatpush1.bf16.msra.mxu0 %v4118
      %6159 = vmatprep.subr.bf16.mxu0 %v4129
      %6160 = vmatpush1.bf16.msra.mxu0 %v4128
      %6161 = vmatprep.subr.bf16.mxu0 %v4139
      %6162 = vmatpush1.bf16.msra.mxu0 %v4138
      %6163 = vmatprep.subr.bf16.mxu0 %v4149
      %6164 = vmatpush1.bf16.msra.mxu0 %v4148
      %6165 = vmatprep.subr.bf16.mxu0 %v4159
      %6166 = vmatpush1.bf16.msra.mxu0 %v4158
      %6167 = vmatprep.subr.bf16.mxu0 %v4169
      %6168 = vmatpush1.bf16.msra.mxu0 %v4168
      %6169 = vmatprep.subr.bf16.mxu0 %v4179
      %6170 = vmatpush1.bf16.msra.mxu0 %v4178
      %6171 = vmatprep.subr.bf16.mxu0 %v4189
      %6172 = vmatpush1.bf16.msra.mxu0 %v4188
      %6173 = vmatprep.subr.bf16.mxu0 %v4199
      %6174 = vmatpush1.bf16.msra.mxu0 %v4198
      %6175 = vmatprep.subr.bf16.mxu0 %v4209
      %6176 = vmatpush1.bf16.msra.mxu0 %v4208
      %6177 = vmatprep.subr.bf16.mxu0 %v4219
      %6178 = vmatpush1.bf16.msra.mxu0 %v4218
      %6179 = vmatprep.subr.bf16.mxu0 %v4229
      %6180 = vmatpush1.bf16.msra.mxu0 %v4228
      %6181 = vmatprep.subr.bf16.mxu0 %v4239
      %6182 = vmatpush1.bf16.msra.mxu0 %v4238
      %6183 = vmatprep.subr.bf16.mxu0 %v4249
      %6184 = vmatpush1.bf16.msra.mxu0 %v4248
      %6185 = vmatprep.mubr.bf16.mxu0 %v1197
      %6186 = vmatmul.mubr.bf16.gmra.mrb[0].mxu0 %v1196
      %v6187 = vpop.f32.mrb[0].mxu0
      %v6188 = vadd.f32 %v6147, %v6187
      %v6189 = vpop.f32.mrb[0].mxu0
      %v6190 = vadd.f32 %v6149, %v6189
      %v6191 = vpop.f32.mrb[0].mxu0
      %v6192 = vpop.f32.mrb[0].mxu0
      %6193 = vdwg.mxu0
      %6194 = vmatprep.subr.bf16.mxu0 %v4259
      %6195 = vmatpush1.bf16.msra.mxu0 %v4258
      %6196 = vmatprep.subr.bf16.mxu0 %v4269
      %6197 = vmatpush1.bf16.msra.mxu0 %v4268
      %6198 = vmatprep.subr.bf16.mxu0 %v4279
      %6199 = vmatpush1.bf16.msra.mxu0 %v4278
      %6200 = vmatprep.subr.bf16.mxu0 %v4289
      %6201 = vmatpush1.bf16.msra.mxu0 %v4288
      %6202 = vmatprep.subr.bf16.mxu0 %v4299
      %6203 = vmatpush1.bf16.msra.mxu0 %v4298
      %6204 = vmatprep.subr.bf16.mxu0 %v4309
      %6205 = vmatpush1.bf16.msra.mxu0 %v4308
      %6206 = vmatprep.subr.bf16.mxu0 %v4319
      %6207 = vmatpush1.bf16.msra.mxu0 %v4318
      %6208 = vmatprep.subr.bf16.mxu0 %v4329
      %6209 = vmatpush1.bf16.msra.mxu0 %v4328
      %6210 = vmatprep.subr.bf16.mxu0 %v4339
      %6211 = vmatpush1.bf16.msra.mxu0 %v4338
      %6212 = vmatprep.subr.bf16.mxu0 %v4349
      %6213 = vmatpush1.bf16.msra.mxu0 %v4348
      %6214 = vmatprep.subr.bf16.mxu0 %v4359
      %6215 = vmatpush1.bf16.msra.mxu0 %v4358
      %6216 = vmatprep.subr.bf16.mxu0 %v4369
      %6217 = vmatpush1.bf16.msra.mxu0 %v4368
      %6218 = vmatprep.subr.bf16.mxu0 %v4379
      %6219 = vmatpush1.bf16.msra.mxu0 %v4378
      %6220 = vmatprep.subr.bf16.mxu0 %v4389
      %6221 = vmatpush1.bf16.msra.mxu0 %v4388
      %6222 = vmatprep.subr.bf16.mxu0 %v4399
      %6223 = vmatpush1.bf16.msra.mxu0 %v4398
      %6224 = vmatprep.subr.bf16.mxu0 %v4409
      %6225 = vmatpush1.bf16.msra.mxu0 %v4408
      %6226 = vmatprep.mubr.bf16.mxu0 %v1199
      %6227 = vmatmul.mubr.bf16.gmra.mrb[0].mxu0 %v1198
      %v6228 = vpop.f32.mrb[0].mxu0
      %v6229 = vadd.f32 %v6188, %v6228
      %v6230 = vpop.f32.mrb[0].mxu0
      %v6231 = vadd.f32 %v6190, %v6230
      %v6232 = vpop.f32.mrb[0].mxu0
      %v6233 = vpop.f32.mrb[0].mxu0
      %6234 = vdwg.mxu0
      %v6235 = vadd.f32 %v360, %v5409
      %v6236 = vadd.f32 %v361, %v5411
      %v6237 = vadd.f32 %v362, %v5614
      %v6238 = vadd.f32 %v363, %v5616
      %v6239 = vadd.f32 %v364, %v5819
      %v6240 = vadd.f32 %v365, %v5821
      %v6241 = vadd.f32 %v366, %v6024
      %v6242 = vadd.f32 %v367, %v6026
      %v6243 = vadd.f32 %v368, %v6229
      %v6244 = vadd.f32 %v369, %v6231
      %6245 = vst [vmem:[#allocation2] sm:$0xff] %v6235
      %6246 = vst [vmem:[#allocation2 + $0x8] sm:$0xff] %v6236
      %6247 = vst [vmem:[#allocation2 + $0x10] sm:$0xff] %v6237
      %6248 = vst [vmem:[#allocation2 + $0x18] sm:$0xff] %v6238
      %6249 = vst [vmem:[#allocation2 + $0x20] sm:$0xff] %v6239
      %6250 = vst [vmem:[#allocation2 + $0x28] sm:$0xff] %v6240
      %6251 = vst [vmem:[#allocation2 + $0x30] sm:$0xff] %v6241
      %6252 = vst [vmem:[#allocation2 + $0x38] sm:$0xff] %v6242
      %6253 = vst [vmem:[#allocation2 + $0x40] sm:$0xff] %v6243
      %6254 = vst [vmem:[#allocation2 + $0x48] sm:$0xff] %v6244
      %p6255 = scmp.eq.s32.totalorder %s20, 2
      // Predicated region
      $region61: #{model_forward.7} parent=55 // pred_check
        %p6256 = pneg %p6255
      $region62: #{model_forward.7} parent=55 // pred_check_branch
        %6258 = sbr.rel (%p6256) target = $region64
      $region63: #{model_forward.7} parent=55 // pred_region
        %v6259 = vld [vmem:[#allocation2] sm:$0xff]
        %v6260 = vld [vmem:[#allocation2 + $0x8] sm:$0xff]
        %v6261 = vld [vmem:[#allocation2 + $0x10] sm:$0xff]
        %v6262 = vld [vmem:[#allocation2 + $0x18] sm:$0xff]
        %v6263 = vld [vmem:[#allocation2 + $0x20] sm:$0xff]
        %v6264 = vld [vmem:[#allocation2 + $0x28] sm:$0xff]
        %v6265 = vld [vmem:[#allocation2 + $0x30] sm:$0xff]
        %v6266 = vld [vmem:[#allocation2 + $0x38] sm:$0xff]
        %v6267 = vld [vmem:[#allocation2 + $0x40] sm:$0xff]
        %v6268 = vld [vmem:[#allocation2 + $0x48] sm:$0xff]
        %v6269 = vld [vmem:[%s2] sm:$0xff]
        %v6270 = vld [vmem:[%s2 + $0x8] sm:$0x3]
        %v6273 = vlaneseq
        %v6274 = vshrl.u32 %v6273, 7
        %v6275 = vsub.s32 0, %v6274
        %v6276 = vrot.slane %v6269, %v6275
        %v6277 = vlaneseq
        %v6278 = vshrl.u32 %v6277, 7
        %v6279 = vsub.s32 1, %v6278
        %v6280 = vrot.slane %v6269, %v6279
        %v6281 = vlaneseq
        %v6282 = vshrl.u32 %v6281, 7
        %v6283 = vsub.s32 2, %v6282
        %v6284 = vrot.slane %v6269, %v6283
        %v6285 = vlaneseq
        %v6286 = vshrl.u32 %v6285, 7
        %v6287 = vsub.s32 3, %v6286
        %v6288 = vrot.slane %v6269, %v6287
        %v6289 = vlaneseq
        %v6290 = vshrl.u32 %v6289, 7
        %v6291 = vsub.s32 4, %v6290
        %v6292 = vrot.slane %v6269, %v6291
        %v6293 = vlaneseq
        %v6294 = vshrl.u32 %v6293, 7
        %v6295 = vsub.s32 5, %v6294
        %v6296 = vrot.slane %v6269, %v6295
        %v6297 = vlaneseq
        %v6298 = vshrl.u32 %v6297, 7
        %v6299 = vsub.s32 6, %v6298
        %v6300 = vrot.slane %v6269, %v6299
        %v6301 = vlaneseq
        %v6302 = vshrl.u32 %v6301, 7
        %v6303 = vsub.s32 7, %v6302
        %v6304 = vrot.slane %v6269, %v6303
        %v6305 = vlaneseq
        %v6306 = vshrl.u32 %v6305, 7
        %v6307 = vsub.s32 0, %v6306
        %v6308 = vrot.slane %v6270, %v6307
        %v6309 = vlaneseq
        %v6310 = vshrl.u32 %v6309, 7
        %v6311 = vsub.s32 1, %v6310
        %v6312 = vrot.slane %v6270, %v6311
        %v6323 = vmul.f32 %v6259, %v6276
        %v6324 = vmul.f32 %v6260, %v6280
        %v6325 = vmul.f32 %v6261, %v6284
        %v6326 = vmul.f32 %v6262, %v6288
        %v6327 = vmul.f32 %v6263, %v6292
        %v6328 = vmul.f32 %v6264, %v6296
        %v6329 = vmul.f32 %v6265, %v6300
        %v6330 = vmul.f32 %v6266, %v6304
        %v6331 = vmul.f32 %v6267, %v6308
        %v6332 = vmul.f32 %v6268, %v6312
        %v6333 = vld [vmem:[%s3] sm:$0xff]
        %v6334 = vld [vmem:[%s3 + $0x8] sm:$0x3]
        %v6337 = vlaneseq
        %v6338 = vshrl.u32 %v6337, 7
        %v6339 = vsub.s32 0, %v6338
        %v6340 = vrot.slane %v6333, %v6339
        %v6341 = vlaneseq
        %v6342 = vshrl.u32 %v6341, 7
        %v6343 = vsub.s32 1, %v6342
        %v6344 = vrot.slane %v6333, %v6343
        %v6345 = vlaneseq
        %v6346 = vshrl.u32 %v6345, 7
        %v6347 = vsub.s32 2, %v6346
        %v6348 = vrot.slane %v6333, %v6347
        %v6349 = vlaneseq
        %v6350 = vshrl.u32 %v6349, 7
        %v6351 = vsub.s32 3, %v6350
        %v6352 = vrot.slane %v6333, %v6351
        %v6353 = vlaneseq
        %v6354 = vshrl.u32 %v6353, 7
        %v6355 = vsub.s32 4, %v6354
        %v6356 = vrot.slane %v6333, %v6355
        %v6357 = vlaneseq
        %v6358 = vshrl.u32 %v6357, 7
        %v6359 = vsub.s32 5, %v6358
        %v6360 = vrot.slane %v6333, %v6359
        %v6361 = vlaneseq
        %v6362 = vshrl.u32 %v6361, 7
        %v6363 = vsub.s32 6, %v6362
        %v6364 = vrot.slane %v6333, %v6363
        %v6365 = vlaneseq
        %v6366 = vshrl.u32 %v6365, 7
        %v6367 = vsub.s32 7, %v6366
        %v6368 = vrot.slane %v6333, %v6367
        %v6369 = vlaneseq
        %v6370 = vshrl.u32 %v6369, 7
        %v6371 = vsub.s32 0, %v6370
        %v6372 = vrot.slane %v6334, %v6371
        %v6373 = vlaneseq
        %v6374 = vshrl.u32 %v6373, 7
        %v6375 = vsub.s32 1, %v6374
        %v6376 = vrot.slane %v6334, %v6375
        %v6387 = vadd.f32 %v6323, %v6340
        %v6388 = vadd.f32 %v6324, %v6344
        %v6389 = vadd.f32 %v6325, %v6348
        %v6390 = vadd.f32 %v6326, %v6352
        %v6391 = vadd.f32 %v6327, %v6356
        %v6392 = vadd.f32 %v6328, %v6360
        %v6393 = vadd.f32 %v6329, %v6364
        %v6394 = vadd.f32 %v6330, %v6368
        %v6395 = vadd.f32 %v6331, %v6372
        %v6396 = vadd.f32 %v6332, %v6376
        %v6397 = vmax.f32 %v6387, 0.0
        %v6398 = vmax.f32 %v6388, 0.0
        %v6399 = vmax.f32 %v6389, 0.0
        %v6400 = vmax.f32 %v6390, 0.0
        %v6401 = vmax.f32 %v6391, 0.0
        %v6402 = vmax.f32 %v6392, 0.0
        %v6403 = vmax.f32 %v6393, 0.0
        %v6404 = vmax.f32 %v6394, 0.0
        %v6405 = vmax.f32 %v6395, 0.0
        %v6406 = vmax.f32 %v6396, 0.0
        %v6407 = vpack.c.bf16 %v6397, %v6397
        %v6408 = vpack.c.bf16 %v6398, %v6398
        %v6409 = vpack.c.bf16 %v6399, %v6399
        %v6410 = vpack.c.bf16 %v6400, %v6400
        %v6411 = vpack.c.bf16 %v6401, %v6401
        %v6412 = vpack.c.bf16 %v6402, %v6402
        %v6413 = vpack.c.bf16 %v6403, %v6403
        %v6414 = vpack.c.bf16 %v6404, %v6404
        %v6415 = vpack.c.bf16 %v6405, %v6405
        %v6416 = vpack.c.bf16 %v6406, %v6406
        %v6417 = vld [vmem:[%s4] sm:$0xf]
        %v6418 = vld [vmem:[%s4 + $0x4] sm:$0xf]
        %v6419 = vld [vmem:[%s4 + $0x8] sm:$0xf]
        %v6420 = vld [vmem:[%s4 + $0xc] sm:$0xf]
        %v6421 = vld [vmem:[%s4 + $0x10] sm:$0xf]
        %v6422 = vld [vmem:[%s4 + $0x14] sm:$0xf]
        %v6423 = vld [vmem:[%s4 + $0x18] sm:$0xf]
        %v6424 = vld [vmem:[%s4 + $0x1c] sm:$0xf]
        %v6425 = vld [vmem:[%s4 + $0x20] sm:$0xf]
        %v6426 = vld [vmem:[%s4 + $0x24] sm:$0xf]
        %v6427 = vld [vmem:[%s4 + $0x28] sm:$0xf]
        %v6428 = vld [vmem:[%s4 + $0x2c] sm:$0xf]
        %v6429 = vld [vmem:[%s4 + $0x30] sm:$0xf]
        %v6430 = vld [vmem:[%s4 + $0x34] sm:$0xf]
        %v6431 = vld [vmem:[%s4 + $0x38] sm:$0xf]
        %v6432 = vld [vmem:[%s4 + $0x3c] sm:$0xf]
        %v6433 = vld [vmem:[%s4 + $0x40] sm:$0xf]
        %v6434 = vld [vmem:[%s4 + $0x44] sm:$0xf]
        %v6435 = vld [vmem:[%s4 + $0x48] sm:$0xf]
        %v6436 = vld [vmem:[%s4 + $0x4c] sm:$0xf]
        %v6437 = vld [vmem:[%s4 + $0x50] sm:$0xf]
        %v6438 = vld [vmem:[%s4 + $0x54] sm:$0xf]
        %v6439 = vld [vmem:[%s4 + $0x58] sm:$0xf]
        %v6440 = vld [vmem:[%s4 + $0x5c] sm:$0xf]
        %v6441 = vld [vmem:[%s4 + $0x60] sm:$0xf]
        %v6442 = vld [vmem:[%s4 + $0x64] sm:$0xf]
        %v6443 = vld [vmem:[%s4 + $0x68] sm:$0xf]
        %v6444 = vld [vmem:[%s4 + $0x6c] sm:$0xf]
        %v6445 = vld [vmem:[%s4 + $0x70] sm:$0xf]
        %v6446 = vld [vmem:[%s4 + $0x74] sm:$0xf]
        %v6447 = vld [vmem:[%s4 + $0x78] sm:$0xf]
        %v6448 = vld [vmem:[%s4 + $0x7c] sm:$0xf]
        %v6449 = vld [vmem:[%s4 + $0x80] sm:$0xf]
        %v6450 = vld [vmem:[%s4 + $0x84] sm:$0xf]
        %v6451 = vld [vmem:[%s4 + $0x88] sm:$0xf]
        %v6452 = vld [vmem:[%s4 + $0x8c] sm:$0xf]
        %v6453 = vld [vmem:[%s4 + $0x90] sm:$0xf]
        %v6454 = vld [vmem:[%s4 + $0x94] sm:$0xf]
        %v6455 = vld [vmem:[%s4 + $0x98] sm:$0xf]
        %v6456 = vld [vmem:[%s4 + $0x9c] sm:$0xf]
        %v6457 = vld [vmem:[%s4 + $0xa0] sm:$0xf]
        %v6458 = vld [vmem:[%s4 + $0xa4] sm:$0xf]
        %v6459 = vld [vmem:[%s4 + $0xa8] sm:$0xf]
        %v6460 = vld [vmem:[%s4 + $0xac] sm:$0xf]
        %v6461 = vld [vmem:[%s4 + $0xb0] sm:$0xf]
        %v6462 = vld [vmem:[%s4 + $0xb4] sm:$0xf]
        %v6463 = vld [vmem:[%s4 + $0xb8] sm:$0xf]
        %v6464 = vld [vmem:[%s4 + $0xbc] sm:$0xf]
        %v6465 = vld [vmem:[%s4 + $0xc0] sm:$0xf]
        %v6466 = vld [vmem:[%s4 + $0xc4] sm:$0xf]
        %v6467 = vld [vmem:[%s4 + $0xc8] sm:$0xf]
        %v6468 = vld [vmem:[%s4 + $0xcc] sm:$0xf]
        %v6469 = vld [vmem:[%s4 + $0xd0] sm:$0xf]
        %v6470 = vld [vmem:[%s4 + $0xd4] sm:$0xf]
        %v6471 = vld [vmem:[%s4 + $0xd8] sm:$0xf]
        %v6472 = vld [vmem:[%s4 + $0xdc] sm:$0xf]
        %v6473 = vld [vmem:[%s4 + $0xe0] sm:$0xf]
        %v6474 = vld [vmem:[%s4 + $0xe4] sm:$0xf]
        %v6475 = vld [vmem:[%s4 + $0xe8] sm:$0xf]
        %v6476 = vld [vmem:[%s4 + $0xec] sm:$0xf]
        %v6477 = vld [vmem:[%s4 + $0xf0] sm:$0xf]
        %v6478 = vld [vmem:[%s4 + $0xf4] sm:$0xf]
        %v6479 = vld [vmem:[%s4 + $0xf8] sm:$0xf]
        %v6480 = vld [vmem:[%s4 + $0xfc] sm:$0xf]
        %v6481 = vld [vmem:[%s4 + $0x100] sm:$0xf]
        %v6482 = vld [vmem:[%s4 + $0x104] sm:$0xf]
        %v6483 = vld [vmem:[%s4 + $0x108] sm:$0xf]
        %v6484 = vld [vmem:[%s4 + $0x10c] sm:$0xf]
        %v6485 = vld [vmem:[%s4 + $0x110] sm:$0xf]
        %v6486 = vld [vmem:[%s4 + $0x114] sm:$0xf]
        %v6487 = vld [vmem:[%s4 + $0x118] sm:$0xf]
        %v6488 = vld [vmem:[%s4 + $0x11c] sm:$0xf]
        %v6489 = vld [vmem:[%s4 + $0x120] sm:$0xf]
        %v6490 = vld [vmem:[%s4 + $0x124] sm:$0xf]
        %v6491 = vld [vmem:[%s4 + $0x128] sm:$0xf]
        %v6492 = vld [vmem:[%s4 + $0x12c] sm:$0xf]
        %v6493 = vld [vmem:[%s4 + $0x130] sm:$0xf]
        %v6494 = vld [vmem:[%s4 + $0x134] sm:$0xf]
        %v6495 = vld [vmem:[%s4 + $0x138] sm:$0xf]
        %v6496 = vld [vmem:[%s4 + $0x13c] sm:$0xf]
        %v6497 = vld [vmem:[%s4 + $0x140] sm:$0xf]
        %v6498 = vld [vmem:[%s4 + $0x144] sm:$0xf]
        %v6499 = vld [vmem:[%s4 + $0x148] sm:$0xf]
        %v6500 = vld [vmem:[%s4 + $0x14c] sm:$0xf]
        %v6501 = vld [vmem:[%s4 + $0x150] sm:$0xf]
        %v6502 = vld [vmem:[%s4 + $0x154] sm:$0xf]
        %v6503 = vld [vmem:[%s4 + $0x158] sm:$0xf]
        %v6504 = vld [vmem:[%s4 + $0x15c] sm:$0xf]
        %v6505 = vld [vmem:[%s4 + $0x160] sm:$0xf]
        %v6506 = vld [vmem:[%s4 + $0x164] sm:$0xf]
        %v6507 = vld [vmem:[%s4 + $0x168] sm:$0xf]
        %v6508 = vld [vmem:[%s4 + $0x16c] sm:$0xf]
        %v6509 = vld [vmem:[%s4 + $0x170] sm:$0xf]
        %v6510 = vld [vmem:[%s4 + $0x174] sm:$0xf]
        %v6511 = vld [vmem:[%s4 + $0x178] sm:$0xf]
        %v6512 = vld [vmem:[%s4 + $0x17c] sm:$0xf]
        %v6513 = vld [vmem:[%s4 + $0x180] sm:$0xf]
        %v6514 = vld [vmem:[%s4 + $0x184] sm:$0xf]
        %v6515 = vld [vmem:[%s4 + $0x188] sm:$0xf]
        %v6516 = vld [vmem:[%s4 + $0x18c] sm:$0xf]
        %v6517 = vld [vmem:[%s4 + $0x190] sm:$0xf]
        %v6518 = vld [vmem:[%s4 + $0x194] sm:$0xf]
        %v6519 = vld [vmem:[%s4 + $0x198] sm:$0xf]
        %v6520 = vld [vmem:[%s4 + $0x19c] sm:$0xf]
        %v6521 = vld [vmem:[%s4 + $0x1a0] sm:$0xf]
        %v6522 = vld [vmem:[%s4 + $0x1a4] sm:$0xf]
        %v6523 = vld [vmem:[%s4 + $0x1a8] sm:$0xf]
        %v6524 = vld [vmem:[%s4 + $0x1ac] sm:$0xf]
        %v6525 = vld [vmem:[%s4 + $0x1b0] sm:$0xf]
        %v6526 = vld [vmem:[%s4 + $0x1b4] sm:$0xf]
        %v6527 = vld [vmem:[%s4 + $0x1b8] sm:$0xf]
        %v6528 = vld [vmem:[%s4 + $0x1bc] sm:$0xf]
        %v6529 = vld [vmem:[%s4 + $0x1c0] sm:$0xf]
        %v6530 = vld [vmem:[%s4 + $0x1c4] sm:$0xf]
        %v6531 = vld [vmem:[%s4 + $0x1c8] sm:$0xf]
        %v6532 = vld [vmem:[%s4 + $0x1cc] sm:$0xf]
        %v6533 = vld [vmem:[%s4 + $0x1d0] sm:$0xf]
        %v6534 = vld [vmem:[%s4 + $0x1d4] sm:$0xf]
        %v6535 = vld [vmem:[%s4 + $0x1d8] sm:$0xf]
        %v6536 = vld [vmem:[%s4 + $0x1dc] sm:$0xf]
        %v6537 = vld [vmem:[%s4 + $0x1e0] sm:$0xf]
        %v6538 = vld [vmem:[%s4 + $0x1e4] sm:$0xf]
        %v6539 = vld [vmem:[%s4 + $0x1e8] sm:$0xf]
        %v6540 = vld [vmem:[%s4 + $0x1ec] sm:$0xf]
        %v6541 = vld [vmem:[%s4 + $0x1f0] sm:$0xf]
        %v6542 = vld [vmem:[%s4 + $0x1f4] sm:$0xf]
        %v6543 = vld [vmem:[%s4 + $0x1f8] sm:$0xf]
        %v6544 = vld [vmem:[%s4 + $0x1fc] sm:$0xf]
        %v6545 = vld [vmem:[%s4 + $0x200] sm:$0xf]
        %v6546 = vld [vmem:[%s4 + $0x204] sm:$0xf]
        %v6547 = vld [vmem:[%s4 + $0x208] sm:$0xf]
        %v6548 = vld [vmem:[%s4 + $0x20c] sm:$0xf]
        %v6549 = vld [vmem:[%s4 + $0x210] sm:$0xf]
        %v6550 = vld [vmem:[%s4 + $0x214] sm:$0xf]
        %v6551 = vld [vmem:[%s4 + $0x218] sm:$0xf]
        %v6552 = vld [vmem:[%s4 + $0x21c] sm:$0xf]
        %v6553 = vld [vmem:[%s4 + $0x220] sm:$0xf]
        %v6554 = vld [vmem:[%s4 + $0x224] sm:$0xf]
        %v6555 = vld [vmem:[%s4 + $0x228] sm:$0xf]
        %v6556 = vld [vmem:[%s4 + $0x22c] sm:$0xf]
        %v6557 = vld [vmem:[%s4 + $0x230] sm:$0xf]
        %v6558 = vld [vmem:[%s4 + $0x234] sm:$0xf]
        %v6559 = vld [vmem:[%s4 + $0x238] sm:$0xf]
        %v6560 = vld [vmem:[%s4 + $0x23c] sm:$0xf]
        %v6561 = vld [vmem:[%s4 + $0x240] sm:$0xf]
        %v6562 = vld [vmem:[%s4 + $0x244] sm:$0xf]
        %v6563 = vld [vmem:[%s4 + $0x248] sm:$0xf]
        %v6564 = vld [vmem:[%s4 + $0x24c] sm:$0xf]
        %v6565 = vld [vmem:[%s4 + $0x250] sm:$0xf]
        %v6566 = vld [vmem:[%s4 + $0x254] sm:$0xf]
        %v6567 = vld [vmem:[%s4 + $0x258] sm:$0xf]
        %v6568 = vld [vmem:[%s4 + $0x25c] sm:$0xf]
        %v6569 = vld [vmem:[%s4 + $0x260] sm:$0xf]
        %v6570 = vld [vmem:[%s4 + $0x264] sm:$0xf]
        %v6571 = vld [vmem:[%s4 + $0x268] sm:$0xf]
        %v6572 = vld [vmem:[%s4 + $0x26c] sm:$0xf]
        %v6573 = vld [vmem:[%s4 + $0x270] sm:$0xf]
        %v6574 = vld [vmem:[%s4 + $0x274] sm:$0xf]
        %v6575 = vld [vmem:[%s4 + $0x278] sm:$0xf]
        %v6576 = vld [vmem:[%s4 + $0x27c] sm:$0xf]
        %v6737 = vunpack.c.l.b16 %v6417
        %v6738 = vunpack.c.l.b16 %v6418
        %v6739 = vunpack.c.l.b16 %v6419
        %v6740 = vunpack.c.l.b16 %v6420
        %v6741 = vunpack.c.l.b16 %v6421
        %v6742 = vunpack.c.l.b16 %v6422
        %v6743 = vunpack.c.l.b16 %v6423
        %v6744 = vunpack.c.l.b16 %v6424
        %v6745 = vunpack.c.l.b16 %v6425
        %v6746 = vunpack.c.l.b16 %v6426
        %v6747 = vunpack.c.l.b16 %v6427
        %v6748 = vunpack.c.l.b16 %v6428
        %v6749 = vunpack.c.l.b16 %v6429
        %v6750 = vunpack.c.l.b16 %v6430
        %v6751 = vunpack.c.l.b16 %v6431
        %v6752 = vunpack.c.l.b16 %v6432
        %v6753 = vunpack.c.l.b16 %v6433
        %v6754 = vunpack.c.l.b16 %v6434
        %v6755 = vunpack.c.l.b16 %v6435
        %v6756 = vunpack.c.l.b16 %v6436
        %v6757 = vunpack.c.l.b16 %v6437
        %v6758 = vunpack.c.l.b16 %v6438
        %v6759 = vunpack.c.l.b16 %v6439
        %v6760 = vunpack.c.l.b16 %v6440
        %v6761 = vunpack.c.l.b16 %v6441
        %v6762 = vunpack.c.l.b16 %v6442
        %v6763 = vunpack.c.l.b16 %v6443
        %v6764 = vunpack.c.l.b16 %v6444
        %v6765 = vunpack.c.l.b16 %v6445
        %v6766 = vunpack.c.l.b16 %v6446
        %v6767 = vunpack.c.l.b16 %v6447
        %v6768 = vunpack.c.l.b16 %v6448
        %v6769 = vunpack.c.l.b16 %v6449
        %v6770 = vunpack.c.l.b16 %v6450
        %v6771 = vunpack.c.l.b16 %v6451
        %v6772 = vunpack.c.l.b16 %v6452
        %v6773 = vunpack.c.l.b16 %v6453
        %v6774 = vunpack.c.l.b16 %v6454
        %v6775 = vunpack.c.l.b16 %v6455
        %v6776 = vunpack.c.l.b16 %v6456
        %v6777 = vunpack.c.l.b16 %v6457
        %v6778 = vunpack.c.l.b16 %v6458
        %v6779 = vunpack.c.l.b16 %v6459
        %v6780 = vunpack.c.l.b16 %v6460
        %v6781 = vunpack.c.l.b16 %v6461
        %v6782 = vunpack.c.l.b16 %v6462
        %v6783 = vunpack.c.l.b16 %v6463
        %v6784 = vunpack.c.l.b16 %v6464
        %v6785 = vunpack.c.l.b16 %v6465
        %v6786 = vunpack.c.l.b16 %v6466
        %v6787 = vunpack.c.l.b16 %v6467
        %v6788 = vunpack.c.l.b16 %v6468
        %v6789 = vunpack.c.l.b16 %v6469
        %v6790 = vunpack.c.l.b16 %v6470
        %v6791 = vunpack.c.l.b16 %v6471
        %v6792 = vunpack.c.l.b16 %v6472
        %v6793 = vunpack.c.l.b16 %v6473
        %v6794 = vunpack.c.l.b16 %v6474
        %v6795 = vunpack.c.l.b16 %v6475
        %v6796 = vunpack.c.l.b16 %v6476
        %v6797 = vunpack.c.l.b16 %v6477
        %v6798 = vunpack.c.l.b16 %v6478
        %v6799 = vunpack.c.l.b16 %v6479
        %v6800 = vunpack.c.l.b16 %v6480
        %v6801 = vunpack.c.l.b16 %v6481
        %v6802 = vunpack.c.l.b16 %v6482
        %v6803 = vunpack.c.l.b16 %v6483
        %v6804 = vunpack.c.l.b16 %v6484
        %v6805 = vunpack.c.l.b16 %v6485
        %v6806 = vunpack.c.l.b16 %v6486
        %v6807 = vunpack.c.l.b16 %v6487
        %v6808 = vunpack.c.l.b16 %v6488
        %v6809 = vunpack.c.l.b16 %v6489
        %v6810 = vunpack.c.l.b16 %v6490
        %v6811 = vunpack.c.l.b16 %v6491
        %v6812 = vunpack.c.l.b16 %v6492
        %v6813 = vunpack.c.l.b16 %v6493
        %v6814 = vunpack.c.l.b16 %v6494
        %v6815 = vunpack.c.l.b16 %v6495
        %v6816 = vunpack.c.l.b16 %v6496
        %v6817 = vunpack.c.l.b16 %v6497
        %v6818 = vunpack.c.l.b16 %v6498
        %v6819 = vunpack.c.l.b16 %v6499
        %v6820 = vunpack.c.l.b16 %v6500
        %v6821 = vunpack.c.l.b16 %v6501
        %v6822 = vunpack.c.l.b16 %v6502
        %v6823 = vunpack.c.l.b16 %v6503
        %v6824 = vunpack.c.l.b16 %v6504
        %v6825 = vunpack.c.l.b16 %v6505
        %v6826 = vunpack.c.l.b16 %v6506
        %v6827 = vunpack.c.l.b16 %v6507
        %v6828 = vunpack.c.l.b16 %v6508
        %v6829 = vunpack.c.l.b16 %v6509
        %v6830 = vunpack.c.l.b16 %v6510
        %v6831 = vunpack.c.l.b16 %v6511
        %v6832 = vunpack.c.l.b16 %v6512
        %v6833 = vunpack.c.l.b16 %v6513
        %v6834 = vunpack.c.l.b16 %v6514
        %v6835 = vunpack.c.l.b16 %v6515
        %v6836 = vunpack.c.l.b16 %v6516
        %v6837 = vunpack.c.l.b16 %v6517
        %v6838 = vunpack.c.l.b16 %v6518
        %v6839 = vunpack.c.l.b16 %v6519
        %v6840 = vunpack.c.l.b16 %v6520
        %v6841 = vunpack.c.l.b16 %v6521
        %v6842 = vunpack.c.l.b16 %v6522
        %v6843 = vunpack.c.l.b16 %v6523
        %v6844 = vunpack.c.l.b16 %v6524
        %v6845 = vunpack.c.l.b16 %v6525
        %v6846 = vunpack.c.l.b16 %v6526
        %v6847 = vunpack.c.l.b16 %v6527
        %v6848 = vunpack.c.l.b16 %v6528
        %v6849 = vunpack.c.l.b16 %v6529
        %v6850 = vunpack.c.l.b16 %v6530
        %v6851 = vunpack.c.l.b16 %v6531
        %v6852 = vunpack.c.l.b16 %v6532
        %v6853 = vunpack.c.l.b16 %v6533
        %v6854 = vunpack.c.l.b16 %v6534
        %v6855 = vunpack.c.l.b16 %v6535
        %v6856 = vunpack.c.l.b16 %v6536
        %v6857 = vunpack.c.l.b16 %v6537
        %v6858 = vunpack.c.l.b16 %v6538
        %v6859 = vunpack.c.l.b16 %v6539
        %v6860 = vunpack.c.l.b16 %v6540
        %v6861 = vunpack.c.l.b16 %v6541
        %v6862 = vunpack.c.l.b16 %v6542
        %v6863 = vunpack.c.l.b16 %v6543
        %v6864 = vunpack.c.l.b16 %v6544
        %v6865 = vunpack.c.l.b16 %v6545
        %v6866 = vunpack.c.l.b16 %v6546
        %v6867 = vunpack.c.l.b16 %v6547
        %v6868 = vunpack.c.l.b16 %v6548
        %v6869 = vunpack.c.l.b16 %v6549
        %v6870 = vunpack.c.l.b16 %v6550
        %v6871 = vunpack.c.l.b16 %v6551
        %v6872 = vunpack.c.l.b16 %v6552
        %v6873 = vunpack.c.l.b16 %v6553
        %v6874 = vunpack.c.l.b16 %v6554
        %v6875 = vunpack.c.l.b16 %v6555
        %v6876 = vunpack.c.l.b16 %v6556
        %v6877 = vunpack.c.l.b16 %v6557
        %v6878 = vunpack.c.l.b16 %v6558
        %v6879 = vunpack.c.l.b16 %v6559
        %v6880 = vunpack.c.l.b16 %v6560
        %v6881 = vunpack.c.l.b16 %v6561
        %v6882 = vunpack.c.l.b16 %v6562
        %v6883 = vunpack.c.l.b16 %v6563
        %v6884 = vunpack.c.l.b16 %v6564
        %v6885 = vunpack.c.l.b16 %v6565
        %v6886 = vunpack.c.l.b16 %v6566
        %v6887 = vunpack.c.l.b16 %v6567
        %v6888 = vunpack.c.l.b16 %v6568
        %v6889 = vunpack.c.l.b16 %v6569
        %v6890 = vunpack.c.l.b16 %v6570
        %v6891 = vunpack.c.l.b16 %v6571
        %v6892 = vunpack.c.l.b16 %v6572
        %v6893 = vunpack.c.l.b16 %v6573
        %v6894 = vunpack.c.l.b16 %v6574
        %v6895 = vunpack.c.l.b16 %v6575
        %v6896 = vunpack.c.l.b16 %v6576
        %v6897 = vpack.c.b16 %v6738, %v6737
        %v6898 = vpack.c.b16 %v6740, %v6739
        %v6899 = vpack.c.b16 %v6742, %v6741
        %v6900 = vpack.c.b16 %v6744, %v6743
        %v6901 = vpack.c.b16 %v6746, %v6745
        %v6902 = vpack.c.b16 %v6748, %v6747
        %v6903 = vpack.c.b16 %v6750, %v6749
        %v6904 = vpack.c.b16 %v6752, %v6751
        %v6905 = vpack.c.b16 %v6754, %v6753
        %v6906 = vpack.c.b16 %v6756, %v6755
        %v6907 = vpack.c.b16 %v6758, %v6757
        %v6908 = vpack.c.b16 %v6760, %v6759
        %v6909 = vpack.c.b16 %v6762, %v6761
        %v6910 = vpack.c.b16 %v6764, %v6763
        %v6911 = vpack.c.b16 %v6766, %v6765
        %v6912 = vpack.c.b16 %v6768, %v6767
        %v6913 = vpack.c.b16 %v6770, %v6769
        %v6914 = vpack.c.b16 %v6772, %v6771
        %v6915 = vpack.c.b16 %v6774, %v6773
        %v6916 = vpack.c.b16 %v6776, %v6775
        %v6917 = vpack.c.b16 %v6778, %v6777
        %v6918 = vpack.c.b16 %v6780, %v6779
        %v6919 = vpack.c.b16 %v6782, %v6781
        %v6920 = vpack.c.b16 %v6784, %v6783
        %v6921 = vpack.c.b16 %v6786, %v6785
        %v6922 = vpack.c.b16 %v6788, %v6787
        %v6923 = vpack.c.b16 %v6790, %v6789
        %v6924 = vpack.c.b16 %v6792, %v6791
        %v6925 = vpack.c.b16 %v6794, %v6793
        %v6926 = vpack.c.b16 %v6796, %v6795
        %v6927 = vpack.c.b16 %v6798, %v6797
        %v6928 = vpack.c.b16 %v6800, %v6799
        %v6929 = vpack.c.b16 %v6802, %v6801
        %v6930 = vpack.c.b16 %v6804, %v6803
        %v6931 = vpack.c.b16 %v6806, %v6805
        %v6932 = vpack.c.b16 %v6808, %v6807
        %v6933 = vpack.c.b16 %v6810, %v6809
        %v6934 = vpack.c.b16 %v6812, %v6811
        %v6935 = vpack.c.b16 %v6814, %v6813
        %v6936 = vpack.c.b16 %v6816, %v6815
        %v6937 = vpack.c.b16 %v6818, %v6817
        %v6938 = vpack.c.b16 %v6820, %v6819
        %v6939 = vpack.c.b16 %v6822, %v6821
        %v6940 = vpack.c.b16 %v6824, %v6823
        %v6941 = vpack.c.b16 %v6826, %v6825
        %v6942 = vpack.c.b16 %v6828, %v6827
        %v6943 = vpack.c.b16 %v6830, %v6829
        %v6944 = vpack.c.b16 %v6832, %v6831
        %v6945 = vpack.c.b16 %v6834, %v6833
        %v6946 = vpack.c.b16 %v6836, %v6835
        %v6947 = vpack.c.b16 %v6838, %v6837
        %v6948 = vpack.c.b16 %v6840, %v6839
        %v6949 = vpack.c.b16 %v6842, %v6841
        %v6950 = vpack.c.b16 %v6844, %v6843
        %v6951 = vpack.c.b16 %v6846, %v6845
        %v6952 = vpack.c.b16 %v6848, %v6847
        %v6953 = vpack.c.b16 %v6850, %v6849
        %v6954 = vpack.c.b16 %v6852, %v6851
        %v6955 = vpack.c.b16 %v6854, %v6853
        %v6956 = vpack.c.b16 %v6856, %v6855
        %v6957 = vpack.c.b16 %v6858, %v6857
        %v6958 = vpack.c.b16 %v6860, %v6859
        %v6959 = vpack.c.b16 %v6862, %v6861
        %v6960 = vpack.c.b16 %v6864, %v6863
        %v6961 = vpack.c.b16 %v6866, %v6865
        %v6962 = vpack.c.b16 %v6868, %v6867
        %v6963 = vpack.c.b16 %v6870, %v6869
        %v6964 = vpack.c.b16 %v6872, %v6871
        %v6965 = vpack.c.b16 %v6874, %v6873
        %v6966 = vpack.c.b16 %v6876, %v6875
        %v6967 = vpack.c.b16 %v6878, %v6877
        %v6968 = vpack.c.b16 %v6880, %v6879
        %v6969 = vpack.c.b16 %v6882, %v6881
        %v6970 = vpack.c.b16 %v6884, %v6883
        %v6971 = vpack.c.b16 %v6886, %v6885
        %v6972 = vpack.c.b16 %v6888, %v6887
        %v6973 = vpack.c.b16 %v6890, %v6889
        %v6974 = vpack.c.b16 %v6892, %v6891
        %v6975 = vpack.c.b16 %v6894, %v6893
        %v6976 = vpack.c.b16 %v6896, %v6895
        %7057 = vmatprep.subr.bf16.mxu0 0
        %7058 = vmatpush1.bf16.msra.mxu0 %v6897
        %7059 = vmatprep.subr.bf16.mxu0 0
        %7060 = vmatpush1.bf16.msra.mxu0 %v6898
        %7061 = vmatprep.subr.bf16.mxu0 0
        %7062 = vmatpush1.bf16.msra.mxu0 %v6899
        %7063 = vmatprep.subr.bf16.mxu0 0
        %7064 = vmatpush1.bf16.msra.mxu0 %v6900
        %7065 = vmatprep.subr.bf16.mxu0 0
        %7066 = vmatpush1.bf16.msra.mxu0 %v6901
        %7067 = vmatprep.subr.bf16.mxu0 0
        %7068 = vmatpush1.bf16.msra.mxu0 %v6902
        %7069 = vmatprep.subr.bf16.mxu0 0
        %7070 = vmatpush1.bf16.msra.mxu0 %v6903
        %7071 = vmatprep.subr.bf16.mxu0 0
        %7072 = vmatpush1.bf16.msra.mxu0 %v6904
        %7073 = vmatprep.subr.bf16.mxu0 0
        %7074 = vmatpush1.bf16.msra.mxu0 %v6905
        %7075 = vmatprep.subr.bf16.mxu0 0
        %7076 = vmatpush1.bf16.msra.mxu0 %v6906
        %7077 = vmatprep.subr.bf16.mxu0 0
        %7078 = vmatpush1.bf16.msra.mxu0 %v6907
        %7079 = vmatprep.subr.bf16.mxu0 0
        %7080 = vmatpush1.bf16.msra.mxu0 %v6908
        %7081 = vmatprep.subr.bf16.mxu0 0
        %7082 = vmatpush1.bf16.msra.mxu0 %v6909
        %7083 = vmatprep.subr.bf16.mxu0 0
        %7084 = vmatpush1.bf16.msra.mxu0 %v6910
        %7085 = vmatprep.subr.bf16.mxu0 0
        %7086 = vmatpush1.bf16.msra.mxu0 %v6911
        %7087 = vmatprep.subr.bf16.mxu0 0
        %7088 = vmatpush1.bf16.msra.mxu0 %v6912
        %7089 = vmatprep.mubr.bf16.mxu0 %v6408
        %7090 = vmatmul.mubr.bf16.gmra.mrb[0].mxu0 %v6407
        %v7091 = vpop.f32.mrb[0].mxu0
        %v7092 = vadd.f32 0.0, %v7091
        %v7093 = vpop.f32.mrb[0].mxu0
        %v7094 = vpop.f32.mrb[0].mxu0
        %v7095 = vpop.f32.mrb[0].mxu0
        %7096 = vdwg.mxu0
        %7097 = vmatprep.subr.bf16.mxu0 0
        %7098 = vmatpush1.bf16.msra.mxu0 %v6913
        %7099 = vmatprep.subr.bf16.mxu0 0
        %7100 = vmatpush1.bf16.msra.mxu0 %v6914
        %7101 = vmatprep.subr.bf16.mxu0 0
        %7102 = vmatpush1.bf16.msra.mxu0 %v6915
        %7103 = vmatprep.subr.bf16.mxu0 0
        %7104 = vmatpush1.bf16.msra.mxu0 %v6916
        %7105 = vmatprep.subr.bf16.mxu0 0
        %7106 = vmatpush1.bf16.msra.mxu0 %v6917
        %7107 = vmatprep.subr.bf16.mxu0 0
        %7108 = vmatpush1.bf16.msra.mxu0 %v6918
        %7109 = vmatprep.subr.bf16.mxu0 0
        %7110 = vmatpush1.bf16.msra.mxu0 %v6919
        %7111 = vmatprep.subr.bf16.mxu0 0
        %7112 = vmatpush1.bf16.msra.mxu0 %v6920
        %7113 = vmatprep.subr.bf16.mxu0 0
        %7114 = vmatpush1.bf16.msra.mxu0 %v6921
        %7115 = vmatprep.subr.bf16.mxu0 0
        %7116 = vmatpush1.bf16.msra.mxu0 %v6922
        %7117 = vmatprep.subr.bf16.mxu0 0
        %7118 = vmatpush1.bf16.msra.mxu0 %v6923
        %7119 = vmatprep.subr.bf16.mxu0 0
        %7120 = vmatpush1.bf16.msra.mxu0 %v6924
        %7121 = vmatprep.subr.bf16.mxu0 0
        %7122 = vmatpush1.bf16.msra.mxu0 %v6925
        %7123 = vmatprep.subr.bf16.mxu0 0
        %7124 = vmatpush1.bf16.msra.mxu0 %v6926
        %7125 = vmatprep.subr.bf16.mxu0 0
        %7126 = vmatpush1.bf16.msra.mxu0 %v6927
        %7127 = vmatprep.subr.bf16.mxu0 0
        %7128 = vmatpush1.bf16.msra.mxu0 %v6928
        %7129 = vmatprep.mubr.bf16.mxu0 %v6410
        %7130 = vmatmul.mubr.bf16.gmra.mrb[0].mxu0 %v6409
        %v7131 = vpop.f32.mrb[0].mxu0
        %v7132 = vadd.f32 %v7092, %v7131
        %v7133 = vpop.f32.mrb[0].mxu0
        %v7134 = vpop.f32.mrb[0].mxu0
        %v7135 = vpop.f32.mrb[0].mxu0
        %7136 = vdwg.mxu0
        %7137 = vmatprep.subr.bf16.mxu0 0
        %7138 = vmatpush1.bf16.msra.mxu0 %v6929
        %7139 = vmatprep.subr.bf16.mxu0 0
        %7140 = vmatpush1.bf16.msra.mxu0 %v6930
        %7141 = vmatprep.subr.bf16.mxu0 0
        %7142 = vmatpush1.bf16.msra.mxu0 %v6931
        %7143 = vmatprep.subr.bf16.mxu0 0
        %7144 = vmatpush1.bf16.msra.mxu0 %v6932
        %7145 = vmatprep.subr.bf16.mxu0 0
        %7146 = vmatpush1.bf16.msra.mxu0 %v6933
        %7147 = vmatprep.subr.bf16.mxu0 0
        %7148 = vmatpush1.bf16.msra.mxu0 %v6934
        %7149 = vmatprep.subr.bf16.mxu0 0
        %7150 = vmatpush1.bf16.msra.mxu0 %v6935
        %7151 = vmatprep.subr.bf16.mxu0 0
        %7152 = vmatpush1.bf16.msra.mxu0 %v6936
        %7153 = vmatprep.subr.bf16.mxu0 0
        %7154 = vmatpush1.bf16.msra.mxu0 %v6937
        %7155 = vmatprep.subr.bf16.mxu0 0
        %7156 = vmatpush1.bf16.msra.mxu0 %v6938
        %7157 = vmatprep.subr.bf16.mxu0 0
        %7158 = vmatpush1.bf16.msra.mxu0 %v6939
        %7159 = vmatprep.subr.bf16.mxu0 0
        %7160 = vmatpush1.bf16.msra.mxu0 %v6940
        %7161 = vmatprep.subr.bf16.mxu0 0
        %7162 = vmatpush1.bf16.msra.mxu0 %v6941
        %7163 = vmatprep.subr.bf16.mxu0 0
        %7164 = vmatpush1.bf16.msra.mxu0 %v6942
        %7165 = vmatprep.subr.bf16.mxu0 0
        %7166 = vmatpush1.bf16.msra.mxu0 %v6943
        %7167 = vmatprep.subr.bf16.mxu0 0
        %7168 = vmatpush1.bf16.msra.mxu0 %v6944
        %7169 = vmatprep.mubr.bf16.mxu0 %v6412
        %7170 = vmatmul.mubr.bf16.gmra.mrb[0].mxu0 %v6411
        %v7171 = vpop.f32.mrb[0].mxu0
        %v7172 = vadd.f32 %v7132, %v7171
        %v7173 = vpop.f32.mrb[0].mxu0
        %v7174 = vpop.f32.mrb[0].mxu0
        %v7175 = vpop.f32.mrb[0].mxu0
        %7176 = vdwg.mxu0
        %7177 = vmatprep.subr.bf16.mxu0 0
        %7178 = vmatpush1.bf16.msra.mxu0 %v6945
        %7179 = vmatprep.subr.bf16.mxu0 0
        %7180 = vmatpush1.bf16.msra.mxu0 %v6946
        %7181 = vmatprep.subr.bf16.mxu0 0
        %7182 = vmatpush1.bf16.msra.mxu0 %v6947
        %7183 = vmatprep.subr.bf16.mxu0 0
        %7184 = vmatpush1.bf16.msra.mxu0 %v6948
        %7185 = vmatprep.subr.bf16.mxu0 0
        %7186 = vmatpush1.bf16.msra.mxu0 %v6949
        %7187 = vmatprep.subr.bf16.mxu0 0
        %7188 = vmatpush1.bf16.msra.mxu0 %v6950
        %7189 = vmatprep.subr.bf16.mxu0 0
        %7190 = vmatpush1.bf16.msra.mxu0 %v6951
        %7191 = vmatprep.subr.bf16.mxu0 0
        %7192 = vmatpush1.bf16.msra.mxu0 %v6952
        %7193 = vmatprep.subr.bf16.mxu0 0
        %7194 = vmatpush1.bf16.msra.mxu0 %v6953
        %7195 = vmatprep.subr.bf16.mxu0 0
        %7196 = vmatpush1.bf16.msra.mxu0 %v6954
        %7197 = vmatprep.subr.bf16.mxu0 0
        %7198 = vmatpush1.bf16.msra.mxu0 %v6955
        %7199 = vmatprep.subr.bf16.mxu0 0
        %7200 = vmatpush1.bf16.msra.mxu0 %v6956
        %7201 = vmatprep.subr.bf16.mxu0 0
        %7202 = vmatpush1.bf16.msra.mxu0 %v6957
        %7203 = vmatprep.subr.bf16.mxu0 0
        %7204 = vmatpush1.bf16.msra.mxu0 %v6958
        %7205 = vmatprep.subr.bf16.mxu0 0
        %7206 = vmatpush1.bf16.msra.mxu0 %v6959
        %7207 = vmatprep.subr.bf16.mxu0 0
        %7208 = vmatpush1.bf16.msra.mxu0 %v6960
        %7209 = vmatprep.mubr.bf16.mxu0 %v6414
        %7210 = vmatmul.mubr.bf16.gmra.mrb[0].mxu0 %v6413
        %v7211 = vpop.f32.mrb[0].mxu0
        %v7212 = vadd.f32 %v7172, %v7211
        %v7213 = vpop.f32.mrb[0].mxu0
        %v7214 = vpop.f32.mrb[0].mxu0
        %v7215 = vpop.f32.mrb[0].mxu0
        %7216 = vdwg.mxu0
        %7217 = vmatprep.subr.bf16.mxu0 0
        %7218 = vmatpush1.bf16.msra.mxu0 %v6961
        %7219 = vmatprep.subr.bf16.mxu0 0
        %7220 = vmatpush1.bf16.msra.mxu0 %v6962
        %7221 = vmatprep.subr.bf16.mxu0 0
        %7222 = vmatpush1.bf16.msra.mxu0 %v6963
        %7223 = vmatprep.subr.bf16.mxu0 0
        %7224 = vmatpush1.bf16.msra.mxu0 %v6964
        %7225 = vmatprep.subr.bf16.mxu0 0
        %7226 = vmatpush1.bf16.msra.mxu0 %v6965
        %7227 = vmatprep.subr.bf16.mxu0 0
        %7228 = vmatpush1.bf16.msra.mxu0 %v6966
        %7229 = vmatprep.subr.bf16.mxu0 0
        %7230 = vmatpush1.bf16.msra.mxu0 %v6967
        %7231 = vmatprep.subr.bf16.mxu0 0
        %7232 = vmatpush1.bf16.msra.mxu0 %v6968
        %7233 = vmatprep.subr.bf16.mxu0 0
        %7234 = vmatpush1.bf16.msra.mxu0 %v6969
        %7235 = vmatprep.subr.bf16.mxu0 0
        %7236 = vmatpush1.bf16.msra.mxu0 %v6970
        %7237 = vmatprep.subr.bf16.mxu0 0
        %7238 = vmatpush1.bf16.msra.mxu0 %v6971
        %7239 = vmatprep.subr.bf16.mxu0 0
        %7240 = vmatpush1.bf16.msra.mxu0 %v6972
        %7241 = vmatprep.subr.bf16.mxu0 0
        %7242 = vmatpush1.bf16.msra.mxu0 %v6973
        %7243 = vmatprep.subr.bf16.mxu0 0
        %7244 = vmatpush1.bf16.msra.mxu0 %v6974
        %7245 = vmatprep.subr.bf16.mxu0 0
        %7246 = vmatpush1.bf16.msra.mxu0 %v6975
        %7247 = vmatprep.subr.bf16.mxu0 0
        %7248 = vmatpush1.bf16.msra.mxu0 %v6976
        %7249 = vmatprep.mubr.bf16.mxu0 %v6416
        %7250 = vmatmul.mubr.bf16.gmra.mrb[0].mxu0 %v6415
        %v7251 = vpop.f32.mrb[0].mxu0
        %v7252 = vadd.f32 %v7212, %v7251
        %v7253 = vpop.f32.mrb[0].mxu0
        %v7254 = vpop.f32.mrb[0].mxu0
        %v7255 = vpop.f32.mrb[0].mxu0
        %7256 = vdwg.mxu0
        %v7257 = vld [vmem:[%s5] sm:$0x1]
        %v7259 = vlaneseq
        %v7260 = vshrl.u32 %v7259, 7
        %v7261 = vsub.s32 0, %v7260
        %v7262 = vrot.slane %v7257, %v7261
        %v7264 = vmul.f32 %v7252, %v7262
        %v7265 = vld [vmem:[%s6] sm:$0x1]
        %v7267 = vlaneseq
        %v7268 = vshrl.u32 %v7267, 7
        %v7269 = vsub.s32 0, %v7268
        %v7270 = vrot.slane %v7265, %v7269
        %v7272 = vadd.f32 %v7264, %v7270
        %v7273 = vmax.f32 %v7272, 0.0
        %v7274 = vpack.c.bf16 %v7273, %v7273
        %v7275 = vld [vmem:[%s7] sm:$0xf]
        %v7276 = vld [vmem:[%s7 + $0x4] sm:$0xf]
        %v7277 = vld [vmem:[%s7 + $0x8] sm:$0xf]
        %v7278 = vld [vmem:[%s7 + $0xc] sm:$0xf]
        %v7279 = vld [vmem:[%s7 + $0x10] sm:$0xf]
        %v7280 = vld [vmem:[%s7 + $0x14] sm:$0xf]
        %v7281 = vld [vmem:[%s7 + $0x18] sm:$0xf]
        %v7282 = vld [vmem:[%s7 + $0x1c] sm:$0xf]
        %v7283 = vld [vmem:[%s7 + $0x20] sm:$0xf]
        %v7284 = vld [vmem:[%s7 + $0x24] sm:$0xf]
        %v7285 = vld [vmem:[%s7 + $0x28] sm:$0xf]
        %v7286 = vld [vmem:[%s7 + $0x2c] sm:$0xf]
        %v7287 = vld [vmem:[%s7 + $0x30] sm:$0xf]
        %v7288 = vld [vmem:[%s7 + $0x34] sm:$0xf]
        %v7289 = vld [vmem:[%s7 + $0x38] sm:$0xf]
        %v7290 = vld [vmem:[%s7 + $0x3c] sm:$0xf]
        %v7291 = vld [vmem:[%s8] sm:$0x1]
        %v7293 = vlaneseq
        %v7294 = vshrl.u32 %v7293, 7
        %v7295 = vsub.s32 0, %v7294
        %v7296 = vrot.slane %v7291, %v7295
        %v7314 = vunpack.c.l.b16 %v7275
        %v7315 = vunpack.c.l.b16 %v7276
        %v7316 = vunpack.c.l.b16 %v7277
        %v7317 = vunpack.c.l.b16 %v7278
        %v7318 = vunpack.c.l.b16 %v7279
        %v7319 = vunpack.c.l.b16 %v7280
        %v7320 = vunpack.c.l.b16 %v7281
        %v7321 = vunpack.c.l.b16 %v7282
        %v7322 = vunpack.c.l.b16 %v7283
        %v7323 = vunpack.c.l.b16 %v7284
        %v7324 = vunpack.c.l.b16 %v7285
        %v7325 = vunpack.c.l.b16 %v7286
        %v7326 = vunpack.c.l.b16 %v7287
        %v7327 = vunpack.c.l.b16 %v7288
        %v7328 = vunpack.c.l.b16 %v7289
        %v7329 = vunpack.c.l.b16 %v7290
        %v7330 = vpack.c.b16 %v7315, %v7314
        %v7331 = vpack.c.b16 %v7317, %v7316
        %v7332 = vpack.c.b16 %v7319, %v7318
        %v7333 = vpack.c.b16 %v7321, %v7320
        %v7334 = vpack.c.b16 %v7323, %v7322
        %v7335 = vpack.c.b16 %v7325, %v7324
        %v7336 = vpack.c.b16 %v7327, %v7326
        %v7337 = vpack.c.b16 %v7329, %v7328
        %7346 = vmatprep.subr.bf16.mxu0 0
        %7347 = vmatpush1.bf16.msra.mxu0 %v7330
        %7348 = vmatprep.subr.bf16.mxu0 0
        %7349 = vmatpush1.bf16.msra.mxu0 %v7331
        %7350 = vmatprep.subr.bf16.mxu0 0
        %7351 = vmatpush1.bf16.msra.mxu0 %v7332
        %7352 = vmatprep.subr.bf16.mxu0 0
        %7353 = vmatpush1.bf16.msra.mxu0 %v7333
        %7354 = vmatprep.subr.bf16.mxu0 0
        %7355 = vmatpush1.bf16.msra.mxu0 %v7334
        %7356 = vmatprep.subr.bf16.mxu0 0
        %7357 = vmatpush1.bf16.msra.mxu0 %v7335
        %7358 = vmatprep.subr.bf16.mxu0 0
        %7359 = vmatpush1.bf16.msra.mxu0 %v7336
        %7360 = vmatprep.subr.bf16.mxu0 0
        %7361 = vmatpush1.bf16.msra.mxu0 %v7337
        %7362 = vmatprep.subr.bf16.mxu0 0
        %7363 = vmatpush1.bf16.msra.mxu0 0
        %7364 = vmatprep.subr.bf16.mxu0 0
        %7365 = vmatpush1.bf16.msra.mxu0 0
        %7366 = vmatprep.subr.bf16.mxu0 0
        %7367 = vmatpush1.bf16.msra.mxu0 0
        %7368 = vmatprep.subr.bf16.mxu0 0
        %7369 = vmatpush1.bf16.msra.mxu0 0
        %7370 = vmatprep.subr.bf16.mxu0 0
        %7371 = vmatpush1.bf16.msra.mxu0 0
        %7372 = vmatprep.subr.bf16.mxu0 0
        %7373 = vmatpush1.bf16.msra.mxu0 0
        %7374 = vmatprep.subr.bf16.mxu0 0
        %7375 = vmatpush1.bf16.msra.mxu0 0
        %7376 = vmatprep.subr.bf16.mxu0 0
        %7377 = vmatpush1.bf16.msra.mxu0 0
        %7378 = vmatprep.mubr.bf16.mxu0 0
        %7379 = vmatmul.mubr.bf16.gmra.mrb[0].mxu0 %v7274
        %v7380 = vpop.f32.mrb[0].mxu0
        %v7381 = vadd.f32 %v7296, %v7380
        %v7382 = vpop.f32.mrb[0].mxu0
        %v7383 = vpop.f32.mrb[0].mxu0
        %v7384 = vpop.f32.mrb[0].mxu0
        %7385 = vdwg.mxu0
        %7386 = vst [vmem:[%s9] sm:$0xff] %v7381
      $region64: #{model_forward.7} parent=55 // pred_fallthru
        _
      // Predicated region
      $region65: #{model_forward.7} parent=55 // pred_check
        %p7387 = pneg %p232
      $region66: #{model_forward.7} parent=55 // pred_check_branch
        %7389 = sbr.rel (%p7387) target = $region68
      $region67: #{model_forward.7} parent=55 // pred_region
        _
      $region68: #{model_forward.7} parent=55 // pred_fallthru
        _
      // Predicated region
      $region69: #{model_forward.7} parent=55 // pred_check
        %p7390 = pneg %p232
      $region70: #{model_forward.7} parent=55 // pred_check_branch
        %7392 = sbr.rel (%p7390) target = $region72
      $region71: #{model_forward.7} parent=55 // pred_region
        _
      $region72: #{model_forward.7} parent=55 // pred_fallthru
        _
    $region56: #{model_forward.7} parent=5 // pred_fallthru
      _
    %p7393 = scmp.le.s32.totalorder 2, %s15
    // Predicated region
    $region73: #{model_forward.7} parent=5 // pred_check
      %p7394 = pneg %p7393
    $region74: #{model_forward.7} parent=5 // pred_check_branch
      %7396 = sbr.rel (%p7394) target = $region76
    $region75: #{model_forward.7} parent=5 // pred_region
      %s7397 = ssub.s32 %s15, 2
    $region76: #{model_forward.7} parent=5 // pred_fallthru
      _
  $region6: #{model_forward.7} parent=0 // loop_footer
    %s19 = sadd.s32 1, %s15
  $region7: #{model_forward.7} parent=0 // loop_footer_branch
    %14 = sbr.rel target = $region3
  $region8: #{model_forward.7} parent=0 // loop_exit
    _

</llo_original>
